<compile_context>
chip_gen: v7x
topology: tpu7x:2x2x1
jax: 0.10.0
libtpu: 0.0.40
codegen_flags: <defaults>
</compile_context>

<pallas_src>
import jax
import jax.numpy as jnp
from jax import lax
from jax.experimental import pallas as pl
from jax.experimental.pallas import tpu as pltpu

EPS = 1e-5


def _rup(x, m):
    return (x + m - 1) // m * m


def _pads(bb):
    # max |flat tap shift|: layer1 = 2*32+2 rows/cols, layer2 = 2*32+4 (dilated
    # columns); rounded up to 128-lane multiples so slab-center writes align.
    return _rup(66 * bb, 128), _rup(68 * bb, 128)


# ----------------------------------------------------------------------------
# Fused Pallas kernel: one block of `bb` images per grid step.
# Lane layout: lane = position * bb + image (image-interleaved), where
# position indexes a 32x32 (layer 1) / 16x32 (layer 2) zero-margined slot.
# ----------------------------------------------------------------------------
def _cnn_mnist_kernel(x_ref, w1_ref, b1_ref, w2_ref, b2_ref, msk_ref,
                      wfc_ref, bfc_ref, o_ref,
                      xs_ref, p1_ref, ms_ref, p2_ref):
    f32 = jnp.float32
    bf16 = jnp.bfloat16
    bb = o_ref.shape[1]            # images per block
    L1 = x_ref.shape[1]            # 1024*bb : 32x32 slot per image
    L2 = L1 // 2                   # 512*bb  : even rows only (16x32 slot)
    row = 32 * bb                  # lane stride between consecutive rows
    pad1, pad2 = _pads(bb)

    # ---------------- layer 1: conv5x5(pad=2) + BN(folded) + ReLU -------------
    # Zero the slab margins every step (megacore-safe), write the images, then
    # build the (25, L1) im2col matrix with 25 aligned row stores.  Image
    # margins are zero, so out-of-image taps need no validity masks.
    xs_ref[:, 0:pad1] = jnp.zeros((1, pad1), bf16)
    xs_ref[:, pad1 + L1:pad1 + L1 + pad1] = jnp.zeros((1, pad1), bf16)
    xs_ref[:, pad1:pad1 + L1] = x_ref[...].astype(bf16)
    for kh in range(5):
        for kw in range(5):
            t = kh * 5 + kw
            sft = ((kh - 2) * 32 + (kw - 2)) * bb
            p1_ref[t:t + 1, :] = xs_ref[:, pad1 + sft:pad1 + sft + L1]
    a1 = jnp.dot(w1_ref[...], p1_ref[...], preferred_element_type=f32)  # (16,L1)
    a1 = jnp.maximum(a1 + b1_ref[...], 0.0)

    # ---------------- pool1: 2x2 max, NO decimation ---------------------------
    # The max lives at every position; only even-row/even-col entries are real
    # pooled values -- the decimation is folded into the next stages.
    a1p = jnp.concatenate([a1, jnp.zeros((16, 33 * bb), f32)], axis=1)
    m = jnp.maximum(jnp.maximum(a1p[:, 0:L1], a1p[:, bb:bb + L1]),
                    jnp.maximum(a1p[:, row:row + L1],
                                a1p[:, row + bb:row + bb + L1]))

    # -------- even-row compression + single in-image lane mask ----------------
    m_e = jnp.concatenate(
        [m[:, 2 * k * row:2 * k * row + row] for k in range(16)], axis=1)  # (16,L2)
    ms_ref[:, 0:pad2] = jnp.zeros((16, pad2), bf16)
    ms_ref[:, pad2 + L2:pad2 + L2 + pad2] = jnp.zeros((16, pad2), bf16)
    ms_ref[:, pad2:pad2 + L2] = (m_e * msk_ref[...]).astype(bf16)

    # ---------------- layer 2: conv5x5 on the pooled grid ---------------------
    # Row taps step whole (even) rows; column taps are dilated by 2 because the
    # horizontal pool-1 decimation is deferred.  One (32,400)x(400,L2) matmul.
    for kh in range(5):
        for kw in range(5):
            t = kh * 5 + kw
            sft = ((kh - 2) * 32 + 2 * (kw - 2)) * bb
            p2_ref[16 * t:16 * (t + 1), :] = ms_ref[:, pad2 + sft:pad2 + sft + L2]
    a2 = jnp.dot(w2_ref[...], p2_ref[...], preferred_element_type=f32)  # (32,L2)
    a2 = jnp.maximum(a2 + b2_ref[...], 0.0)

    # ---------------- pool2: 2x2 max over the (even-row, even-col) grid -------
    a2p = jnp.concatenate([a2, jnp.zeros((32, 34 * bb), f32)], axis=1)
    mx2 = jnp.maximum(jnp.maximum(a2p[:, 0:L2], a2p[:, 2 * bb:2 * bb + L2]),
                      jnp.maximum(a2p[:, row:row + L2],
                                  a2p[:, row + 2 * bb:row + 2 * bb + L2]))

    # ---------------- FC: gather the 49 live positions, one matmul ------------
    # Final values per image sit at compressed position 64*s + 4*t (s,t in
    # [0,7)); slices are bb-wide and 32*bb-lane aligned.  Weight columns were
    # permuted host-side to match this (s, t, channel) row order.
    cols = []
    for s in range(7):
        for t in range(7):
            off = (64 * s + 4 * t) * bb
            cols.append(mx2[:, off:off + bb])
    pmat = jnp.concatenate(cols, axis=0)                                # (1568,bb)
    o_ref[...] = (jnp.dot(wfc_ref[...], pmat, preferred_element_type=f32)
                  + bfc_ref[...])                                       # (10,bb)


# ----------------------------------------------------------------------------
# Host-side parameter folding / constants (plain JAX, tiny)
# ----------------------------------------------------------------------------
def _prep_params(p, bb):
    s1 = p["bn1_gamma"] / jnp.sqrt(p["bn1_var"] + EPS)
    b1 = (p["conv1_b"] - p["bn1_mean"]) * s1 + p["bn1_beta"]
    s2 = p["bn2_gamma"] / jnp.sqrt(p["bn2_var"] + EPS)
    b2 = (p["conv2_b"] - p["bn2_mean"]) * s2 + p["bn2_beta"]
    # conv weights with BN scale folded in, bf16 MXU operands.
    w1 = (p["conv1_w"].reshape(16, 25) * s1[:, None]).astype(jnp.bfloat16)
    w2 = (jnp.transpose(p["conv2_w"], (0, 2, 3, 1)).reshape(32, 400)
          * s2[:, None]).astype(jnp.bfloat16)                   # row = 16*tap + cin
    # in-image lane mask for the compressed (16 rows x 32 cols) layer-2 grid.
    pos = jnp.arange(512, dtype=jnp.int32)
    valid = ((pos // 32) < 14) & ((pos % 32) < 28)
    mask2 = jnp.repeat(valid.astype(jnp.float32), bb).reshape(1, 512 * bb)
    # FC weight columns re-ordered to the kernel's (s, t, channel) gather order.
    wfc = (p["fc_w"].reshape(10, 32, 7, 7).transpose(0, 2, 3, 1)
           .reshape(10, 1568)).astype(jnp.float32)
    return dict(w1=w1, b1=b1.reshape(16, 1), w2=w2, b2=b2.reshape(32, 1),
                mask2=mask2, wfc=wfc, bfc=p["fc_b"].reshape(10, 1))


def _prep_input(x_nchw, bb, Bp):
    B = x_nchw.shape[0]
    x = x_nchw.astype(jnp.float32).reshape(B, 28, 28)
    x = jnp.pad(x, ((0, Bp - B), (0, 4), (0, 4)))          # (Bp, 32, 32), zero margins
    nblk = Bp // bb
    x = x.reshape(nblk, bb, 1024)
    x = jnp.transpose(x, (0, 2, 1)).reshape(nblk, 1, 1024 * bb)   # interleave images
    return x


def cnn_mnist_forward(x_nchw, params, block_size=8):
    B = x_nchw.shape[0]
    bb = max(1, min(block_size, B))      # images per grid step
    nblk = -(-B // bb)
    Bp = nblk * bb
    L1 = 1024 * bb
    L2 = 512 * bb
    pad1, pad2 = _pads(bb)

    c = _prep_params(params, bb)
    xk = _prep_input(x_nchw, bb, Bp)
    const2 = lambda i: (0, 0)

    out = pl.pallas_call(
        _cnn_mnist_kernel,
        out_shape=jax.ShapeDtypeStruct((nblk, 10, bb), jnp.float32),
        grid=(nblk,),
        in_specs=[
            pl.BlockSpec((None, 1, L1), lambda i: (i, 0, 0)),   # image block
            pl.BlockSpec((16, 25), const2),                     # folded conv1 w (bf16)
            pl.BlockSpec((16, 1), const2),                      # folded BN1 shift
            pl.BlockSpec((32, 400), const2),                    # folded conv2 w (bf16)
            pl.BlockSpec((32, 1), const2),                      # folded BN2 shift
            pl.BlockSpec((1, L2), const2),                      # in-image lane mask
            pl.BlockSpec((10, 1568), const2),                   # permuted FC weight
            pl.BlockSpec((10, 1), const2),                      # FC bias
        ],
        out_specs=pl.BlockSpec((None, 10, bb), lambda i: (i, 0, 0)),
        scratch_shapes=[
            pltpu.VMEM((1, L1 + 2 * pad1), jnp.bfloat16),       # padded layer-1 input
            pltpu.VMEM((25, L1), jnp.bfloat16),                 # layer-1 im2col
            pltpu.VMEM((16, L2 + 2 * pad2), jnp.bfloat16),      # padded layer-2 input
            pltpu.VMEM((400, L2), jnp.bfloat16),                # layer-2 im2col
        ],
        compiler_params=pltpu.CompilerParams(
            dimension_semantics=("parallel",),
            vmem_limit_bytes=48 * 1024 * 1024),
    )(xk, c["w1"], c["b1"], c["w2"], c["b2"], c["mask2"], c["wfc"], c["bfc"])

    out = jnp.transpose(out, (0, 2, 1)).reshape(Bp, 10)
    return out[:B]


# ----------------------------------------------------------------------------
# Pure-JAX reference and deterministic parameter init
# ----------------------------------------------------------------------------
def reference_forward(x, p):
    def layer(x, w, b, g, be, m, v):
        y = lax.conv_general_dilated(
            x, w, (1, 1), ((2, 2), (2, 2)),
            dimension_numbers=("NCHW", "OIHW", "NCHW"),
            precision=lax.Precision.HIGHEST,
        )
        y = y + b[None, :, None, None]
        y = (y - m[None, :, None, None]) * (g / jnp.sqrt(v + EPS))[None, :, None, None]
        y = y + be[None, :, None, None]
        y = jnp.maximum(y, 0.0)
        B, C, H, W = y.shape
        return y.reshape(B, C, H // 2, 2, W // 2, 2).max(axis=(3, 5))

    y = layer(x, p["conv1_w"], p["conv1_b"], p["bn1_gamma"], p["bn1_beta"],
              p["bn1_mean"], p["bn1_var"])
    y = layer(y, p["conv2_w"], p["conv2_b"], p["bn2_gamma"], p["bn2_beta"],
              p["bn2_mean"], p["bn2_var"])
    y = y.reshape(y.shape[0], -1)
    return y @ p["fc_w"].T + p["fc_b"]


def init_params(key):
    ks = jax.random.split(key, 14)
    f32 = jnp.float32
    return {
        "conv1_w": 0.1 * jax.random.normal(ks[0], (16, 1, 5, 5), f32),
        "conv1_b": 0.05 * jax.random.normal(ks[1], (16,), f32),
        "bn1_gamma": 1.0 + 0.1 * jax.random.normal(ks[2], (16,), f32),
        "bn1_beta": 0.05 * jax.random.normal(ks[3], (16,), f32),
        "bn1_mean": 0.05 * jax.random.normal(ks[4], (16,), f32),
        "bn1_var": jax.random.uniform(ks[5], (16,), f32, 0.5, 1.5),
        "conv2_w": 0.1 * jax.random.normal(ks[6], (32, 16, 5, 5), f32),
        "conv2_b": 0.05 * jax.random.normal(ks[7], (32,), f32),
        "bn2_gamma": 1.0 + 0.1 * jax.random.normal(ks[8], (32,), f32),
        "bn2_beta": 0.05 * jax.random.normal(ks[9], (32,), f32),
        "bn2_mean": 0.05 * jax.random.normal(ks[10], (32,), f32),
        "bn2_var": jax.random.uniform(ks[11], (32,), f32, 0.5, 1.5),
        "fc_w": 0.05 * jax.random.normal(ks[12], (10, 7 * 7 * 32), f32),
        "fc_b": 0.05 * jax.random.normal(ks[13], (10,), f32),
    }


if __name__ == "__main__":
    key = jax.random.PRNGKey(0)
    kx, kp = jax.random.split(key)
    # Module architecture fixes the input to 1x28x28 (fc expects 7*7*32); batch=2.
    x = jax.random.normal(kx, (2, 1, 28, 28), jnp.float32)
    params = init_params(kp)

    out = jax.block_until_ready(cnn_mnist_forward(x, params))
    ref = jax.block_until_ready(reference_forward(x, params))

    assert out.shape == (2, 10), out.shape
    # bf16 MXU operands (per perf review) move results by O(1e-2) vs the pure
    # f32 reference; 5e-2 keeps comfortable margin.
    err = float(jnp.max(jnp.abs(out - ref)))
    assert err < 5e-2, f"max abs err too large: {err}"
    print("KERNEL_OK")
</pallas_src>

<mosaic_0001>
module attributes {stable_mosaic.version = 11 : i64} {
  func.func @_cnn_mnist_kernel(%arg0: i32, %arg1: memref<1x1x2048xf32, #tpu.memory_space<vmem>>, %arg2: memref<16x25xbf16, #tpu.memory_space<vmem>>, %arg3: memref<16x1xf32, #tpu.memory_space<vmem>>, %arg4: memref<32x400xbf16, #tpu.memory_space<vmem>>, %arg5: memref<32x1xf32, #tpu.memory_space<vmem>>, %arg6: memref<1x1024xf32, #tpu.memory_space<vmem>>, %arg7: memref<10x1568xf32, #tpu.memory_space<vmem>>, %arg8: memref<10x1xf32, #tpu.memory_space<vmem>>, %arg9: memref<1x10x2xf32, #tpu.memory_space<vmem>>, %arg10: memref<1x2560xbf16, #tpu.memory_space<vmem>>, %arg11: memref<25x2048xbf16, #tpu.memory_space<vmem>>, %arg12: memref<16x1536xbf16, #tpu.memory_space<vmem>>, %arg13: memref<400x1024xbf16, #tpu.memory_space<vmem>>) attributes {dimension_semantics = [#tpu.dimension_semantics<parallel>], iteration_bounds = array<i64: 1>, scalar_prefetch = 0 : i64, scratch_operands = 4 : i64, tpu.core_type = #tpu.core_type<tc>, window_params = [{transform_indices = @transform_0, window_bounds = array<i64: 1, 1, 2048>}, {pipeline_mode = #tpu.pipeline_mode<synchronous>, transform_indices = @transform_1, window_bounds = array<i64: 16, 25>}, {pipeline_mode = #tpu.pipeline_mode<synchronous>, transform_indices = @transform_2, window_bounds = array<i64: 16, 1>}, {pipeline_mode = #tpu.pipeline_mode<synchronous>, transform_indices = @transform_3, window_bounds = array<i64: 32, 400>}, {pipeline_mode = #tpu.pipeline_mode<synchronous>, transform_indices = @transform_4, window_bounds = array<i64: 32, 1>}, {pipeline_mode = #tpu.pipeline_mode<synchronous>, transform_indices = @transform_5, window_bounds = array<i64: 1, 1024>}, {pipeline_mode = #tpu.pipeline_mode<synchronous>, transform_indices = @transform_6, window_bounds = array<i64: 10, 1568>}, {pipeline_mode = #tpu.pipeline_mode<synchronous>, transform_indices = @transform_7, window_bounds = array<i64: 10, 1>}, {transform_indices = @transform_8, window_bounds = array<i64: 1, 10, 2>}]} {
    %cst = arith.constant 0.000000e+00 : bf16
    %0 = vector.broadcast %cst : bf16 to vector<1x256xbf16>
    %c0 = arith.constant 0 : index
    %c0_0 = arith.constant 0 : index
    %1 = vector.load %arg10[%c0, %c0_0] : memref<1x2560xbf16, #tpu.memory_space<vmem>>, vector<1x256xbf16>
    tpu.vector_store %arg10[%c0, %c0_0], %0 {strides = array<i32>} : memref<1x2560xbf16, #tpu.memory_space<vmem>>, vector<1x256xbf16>,
    %cst_1 = arith.constant 0.000000e+00 : bf16
    %2 = vector.broadcast %cst_1 : bf16 to vector<1x256xbf16>
    %c0_2 = arith.constant 0 : index
    %c2304 = arith.constant 2304 : index
    %3 = vector.load %arg10[%c0_2, %c2304] : memref<1x2560xbf16, #tpu.memory_space<vmem>>, vector<1x256xbf16>
    tpu.vector_store %arg10[%c0_2, %c2304], %2 {strides = array<i32>} : memref<1x2560xbf16, #tpu.memory_space<vmem>>, vector<1x256xbf16>,
    %c0_3 = arith.constant 0 : index
    %c0_4 = arith.constant 0 : index
    %c0_5 = arith.constant 0 : index
    %4 = vector.load %arg1[%c0_3, %c0_4, %c0_5] : memref<1x1x2048xf32, #tpu.memory_space<vmem>>, vector<1x1x2048xf32>
    %5 = vector.shape_cast %4 : vector<1x1x2048xf32> to vector<1x2048xf32>
    %6 = arith.truncf %5 : vector<1x2048xf32> to vector<1x2048xbf16>
    %c0_6 = arith.constant 0 : index
    %c256 = arith.constant 256 : index
    %7 = vector.load %arg10[%c0_6, %c256] : memref<1x2560xbf16, #tpu.memory_space<vmem>>, vector<1x2048xbf16>
    tpu.vector_store %arg10[%c0_6, %c256], %6 {strides = array<i32>} : memref<1x2560xbf16, #tpu.memory_space<vmem>>, vector<1x2048xbf16>,
    %c0_7 = arith.constant 0 : index
    %c124 = arith.constant 124 : index
    %8 = vector.load %arg10[%c0_7, %c124] : memref<1x2560xbf16, #tpu.memory_space<vmem>>, vector<1x2048xbf16>
    %c0_8 = arith.constant 0 : index
    %c0_9 = arith.constant 0 : index
    %9 = vector.load %arg11[%c0_8, %c0_9] : memref<25x2048xbf16, #tpu.memory_space<vmem>>, vector<1x2048xbf16>
    tpu.vector_store %arg11[%c0_8, %c0_9], %8 {strides = array<i32>} : memref<25x2048xbf16, #tpu.memory_space<vmem>>, vector<1x2048xbf16>,
    %c0_10 = arith.constant 0 : index
    %c126 = arith.constant 126 : index
    %10 = vector.load %arg10[%c0_10, %c126] : memref<1x2560xbf16, #tpu.memory_space<vmem>>, vector<1x2048xbf16>
    %c1 = arith.constant 1 : index
    %c0_11 = arith.constant 0 : index
    %11 = vector.load %arg11[%c1, %c0_11] : memref<25x2048xbf16, #tpu.memory_space<vmem>>, vector<1x2048xbf16>
    tpu.vector_store %arg11[%c1, %c0_11], %10 {strides = array<i32>} : memref<25x2048xbf16, #tpu.memory_space<vmem>>, vector<1x2048xbf16>,
    %c0_12 = arith.constant 0 : index
    %c128 = arith.constant 128 : index
    %12 = vector.load %arg10[%c0_12, %c128] : memref<1x2560xbf16, #tpu.memory_space<vmem>>, vector<1x2048xbf16>
    %c2 = arith.constant 2 : index
    %c0_13 = arith.constant 0 : index
    %13 = vector.load %arg11[%c2, %c0_13] : memref<25x2048xbf16, #tpu.memory_space<vmem>>, vector<1x2048xbf16>
    tpu.vector_store %arg11[%c2, %c0_13], %12 {strides = array<i32>} : memref<25x2048xbf16, #tpu.memory_space<vmem>>, vector<1x2048xbf16>,
    %c0_14 = arith.constant 0 : index
    %c130 = arith.constant 130 : index
    %14 = vector.load %arg10[%c0_14, %c130] : memref<1x2560xbf16, #tpu.memory_space<vmem>>, vector<1x2048xbf16>
    %c3 = arith.constant 3 : index
    %c0_15 = arith.constant 0 : index
    %15 = vector.load %arg11[%c3, %c0_15] : memref<25x2048xbf16, #tpu.memory_space<vmem>>, vector<1x2048xbf16>
    tpu.vector_store %arg11[%c3, %c0_15], %14 {strides = array<i32>} : memref<25x2048xbf16, #tpu.memory_space<vmem>>, vector<1x2048xbf16>,
    %c0_16 = arith.constant 0 : index
    %c132 = arith.constant 132 : index
    %16 = vector.load %arg10[%c0_16, %c132] : memref<1x2560xbf16, #tpu.memory_space<vmem>>, vector<1x2048xbf16>
    %c4 = arith.constant 4 : index
    %c0_17 = arith.constant 0 : index
    %17 = vector.load %arg11[%c4, %c0_17] : memref<25x2048xbf16, #tpu.memory_space<vmem>>, vector<1x2048xbf16>
    tpu.vector_store %arg11[%c4, %c0_17], %16 {strides = array<i32>} : memref<25x2048xbf16, #tpu.memory_space<vmem>>, vector<1x2048xbf16>,
    %c0_18 = arith.constant 0 : index
    %c188 = arith.constant 188 : index
    %18 = vector.load %arg10[%c0_18, %c188] : memref<1x2560xbf16, #tpu.memory_space<vmem>>, vector<1x2048xbf16>
    %c5 = arith.constant 5 : index
    %c0_19 = arith.constant 0 : index
    %19 = vector.load %arg11[%c5, %c0_19] : memref<25x2048xbf16, #tpu.memory_space<vmem>>, vector<1x2048xbf16>
    tpu.vector_store %arg11[%c5, %c0_19], %18 {strides = array<i32>} : memref<25x2048xbf16, #tpu.memory_space<vmem>>, vector<1x2048xbf16>,
    %c0_20 = arith.constant 0 : index
    %c190 = arith.constant 190 : index
    %20 = vector.load %arg10[%c0_20, %c190] : memref<1x2560xbf16, #tpu.memory_space<vmem>>, vector<1x2048xbf16>
    %c6 = arith.constant 6 : index
    %c0_21 = arith.constant 0 : index
    %21 = vector.load %arg11[%c6, %c0_21] : memref<25x2048xbf16, #tpu.memory_space<vmem>>, vector<1x2048xbf16>
    tpu.vector_store %arg11[%c6, %c0_21], %20 {strides = array<i32>} : memref<25x2048xbf16, #tpu.memory_space<vmem>>, vector<1x2048xbf16>,
    %c0_22 = arith.constant 0 : index
    %c192 = arith.constant 192 : index
    %22 = vector.load %arg10[%c0_22, %c192] : memref<1x2560xbf16, #tpu.memory_space<vmem>>, vector<1x2048xbf16>
    %c7 = arith.constant 7 : index
    %c0_23 = arith.constant 0 : index
    %23 = vector.load %arg11[%c7, %c0_23] : memref<25x2048xbf16, #tpu.memory_space<vmem>>, vector<1x2048xbf16>
    tpu.vector_store %arg11[%c7, %c0_23], %22 {strides = array<i32>} : memref<25x2048xbf16, #tpu.memory_space<vmem>>, vector<1x2048xbf16>,
    %c0_24 = arith.constant 0 : index
    %c194 = arith.constant 194 : index
    %24 = vector.load %arg10[%c0_24, %c194] : memref<1x2560xbf16, #tpu.memory_space<vmem>>, vector<1x2048xbf16>
    %c8 = arith.constant 8 : index
    %c0_25 = arith.constant 0 : index
    %25 = vector.load %arg11[%c8, %c0_25] : memref<25x2048xbf16, #tpu.memory_space<vmem>>, vector<1x2048xbf16>
    tpu.vector_store %arg11[%c8, %c0_25], %24 {strides = array<i32>} : memref<25x2048xbf16, #tpu.memory_space<vmem>>, vector<1x2048xbf16>,
    %c0_26 = arith.constant 0 : index
    %c196 = arith.constant 196 : index
    %26 = vector.load %arg10[%c0_26, %c196] : memref<1x2560xbf16, #tpu.memory_space<vmem>>, vector<1x2048xbf16>
    %c9 = arith.constant 9 : index
    %c0_27 = arith.constant 0 : index
    %27 = vector.load %arg11[%c9, %c0_27] : memref<25x2048xbf16, #tpu.memory_space<vmem>>, vector<1x2048xbf16>
    tpu.vector_store %arg11[%c9, %c0_27], %26 {strides = array<i32>} : memref<25x2048xbf16, #tpu.memory_space<vmem>>, vector<1x2048xbf16>,
    %c0_28 = arith.constant 0 : index
    %c252 = arith.constant 252 : index
    %28 = vector.load %arg10[%c0_28, %c252] : memref<1x2560xbf16, #tpu.memory_space<vmem>>, vector<1x2048xbf16>
    %c10 = arith.constant 10 : index
    %c0_29 = arith.constant 0 : index
    %29 = vector.load %arg11[%c10, %c0_29] : memref<25x2048xbf16, #tpu.memory_space<vmem>>, vector<1x2048xbf16>
    tpu.vector_store %arg11[%c10, %c0_29], %28 {strides = array<i32>} : memref<25x2048xbf16, #tpu.memory_space<vmem>>, vector<1x2048xbf16>,
    %c0_30 = arith.constant 0 : index
    %c254 = arith.constant 254 : index
    %30 = vector.load %arg10[%c0_30, %c254] : memref<1x2560xbf16, #tpu.memory_space<vmem>>, vector<1x2048xbf16>
    %c11 = arith.constant 11 : index
    %c0_31 = arith.constant 0 : index
    %31 = vector.load %arg11[%c11, %c0_31] : memref<25x2048xbf16, #tpu.memory_space<vmem>>, vector<1x2048xbf16>
    tpu.vector_store %arg11[%c11, %c0_31], %30 {strides = array<i32>} : memref<25x2048xbf16, #tpu.memory_space<vmem>>, vector<1x2048xbf16>,
    %c0_32 = arith.constant 0 : index
    %c256_33 = arith.constant 256 : index
    %32 = vector.load %arg10[%c0_32, %c256_33] : memref<1x2560xbf16, #tpu.memory_space<vmem>>, vector<1x2048xbf16>
    %c12 = arith.constant 12 : index
    %c0_34 = arith.constant 0 : index
    %33 = vector.load %arg11[%c12, %c0_34] : memref<25x2048xbf16, #tpu.memory_space<vmem>>, vector<1x2048xbf16>
    tpu.vector_store %arg11[%c12, %c0_34], %32 {strides = array<i32>} : memref<25x2048xbf16, #tpu.memory_space<vmem>>, vector<1x2048xbf16>,
    %c0_35 = arith.constant 0 : index
    %c258 = arith.constant 258 : index
    %34 = vector.load %arg10[%c0_35, %c258] : memref<1x2560xbf16, #tpu.memory_space<vmem>>, vector<1x2048xbf16>
    %c13 = arith.constant 13 : index
    %c0_36 = arith.constant 0 : index
    %35 = vector.load %arg11[%c13, %c0_36] : memref<25x2048xbf16, #tpu.memory_space<vmem>>, vector<1x2048xbf16>
    tpu.vector_store %arg11[%c13, %c0_36], %34 {strides = array<i32>} : memref<25x2048xbf16, #tpu.memory_space<vmem>>, vector<1x2048xbf16>,
    %c0_37 = arith.constant 0 : index
    %c260 = arith.constant 260 : index
    %36 = vector.load %arg10[%c0_37, %c260] : memref<1x2560xbf16, #tpu.memory_space<vmem>>, vector<1x2048xbf16>
    %c14 = arith.constant 14 : index
    %c0_38 = arith.constant 0 : index
    %37 = vector.load %arg11[%c14, %c0_38] : memref<25x2048xbf16, #tpu.memory_space<vmem>>, vector<1x2048xbf16>
    tpu.vector_store %arg11[%c14, %c0_38], %36 {strides = array<i32>} : memref<25x2048xbf16, #tpu.memory_space<vmem>>, vector<1x2048xbf16>,
    %c0_39 = arith.constant 0 : index
    %c316 = arith.constant 316 : index
    %38 = vector.load %arg10[%c0_39, %c316] : memref<1x2560xbf16, #tpu.memory_space<vmem>>, vector<1x2048xbf16>
    %c15 = arith.constant 15 : index
    %c0_40 = arith.constant 0 : index
    %39 = vector.load %arg11[%c15, %c0_40] : memref<25x2048xbf16, #tpu.memory_space<vmem>>, vector<1x2048xbf16>
    tpu.vector_store %arg11[%c15, %c0_40], %38 {strides = array<i32>} : memref<25x2048xbf16, #tpu.memory_space<vmem>>, vector<1x2048xbf16>,
    %c0_41 = arith.constant 0 : index
    %c318 = arith.constant 318 : index
    %40 = vector.load %arg10[%c0_41, %c318] : memref<1x2560xbf16, #tpu.memory_space<vmem>>, vector<1x2048xbf16>
    %c16 = arith.constant 16 : index
    %c0_42 = arith.constant 0 : index
    %41 = vector.load %arg11[%c16, %c0_42] : memref<25x2048xbf16, #tpu.memory_space<vmem>>, vector<1x2048xbf16>
    tpu.vector_store %arg11[%c16, %c0_42], %40 {strides = array<i32>} : memref<25x2048xbf16, #tpu.memory_space<vmem>>, vector<1x2048xbf16>,
    %c0_43 = arith.constant 0 : index
    %c320 = arith.constant 320 : index
    %42 = vector.load %arg10[%c0_43, %c320] : memref<1x2560xbf16, #tpu.memory_space<vmem>>, vector<1x2048xbf16>
    %c17 = arith.constant 17 : index
    %c0_44 = arith.constant 0 : index
    %43 = vector.load %arg11[%c17, %c0_44] : memref<25x2048xbf16, #tpu.memory_space<vmem>>, vector<1x2048xbf16>
    tpu.vector_store %arg11[%c17, %c0_44], %42 {strides = array<i32>} : memref<25x2048xbf16, #tpu.memory_space<vmem>>, vector<1x2048xbf16>,
    %c0_45 = arith.constant 0 : index
    %c322 = arith.constant 322 : index
    %44 = vector.load %arg10[%c0_45, %c322] : memref<1x2560xbf16, #tpu.memory_space<vmem>>, vector<1x2048xbf16>
    %c18 = arith.constant 18 : index
    %c0_46 = arith.constant 0 : index
    %45 = vector.load %arg11[%c18, %c0_46] : memref<25x2048xbf16, #tpu.memory_space<vmem>>, vector<1x2048xbf16>
    tpu.vector_store %arg11[%c18, %c0_46], %44 {strides = array<i32>} : memref<25x2048xbf16, #tpu.memory_space<vmem>>, vector<1x2048xbf16>,
    %c0_47 = arith.constant 0 : index
    %c324 = arith.constant 324 : index
    %46 = vector.load %arg10[%c0_47, %c324] : memref<1x2560xbf16, #tpu.memory_space<vmem>>, vector<1x2048xbf16>
    %c19 = arith.constant 19 : index
    %c0_48 = arith.constant 0 : index
    %47 = vector.load %arg11[%c19, %c0_48] : memref<25x2048xbf16, #tpu.memory_space<vmem>>, vector<1x2048xbf16>
    tpu.vector_store %arg11[%c19, %c0_48], %46 {strides = array<i32>} : memref<25x2048xbf16, #tpu.memory_space<vmem>>, vector<1x2048xbf16>,
    %c0_49 = arith.constant 0 : index
    %c380 = arith.constant 380 : index
    %48 = vector.load %arg10[%c0_49, %c380] : memref<1x2560xbf16, #tpu.memory_space<vmem>>, vector<1x2048xbf16>
    %c20 = arith.constant 20 : index
    %c0_50 = arith.constant 0 : index
    %49 = vector.load %arg11[%c20, %c0_50] : memref<25x2048xbf16, #tpu.memory_space<vmem>>, vector<1x2048xbf16>
    tpu.vector_store %arg11[%c20, %c0_50], %48 {strides = array<i32>} : memref<25x2048xbf16, #tpu.memory_space<vmem>>, vector<1x2048xbf16>,
    %c0_51 = arith.constant 0 : index
    %c382 = arith.constant 382 : index
    %50 = vector.load %arg10[%c0_51, %c382] : memref<1x2560xbf16, #tpu.memory_space<vmem>>, vector<1x2048xbf16>
    %c21 = arith.constant 21 : index
    %c0_52 = arith.constant 0 : index
    %51 = vector.load %arg11[%c21, %c0_52] : memref<25x2048xbf16, #tpu.memory_space<vmem>>, vector<1x2048xbf16>
    tpu.vector_store %arg11[%c21, %c0_52], %50 {strides = array<i32>} : memref<25x2048xbf16, #tpu.memory_space<vmem>>, vector<1x2048xbf16>,
    %c0_53 = arith.constant 0 : index
    %c384 = arith.constant 384 : index
    %52 = vector.load %arg10[%c0_53, %c384] : memref<1x2560xbf16, #tpu.memory_space<vmem>>, vector<1x2048xbf16>
    %c22 = arith.constant 22 : index
    %c0_54 = arith.constant 0 : index
    %53 = vector.load %arg11[%c22, %c0_54] : memref<25x2048xbf16, #tpu.memory_space<vmem>>, vector<1x2048xbf16>
    tpu.vector_store %arg11[%c22, %c0_54], %52 {strides = array<i32>} : memref<25x2048xbf16, #tpu.memory_space<vmem>>, vector<1x2048xbf16>,
    %c0_55 = arith.constant 0 : index
    %c386 = arith.constant 386 : index
    %54 = vector.load %arg10[%c0_55, %c386] : memref<1x2560xbf16, #tpu.memory_space<vmem>>, vector<1x2048xbf16>
    %c23 = arith.constant 23 : index
    %c0_56 = arith.constant 0 : index
    %55 = vector.load %arg11[%c23, %c0_56] : memref<25x2048xbf16, #tpu.memory_space<vmem>>, vector<1x2048xbf16>
    tpu.vector_store %arg11[%c23, %c0_56], %54 {strides = array<i32>} : memref<25x2048xbf16, #tpu.memory_space<vmem>>, vector<1x2048xbf16>,
    %c0_57 = arith.constant 0 : index
    %c388 = arith.constant 388 : index
    %56 = vector.load %arg10[%c0_57, %c388] : memref<1x2560xbf16, #tpu.memory_space<vmem>>, vector<1x2048xbf16>
    %c24 = arith.constant 24 : index
    %c0_58 = arith.constant 0 : index
    %57 = vector.load %arg11[%c24, %c0_58] : memref<25x2048xbf16, #tpu.memory_space<vmem>>, vector<1x2048xbf16>
    tpu.vector_store %arg11[%c24, %c0_58], %56 {strides = array<i32>} : memref<25x2048xbf16, #tpu.memory_space<vmem>>, vector<1x2048xbf16>,
    %c0_59 = arith.constant 0 : index
    %c0_60 = arith.constant 0 : index
    %58 = vector.load %arg2[%c0_59, %c0_60] : memref<16x25xbf16, #tpu.memory_space<vmem>>, vector<16x25xbf16>
    %c0_61 = arith.constant 0 : index
    %c0_62 = arith.constant 0 : index
    %59 = vector.load %arg11[%c0_61, %c0_62] : memref<25x2048xbf16, #tpu.memory_space<vmem>>, vector<25x2048xbf16>
    %cst_63 = arith.constant dense<0.000000e+00> : vector<16x2048xf32>
    %60 = tpu.matmul %58, %59, %cst_63 {dimension_numbers = #tpu.dot_dimension_numbers<[1], [0], [0], [1], [0, 0, 1, 1], [], []>} : vector<16x25xbf16>, vector<25x2048xbf16>, vector<16x2048xf32> -> vector<16x2048xf32>
    %c0_64 = arith.constant 0 : index
    %c0_65 = arith.constant 0 : index
    %61 = vector.load %arg3[%c0_64, %c0_65] : memref<16x1xf32, #tpu.memory_space<vmem>>, vector<16x1xf32>
    %62 = vector.broadcast %61 : vector<16x1xf32> to vector<16x2048xf32>
    %63 = arith.addf %60, %62 : vector<16x2048xf32>
    %cst_66 = arith.constant 0.000000e+00 : f32
    %64 = vector.broadcast %cst_66 : f32 to vector<16x2048xf32>
    %65 = arith.maximumf %63, %64 : vector<16x2048xf32>
    %cst_67 = arith.constant 0.000000e+00 : f32
    %66 = vector.broadcast %cst_67 : f32 to vector<16x66xf32>
    %67 = tpu.concatenate %65, %66 in 1 : vector<16x2048xf32>, vector<16x66xf32> -> vector<16x2114xf32>
    %68 = vector.extract_strided_slice %67 {offsets = [0, 0], sizes = [16, 2048], strides = [1, 1]} : vector<16x2114xf32> to vector<16x2048xf32>
    %69 = vector.extract_strided_slice %67 {offsets = [0, 2], sizes = [16, 2048], strides = [1, 1]} : vector<16x2114xf32> to vector<16x2048xf32>
    %70 = arith.maximumf %68, %69 : vector<16x2048xf32>
    %71 = vector.extract_strided_slice %67 {offsets = [0, 64], sizes = [16, 2048], strides = [1, 1]} : vector<16x2114xf32> to vector<16x2048xf32>
    %72 = vector.extract_strided_slice %67 {offsets = [0, 66], sizes = [16, 2048], strides = [1, 1]} : vector<16x2114xf32> to vector<16x2048xf32>
    %73 = arith.maximumf %71, %72 : vector<16x2048xf32>
    %74 = arith.maximumf %70, %73 : vector<16x2048xf32>
    %75 = vector.extract_strided_slice %74 {offsets = [0, 0], sizes = [16, 64], strides = [1, 1]} : vector<16x2048xf32> to vector<16x64xf32>
    %76 = vector.extract_strided_slice %74 {offsets = [0, 128], sizes = [16, 64], strides = [1, 1]} : vector<16x2048xf32> to vector<16x64xf32>
    %77 = vector.extract_strided_slice %74 {offsets = [0, 256], sizes = [16, 64], strides = [1, 1]} : vector<16x2048xf32> to vector<16x64xf32>
    %78 = vector.extract_strided_slice %74 {offsets = [0, 384], sizes = [16, 64], strides = [1, 1]} : vector<16x2048xf32> to vector<16x64xf32>
    %79 = vector.extract_strided_slice %74 {offsets = [0, 512], sizes = [16, 64], strides = [1, 1]} : vector<16x2048xf32> to vector<16x64xf32>
    %80 = vector.extract_strided_slice %74 {offsets = [0, 640], sizes = [16, 64], strides = [1, 1]} : vector<16x2048xf32> to vector<16x64xf32>
    %81 = vector.extract_strided_slice %74 {offsets = [0, 768], sizes = [16, 64], strides = [1, 1]} : vector<16x2048xf32> to vector<16x64xf32>
    %82 = vector.extract_strided_slice %74 {offsets = [0, 896], sizes = [16, 64], strides = [1, 1]} : vector<16x2048xf32> to vector<16x64xf32>
    %83 = vector.extract_strided_slice %74 {offsets = [0, 1024], sizes = [16, 64], strides = [1, 1]} : vector<16x2048xf32> to vector<16x64xf32>
    %84 = vector.extract_strided_slice %74 {offsets = [0, 1152], sizes = [16, 64], strides = [1, 1]} : vector<16x2048xf32> to vector<16x64xf32>
    %85 = vector.extract_strided_slice %74 {offsets = [0, 1280], sizes = [16, 64], strides = [1, 1]} : vector<16x2048xf32> to vector<16x64xf32>
    %86 = vector.extract_strided_slice %74 {offsets = [0, 1408], sizes = [16, 64], strides = [1, 1]} : vector<16x2048xf32> to vector<16x64xf32>
    %87 = vector.extract_strided_slice %74 {offsets = [0, 1536], sizes = [16, 64], strides = [1, 1]} : vector<16x2048xf32> to vector<16x64xf32>
    %88 = vector.extract_strided_slice %74 {offsets = [0, 1664], sizes = [16, 64], strides = [1, 1]} : vector<16x2048xf32> to vector<16x64xf32>
    %89 = vector.extract_strided_slice %74 {offsets = [0, 1792], sizes = [16, 64], strides = [1, 1]} : vector<16x2048xf32> to vector<16x64xf32>
    %90 = vector.extract_strided_slice %74 {offsets = [0, 1920], sizes = [16, 64], strides = [1, 1]} : vector<16x2048xf32> to vector<16x64xf32>
    %91 = tpu.concatenate %75, %76, %77, %78, %79, %80, %81, %82, %83, %84, %85, %86, %87, %88, %89, %90 in 1 : vector<16x64xf32>, vector<16x64xf32>, vector<16x64xf32>, vector<16x64xf32>, vector<16x64xf32>, vector<16x64xf32>, vector<16x64xf32>, vector<16x64xf32>, vector<16x64xf32>, vector<16x64xf32>, vector<16x64xf32>, vector<16x64xf32>, vector<16x64xf32>, vector<16x64xf32>, vector<16x64xf32>, vector<16x64xf32> -> vector<16x1024xf32>
    %cst_68 = arith.constant 0.000000e+00 : bf16
    %92 = vector.broadcast %cst_68 : bf16 to vector<16x256xbf16>
    %c0_69 = arith.constant 0 : index
    %c0_70 = arith.constant 0 : index
    %93 = vector.load %arg12[%c0_69, %c0_70] : memref<16x1536xbf16, #tpu.memory_space<vmem>>, vector<16x256xbf16>
    tpu.vector_store %arg12[%c0_69, %c0_70], %92 {strides = array<i32>} : memref<16x1536xbf16, #tpu.memory_space<vmem>>, vector<16x256xbf16>,
    %cst_71 = arith.constant 0.000000e+00 : bf16
    %94 = vector.broadcast %cst_71 : bf16 to vector<16x256xbf16>
    %c0_72 = arith.constant 0 : index
    %c1280 = arith.constant 1280 : index
    %95 = vector.load %arg12[%c0_72, %c1280] : memref<16x1536xbf16, #tpu.memory_space<vmem>>, vector<16x256xbf16>
    tpu.vector_store %arg12[%c0_72, %c1280], %94 {strides = array<i32>} : memref<16x1536xbf16, #tpu.memory_space<vmem>>, vector<16x256xbf16>,
    %c0_73 = arith.constant 0 : index
    %c0_74 = arith.constant 0 : index
    %96 = vector.load %arg6[%c0_73, %c0_74] : memref<1x1024xf32, #tpu.memory_space<vmem>>, vector<1x1024xf32>
    %97 = vector.broadcast %96 : vector<1x1024xf32> to vector<16x1024xf32>
    %98 = arith.mulf %91, %97 : vector<16x1024xf32>
    %99 = arith.truncf %98 : vector<16x1024xf32> to vector<16x1024xbf16>
    %c0_75 = arith.constant 0 : index
    %c256_76 = arith.constant 256 : index
    %100 = vector.load %arg12[%c0_75, %c256_76] : memref<16x1536xbf16, #tpu.memory_space<vmem>>, vector<16x1024xbf16>
    tpu.vector_store %arg12[%c0_75, %c256_76], %99 {strides = array<i32>} : memref<16x1536xbf16, #tpu.memory_space<vmem>>, vector<16x1024xbf16>,
    %c0_77 = arith.constant 0 : index
    %c120 = arith.constant 120 : index
    %101 = vector.load %arg12[%c0_77, %c120] : memref<16x1536xbf16, #tpu.memory_space<vmem>>, vector<16x1024xbf16>
    %c0_78 = arith.constant 0 : index
    %c0_79 = arith.constant 0 : index
    %102 = vector.load %arg13[%c0_78, %c0_79] : memref<400x1024xbf16, #tpu.memory_space<vmem>>, vector<16x1024xbf16>
    tpu.vector_store %arg13[%c0_78, %c0_79], %101 {strides = array<i32>} : memref<400x1024xbf16, #tpu.memory_space<vmem>>, vector<16x1024xbf16>,
    %c0_80 = arith.constant 0 : index
    %c124_81 = arith.constant 124 : index
    %103 = vector.load %arg12[%c0_80, %c124_81] : memref<16x1536xbf16, #tpu.memory_space<vmem>>, vector<16x1024xbf16>
    %c16_82 = arith.constant 16 : index
    %c0_83 = arith.constant 0 : index
    %104 = vector.load %arg13[%c16_82, %c0_83] : memref<400x1024xbf16, #tpu.memory_space<vmem>>, vector<16x1024xbf16>
    tpu.vector_store %arg13[%c16_82, %c0_83], %103 {strides = array<i32>} : memref<400x1024xbf16, #tpu.memory_space<vmem>>, vector<16x1024xbf16>,
    %c0_84 = arith.constant 0 : index
    %c128_85 = arith.constant 128 : index
    %105 = vector.load %arg12[%c0_84, %c128_85] : memref<16x1536xbf16, #tpu.memory_space<vmem>>, vector<16x1024xbf16>
    %c32 = arith.constant 32 : index
    %c0_86 = arith.constant 0 : index
    %106 = vector.load %arg13[%c32, %c0_86] : memref<400x1024xbf16, #tpu.memory_space<vmem>>, vector<16x1024xbf16>
    tpu.vector_store %arg13[%c32, %c0_86], %105 {strides = array<i32>} : memref<400x1024xbf16, #tpu.memory_space<vmem>>, vector<16x1024xbf16>,
    %c0_87 = arith.constant 0 : index
    %c132_88 = arith.constant 132 : index
    %107 = vector.load %arg12[%c0_87, %c132_88] : memref<16x1536xbf16, #tpu.memory_space<vmem>>, vector<16x1024xbf16>
    %c48 = arith.constant 48 : index
    %c0_89 = arith.constant 0 : index
    %108 = vector.load %arg13[%c48, %c0_89] : memref<400x1024xbf16, #tpu.memory_space<vmem>>, vector<16x1024xbf16>
    tpu.vector_store %arg13[%c48, %c0_89], %107 {strides = array<i32>} : memref<400x1024xbf16, #tpu.memory_space<vmem>>, vector<16x1024xbf16>,
    %c0_90 = arith.constant 0 : index
    %c136 = arith.constant 136 : index
    %109 = vector.load %arg12[%c0_90, %c136] : memref<16x1536xbf16, #tpu.memory_space<vmem>>, vector<16x1024xbf16>
    %c64 = arith.constant 64 : index
    %c0_91 = arith.constant 0 : index
    %110 = vector.load %arg13[%c64, %c0_91] : memref<400x1024xbf16, #tpu.memory_space<vmem>>, vector<16x1024xbf16>
    tpu.vector_store %arg13[%c64, %c0_91], %109 {strides = array<i32>} : memref<400x1024xbf16, #tpu.memory_space<vmem>>, vector<16x1024xbf16>,
    %c0_92 = arith.constant 0 : index
    %c184 = arith.constant 184 : index
    %111 = vector.load %arg12[%c0_92, %c184] : memref<16x1536xbf16, #tpu.memory_space<vmem>>, vector<16x1024xbf16>
    %c80 = arith.constant 80 : index
    %c0_93 = arith.constant 0 : index
    %112 = vector.load %arg13[%c80, %c0_93] : memref<400x1024xbf16, #tpu.memory_space<vmem>>, vector<16x1024xbf16>
    tpu.vector_store %arg13[%c80, %c0_93], %111 {strides = array<i32>} : memref<400x1024xbf16, #tpu.memory_space<vmem>>, vector<16x1024xbf16>,
    %c0_94 = arith.constant 0 : index
    %c188_95 = arith.constant 188 : index
    %113 = vector.load %arg12[%c0_94, %c188_95] : memref<16x1536xbf16, #tpu.memory_space<vmem>>, vector<16x1024xbf16>
    %c96 = arith.constant 96 : index
    %c0_96 = arith.constant 0 : index
    %114 = vector.load %arg13[%c96, %c0_96] : memref<400x1024xbf16, #tpu.memory_space<vmem>>, vector<16x1024xbf16>
    tpu.vector_store %arg13[%c96, %c0_96], %113 {strides = array<i32>} : memref<400x1024xbf16, #tpu.memory_space<vmem>>, vector<16x1024xbf16>,
    %c0_97 = arith.constant 0 : index
    %c192_98 = arith.constant 192 : index
    %115 = vector.load %arg12[%c0_97, %c192_98] : memref<16x1536xbf16, #tpu.memory_space<vmem>>, vector<16x1024xbf16>
    %c112 = arith.constant 112 : index
    %c0_99 = arith.constant 0 : index
    %116 = vector.load %arg13[%c112, %c0_99] : memref<400x1024xbf16, #tpu.memory_space<vmem>>, vector<16x1024xbf16>
    tpu.vector_store %arg13[%c112, %c0_99], %115 {strides = array<i32>} : memref<400x1024xbf16, #tpu.memory_space<vmem>>, vector<16x1024xbf16>,
    %c0_100 = arith.constant 0 : index
    %c196_101 = arith.constant 196 : index
    %117 = vector.load %arg12[%c0_100, %c196_101] : memref<16x1536xbf16, #tpu.memory_space<vmem>>, vector<16x1024xbf16>
    %c128_102 = arith.constant 128 : index
    %c0_103 = arith.constant 0 : index
    %118 = vector.load %arg13[%c128_102, %c0_103] : memref<400x1024xbf16, #tpu.memory_space<vmem>>, vector<16x1024xbf16>
    tpu.vector_store %arg13[%c128_102, %c0_103], %117 {strides = array<i32>} : memref<400x1024xbf16, #tpu.memory_space<vmem>>, vector<16x1024xbf16>,
    %c0_104 = arith.constant 0 : index
    %c200 = arith.constant 200 : index
    %119 = vector.load %arg12[%c0_104, %c200] : memref<16x1536xbf16, #tpu.memory_space<vmem>>, vector<16x1024xbf16>
    %c144 = arith.constant 144 : index
    %c0_105 = arith.constant 0 : index
    %120 = vector.load %arg13[%c144, %c0_105] : memref<400x1024xbf16, #tpu.memory_space<vmem>>, vector<16x1024xbf16>
    tpu.vector_store %arg13[%c144, %c0_105], %119 {strides = array<i32>} : memref<400x1024xbf16, #tpu.memory_space<vmem>>, vector<16x1024xbf16>,
    %c0_106 = arith.constant 0 : index
    %c248 = arith.constant 248 : index
    %121 = vector.load %arg12[%c0_106, %c248] : memref<16x1536xbf16, #tpu.memory_space<vmem>>, vector<16x1024xbf16>
    %c160 = arith.constant 160 : index
    %c0_107 = arith.constant 0 : index
    %122 = vector.load %arg13[%c160, %c0_107] : memref<400x1024xbf16, #tpu.memory_space<vmem>>, vector<16x1024xbf16>
    tpu.vector_store %arg13[%c160, %c0_107], %121 {strides = array<i32>} : memref<400x1024xbf16, #tpu.memory_space<vmem>>, vector<16x1024xbf16>,
    %c0_108 = arith.constant 0 : index
    %c252_109 = arith.constant 252 : index
    %123 = vector.load %arg12[%c0_108, %c252_109] : memref<16x1536xbf16, #tpu.memory_space<vmem>>, vector<16x1024xbf16>
    %c176 = arith.constant 176 : index
    %c0_110 = arith.constant 0 : index
    %124 = vector.load %arg13[%c176, %c0_110] : memref<400x1024xbf16, #tpu.memory_space<vmem>>, vector<16x1024xbf16>
    tpu.vector_store %arg13[%c176, %c0_110], %123 {strides = array<i32>} : memref<400x1024xbf16, #tpu.memory_space<vmem>>, vector<16x1024xbf16>,
    %c0_111 = arith.constant 0 : index
    %c256_112 = arith.constant 256 : index
    %125 = vector.load %arg12[%c0_111, %c256_112] : memref<16x1536xbf16, #tpu.memory_space<vmem>>, vector<16x1024xbf16>
    %c192_113 = arith.constant 192 : index
    %c0_114 = arith.constant 0 : index
    %126 = vector.load %arg13[%c192_113, %c0_114] : memref<400x1024xbf16, #tpu.memory_space<vmem>>, vector<16x1024xbf16>
    tpu.vector_store %arg13[%c192_113, %c0_114], %125 {strides = array<i32>} : memref<400x1024xbf16, #tpu.memory_space<vmem>>, vector<16x1024xbf16>,
    %c0_115 = arith.constant 0 : index
    %c260_116 = arith.constant 260 : index
    %127 = vector.load %arg12[%c0_115, %c260_116] : memref<16x1536xbf16, #tpu.memory_space<vmem>>, vector<16x1024xbf16>
    %c208 = arith.constant 208 : index
    %c0_117 = arith.constant 0 : index
    %128 = vector.load %arg13[%c208, %c0_117] : memref<400x1024xbf16, #tpu.memory_space<vmem>>, vector<16x1024xbf16>
    tpu.vector_store %arg13[%c208, %c0_117], %127 {strides = array<i32>} : memref<400x1024xbf16, #tpu.memory_space<vmem>>, vector<16x1024xbf16>,
    %c0_118 = arith.constant 0 : index
    %c264 = arith.constant 264 : index
    %129 = vector.load %arg12[%c0_118, %c264] : memref<16x1536xbf16, #tpu.memory_space<vmem>>, vector<16x1024xbf16>
    %c224 = arith.constant 224 : index
    %c0_119 = arith.constant 0 : index
    %130 = vector.load %arg13[%c224, %c0_119] : memref<400x1024xbf16, #tpu.memory_space<vmem>>, vector<16x1024xbf16>
    tpu.vector_store %arg13[%c224, %c0_119], %129 {strides = array<i32>} : memref<400x1024xbf16, #tpu.memory_space<vmem>>, vector<16x1024xbf16>,
    %c0_120 = arith.constant 0 : index
    %c312 = arith.constant 312 : index
    %131 = vector.load %arg12[%c0_120, %c312] : memref<16x1536xbf16, #tpu.memory_space<vmem>>, vector<16x1024xbf16>
    %c240 = arith.constant 240 : index
    %c0_121 = arith.constant 0 : index
    %132 = vector.load %arg13[%c240, %c0_121] : memref<400x1024xbf16, #tpu.memory_space<vmem>>, vector<16x1024xbf16>
    tpu.vector_store %arg13[%c240, %c0_121], %131 {strides = array<i32>} : memref<400x1024xbf16, #tpu.memory_space<vmem>>, vector<16x1024xbf16>,
    %c0_122 = arith.constant 0 : index
    %c316_123 = arith.constant 316 : index
    %133 = vector.load %arg12[%c0_122, %c316_123] : memref<16x1536xbf16, #tpu.memory_space<vmem>>, vector<16x1024xbf16>
    %c256_124 = arith.constant 256 : index
    %c0_125 = arith.constant 0 : index
    %134 = vector.load %arg13[%c256_124, %c0_125] : memref<400x1024xbf16, #tpu.memory_space<vmem>>, vector<16x1024xbf16>
    tpu.vector_store %arg13[%c256_124, %c0_125], %133 {strides = array<i32>} : memref<400x1024xbf16, #tpu.memory_space<vmem>>, vector<16x1024xbf16>,
    %c0_126 = arith.constant 0 : index
    %c320_127 = arith.constant 320 : index
    %135 = vector.load %arg12[%c0_126, %c320_127] : memref<16x1536xbf16, #tpu.memory_space<vmem>>, vector<16x1024xbf16>
    %c272 = arith.constant 272 : index
    %c0_128 = arith.constant 0 : index
    %136 = vector.load %arg13[%c272, %c0_128] : memref<400x1024xbf16, #tpu.memory_space<vmem>>, vector<16x1024xbf16>
    tpu.vector_store %arg13[%c272, %c0_128], %135 {strides = array<i32>} : memref<400x1024xbf16, #tpu.memory_space<vmem>>, vector<16x1024xbf16>,
    %c0_129 = arith.constant 0 : index
    %c324_130 = arith.constant 324 : index
    %137 = vector.load %arg12[%c0_129, %c324_130] : memref<16x1536xbf16, #tpu.memory_space<vmem>>, vector<16x1024xbf16>
    %c288 = arith.constant 288 : index
    %c0_131 = arith.constant 0 : index
    %138 = vector.load %arg13[%c288, %c0_131] : memref<400x1024xbf16, #tpu.memory_space<vmem>>, vector<16x1024xbf16>
    tpu.vector_store %arg13[%c288, %c0_131], %137 {strides = array<i32>} : memref<400x1024xbf16, #tpu.memory_space<vmem>>, vector<16x1024xbf16>,
    %c0_132 = arith.constant 0 : index
    %c328 = arith.constant 328 : index
    %139 = vector.load %arg12[%c0_132, %c328] : memref<16x1536xbf16, #tpu.memory_space<vmem>>, vector<16x1024xbf16>
    %c304 = arith.constant 304 : index
    %c0_133 = arith.constant 0 : index
    %140 = vector.load %arg13[%c304, %c0_133] : memref<400x1024xbf16, #tpu.memory_space<vmem>>, vector<16x1024xbf16>
    tpu.vector_store %arg13[%c304, %c0_133], %139 {strides = array<i32>} : memref<400x1024xbf16, #tpu.memory_space<vmem>>, vector<16x1024xbf16>,
    %c0_134 = arith.constant 0 : index
    %c376 = arith.constant 376 : index
    %141 = vector.load %arg12[%c0_134, %c376] : memref<16x1536xbf16, #tpu.memory_space<vmem>>, vector<16x1024xbf16>
    %c320_135 = arith.constant 320 : index
    %c0_136 = arith.constant 0 : index
    %142 = vector.load %arg13[%c320_135, %c0_136] : memref<400x1024xbf16, #tpu.memory_space<vmem>>, vector<16x1024xbf16>
    tpu.vector_store %arg13[%c320_135, %c0_136], %141 {strides = array<i32>} : memref<400x1024xbf16, #tpu.memory_space<vmem>>, vector<16x1024xbf16>,
    %c0_137 = arith.constant 0 : index
    %c380_138 = arith.constant 380 : index
    %143 = vector.load %arg12[%c0_137, %c380_138] : memref<16x1536xbf16, #tpu.memory_space<vmem>>, vector<16x1024xbf16>
    %c336 = arith.constant 336 : index
    %c0_139 = arith.constant 0 : index
    %144 = vector.load %arg13[%c336, %c0_139] : memref<400x1024xbf16, #tpu.memory_space<vmem>>, vector<16x1024xbf16>
    tpu.vector_store %arg13[%c336, %c0_139], %143 {strides = array<i32>} : memref<400x1024xbf16, #tpu.memory_space<vmem>>, vector<16x1024xbf16>,
    %c0_140 = arith.constant 0 : index
    %c384_141 = arith.constant 384 : index
    %145 = vector.load %arg12[%c0_140, %c384_141] : memref<16x1536xbf16, #tpu.memory_space<vmem>>, vector<16x1024xbf16>
    %c352 = arith.constant 352 : index
    %c0_142 = arith.constant 0 : index
    %146 = vector.load %arg13[%c352, %c0_142] : memref<400x1024xbf16, #tpu.memory_space<vmem>>, vector<16x1024xbf16>
    tpu.vector_store %arg13[%c352, %c0_142], %145 {strides = array<i32>} : memref<400x1024xbf16, #tpu.memory_space<vmem>>, vector<16x1024xbf16>,
    %c0_143 = arith.constant 0 : index
    %c388_144 = arith.constant 388 : index
    %147 = vector.load %arg12[%c0_143, %c388_144] : memref<16x1536xbf16, #tpu.memory_space<vmem>>, vector<16x1024xbf16>
    %c368 = arith.constant 368 : index
    %c0_145 = arith.constant 0 : index
    %148 = vector.load %arg13[%c368, %c0_145] : memref<400x1024xbf16, #tpu.memory_space<vmem>>, vector<16x1024xbf16>
    tpu.vector_store %arg13[%c368, %c0_145], %147 {strides = array<i32>} : memref<400x1024xbf16, #tpu.memory_space<vmem>>, vector<16x1024xbf16>,
    %c0_146 = arith.constant 0 : index
    %c392 = arith.constant 392 : index
    %149 = vector.load %arg12[%c0_146, %c392] : memref<16x1536xbf16, #tpu.memory_space<vmem>>, vector<16x1024xbf16>
    %c384_147 = arith.constant 384 : index
    %c0_148 = arith.constant 0 : index
    %150 = vector.load %arg13[%c384_147, %c0_148] : memref<400x1024xbf16, #tpu.memory_space<vmem>>, vector<16x1024xbf16>
    tpu.vector_store %arg13[%c384_147, %c0_148], %149 {strides = array<i32>} : memref<400x1024xbf16, #tpu.memory_space<vmem>>, vector<16x1024xbf16>,
    %c0_149 = arith.constant 0 : index
    %c0_150 = arith.constant 0 : index
    %151 = vector.load %arg4[%c0_149, %c0_150] : memref<32x400xbf16, #tpu.memory_space<vmem>>, vector<32x400xbf16>
    %c0_151 = arith.constant 0 : index
    %c0_152 = arith.constant 0 : index
    %152 = vector.load %arg13[%c0_151, %c0_152] : memref<400x1024xbf16, #tpu.memory_space<vmem>>, vector<400x1024xbf16>
    %cst_153 = arith.constant dense<0.000000e+00> : vector<32x1024xf32>
    %153 = tpu.matmul %151, %152, %cst_153 {dimension_numbers = #tpu.dot_dimension_numbers<[1], [0], [0], [1], [0, 0, 1, 1], [], []>} : vector<32x400xbf16>, vector<400x1024xbf16>, vector<32x1024xf32> -> vector<32x1024xf32>
    %c0_154 = arith.constant 0 : index
    %c0_155 = arith.constant 0 : index
    %154 = vector.load %arg5[%c0_154, %c0_155] : memref<32x1xf32, #tpu.memory_space<vmem>>, vector<32x1xf32>
    %155 = vector.broadcast %154 : vector<32x1xf32> to vector<32x1024xf32>
    %156 = arith.addf %153, %155 : vector<32x1024xf32>
    %cst_156 = arith.constant 0.000000e+00 : f32
    %157 = vector.broadcast %cst_156 : f32 to vector<32x1024xf32>
    %158 = arith.maximumf %156, %157 : vector<32x1024xf32>
    %cst_157 = arith.constant 0.000000e+00 : f32
    %159 = vector.broadcast %cst_157 : f32 to vector<32x68xf32>
    %160 = tpu.concatenate %158, %159 in 1 : vector<32x1024xf32>, vector<32x68xf32> -> vector<32x1092xf32>
    %161 = vector.extract_strided_slice %160 {offsets = [0, 0], sizes = [32, 1024], strides = [1, 1]} : vector<32x1092xf32> to vector<32x1024xf32>
    %162 = vector.extract_strided_slice %160 {offsets = [0, 4], sizes = [32, 1024], strides = [1, 1]} : vector<32x1092xf32> to vector<32x1024xf32>
    %163 = arith.maximumf %161, %162 : vector<32x1024xf32>
    %164 = vector.extract_strided_slice %160 {offsets = [0, 64], sizes = [32, 1024], strides = [1, 1]} : vector<32x1092xf32> to vector<32x1024xf32>
    %165 = vector.extract_strided_slice %160 {offsets = [0, 68], sizes = [32, 1024], strides = [1, 1]} : vector<32x1092xf32> to vector<32x1024xf32>
    %166 = arith.maximumf %164, %165 : vector<32x1024xf32>
    %167 = arith.maximumf %163, %166 : vector<32x1024xf32>
    %168 = vector.extract_strided_slice %167 {offsets = [0, 0], sizes = [32, 2], strides = [1, 1]} : vector<32x1024xf32> to vector<32x2xf32>
    %169 = vector.extract_strided_slice %167 {offsets = [0, 8], sizes = [32, 2], strides = [1, 1]} : vector<32x1024xf32> to vector<32x2xf32>
    %170 = vector.extract_strided_slice %167 {offsets = [0, 16], sizes = [32, 2], strides = [1, 1]} : vector<32x1024xf32> to vector<32x2xf32>
    %171 = vector.extract_strided_slice %167 {offsets = [0, 24], sizes = [32, 2], strides = [1, 1]} : vector<32x1024xf32> to vector<32x2xf32>
    %172 = vector.extract_strided_slice %167 {offsets = [0, 32], sizes = [32, 2], strides = [1, 1]} : vector<32x1024xf32> to vector<32x2xf32>
    %173 = vector.extract_strided_slice %167 {offsets = [0, 40], sizes = [32, 2], strides = [1, 1]} : vector<32x1024xf32> to vector<32x2xf32>
    %174 = vector.extract_strided_slice %167 {offsets = [0, 48], sizes = [32, 2], strides = [1, 1]} : vector<32x1024xf32> to vector<32x2xf32>
    %175 = vector.extract_strided_slice %167 {offsets = [0, 128], sizes = [32, 2], strides = [1, 1]} : vector<32x1024xf32> to vector<32x2xf32>
    %176 = vector.extract_strided_slice %167 {offsets = [0, 136], sizes = [32, 2], strides = [1, 1]} : vector<32x1024xf32> to vector<32x2xf32>
    %177 = vector.extract_strided_slice %167 {offsets = [0, 144], sizes = [32, 2], strides = [1, 1]} : vector<32x1024xf32> to vector<32x2xf32>
    %178 = vector.extract_strided_slice %167 {offsets = [0, 152], sizes = [32, 2], strides = [1, 1]} : vector<32x1024xf32> to vector<32x2xf32>
    %179 = vector.extract_strided_slice %167 {offsets = [0, 160], sizes = [32, 2], strides = [1, 1]} : vector<32x1024xf32> to vector<32x2xf32>
    %180 = vector.extract_strided_slice %167 {offsets = [0, 168], sizes = [32, 2], strides = [1, 1]} : vector<32x1024xf32> to vector<32x2xf32>
    %181 = vector.extract_strided_slice %167 {offsets = [0, 176], sizes = [32, 2], strides = [1, 1]} : vector<32x1024xf32> to vector<32x2xf32>
    %182 = vector.extract_strided_slice %167 {offsets = [0, 256], sizes = [32, 2], strides = [1, 1]} : vector<32x1024xf32> to vector<32x2xf32>
    %183 = vector.extract_strided_slice %167 {offsets = [0, 264], sizes = [32, 2], strides = [1, 1]} : vector<32x1024xf32> to vector<32x2xf32>
    %184 = vector.extract_strided_slice %167 {offsets = [0, 272], sizes = [32, 2], strides = [1, 1]} : vector<32x1024xf32> to vector<32x2xf32>
    %185 = vector.extract_strided_slice %167 {offsets = [0, 280], sizes = [32, 2], strides = [1, 1]} : vector<32x1024xf32> to vector<32x2xf32>
    %186 = vector.extract_strided_slice %167 {offsets = [0, 288], sizes = [32, 2], strides = [1, 1]} : vector<32x1024xf32> to vector<32x2xf32>
    %187 = vector.extract_strided_slice %167 {offsets = [0, 296], sizes = [32, 2], strides = [1, 1]} : vector<32x1024xf32> to vector<32x2xf32>
    %188 = vector.extract_strided_slice %167 {offsets = [0, 304], sizes = [32, 2], strides = [1, 1]} : vector<32x1024xf32> to vector<32x2xf32>
    %189 = vector.extract_strided_slice %167 {offsets = [0, 384], sizes = [32, 2], strides = [1, 1]} : vector<32x1024xf32> to vector<32x2xf32>
    %190 = vector.extract_strided_slice %167 {offsets = [0, 392], sizes = [32, 2], strides = [1, 1]} : vector<32x1024xf32> to vector<32x2xf32>
    %191 = vector.extract_strided_slice %167 {offsets = [0, 400], sizes = [32, 2], strides = [1, 1]} : vector<32x1024xf32> to vector<32x2xf32>
    %192 = vector.extract_strided_slice %167 {offsets = [0, 408], sizes = [32, 2], strides = [1, 1]} : vector<32x1024xf32> to vector<32x2xf32>
    %193 = vector.extract_strided_slice %167 {offsets = [0, 416], sizes = [32, 2], strides = [1, 1]} : vector<32x1024xf32> to vector<32x2xf32>
    %194 = vector.extract_strided_slice %167 {offsets = [0, 424], sizes = [32, 2], strides = [1, 1]} : vector<32x1024xf32> to vector<32x2xf32>
    %195 = vector.extract_strided_slice %167 {offsets = [0, 432], sizes = [32, 2], strides = [1, 1]} : vector<32x1024xf32> to vector<32x2xf32>
    %196 = vector.extract_strided_slice %167 {offsets = [0, 512], sizes = [32, 2], strides = [1, 1]} : vector<32x1024xf32> to vector<32x2xf32>
    %197 = vector.extract_strided_slice %167 {offsets = [0, 520], sizes = [32, 2], strides = [1, 1]} : vector<32x1024xf32> to vector<32x2xf32>
    %198 = vector.extract_strided_slice %167 {offsets = [0, 528], sizes = [32, 2], strides = [1, 1]} : vector<32x1024xf32> to vector<32x2xf32>
    %199 = vector.extract_strided_slice %167 {offsets = [0, 536], sizes = [32, 2], strides = [1, 1]} : vector<32x1024xf32> to vector<32x2xf32>
    %200 = vector.extract_strided_slice %167 {offsets = [0, 544], sizes = [32, 2], strides = [1, 1]} : vector<32x1024xf32> to vector<32x2xf32>
    %201 = vector.extract_strided_slice %167 {offsets = [0, 552], sizes = [32, 2], strides = [1, 1]} : vector<32x1024xf32> to vector<32x2xf32>
    %202 = vector.extract_strided_slice %167 {offsets = [0, 560], sizes = [32, 2], strides = [1, 1]} : vector<32x1024xf32> to vector<32x2xf32>
    %203 = vector.extract_strided_slice %167 {offsets = [0, 640], sizes = [32, 2], strides = [1, 1]} : vector<32x1024xf32> to vector<32x2xf32>
    %204 = vector.extract_strided_slice %167 {offsets = [0, 648], sizes = [32, 2], strides = [1, 1]} : vector<32x1024xf32> to vector<32x2xf32>
    %205 = vector.extract_strided_slice %167 {offsets = [0, 656], sizes = [32, 2], strides = [1, 1]} : vector<32x1024xf32> to vector<32x2xf32>
    %206 = vector.extract_strided_slice %167 {offsets = [0, 664], sizes = [32, 2], strides = [1, 1]} : vector<32x1024xf32> to vector<32x2xf32>
    %207 = vector.extract_strided_slice %167 {offsets = [0, 672], sizes = [32, 2], strides = [1, 1]} : vector<32x1024xf32> to vector<32x2xf32>
    %208 = vector.extract_strided_slice %167 {offsets = [0, 680], sizes = [32, 2], strides = [1, 1]} : vector<32x1024xf32> to vector<32x2xf32>
    %209 = vector.extract_strided_slice %167 {offsets = [0, 688], sizes = [32, 2], strides = [1, 1]} : vector<32x1024xf32> to vector<32x2xf32>
    %210 = vector.extract_strided_slice %167 {offsets = [0, 768], sizes = [32, 2], strides = [1, 1]} : vector<32x1024xf32> to vector<32x2xf32>
    %211 = vector.extract_strided_slice %167 {offsets = [0, 776], sizes = [32, 2], strides = [1, 1]} : vector<32x1024xf32> to vector<32x2xf32>
    %212 = vector.extract_strided_slice %167 {offsets = [0, 784], sizes = [32, 2], strides = [1, 1]} : vector<32x1024xf32> to vector<32x2xf32>
    %213 = vector.extract_strided_slice %167 {offsets = [0, 792], sizes = [32, 2], strides = [1, 1]} : vector<32x1024xf32> to vector<32x2xf32>
    %214 = vector.extract_strided_slice %167 {offsets = [0, 800], sizes = [32, 2], strides = [1, 1]} : vector<32x1024xf32> to vector<32x2xf32>
    %215 = vector.extract_strided_slice %167 {offsets = [0, 808], sizes = [32, 2], strides = [1, 1]} : vector<32x1024xf32> to vector<32x2xf32>
    %216 = vector.extract_strided_slice %167 {offsets = [0, 816], sizes = [32, 2], strides = [1, 1]} : vector<32x1024xf32> to vector<32x2xf32>
    %217 = tpu.concatenate %168, %169, %170, %171, %172, %173, %174, %175, %176, %177, %178, %179, %180, %181, %182, %183 in 0 : vector<32x2xf32>, vector<32x2xf32>, vector<32x2xf32>, vector<32x2xf32>, vector<32x2xf32>, vector<32x2xf32>, vector<32x2xf32>, vector<32x2xf32>, vector<32x2xf32>, vector<32x2xf32>, vector<32x2xf32>, vector<32x2xf32>, vector<32x2xf32>, vector<32x2xf32>, vector<32x2xf32>, vector<32x2xf32> -> vector<512x2xf32>
    %218 = tpu.concatenate %184, %185, %186, %187, %188, %189, %190, %191, %192, %193, %194, %195, %196, %197, %198, %199 in 0 : vector<32x2xf32>, vector<32x2xf32>, vector<32x2xf32>, vector<32x2xf32>, vector<32x2xf32>, vector<32x2xf32>, vector<32x2xf32>, vector<32x2xf32>, vector<32x2xf32>, vector<32x2xf32>, vector<32x2xf32>, vector<32x2xf32>, vector<32x2xf32>, vector<32x2xf32>, vector<32x2xf32>, vector<32x2xf32> -> vector<512x2xf32>
    %219 = tpu.concatenate %200, %201, %202, %203, %204, %205, %206, %207, %208, %209, %210, %211, %212, %213, %214, %215 in 0 : vector<32x2xf32>, vector<32x2xf32>, vector<32x2xf32>, vector<32x2xf32>, vector<32x2xf32>, vector<32x2xf32>, vector<32x2xf32>, vector<32x2xf32>, vector<32x2xf32>, vector<32x2xf32>, vector<32x2xf32>, vector<32x2xf32>, vector<32x2xf32>, vector<32x2xf32>, vector<32x2xf32>, vector<32x2xf32> -> vector<512x2xf32>
    %220 = tpu.concatenate %217, %218, %219, %216 in 0 : vector<512x2xf32>, vector<512x2xf32>, vector<512x2xf32>, vector<32x2xf32> -> vector<1568x2xf32>
    %c0_158 = arith.constant 0 : index
    %c0_159 = arith.constant 0 : index
    %221 = vector.load %arg7[%c0_158, %c0_159] : memref<10x1568xf32, #tpu.memory_space<vmem>>, vector<10x1568xf32>
    %cst_160 = arith.constant dense<0.000000e+00> : vector<10x2xf32>
    %222 = tpu.matmul %221, %220, %cst_160 {dimension_numbers = #tpu.dot_dimension_numbers<[1], [0], [0], [1], [0, 0, 1, 1], [], []>} : vector<10x1568xf32>, vector<1568x2xf32>, vector<10x2xf32> -> vector<10x2xf32>
    %c0_161 = arith.constant 0 : index
    %c0_162 = arith.constant 0 : index
    %223 = vector.load %arg8[%c0_161, %c0_162] : memref<10x1xf32, #tpu.memory_space<vmem>>, vector<10x1xf32>
    %224 = vector.broadcast %223 : vector<10x1xf32> to vector<10x2xf32>
    %225 = arith.addf %222, %224 : vector<10x2xf32>
    %c0_163 = arith.constant 0 : index
    %c0_164 = arith.constant 0 : index
    %c0_165 = arith.constant 0 : index
    %226 = vector.load %arg9[%c0_163, %c0_164, %c0_165] : memref<1x10x2xf32, #tpu.memory_space<vmem>>, vector<1x10x2xf32>
    %227 = vector.shape_cast %226 : vector<1x10x2xf32> to vector<10x2xf32>
    %228 = vector.shape_cast %225 : vector<10x2xf32> to vector<1x10x2xf32>
    tpu.vector_store %arg9[%c0_163, %c0_164, %c0_165], %228 {strides = array<i32>} : memref<1x10x2xf32, #tpu.memory_space<vmem>>, vector<1x10x2xf32>,
    return
  }
  func.func @transform_0(%arg0: i32) -> (i32, i32, i32) {
    %c0_i32 = arith.constant 0 : i32
    %c0_i32_0 = arith.constant 0 : i32
    %c0_i32_1 = arith.constant 0 : i32
    return %arg0, %c0_i32, %c0_i32_0 : i32, i32, i32
  }
  func.func @transform_1(%arg0: i32) -> (i32, i32) {
    %c0_i32 = arith.constant 0 : i32
    %c0_i32_0 = arith.constant 0 : i32
    %c0_i32_1 = arith.constant 0 : i32
    return %c0_i32, %c0_i32_0 : i32, i32
  }
  func.func @transform_2(%arg0: i32) -> (i32, i32) {
    %c0_i32 = arith.constant 0 : i32
    %c0_i32_0 = arith.constant 0 : i32
    %c0_i32_1 = arith.constant 0 : i32
    return %c0_i32, %c0_i32_0 : i32, i32
  }
  func.func @transform_3(%arg0: i32) -> (i32, i32) {
    %c0_i32 = arith.constant 0 : i32
    %c0_i32_0 = arith.constant 0 : i32
    %c0_i32_1 = arith.constant 0 : i32
    return %c0_i32, %c0_i32_0 : i32, i32
  }
  func.func @transform_4(%arg0: i32) -> (i32, i32) {
    %c0_i32 = arith.constant 0 : i32
    %c0_i32_0 = arith.constant 0 : i32
    %c0_i32_1 = arith.constant 0 : i32
    return %c0_i32, %c0_i32_0 : i32, i32
  }
  func.func @transform_5(%arg0: i32) -> (i32, i32) {
    %c0_i32 = arith.constant 0 : i32
    %c0_i32_0 = arith.constant 0 : i32
    %c0_i32_1 = arith.constant 0 : i32
    return %c0_i32, %c0_i32_0 : i32, i32
  }
  func.func @transform_6(%arg0: i32) -> (i32, i32) {
    %c0_i32 = arith.constant 0 : i32
    %c0_i32_0 = arith.constant 0 : i32
    %c0_i32_1 = arith.constant 0 : i32
    return %c0_i32, %c0_i32_0 : i32, i32
  }
  func.func @transform_7(%arg0: i32) -> (i32, i32) {
    %c0_i32 = arith.constant 0 : i32
    %c0_i32_0 = arith.constant 0 : i32
    %c0_i32_1 = arith.constant 0 : i32
    return %c0_i32, %c0_i32_0 : i32, i32
  }
  func.func @transform_8(%arg0: i32) -> (i32, i32, i32) {
    %c0_i32 = arith.constant 0 : i32
    %c0_i32_0 = arith.constant 0 : i32
    %c0_i32_1 = arith.constant 0 : i32
    return %arg0, %c0_i32, %c0_i32_0 : i32, i32, i32
  }
}

</mosaic_0001>

<llo_original>
// kernel: tpu_custom_call.1
$region0: #{tpu_custom_call.1}
  #allocation0 [shape = 'u32[]', space=smem, size = 0x4, offset = 0x4, fixed_abs, tag = 'smem constant byte address 0x4 - core index']
  #allocation1 [shape = 'u32[144,128]{1,0:T(1,128)}', space=vmem, size = 0x12000, scoped, tag = 'internal scratch']
  #allocation2 [shape = 'bf16[1,2560]{1,0:T(2,128)(2,1)}', space=vmem, size = 0x2800, scoped, tag = 'scratch operand']
  #allocation3 [shape = 'bf16[25,2048]{1,0:T(8,128)(2,1)}', space=vmem, size = 0x20000, scoped, tag = 'scratch operand']
  #allocation4 [shape = 'bf16[16,1536]{1,0:T(16,128)(2,1)}', space=vmem, size = 0xc000, scoped, tag = 'scratch operand']
  #allocation5 [shape = 'bf16[400,1024]{1,0:T(16,128)(2,1)}', space=vmem, size = 0xc8000, scoped, tag = 'scratch operand']
  %s0 = inlined_call_operand.hbm [shape: f32[1,1,2048], index: 0, kind: input, shape index: {}]
  %s1 = inlined_call_operand.vmem [shape: bf16[16,25], index: 1, kind: input, shape index: {}]
  %s2 = inlined_call_operand.vmem [shape: f32[16,1], index: 2, kind: input, shape index: {}]
  %s3 = inlined_call_operand.vmem [shape: bf16[32,400], index: 3, kind: input, shape index: {}]
  %s4 = inlined_call_operand.vmem [shape: f32[32,1], index: 4, kind: input, shape index: {}]
  %s5 = inlined_call_operand.vmem [shape: f32[1,1024], index: 5, kind: input, shape index: {}]
  %s6 = inlined_call_operand.hbm [shape: f32[10,1568], index: 6, kind: input, shape index: {}]
  %s7 = inlined_call_operand.vmem [shape: f32[10,1], index: 7, kind: input, shape index: {}]
  %s8 = inlined_call_operand.vmem [shape: f32[1,10,2], index: 8, kind: output, shape index: {}]
  %s9 = sld [smem:[#allocation0]]
  $region50: #{tpu_custom_call.1} parent=0
    _
  %s11 = ssub.s32 1, %s9
  %s12 = scalar_select 0, %s11, %s9
  $region1: #{tpu_custom_call.1} parent=0
    #allocation6 [shape = 'u8[8192]{0}', space=vmem, size = 0x2000, scoped, tag = 'input window, operand 0, single buffered']
    #allocation7 [shape = 's32[1]{0}', space=sflag, size = 0x4, scoped, tag = 'scoped memory for tpu_custom_call.1']
    #allocation8 [shape = 'u8[106496]{0}', space=vmem, size = 0x1a000, scoped, tag = 'input window, operand 6, single buffered']
    #allocation9 [shape = 's32[1]{0}', space=sflag, size = 0x4, scoped, tag = 'scoped memory for tpu_custom_call.1']
    %13 = vsyncpa [#allocation7], 0
    %14 = vsyncpa [#allocation9], 0
    // Predicated region
    $region2: #{tpu_custom_call.1} parent=1 // pred_check
      _
    $region3: #{tpu_custom_call.1} parent=1 // pred_check_branch
      %16 = sbr.rel (0) target = $region5
    $region4: #{tpu_custom_call.1} parent=1 // pred_region
      %s18 = ssub.s32 256, 256
      %19 = vsyncadd [#allocation7], %s18
      %s21 = sshll.u32 [#allocation6], 4
      %s22 = int_to_ptr.vmem [resolvable:$true] %s21
      %24 = dma.hbm_to_vmem [thread:$0]  %s0, 256, %s22, [#allocation7]
    $region5: #{tpu_custom_call.1} parent=1 // pred_fallthru
      _
    // Predicated region
    $region6: #{tpu_custom_call.1} parent=1 // pred_check
      _
    $region7: #{tpu_custom_call.1} parent=1 // pred_check_branch
      %26 = sbr.rel (0) target = $region9
    $region8: #{tpu_custom_call.1} parent=1 // pred_region
      _
    $region9: #{tpu_custom_call.1} parent=1 // pred_fallthru
      _
    // Predicated region
    $region10: #{tpu_custom_call.1} parent=1 // pred_check
      _
    $region11: #{tpu_custom_call.1} parent=1 // pred_check_branch
      %28 = sbr.rel (0) target = $region13
    $region12: #{tpu_custom_call.1} parent=1 // pred_region
      _
    $region13: #{tpu_custom_call.1} parent=1 // pred_fallthru
      _
    // Predicated region
    $region14: #{tpu_custom_call.1} parent=1 // pred_check
      _
    $region15: #{tpu_custom_call.1} parent=1 // pred_check_branch
      %30 = sbr.rel (0) target = $region17
    $region16: #{tpu_custom_call.1} parent=1 // pred_region
      _
    $region17: #{tpu_custom_call.1} parent=1 // pred_fallthru
      _
    // Predicated region
    $region18: #{tpu_custom_call.1} parent=1 // pred_check
      _
    $region19: #{tpu_custom_call.1} parent=1 // pred_check_branch
      %32 = sbr.rel (0) target = $region21
    $region20: #{tpu_custom_call.1} parent=1 // pred_region
      _
    $region21: #{tpu_custom_call.1} parent=1 // pred_fallthru
      _
    // Predicated region
    $region22: #{tpu_custom_call.1} parent=1 // pred_check
      _
    $region23: #{tpu_custom_call.1} parent=1 // pred_check_branch
      %34 = sbr.rel (0) target = $region25
    $region24: #{tpu_custom_call.1} parent=1 // pred_region
      _
    $region25: #{tpu_custom_call.1} parent=1 // pred_fallthru
      _
    // Predicated region
    $region26: #{tpu_custom_call.1} parent=1 // pred_check
      _
    $region27: #{tpu_custom_call.1} parent=1 // pred_check_branch
      %36 = sbr.rel (0) target = $region29
    $region28: #{tpu_custom_call.1} parent=1 // pred_region
      %s38 = ssub.s32 3328, 3328
      %39 = vsyncadd [#allocation9], %s38
      %s40 = sshll.u32 [#allocation8], 4
      %s41 = int_to_ptr.vmem [resolvable:$true] %s40
      %46 = dma.hbm_to_vmem [thread:$0]  %s6, 3328, %s41, [#allocation9], 1664, 1664, 104
    $region29: #{tpu_custom_call.1} parent=1 // pred_fallthru
      _
    // Predicated region
    $region30: #{tpu_custom_call.1} parent=1 // pred_check
      _
    $region31: #{tpu_custom_call.1} parent=1 // pred_check_branch
      %48 = sbr.rel (0) target = $region33
    $region32: #{tpu_custom_call.1} parent=1 // pred_region
      _
    $region33: #{tpu_custom_call.1} parent=1 // pred_fallthru
      _
    // Predicated region
    $region34: #{tpu_custom_call.1} parent=1 // pred_check
      _
    $region35: #{tpu_custom_call.1} parent=1 // pred_check_branch
      %50 = sbr.rel (0) target = $region37
    $region36: #{tpu_custom_call.1} parent=1 // pred_region
      %51 = dma.done [#allocation7], 256
    $region37: #{tpu_custom_call.1} parent=1 // pred_fallthru
      _
    // Predicated region
    $region38: #{tpu_custom_call.1} parent=1 // pred_check
      _
    $region39: #{tpu_custom_call.1} parent=1 // pred_check_branch
      %53 = sbr.rel (0) target = $region41
    $region40: #{tpu_custom_call.1} parent=1 // pred_region
      %54 = dma.done [#allocation9], 3328
    $region41: #{tpu_custom_call.1} parent=1 // pred_fallthru
      _
    %vm56 = vcmask 1040384
    %vm57 = vsmask.f32 256
    %vm58 = vmand %vm56, %vm57
    %vm59 = vcmask 1041409
    %vm60 = vsmask.f32 1280
    %vm61 = vmand %vm59, %vm60
    %vm62 = vmor %vm61, %vm58
    %v63 = vld [vmem:[#allocation2] sm:$0x3]
    %v64 = vsel %vm62, 0, %v63
    %65 = vst [vmem:[#allocation2] sm:$0x3] %v64
    %v66 = vld [vmem:[#allocation2 + $0x12] sm:$0x3]
    %v67 = vsel %vm62, 0, %v66
    %68 = vst [vmem:[#allocation2 + $0x12] sm:$0x3] %v67
    %v69 = vld [vmem:[#allocation6] sm:$0xff]
    %v70 = vld [vmem:[#allocation6 + $0x8] sm:$0xff]
    %v73 = vlaneseq
    %v74 = vshrl.u32 %v73, 7
    %v75 = vsub.s32 0, %v74
    %v76 = vrot.slane %v69, %v75
    %v77 = vlaneseq
    %v78 = vshrl.u32 %v77, 7
    %v79 = vsub.s32 1, %v78
    %v80 = vrot.slane %v69, %v79
    %v81 = vlaneseq
    %v82 = vshrl.u32 %v81, 7
    %v83 = vsub.s32 2, %v82
    %v84 = vrot.slane %v69, %v83
    %v85 = vlaneseq
    %v86 = vshrl.u32 %v85, 7
    %v87 = vsub.s32 3, %v86
    %v88 = vrot.slane %v69, %v87
    %v89 = vlaneseq
    %v90 = vshrl.u32 %v89, 7
    %v91 = vsub.s32 4, %v90
    %v92 = vrot.slane %v69, %v91
    %v93 = vlaneseq
    %v94 = vshrl.u32 %v93, 7
    %v95 = vsub.s32 5, %v94
    %v96 = vrot.slane %v69, %v95
    %v97 = vlaneseq
    %v98 = vshrl.u32 %v97, 7
    %v99 = vsub.s32 6, %v98
    %v100 = vrot.slane %v69, %v99
    %v101 = vlaneseq
    %v102 = vshrl.u32 %v101, 7
    %v103 = vsub.s32 7, %v102
    %v104 = vrot.slane %v69, %v103
    %v105 = vlaneseq
    %v106 = vshrl.u32 %v105, 7
    %v107 = vsub.s32 0, %v106
    %v108 = vrot.slane %v70, %v107
    %v109 = vlaneseq
    %v110 = vshrl.u32 %v109, 7
    %v111 = vsub.s32 1, %v110
    %v112 = vrot.slane %v70, %v111
    %v113 = vlaneseq
    %v114 = vshrl.u32 %v113, 7
    %v115 = vsub.s32 2, %v114
    %v116 = vrot.slane %v70, %v115
    %v117 = vlaneseq
    %v118 = vshrl.u32 %v117, 7
    %v119 = vsub.s32 3, %v118
    %v120 = vrot.slane %v70, %v119
    %v121 = vlaneseq
    %v122 = vshrl.u32 %v121, 7
    %v123 = vsub.s32 4, %v122
    %v124 = vrot.slane %v70, %v123
    %v125 = vlaneseq
    %v126 = vshrl.u32 %v125, 7
    %v127 = vsub.s32 5, %v126
    %v128 = vrot.slane %v70, %v127
    %v129 = vlaneseq
    %v130 = vshrl.u32 %v129, 7
    %v131 = vsub.s32 6, %v130
    %v132 = vrot.slane %v70, %v131
    %v133 = vlaneseq
    %v134 = vshrl.u32 %v133, 7
    %v135 = vsub.s32 7, %v134
    %v136 = vrot.slane %v70, %v135
    %v153 = vpack.c.bf16 %v76, %v76
    %v154 = vpack.c.bf16 %v80, %v80
    %v155 = vpack.c.bf16 %v84, %v84
    %v156 = vpack.c.bf16 %v88, %v88
    %v157 = vpack.c.bf16 %v92, %v92
    %v158 = vpack.c.bf16 %v96, %v96
    %v159 = vpack.c.bf16 %v100, %v100
    %v160 = vpack.c.bf16 %v104, %v104
    %v161 = vpack.c.bf16 %v108, %v108
    %v162 = vpack.c.bf16 %v112, %v112
    %v163 = vpack.c.bf16 %v116, %v116
    %v164 = vpack.c.bf16 %v120, %v120
    %v165 = vpack.c.bf16 %v124, %v124
    %v166 = vpack.c.bf16 %v128, %v128
    %v167 = vpack.c.bf16 %v132, %v132
    %v168 = vpack.c.bf16 %v136, %v136
    %v185 = vcombine.low %v153, %v154
    %v186 = vcombine.low %v155, %v156
    %v187 = vcombine.low %v157, %v158
    %v188 = vcombine.low %v159, %v160
    %v190 = vunpack.c.l.s4 1966171168
    %v191 = vunpack.c.0.s8 %v190
    %v192 = vlaneseq
    %v193 = vshrl.u32 %v192, 7
    %v194 = vsub.s32 %v191, %v193
    %v195 = vrot.slane %v185, %v194
    %v197 = vunpack.c.l.s4 1966171168
    %v198 = vunpack.c.0.s8 %v197
    %v199 = vlaneseq
    %v200 = vshrl.u32 %v199, 7
    %v201 = vsub.s32 %v198, %v200
    %v202 = vrot.slane %v186, %v201
    %v204 = vunpack.c.l.s4 1966171168
    %v205 = vunpack.c.0.s8 %v204
    %v206 = vlaneseq
    %v207 = vshrl.u32 %v206, 7
    %v208 = vsub.s32 %v205, %v207
    %v209 = vrot.slane %v187, %v208
    %v211 = vunpack.c.l.s4 1966171168
    %v212 = vunpack.c.0.s8 %v211
    %v213 = vlaneseq
    %v214 = vshrl.u32 %v213, 7
    %v215 = vsub.s32 %v212, %v214
    %v216 = vrot.slane %v188, %v215
    %v217 = vcombine.low %v195, %v202
    %v218 = vcombine.low %v209, %v216
    %v220 = vunpack.c.l.s4 1966171168
    %v221 = vunpack.c.0.s8 %v220
    %v222 = vlaneseq
    %v223 = vshrl.u32 %v222, 7
    %v224 = vsub.s32 %v221, %v223
    %v225 = vrot.slane %v217, %v224
    %v227 = vunpack.c.l.s4 1966171168
    %v228 = vunpack.c.0.s8 %v227
    %v229 = vlaneseq
    %v230 = vshrl.u32 %v229, 7
    %v231 = vsub.s32 %v228, %v230
    %v232 = vrot.slane %v218, %v231
    %v233 = vcombine.low %v225, %v232
    %v234 = vcombine.low %v161, %v162
    %v235 = vcombine.low %v163, %v164
    %v236 = vcombine.low %v165, %v166
    %v237 = vcombine.low %v167, %v168
    %v239 = vunpack.c.l.s4 1966171168
    %v240 = vunpack.c.0.s8 %v239
    %v241 = vlaneseq
    %v242 = vshrl.u32 %v241, 7
    %v243 = vsub.s32 %v240, %v242
    %v244 = vrot.slane %v234, %v243
    %v246 = vunpack.c.l.s4 1966171168
    %v247 = vunpack.c.0.s8 %v246
    %v248 = vlaneseq
    %v249 = vshrl.u32 %v248, 7
    %v250 = vsub.s32 %v247, %v249
    %v251 = vrot.slane %v235, %v250
    %v253 = vunpack.c.l.s4 1966171168
    %v254 = vunpack.c.0.s8 %v253
    %v255 = vlaneseq
    %v256 = vshrl.u32 %v255, 7
    %v257 = vsub.s32 %v254, %v256
    %v258 = vrot.slane %v236, %v257
    %v260 = vunpack.c.l.s4 1966171168
    %v261 = vunpack.c.0.s8 %v260
    %v262 = vlaneseq
    %v263 = vshrl.u32 %v262, 7
    %v264 = vsub.s32 %v261, %v263
    %v265 = vrot.slane %v237, %v264
    %v266 = vcombine.low %v244, %v251
    %v267 = vcombine.low %v258, %v265
    %v269 = vunpack.c.l.s4 1966171168
    %v270 = vunpack.c.0.s8 %v269
    %v271 = vlaneseq
    %v272 = vshrl.u32 %v271, 7
    %v273 = vsub.s32 %v270, %v272
    %v274 = vrot.slane %v266, %v273
    %v276 = vunpack.c.l.s4 1966171168
    %v277 = vunpack.c.0.s8 %v276
    %v278 = vlaneseq
    %v279 = vshrl.u32 %v278, 7
    %v280 = vsub.s32 %v277, %v279
    %v281 = vrot.slane %v267, %v280
    %v282 = vcombine.low %v274, %v281
    %vm285 = vcmask 1042434
    %vm286 = vsmask.f32 2304
    %vm287 = vmand %vm285, %vm286
    %vm288 = vmor %vm287, %vm62
    %vm289 = vcmask 1043459
    %vm290 = vsmask.f32 3328
    %vm291 = vmand %vm289, %vm290
    %vm292 = vmor %vm291, %vm288
    %vm293 = vcmask 1044484
    %vm294 = vsmask.f32 4352
    %vm295 = vmand %vm293, %vm294
    %vm296 = vmor %vm295, %vm292
    %vm297 = vcmask 1045509
    %vm298 = vsmask.f32 5376
    %vm299 = vmand %vm297, %vm298
    %vm300 = vmor %vm299, %vm296
    %vm301 = vcmask 1046534
    %vm302 = vsmask.f32 6400
    %vm303 = vmand %vm301, %vm302
    %vm304 = vmor %vm303, %vm300
    %vm305 = vcmask 1047559
    %vm306 = vsmask.f32 7424
    %vm307 = vmand %vm305, %vm306
    %vm308 = vmor %vm307, %vm304
    %v309 = vld [vmem:[#allocation2 + $0x2] sm:$0xff]
    %v310 = vsel %vm308, %v233, %v309
    %311 = vst [vmem:[#allocation2 + $0x2] sm:$0xff] %v310
    %v312 = vld [vmem:[#allocation2 + $0xa] sm:$0xff]
    %v313 = vsel %vm308, %v282, %v312
    %314 = vst [vmem:[#allocation2 + $0xa] sm:$0xff] %v313
    %v315 = vld [vmem:[#allocation2] sm:$0xff]
    %v316 = vld [vmem:[#allocation2 + $0x8] sm:$0xff]
    %v317 = vld [vmem:[#allocation2 + $0x10] sm:$0x1]
    %v321 = vcombine.high %v315, %v315
    %v323 = vunpack.c.l.s4 1935823168
    %v324 = vunpack.c.0.s8 %v323
    %v325 = vlaneseq
    %v326 = vshrl.u32 %v325, 7
    %v327 = vsub.s32 %v324, %v326
    %v328 = vrot.slane %v315, %v327
    %v330 = vunpack.c.l.s4 1935823168
    %v331 = vunpack.c.0.s8 %v330
    %v332 = vlaneseq
    %v333 = vshrl.u32 %v332, 7
    %v334 = vsub.s32 %v331, %v333
    %v335 = vrot.slane %v321, %v334
    %v336 = vcombine.high %v328, %v328
    %v337 = vcombine.high %v335, %v335
    %v339 = vunpack.c.l.s4 1935823168
    %v340 = vunpack.c.0.s8 %v339
    %v341 = vlaneseq
    %v342 = vshrl.u32 %v341, 7
    %v343 = vsub.s32 %v340, %v342
    %v344 = vrot.slane %v328, %v343
    %v346 = vunpack.c.l.s4 1935823168
    %v347 = vunpack.c.0.s8 %v346
    %v348 = vlaneseq
    %v349 = vshrl.u32 %v348, 7
    %v350 = vsub.s32 %v347, %v349
    %v351 = vrot.slane %v336, %v350
    %v353 = vunpack.c.l.s4 1935823168
    %v354 = vunpack.c.0.s8 %v353
    %v355 = vlaneseq
    %v356 = vshrl.u32 %v355, 7
    %v357 = vsub.s32 %v354, %v356
    %v358 = vrot.slane %v335, %v357
    %v360 = vunpack.c.l.s4 1935823168
    %v361 = vunpack.c.0.s8 %v360
    %v362 = vlaneseq
    %v363 = vshrl.u32 %v362, 7
    %v364 = vsub.s32 %v361, %v363
    %v365 = vrot.slane %v337, %v364
    %v366 = vcombine.high %v316, %v316
    %v368 = vunpack.c.l.s4 1935823168
    %v369 = vunpack.c.0.s8 %v368
    %v370 = vlaneseq
    %v371 = vshrl.u32 %v370, 7
    %v372 = vsub.s32 %v369, %v371
    %v373 = vrot.slane %v316, %v372
    %v375 = vunpack.c.l.s4 1935823168
    %v376 = vunpack.c.0.s8 %v375
    %v377 = vlaneseq
    %v378 = vshrl.u32 %v377, 7
    %v379 = vsub.s32 %v376, %v378
    %v380 = vrot.slane %v366, %v379
    %v381 = vcombine.high %v373, %v373
    %v382 = vcombine.high %v380, %v380
    %v384 = vunpack.c.l.s4 1935823168
    %v385 = vunpack.c.0.s8 %v384
    %v386 = vlaneseq
    %v387 = vshrl.u32 %v386, 7
    %v388 = vsub.s32 %v385, %v387
    %v389 = vrot.slane %v373, %v388
    %v391 = vunpack.c.l.s4 1935823168
    %v392 = vunpack.c.0.s8 %v391
    %v393 = vlaneseq
    %v394 = vshrl.u32 %v393, 7
    %v395 = vsub.s32 %v392, %v394
    %v396 = vrot.slane %v381, %v395
    %v398 = vunpack.c.l.s4 1935823168
    %v399 = vunpack.c.0.s8 %v398
    %v400 = vlaneseq
    %v401 = vshrl.u32 %v400, 7
    %v402 = vsub.s32 %v399, %v401
    %v403 = vrot.slane %v380, %v402
    %v405 = vunpack.c.l.s4 1935823168
    %v406 = vunpack.c.0.s8 %v405
    %v407 = vlaneseq
    %v408 = vshrl.u32 %v407, 7
    %v409 = vsub.s32 %v406, %v408
    %v410 = vrot.slane %v382, %v409
    %v412 = vunpack.c.l.s4 1935823168
    %v413 = vunpack.c.0.s8 %v412
    %v414 = vlaneseq
    %v415 = vshrl.u32 %v414, 7
    %v416 = vsub.s32 %v413, %v415
    %v417 = vrot.slane %v317, %v416
    %v419 = vunpack.c.l.s4 1935823168
    %v420 = vunpack.c.0.s8 %v419
    %v421 = vlaneseq
    %v422 = vshrl.u32 %v421, 7
    %v423 = vsub.s32 %v420, %v422
    %v424 = vrot.slane %v417, %v423
    %425 = vrot.lane.b32.xlu0 %v344, 4
    %v426 = vpop.permute.xlu0 %425
    %427 = vrot.lane.b32.xlu0 %v351, 4
    %v428 = vpop.permute.xlu0 %427
    %429 = vrot.lane.b32.xlu0 %v358, 4
    %v430 = vpop.permute.xlu0 %429
    %431 = vrot.lane.b32.xlu0 %v365, 4
    %v432 = vpop.permute.xlu0 %431
    %433 = vrot.lane.b32.xlu0 %v389, 4
    %v434 = vpop.permute.xlu0 %433
    %435 = vrot.lane.b32.xlu0 %v396, 4
    %v436 = vpop.permute.xlu0 %435
    %437 = vrot.lane.b32.xlu0 %v403, 4
    %v438 = vpop.permute.xlu0 %437
    %439 = vrot.lane.b32.xlu0 %v410, 4
    %v440 = vpop.permute.xlu0 %439
    %441 = vrot.lane.b32.xlu0 %v424, 4
    %v442 = vpop.permute.xlu0 %441
    %v443 = vrot.slane %v426, 4
    %v444 = vrot.slane %v428, 4
    %v445 = vrot.slane %v430, 4
    %v446 = vrot.slane %v432, 4
    %v447 = vrot.slane %v434, 4
    %v448 = vrot.slane %v436, 4
    %v449 = vrot.slane %v438, 4
    %v450 = vrot.slane %v440, 4
    %v451 = vrot.slane %v442, 4
    %vm452 = vcmask 1043456
    %v453 = vsel %vm452, %v443, %v444
    %vm454 = vcmask 31744
    %v455 = vsel %vm454, %v426, %v453
    %v456 = vsel %vm452, %v444, %v445
    %v457 = vsel %vm454, %v428, %v456
    %v458 = vsel %vm452, %v445, %v446
    %v459 = vsel %vm454, %v430, %v458
    %v460 = vsel %vm452, %v446, %v447
    %v461 = vsel %vm454, %v432, %v460
    %v462 = vsel %vm452, %v447, %v448
    %v463 = vsel %vm454, %v434, %v462
    %v464 = vsel %vm452, %v448, %v449
    %v465 = vsel %vm454, %v436, %v464
    %v466 = vsel %vm452, %v449, %v450
    %v467 = vsel %vm454, %v438, %v466
    %v468 = vsel %vm452, %v450, %v451
    %v469 = vsel %vm454, %v440, %v468
    %vm478 = vmor %vm295, %vm58
    %v479 = vld [vmem:[#allocation3] sm:$0x11]
    %v480 = vsel %vm478, %v455, %v479
    %481 = vst [vmem:[#allocation3] sm:$0x11] %v480
    %v482 = vld [vmem:[#allocation3 + $0x8] sm:$0x11]
    %v483 = vsel %vm478, %v457, %v482
    %484 = vst [vmem:[#allocation3 + $0x8] sm:$0x11] %v483
    %v485 = vld [vmem:[#allocation3 + $0x10] sm:$0x11]
    %v486 = vsel %vm478, %v459, %v485
    %487 = vst [vmem:[#allocation3 + $0x10] sm:$0x11] %v486
    %v488 = vld [vmem:[#allocation3 + $0x18] sm:$0x11]
    %v489 = vsel %vm478, %v461, %v488
    %490 = vst [vmem:[#allocation3 + $0x18] sm:$0x11] %v489
    %v491 = vld [vmem:[#allocation3 + $0x20] sm:$0x11]
    %v492 = vsel %vm478, %v463, %v491
    %493 = vst [vmem:[#allocation3 + $0x20] sm:$0x11] %v492
    %v494 = vld [vmem:[#allocation3 + $0x28] sm:$0x11]
    %v495 = vsel %vm478, %v465, %v494
    %496 = vst [vmem:[#allocation3 + $0x28] sm:$0x11] %v495
    %v497 = vld [vmem:[#allocation3 + $0x30] sm:$0x11]
    %v498 = vsel %vm478, %v467, %v497
    %499 = vst [vmem:[#allocation3 + $0x30] sm:$0x11] %v498
    %v500 = vld [vmem:[#allocation3 + $0x38] sm:$0x11]
    %v501 = vsel %vm478, %v469, %v500
    %502 = vst [vmem:[#allocation3 + $0x38] sm:$0x11] %v501
    %v503 = vld [vmem:[#allocation2] sm:$0xff]
    %v504 = vld [vmem:[#allocation2 + $0x8] sm:$0xff]
    %v505 = vld [vmem:[#allocation2 + $0x10] sm:$0x1]
    %v509 = vcombine.high %v503, %v503
    %v511 = vunpack.c.l.s4 1935823168
    %v512 = vunpack.c.0.s8 %v511
    %v513 = vlaneseq
    %v514 = vshrl.u32 %v513, 7
    %v515 = vsub.s32 %v512, %v514
    %v516 = vrot.slane %v503, %v515
    %v518 = vunpack.c.l.s4 1935823168
    %v519 = vunpack.c.0.s8 %v518
    %v520 = vlaneseq
    %v521 = vshrl.u32 %v520, 7
    %v522 = vsub.s32 %v519, %v521
    %v523 = vrot.slane %v509, %v522
    %v524 = vcombine.high %v516, %v516
    %v525 = vcombine.high %v523, %v523
    %v527 = vunpack.c.l.s4 1935823168
    %v528 = vunpack.c.0.s8 %v527
    %v529 = vlaneseq
    %v530 = vshrl.u32 %v529, 7
    %v531 = vsub.s32 %v528, %v530
    %v532 = vrot.slane %v516, %v531
    %v534 = vunpack.c.l.s4 1935823168
    %v535 = vunpack.c.0.s8 %v534
    %v536 = vlaneseq
    %v537 = vshrl.u32 %v536, 7
    %v538 = vsub.s32 %v535, %v537
    %v539 = vrot.slane %v524, %v538
    %v541 = vunpack.c.l.s4 1935823168
    %v542 = vunpack.c.0.s8 %v541
    %v543 = vlaneseq
    %v544 = vshrl.u32 %v543, 7
    %v545 = vsub.s32 %v542, %v544
    %v546 = vrot.slane %v523, %v545
    %v548 = vunpack.c.l.s4 1935823168
    %v549 = vunpack.c.0.s8 %v548
    %v550 = vlaneseq
    %v551 = vshrl.u32 %v550, 7
    %v552 = vsub.s32 %v549, %v551
    %v553 = vrot.slane %v525, %v552
    %v554 = vcombine.high %v504, %v504
    %v556 = vunpack.c.l.s4 1935823168
    %v557 = vunpack.c.0.s8 %v556
    %v558 = vlaneseq
    %v559 = vshrl.u32 %v558, 7
    %v560 = vsub.s32 %v557, %v559
    %v561 = vrot.slane %v504, %v560
    %v563 = vunpack.c.l.s4 1935823168
    %v564 = vunpack.c.0.s8 %v563
    %v565 = vlaneseq
    %v566 = vshrl.u32 %v565, 7
    %v567 = vsub.s32 %v564, %v566
    %v568 = vrot.slane %v554, %v567
    %v569 = vcombine.high %v561, %v561
    %v570 = vcombine.high %v568, %v568
    %v572 = vunpack.c.l.s4 1935823168
    %v573 = vunpack.c.0.s8 %v572
    %v574 = vlaneseq
    %v575 = vshrl.u32 %v574, 7
    %v576 = vsub.s32 %v573, %v575
    %v577 = vrot.slane %v561, %v576
    %v579 = vunpack.c.l.s4 1935823168
    %v580 = vunpack.c.0.s8 %v579
    %v581 = vlaneseq
    %v582 = vshrl.u32 %v581, 7
    %v583 = vsub.s32 %v580, %v582
    %v584 = vrot.slane %v569, %v583
    %v586 = vunpack.c.l.s4 1935823168
    %v587 = vunpack.c.0.s8 %v586
    %v588 = vlaneseq
    %v589 = vshrl.u32 %v588, 7
    %v590 = vsub.s32 %v587, %v589
    %v591 = vrot.slane %v568, %v590
    %v593 = vunpack.c.l.s4 1935823168
    %v594 = vunpack.c.0.s8 %v593
    %v595 = vlaneseq
    %v596 = vshrl.u32 %v595, 7
    %v597 = vsub.s32 %v594, %v596
    %v598 = vrot.slane %v570, %v597
    %v600 = vunpack.c.l.s4 1935823168
    %v601 = vunpack.c.0.s8 %v600
    %v602 = vlaneseq
    %v603 = vshrl.u32 %v602, 7
    %v604 = vsub.s32 %v601, %v603
    %v605 = vrot.slane %v505, %v604
    %v607 = vunpack.c.l.s4 1935823168
    %v608 = vunpack.c.0.s8 %v607
    %v609 = vlaneseq
    %v610 = vshrl.u32 %v609, 7
    %v611 = vsub.s32 %v608, %v610
    %v612 = vrot.slane %v605, %v611
    %v614 = vshll.u32 %v532, 16
    %v617 = vshll.u32 %v539, 16
    %v620 = vshll.u32 %v546, 16
    %v623 = vshll.u32 %v553, 16
    %v626 = vshll.u32 %v577, 16
    %v629 = vshll.u32 %v584, 16
    %v632 = vshll.u32 %v591, 16
    %v635 = vshll.u32 %v598, 16
    %v638 = vshll.u32 %v612, 16
    %640 = vrot.lane.b32.xlu0 %v614, 2
    %v641 = vpop.permute.xlu0 %640
    %642 = vrot.lane.b32.xlu0 %v617, 2
    %v643 = vpop.permute.xlu0 %642
    %644 = vrot.lane.b32.xlu0 %v620, 2
    %v645 = vpop.permute.xlu0 %644
    %646 = vrot.lane.b32.xlu0 %v623, 2
    %v647 = vpop.permute.xlu0 %646
    %648 = vrot.lane.b32.xlu0 %v626, 2
    %v649 = vpop.permute.xlu0 %648
    %650 = vrot.lane.b32.xlu0 %v629, 2
    %v651 = vpop.permute.xlu0 %650
    %652 = vrot.lane.b32.xlu0 %v632, 2
    %v653 = vpop.permute.xlu0 %652
    %654 = vrot.lane.b32.xlu0 %v635, 2
    %v655 = vpop.permute.xlu0 %654
    %656 = vrot.lane.b32.xlu0 %v638, 2
    %v657 = vpop.permute.xlu0 %656
    %v658 = vrot.slane %v641, 4
    %v659 = vrot.slane %v643, 4
    %v660 = vrot.slane %v645, 4
    %v661 = vrot.slane %v647, 4
    %v662 = vrot.slane %v649, 4
    %v663 = vrot.slane %v651, 4
    %v664 = vrot.slane %v653, 4
    %v665 = vrot.slane %v655, 4
    %v666 = vrot.slane %v657, 4
    %v667 = vsel %vm452, %v658, %v659
    %vm668 = vcmask 15360
    %v669 = vsel %vm668, %v641, %v667
    %v670 = vsel %vm452, %v659, %v660
    %v671 = vsel %vm668, %v643, %v670
    %v672 = vsel %vm452, %v660, %v661
    %v673 = vsel %vm668, %v645, %v672
    %v674 = vsel %vm452, %v661, %v662
    %v675 = vsel %vm668, %v647, %v674
    %v676 = vsel %vm452, %v662, %v663
    %v677 = vsel %vm668, %v649, %v676
    %v678 = vsel %vm452, %v663, %v664
    %v679 = vsel %vm668, %v651, %v678
    %v680 = vsel %vm452, %v664, %v665
    %v681 = vsel %vm668, %v653, %v680
    %v682 = vsel %vm452, %v665, %v666
    %v683 = vsel %vm668, %v655, %v682
    %vm692 = vsmask.f32 7938
    %vm693 = vmand %vm56, %vm692
    %vm694 = vsmask.f32 7954
    %vm695 = vmand %vm293, %vm694
    %vm696 = vmor %vm695, %vm693
    %v697 = vld [vmem:[#allocation3] sm:$0x11]
    %v698 = vsel %vm696, %v669, %v697
    %699 = vst [vmem:[#allocation3] sm:$0x11] %v698
    %v700 = vld [vmem:[#allocation3 + $0x8] sm:$0x11]
    %v701 = vsel %vm696, %v671, %v700
    %702 = vst [vmem:[#allocation3 + $0x8] sm:$0x11] %v701
    %v703 = vld [vmem:[#allocation3 + $0x10] sm:$0x11]
    %v704 = vsel %vm696, %v673, %v703
    %705 = vst [vmem:[#allocation3 + $0x10] sm:$0x11] %v704
    %v706 = vld [vmem:[#allocation3 + $0x18] sm:$0x11]
    %v707 = vsel %vm696, %v675, %v706
    %708 = vst [vmem:[#allocation3 + $0x18] sm:$0x11] %v707
    %v709 = vld [vmem:[#allocation3 + $0x20] sm:$0x11]
    %v710 = vsel %vm696, %v677, %v709
    %711 = vst [vmem:[#allocation3 + $0x20] sm:$0x11] %v710
    %v712 = vld [vmem:[#allocation3 + $0x28] sm:$0x11]
    %v713 = vsel %vm696, %v679, %v712
    %714 = vst [vmem:[#allocation3 + $0x28] sm:$0x11] %v713
    %v715 = vld [vmem:[#allocation3 + $0x30] sm:$0x11]
    %v716 = vsel %vm696, %v681, %v715
    %717 = vst [vmem:[#allocation3 + $0x30] sm:$0x11] %v716
    %v718 = vld [vmem:[#allocation3 + $0x38] sm:$0x11]
    %v719 = vsel %vm696, %v683, %v718
    %720 = vst [vmem:[#allocation3 + $0x38] sm:$0x11] %v719
    %v721 = vld [vmem:[#allocation2 + $0x1] sm:$0xff]
    %v722 = vld [vmem:[#allocation2 + $0x9] sm:$0xff]
    %v725 = vcombine.high %v721, %v721
    %v727 = vunpack.c.l.s4 1935823168
    %v728 = vunpack.c.0.s8 %v727
    %v729 = vlaneseq
    %v730 = vshrl.u32 %v729, 7
    %v731 = vsub.s32 %v728, %v730
    %v732 = vrot.slane %v721, %v731
    %v734 = vunpack.c.l.s4 1935823168
    %v735 = vunpack.c.0.s8 %v734
    %v736 = vlaneseq
    %v737 = vshrl.u32 %v736, 7
    %v738 = vsub.s32 %v735, %v737
    %v739 = vrot.slane %v725, %v738
    %v740 = vcombine.low %v732, %v732
    %v741 = vcombine.low %v739, %v739
    %v743 = vunpack.c.l.s4 1935823168
    %v744 = vunpack.c.0.s8 %v743
    %v745 = vlaneseq
    %v746 = vshrl.u32 %v745, 7
    %v747 = vsub.s32 %v744, %v746
    %v748 = vrot.slane %v740, %v747
    %v750 = vunpack.c.l.s4 1935823168
    %v751 = vunpack.c.0.s8 %v750
    %v752 = vlaneseq
    %v753 = vshrl.u32 %v752, 7
    %v754 = vsub.s32 %v751, %v753
    %v755 = vrot.slane %v732, %v754
    %v757 = vunpack.c.l.s4 1935823168
    %v758 = vunpack.c.0.s8 %v757
    %v759 = vlaneseq
    %v760 = vshrl.u32 %v759, 7
    %v761 = vsub.s32 %v758, %v760
    %v762 = vrot.slane %v741, %v761
    %v764 = vunpack.c.l.s4 1935823168
    %v765 = vunpack.c.0.s8 %v764
    %v766 = vlaneseq
    %v767 = vshrl.u32 %v766, 7
    %v768 = vsub.s32 %v765, %v767
    %v769 = vrot.slane %v739, %v768
    %v770 = vcombine.high %v722, %v722
    %v772 = vunpack.c.l.s4 1935823168
    %v773 = vunpack.c.0.s8 %v772
    %v774 = vlaneseq
    %v775 = vshrl.u32 %v774, 7
    %v776 = vsub.s32 %v773, %v775
    %v777 = vrot.slane %v722, %v776
    %v779 = vunpack.c.l.s4 1935823168
    %v780 = vunpack.c.0.s8 %v779
    %v781 = vlaneseq
    %v782 = vshrl.u32 %v781, 7
    %v783 = vsub.s32 %v780, %v782
    %v784 = vrot.slane %v770, %v783
    %v785 = vcombine.low %v777, %v777
    %v786 = vcombine.low %v784, %v784
    %v788 = vunpack.c.l.s4 1935823168
    %v789 = vunpack.c.0.s8 %v788
    %v790 = vlaneseq
    %v791 = vshrl.u32 %v790, 7
    %v792 = vsub.s32 %v789, %v791
    %v793 = vrot.slane %v785, %v792
    %v795 = vunpack.c.l.s4 1935823168
    %v796 = vunpack.c.0.s8 %v795
    %v797 = vlaneseq
    %v798 = vshrl.u32 %v797, 7
    %v799 = vsub.s32 %v796, %v798
    %v800 = vrot.slane %v777, %v799
    %v802 = vunpack.c.l.s4 1935823168
    %v803 = vunpack.c.0.s8 %v802
    %v804 = vlaneseq
    %v805 = vshrl.u32 %v804, 7
    %v806 = vsub.s32 %v803, %v805
    %v807 = vrot.slane %v786, %v806
    %v809 = vunpack.c.l.s4 1935823168
    %v810 = vunpack.c.0.s8 %v809
    %v811 = vlaneseq
    %v812 = vshrl.u32 %v811, 7
    %v813 = vsub.s32 %v810, %v812
    %v814 = vrot.slane %v784, %v813
    %vm823 = vmor %vm299, %vm61
    %v824 = vld [vmem:[#allocation3] sm:$0x22]
    %v825 = vsel %vm823, %v748, %v824
    %826 = vst [vmem:[#allocation3] sm:$0x22] %v825
    %v827 = vld [vmem:[#allocation3 + $0x8] sm:$0x22]
    %v828 = vsel %vm823, %v755, %v827
    %829 = vst [vmem:[#allocation3 + $0x8] sm:$0x22] %v828
    %v830 = vld [vmem:[#allocation3 + $0x10] sm:$0x22]
    %v831 = vsel %vm823, %v762, %v830
    %832 = vst [vmem:[#allocation3 + $0x10] sm:$0x22] %v831
    %v833 = vld [vmem:[#allocation3 + $0x18] sm:$0x22]
    %v834 = vsel %vm823, %v769, %v833
    %835 = vst [vmem:[#allocation3 + $0x18] sm:$0x22] %v834
    %v836 = vld [vmem:[#allocation3 + $0x20] sm:$0x22]
    %v837 = vsel %vm823, %v793, %v836
    %838 = vst [vmem:[#allocation3 + $0x20] sm:$0x22] %v837
    %v839 = vld [vmem:[#allocation3 + $0x28] sm:$0x22]
    %v840 = vsel %vm823, %v800, %v839
    %841 = vst [vmem:[#allocation3 + $0x28] sm:$0x22] %v840
    %v842 = vld [vmem:[#allocation3 + $0x30] sm:$0x22]
    %v843 = vsel %vm823, %v807, %v842
    %844 = vst [vmem:[#allocation3 + $0x30] sm:$0x22] %v843
    %v845 = vld [vmem:[#allocation3 + $0x38] sm:$0x22]
    %v846 = vsel %vm823, %v814, %v845
    %847 = vst [vmem:[#allocation3 + $0x38] sm:$0x22] %v846
    %v848 = vld [vmem:[#allocation2 + $0x1] sm:$0xff]
    %v849 = vld [vmem:[#allocation2 + $0x9] sm:$0xff]
    %v850 = vld [vmem:[#allocation2 + $0x11] sm:$0x1]
    %v854 = vcombine.high %v848, %v848
    %v856 = vunpack.c.l.s4 1935823168
    %v857 = vunpack.c.0.s8 %v856
    %v858 = vlaneseq
    %v859 = vshrl.u32 %v858, 7
    %v860 = vsub.s32 %v857, %v859
    %v861 = vrot.slane %v848, %v860
    %v863 = vunpack.c.l.s4 1935823168
    %v864 = vunpack.c.0.s8 %v863
    %v865 = vlaneseq
    %v866 = vshrl.u32 %v865, 7
    %v867 = vsub.s32 %v864, %v866
    %v868 = vrot.slane %v854, %v867
    %v869 = vcombine.high %v861, %v861
    %v870 = vcombine.high %v868, %v868
    %v872 = vunpack.c.l.s4 1935823168
    %v873 = vunpack.c.0.s8 %v872
    %v874 = vlaneseq
    %v875 = vshrl.u32 %v874, 7
    %v876 = vsub.s32 %v873, %v875
    %v877 = vrot.slane %v861, %v876
    %v879 = vunpack.c.l.s4 1935823168
    %v880 = vunpack.c.0.s8 %v879
    %v881 = vlaneseq
    %v882 = vshrl.u32 %v881, 7
    %v883 = vsub.s32 %v880, %v882
    %v884 = vrot.slane %v869, %v883
    %v886 = vunpack.c.l.s4 1935823168
    %v887 = vunpack.c.0.s8 %v886
    %v888 = vlaneseq
    %v889 = vshrl.u32 %v888, 7
    %v890 = vsub.s32 %v887, %v889
    %v891 = vrot.slane %v868, %v890
    %v893 = vunpack.c.l.s4 1935823168
    %v894 = vunpack.c.0.s8 %v893
    %v895 = vlaneseq
    %v896 = vshrl.u32 %v895, 7
    %v897 = vsub.s32 %v894, %v896
    %v898 = vrot.slane %v870, %v897
    %v899 = vcombine.high %v849, %v849
    %v901 = vunpack.c.l.s4 1935823168
    %v902 = vunpack.c.0.s8 %v901
    %v903 = vlaneseq
    %v904 = vshrl.u32 %v903, 7
    %v905 = vsub.s32 %v902, %v904
    %v906 = vrot.slane %v849, %v905
    %v908 = vunpack.c.l.s4 1935823168
    %v909 = vunpack.c.0.s8 %v908
    %v910 = vlaneseq
    %v911 = vshrl.u32 %v910, 7
    %v912 = vsub.s32 %v909, %v911
    %v913 = vrot.slane %v899, %v912
    %v914 = vcombine.high %v906, %v906
    %v915 = vcombine.high %v913, %v913
    %v917 = vunpack.c.l.s4 1935823168
    %v918 = vunpack.c.0.s8 %v917
    %v919 = vlaneseq
    %v920 = vshrl.u32 %v919, 7
    %v921 = vsub.s32 %v918, %v920
    %v922 = vrot.slane %v906, %v921
    %v924 = vunpack.c.l.s4 1935823168
    %v925 = vunpack.c.0.s8 %v924
    %v926 = vlaneseq
    %v927 = vshrl.u32 %v926, 7
    %v928 = vsub.s32 %v925, %v927
    %v929 = vrot.slane %v914, %v928
    %v931 = vunpack.c.l.s4 1935823168
    %v932 = vunpack.c.0.s8 %v931
    %v933 = vlaneseq
    %v934 = vshrl.u32 %v933, 7
    %v935 = vsub.s32 %v932, %v934
    %v936 = vrot.slane %v913, %v935
    %v938 = vunpack.c.l.s4 1935823168
    %v939 = vunpack.c.0.s8 %v938
    %v940 = vlaneseq
    %v941 = vshrl.u32 %v940, 7
    %v942 = vsub.s32 %v939, %v941
    %v943 = vrot.slane %v915, %v942
    %v945 = vunpack.c.l.s4 1935823168
    %v946 = vunpack.c.0.s8 %v945
    %v947 = vlaneseq
    %v948 = vshrl.u32 %v947, 7
    %v949 = vsub.s32 %v946, %v948
    %v950 = vrot.slane %v850, %v949
    %v952 = vunpack.c.l.s4 1935823168
    %v953 = vunpack.c.0.s8 %v952
    %v954 = vlaneseq
    %v955 = vshrl.u32 %v954, 7
    %v956 = vsub.s32 %v953, %v955
    %v957 = vrot.slane %v950, %v956
    %v959 = vshll.u32 %v877, 16
    %v961 = vrot.slane %v959, 7
    %v963 = vshll.u32 %v884, 16
    %v965 = vrot.slane %v963, 7
    %v967 = vshll.u32 %v891, 16
    %v969 = vrot.slane %v967, 7
    %v971 = vshll.u32 %v898, 16
    %v973 = vrot.slane %v971, 7
    %v975 = vshll.u32 %v922, 16
    %v977 = vrot.slane %v975, 7
    %v979 = vshll.u32 %v929, 16
    %v981 = vrot.slane %v979, 7
    %v983 = vshll.u32 %v936, 16
    %v985 = vrot.slane %v983, 7
    %v987 = vshll.u32 %v943, 16
    %v989 = vrot.slane %v987, 7
    %v991 = vshll.u32 %v957, 16
    %v993 = vrot.slane %v991, 7
    %994 = vrot.lane.b32.xlu0 %v961, 126
    %v995 = vpop.permute.xlu0 %994
    %996 = vrot.lane.b32.xlu0 %v965, 126
    %v997 = vpop.permute.xlu0 %996
    %998 = vrot.lane.b32.xlu0 %v969, 126
    %v999 = vpop.permute.xlu0 %998
    %1000 = vrot.lane.b32.xlu0 %v973, 126
    %v1001 = vpop.permute.xlu0 %1000
    %1002 = vrot.lane.b32.xlu0 %v977, 126
    %v1003 = vpop.permute.xlu0 %1002
    %1004 = vrot.lane.b32.xlu0 %v981, 126
    %v1005 = vpop.permute.xlu0 %1004
    %1006 = vrot.lane.b32.xlu0 %v985, 126
    %v1007 = vpop.permute.xlu0 %1006
    %1008 = vrot.lane.b32.xlu0 %v989, 126
    %v1009 = vpop.permute.xlu0 %1008
    %1010 = vrot.lane.b32.xlu0 %v993, 126
    %v1011 = vpop.permute.xlu0 %1010
    %v1012 = vrot.slane %v995, 4
    %v1013 = vrot.slane %v997, 4
    %v1014 = vrot.slane %v999, 4
    %v1015 = vrot.slane %v1001, 4
    %v1016 = vrot.slane %v1003, 4
    %v1017 = vrot.slane %v1005, 4
    %v1018 = vrot.slane %v1007, 4
    %v1019 = vrot.slane %v1009, 4
    %v1020 = vrot.slane %v1011, 4
    %v1021 = vsel %vm452, %v1012, %v1013
    %vm1022 = vcmask 1031168
    %v1023 = vsel %vm1022, %v995, %v1021
    %v1024 = vsel %vm452, %v1013, %v1014
    %v1025 = vsel %vm1022, %v997, %v1024
    %v1026 = vsel %vm452, %v1014, %v1015
    %v1027 = vsel %vm1022, %v999, %v1026
    %v1028 = vsel %vm452, %v1015, %v1016
    %v1029 = vsel %vm1022, %v1001, %v1028
    %v1030 = vsel %vm452, %v1016, %v1017
    %v1031 = vsel %vm1022, %v1003, %v1030
    %v1032 = vsel %vm452, %v1017, %v1018
    %v1033 = vsel %vm1022, %v1005, %v1032
    %v1034 = vsel %vm452, %v1018, %v1019
    %v1035 = vsel %vm1022, %v1007, %v1034
    %v1036 = vsel %vm452, %v1019, %v1020
    %v1037 = vsel %vm1022, %v1009, %v1036
    %vm1046 = vsmask.f32 7942
    %vm1047 = vmand %vm59, %vm1046
    %vm1048 = vsmask.f32 7958
    %vm1049 = vmand %vm297, %vm1048
    %vm1050 = vmor %vm1049, %vm1047
    %v1051 = vld [vmem:[#allocation3] sm:$0x22]
    %v1052 = vsel %vm1050, %v1023, %v1051
    %1053 = vst [vmem:[#allocation3] sm:$0x22] %v1052
    %v1054 = vld [vmem:[#allocation3 + $0x8] sm:$0x22]
    %v1055 = vsel %vm1050, %v1025, %v1054
    %1056 = vst [vmem:[#allocation3 + $0x8] sm:$0x22] %v1055
    %v1057 = vld [vmem:[#allocation3 + $0x10] sm:$0x22]
    %v1058 = vsel %vm1050, %v1027, %v1057
    %1059 = vst [vmem:[#allocation3 + $0x10] sm:$0x22] %v1058
    %v1060 = vld [vmem:[#allocation3 + $0x18] sm:$0x22]
    %v1061 = vsel %vm1050, %v1029, %v1060
    %1062 = vst [vmem:[#allocation3 + $0x18] sm:$0x22] %v1061
    %v1063 = vld [vmem:[#allocation3 + $0x20] sm:$0x22]
    %v1064 = vsel %vm1050, %v1031, %v1063
    %1065 = vst [vmem:[#allocation3 + $0x20] sm:$0x22] %v1064
    %v1066 = vld [vmem:[#allocation3 + $0x28] sm:$0x22]
    %v1067 = vsel %vm1050, %v1033, %v1066
    %1068 = vst [vmem:[#allocation3 + $0x28] sm:$0x22] %v1067
    %v1069 = vld [vmem:[#allocation3 + $0x30] sm:$0x22]
    %v1070 = vsel %vm1050, %v1035, %v1069
    %1071 = vst [vmem:[#allocation3 + $0x30] sm:$0x22] %v1070
    %v1072 = vld [vmem:[#allocation3 + $0x38] sm:$0x22]
    %v1073 = vsel %vm1050, %v1037, %v1072
    %1074 = vst [vmem:[#allocation3 + $0x38] sm:$0x22] %v1073
    %v1075 = vld [vmem:[#allocation2 + $0x1] sm:$0xff]
    %v1076 = vld [vmem:[#allocation2 + $0x9] sm:$0xff]
    %v1077 = vld [vmem:[#allocation2 + $0x11] sm:$0x1]
    %v1081 = vcombine.low %v1075, %v1075
    %v1083 = vunpack.c.l.s4 1935823168
    %v1084 = vunpack.c.0.s8 %v1083
    %v1085 = vlaneseq
    %v1086 = vshrl.u32 %v1085, 7
    %v1087 = vsub.s32 %v1084, %v1086
    %v1088 = vrot.slane %v1081, %v1087
    %v1090 = vunpack.c.l.s4 1935823168
    %v1091 = vunpack.c.0.s8 %v1090
    %v1092 = vlaneseq
    %v1093 = vshrl.u32 %v1092, 7
    %v1094 = vsub.s32 %v1091, %v1093
    %v1095 = vrot.slane %v1075, %v1094
    %v1096 = vcombine.high %v1088, %v1088
    %v1097 = vcombine.high %v1095, %v1095
    %v1099 = vunpack.c.l.s4 1935823168
    %v1100 = vunpack.c.0.s8 %v1099
    %v1101 = vlaneseq
    %v1102 = vshrl.u32 %v1101, 7
    %v1103 = vsub.s32 %v1100, %v1102
    %v1104 = vrot.slane %v1088, %v1103
    %v1106 = vunpack.c.l.s4 1935823168
    %v1107 = vunpack.c.0.s8 %v1106
    %v1108 = vlaneseq
    %v1109 = vshrl.u32 %v1108, 7
    %v1110 = vsub.s32 %v1107, %v1109
    %v1111 = vrot.slane %v1096, %v1110
    %v1113 = vunpack.c.l.s4 1935823168
    %v1114 = vunpack.c.0.s8 %v1113
    %v1115 = vlaneseq
    %v1116 = vshrl.u32 %v1115, 7
    %v1117 = vsub.s32 %v1114, %v1116
    %v1118 = vrot.slane %v1095, %v1117
    %v1120 = vunpack.c.l.s4 1935823168
    %v1121 = vunpack.c.0.s8 %v1120
    %v1122 = vlaneseq
    %v1123 = vshrl.u32 %v1122, 7
    %v1124 = vsub.s32 %v1121, %v1123
    %v1125 = vrot.slane %v1097, %v1124
    %v1126 = vcombine.low %v1076, %v1076
    %v1128 = vunpack.c.l.s4 1935823168
    %v1129 = vunpack.c.0.s8 %v1128
    %v1130 = vlaneseq
    %v1131 = vshrl.u32 %v1130, 7
    %v1132 = vsub.s32 %v1129, %v1131
    %v1133 = vrot.slane %v1126, %v1132
    %v1135 = vunpack.c.l.s4 1935823168
    %v1136 = vunpack.c.0.s8 %v1135
    %v1137 = vlaneseq
    %v1138 = vshrl.u32 %v1137, 7
    %v1139 = vsub.s32 %v1136, %v1138
    %v1140 = vrot.slane %v1076, %v1139
    %v1141 = vcombine.high %v1133, %v1133
    %v1142 = vcombine.high %v1140, %v1140
    %v1144 = vunpack.c.l.s4 1935823168
    %v1145 = vunpack.c.0.s8 %v1144
    %v1146 = vlaneseq
    %v1147 = vshrl.u32 %v1146, 7
    %v1148 = vsub.s32 %v1145, %v1147
    %v1149 = vrot.slane %v1133, %v1148
    %v1151 = vunpack.c.l.s4 1935823168
    %v1152 = vunpack.c.0.s8 %v1151
    %v1153 = vlaneseq
    %v1154 = vshrl.u32 %v1153, 7
    %v1155 = vsub.s32 %v1152, %v1154
    %v1156 = vrot.slane %v1141, %v1155
    %v1158 = vunpack.c.l.s4 1935823168
    %v1159 = vunpack.c.0.s8 %v1158
    %v1160 = vlaneseq
    %v1161 = vshrl.u32 %v1160, 7
    %v1162 = vsub.s32 %v1159, %v1161
    %v1163 = vrot.slane %v1140, %v1162
    %v1165 = vunpack.c.l.s4 1935823168
    %v1166 = vunpack.c.0.s8 %v1165
    %v1167 = vlaneseq
    %v1168 = vshrl.u32 %v1167, 7
    %v1169 = vsub.s32 %v1166, %v1168
    %v1170 = vrot.slane %v1142, %v1169
    %v1171 = vcombine.low %v1077, %v1077
    %v1173 = vunpack.c.l.s4 1935823168
    %v1174 = vunpack.c.0.s8 %v1173
    %v1175 = vlaneseq
    %v1176 = vshrl.u32 %v1175, 7
    %v1177 = vsub.s32 %v1174, %v1176
    %v1178 = vrot.slane %v1171, %v1177
    %v1180 = vunpack.c.l.s4 1935823168
    %v1181 = vunpack.c.0.s8 %v1180
    %v1182 = vlaneseq
    %v1183 = vshrl.u32 %v1182, 7
    %v1184 = vsub.s32 %v1181, %v1183
    %v1185 = vrot.slane %v1178, %v1184
    %1186 = vrot.lane.b32.xlu0 %v1104, 124
    %v1187 = vpop.permute.xlu0 %1186
    %1188 = vrot.lane.b32.xlu0 %v1111, 124
    %v1189 = vpop.permute.xlu0 %1188
    %1190 = vrot.lane.b32.xlu0 %v1118, 124
    %v1191 = vpop.permute.xlu0 %1190
    %1192 = vrot.lane.b32.xlu0 %v1125, 124
    %v1193 = vpop.permute.xlu0 %1192
    %1194 = vrot.lane.b32.xlu0 %v1149, 124
    %v1195 = vpop.permute.xlu0 %1194
    %1196 = vrot.lane.b32.xlu0 %v1156, 124
    %v1197 = vpop.permute.xlu0 %1196
    %1198 = vrot.lane.b32.xlu0 %v1163, 124
    %v1199 = vpop.permute.xlu0 %1198
    %1200 = vrot.lane.b32.xlu0 %v1170, 124
    %v1201 = vpop.permute.xlu0 %1200
    %1202 = vrot.lane.b32.xlu0 %v1185, 124
    %v1203 = vpop.permute.xlu0 %1202
    %v1204 = vrot.slane %v1187, 4
    %v1205 = vrot.slane %v1189, 4
    %v1206 = vrot.slane %v1191, 4
    %v1207 = vrot.slane %v1193, 4
    %v1208 = vrot.slane %v1195, 4
    %v1209 = vrot.slane %v1197, 4
    %v1210 = vrot.slane %v1199, 4
    %v1211 = vrot.slane %v1201, 4
    %v1212 = vrot.slane %v1203, 4
    %v1213 = vsel %vm452, %v1204, %v1205
    %vm1214 = vcmask 1014784
    %v1215 = vsel %vm1214, %v1187, %v1213
    %v1216 = vsel %vm452, %v1205, %v1206
    %v1217 = vsel %vm1214, %v1189, %v1216
    %v1218 = vsel %vm452, %v1206, %v1207
    %v1219 = vsel %vm1214, %v1191, %v1218
    %v1220 = vsel %vm452, %v1207, %v1208
    %v1221 = vsel %vm1214, %v1193, %v1220
    %v1222 = vsel %vm452, %v1208, %v1209
    %v1223 = vsel %vm1214, %v1195, %v1222
    %v1224 = vsel %vm452, %v1209, %v1210
    %v1225 = vsel %vm1214, %v1197, %v1224
    %v1226 = vsel %vm452, %v1210, %v1211
    %v1227 = vsel %vm1214, %v1199, %v1226
    %v1228 = vsel %vm452, %v1211, %v1212
    %v1229 = vsel %vm1214, %v1201, %v1228
    %vm1238 = vmor %vm303, %vm287
    %v1239 = vld [vmem:[#allocation3] sm:$0x44]
    %v1240 = vsel %vm1238, %v1215, %v1239
    %1241 = vst [vmem:[#allocation3] sm:$0x44] %v1240
    %v1242 = vld [vmem:[#allocation3 + $0x8] sm:$0x44]
    %v1243 = vsel %vm1238, %v1217, %v1242
    %1244 = vst [vmem:[#allocation3 + $0x8] sm:$0x44] %v1243
    %v1245 = vld [vmem:[#allocation3 + $0x10] sm:$0x44]
    %v1246 = vsel %vm1238, %v1219, %v1245
    %1247 = vst [vmem:[#allocation3 + $0x10] sm:$0x44] %v1246
    %v1248 = vld [vmem:[#allocation3 + $0x18] sm:$0x44]
    %v1249 = vsel %vm1238, %v1221, %v1248
    %1250 = vst [vmem:[#allocation3 + $0x18] sm:$0x44] %v1249
    %v1251 = vld [vmem:[#allocation3 + $0x20] sm:$0x44]
    %v1252 = vsel %vm1238, %v1223, %v1251
    %1253 = vst [vmem:[#allocation3 + $0x20] sm:$0x44] %v1252
    %v1254 = vld [vmem:[#allocation3 + $0x28] sm:$0x44]
    %v1255 = vsel %vm1238, %v1225, %v1254
    %1256 = vst [vmem:[#allocation3 + $0x28] sm:$0x44] %v1255
    %v1257 = vld [vmem:[#allocation3 + $0x30] sm:$0x44]
    %v1258 = vsel %vm1238, %v1227, %v1257
    %1259 = vst [vmem:[#allocation3 + $0x30] sm:$0x44] %v1258
    %v1260 = vld [vmem:[#allocation3 + $0x38] sm:$0x44]
    %v1261 = vsel %vm1238, %v1229, %v1260
    %1262 = vst [vmem:[#allocation3 + $0x38] sm:$0x44] %v1261
    %v1263 = vld [vmem:[#allocation2 + $0x1] sm:$0xff]
    %v1264 = vld [vmem:[#allocation2 + $0x9] sm:$0xff]
    %v1265 = vld [vmem:[#allocation2 + $0x11] sm:$0x1]
    %v1269 = vcombine.high %v1263, %v1263
    %v1271 = vunpack.c.l.s4 1935823168
    %v1272 = vunpack.c.0.s8 %v1271
    %v1273 = vlaneseq
    %v1274 = vshrl.u32 %v1273, 7
    %v1275 = vsub.s32 %v1272, %v1274
    %v1276 = vrot.slane %v1263, %v1275
    %v1278 = vunpack.c.l.s4 1935823168
    %v1279 = vunpack.c.0.s8 %v1278
    %v1280 = vlaneseq
    %v1281 = vshrl.u32 %v1280, 7
    %v1282 = vsub.s32 %v1279, %v1281
    %v1283 = vrot.slane %v1269, %v1282
    %v1284 = vcombine.high %v1276, %v1276
    %v1285 = vcombine.high %v1283, %v1283
    %v1287 = vunpack.c.l.s4 1935823168
    %v1288 = vunpack.c.0.s8 %v1287
    %v1289 = vlaneseq
    %v1290 = vshrl.u32 %v1289, 7
    %v1291 = vsub.s32 %v1288, %v1290
    %v1292 = vrot.slane %v1276, %v1291
    %v1294 = vunpack.c.l.s4 1935823168
    %v1295 = vunpack.c.0.s8 %v1294
    %v1296 = vlaneseq
    %v1297 = vshrl.u32 %v1296, 7
    %v1298 = vsub.s32 %v1295, %v1297
    %v1299 = vrot.slane %v1284, %v1298
    %v1301 = vunpack.c.l.s4 1935823168
    %v1302 = vunpack.c.0.s8 %v1301
    %v1303 = vlaneseq
    %v1304 = vshrl.u32 %v1303, 7
    %v1305 = vsub.s32 %v1302, %v1304
    %v1306 = vrot.slane %v1283, %v1305
    %v1308 = vunpack.c.l.s4 1935823168
    %v1309 = vunpack.c.0.s8 %v1308
    %v1310 = vlaneseq
    %v1311 = vshrl.u32 %v1310, 7
    %v1312 = vsub.s32 %v1309, %v1311
    %v1313 = vrot.slane %v1285, %v1312
    %v1314 = vcombine.high %v1264, %v1264
    %v1316 = vunpack.c.l.s4 1935823168
    %v1317 = vunpack.c.0.s8 %v1316
    %v1318 = vlaneseq
    %v1319 = vshrl.u32 %v1318, 7
    %v1320 = vsub.s32 %v1317, %v1319
    %v1321 = vrot.slane %v1264, %v1320
    %v1323 = vunpack.c.l.s4 1935823168
    %v1324 = vunpack.c.0.s8 %v1323
    %v1325 = vlaneseq
    %v1326 = vshrl.u32 %v1325, 7
    %v1327 = vsub.s32 %v1324, %v1326
    %v1328 = vrot.slane %v1314, %v1327
    %v1329 = vcombine.high %v1321, %v1321
    %v1330 = vcombine.high %v1328, %v1328
    %v1332 = vunpack.c.l.s4 1935823168
    %v1333 = vunpack.c.0.s8 %v1332
    %v1334 = vlaneseq
    %v1335 = vshrl.u32 %v1334, 7
    %v1336 = vsub.s32 %v1333, %v1335
    %v1337 = vrot.slane %v1321, %v1336
    %v1339 = vunpack.c.l.s4 1935823168
    %v1340 = vunpack.c.0.s8 %v1339
    %v1341 = vlaneseq
    %v1342 = vshrl.u32 %v1341, 7
    %v1343 = vsub.s32 %v1340, %v1342
    %v1344 = vrot.slane %v1329, %v1343
    %v1346 = vunpack.c.l.s4 1935823168
    %v1347 = vunpack.c.0.s8 %v1346
    %v1348 = vlaneseq
    %v1349 = vshrl.u32 %v1348, 7
    %v1350 = vsub.s32 %v1347, %v1349
    %v1351 = vrot.slane %v1328, %v1350
    %v1353 = vunpack.c.l.s4 1935823168
    %v1354 = vunpack.c.0.s8 %v1353
    %v1355 = vlaneseq
    %v1356 = vshrl.u32 %v1355, 7
    %v1357 = vsub.s32 %v1354, %v1356
    %v1358 = vrot.slane %v1330, %v1357
    %v1360 = vunpack.c.l.s4 1935823168
    %v1361 = vunpack.c.0.s8 %v1360
    %v1362 = vlaneseq
    %v1363 = vshrl.u32 %v1362, 7
    %v1364 = vsub.s32 %v1361, %v1363
    %v1365 = vrot.slane %v1265, %v1364
    %v1367 = vunpack.c.l.s4 1935823168
    %v1368 = vunpack.c.0.s8 %v1367
    %v1369 = vlaneseq
    %v1370 = vshrl.u32 %v1369, 7
    %v1371 = vsub.s32 %v1368, %v1370
    %v1372 = vrot.slane %v1365, %v1371
    %v1374 = vshll.u32 %v1292, 16
    %v1376 = vrot.slane %v1374, 6
    %v1378 = vshll.u32 %v1299, 16
    %v1380 = vrot.slane %v1378, 6
    %v1382 = vshll.u32 %v1306, 16
    %v1384 = vrot.slane %v1382, 6
    %v1386 = vshll.u32 %v1313, 16
    %v1388 = vrot.slane %v1386, 6
    %v1390 = vshll.u32 %v1337, 16
    %v1392 = vrot.slane %v1390, 6
    %v1394 = vshll.u32 %v1344, 16
    %v1396 = vrot.slane %v1394, 6
    %v1398 = vshll.u32 %v1351, 16
    %v1400 = vrot.slane %v1398, 6
    %v1402 = vshll.u32 %v1358, 16
    %v1404 = vrot.slane %v1402, 6
    %v1406 = vshll.u32 %v1372, 16
    %v1408 = vrot.slane %v1406, 6
    %1409 = vrot.lane.b32.xlu0 %v1376, 68
    %v1410 = vpop.permute.xlu0 %1409
    %1411 = vrot.lane.b32.xlu0 %v1380, 68
    %v1412 = vpop.permute.xlu0 %1411
    %1413 = vrot.lane.b32.xlu0 %v1384, 68
    %v1414 = vpop.permute.xlu0 %1413
    %1415 = vrot.lane.b32.xlu0 %v1388, 68
    %v1416 = vpop.permute.xlu0 %1415
    %1417 = vrot.lane.b32.xlu0 %v1392, 68
    %v1418 = vpop.permute.xlu0 %1417
    %1419 = vrot.lane.b32.xlu0 %v1396, 68
    %v1420 = vpop.permute.xlu0 %1419
    %1421 = vrot.lane.b32.xlu0 %v1400, 68
    %v1422 = vpop.permute.xlu0 %1421
    %1423 = vrot.lane.b32.xlu0 %v1404, 68
    %v1424 = vpop.permute.xlu0 %1423
    %1425 = vrot.lane.b32.xlu0 %v1408, 68
    %v1426 = vpop.permute.xlu0 %1425
    %v1427 = vrot.slane %v1410, 4
    %v1428 = vrot.slane %v1412, 4
    %v1429 = vrot.slane %v1414, 4
    %v1430 = vrot.slane %v1416, 4
    %v1431 = vrot.slane %v1418, 4
    %v1432 = vrot.slane %v1420, 4
    %v1433 = vrot.slane %v1422, 4
    %v1434 = vrot.slane %v1424, 4
    %v1435 = vrot.slane %v1426, 4
    %v1436 = vsel %vm452, %v1427, %v1428
    %vm1437 = vcmask 556032
    %v1438 = vsel %vm1437, %v1410, %v1436
    %v1439 = vsel %vm452, %v1428, %v1429
    %v1440 = vsel %vm1437, %v1412, %v1439
    %v1441 = vsel %vm452, %v1429, %v1430
    %v1442 = vsel %vm1437, %v1414, %v1441
    %v1443 = vsel %vm452, %v1430, %v1431
    %v1444 = vsel %vm1437, %v1416, %v1443
    %v1445 = vsel %vm452, %v1431, %v1432
    %v1446 = vsel %vm1437, %v1418, %v1445
    %v1447 = vsel %vm452, %v1432, %v1433
    %v1448 = vsel %vm1437, %v1420, %v1447
    %v1449 = vsel %vm452, %v1433, %v1434
    %v1450 = vsel %vm1437, %v1422, %v1449
    %v1451 = vsel %vm452, %v1434, %v1435
    %v1452 = vsel %vm1437, %v1424, %v1451
    %vm1461 = vsmask.f32 7946
    %vm1462 = vmand %vm285, %vm1461
    %vm1463 = vsmask.f32 7962
    %vm1464 = vmand %vm301, %vm1463
    %vm1465 = vmor %vm1464, %vm1462
    %v1466 = vld [vmem:[#allocation3] sm:$0x44]
    %v1467 = vsel %vm1465, %v1438, %v1466
    %1468 = vst [vmem:[#allocation3] sm:$0x44] %v1467
    %v1469 = vld [vmem:[#allocation3 + $0x8] sm:$0x44]
    %v1470 = vsel %vm1465, %v1440, %v1469
    %1471 = vst [vmem:[#allocation3 + $0x8] sm:$0x44] %v1470
    %v1472 = vld [vmem:[#allocation3 + $0x10] sm:$0x44]
    %v1473 = vsel %vm1465, %v1442, %v1472
    %1474 = vst [vmem:[#allocation3 + $0x10] sm:$0x44] %v1473
    %v1475 = vld [vmem:[#allocation3 + $0x18] sm:$0x44]
    %v1476 = vsel %vm1465, %v1444, %v1475
    %1477 = vst [vmem:[#allocation3 + $0x18] sm:$0x44] %v1476
    %v1478 = vld [vmem:[#allocation3 + $0x20] sm:$0x44]
    %v1479 = vsel %vm1465, %v1446, %v1478
    %1480 = vst [vmem:[#allocation3 + $0x20] sm:$0x44] %v1479
    %v1481 = vld [vmem:[#allocation3 + $0x28] sm:$0x44]
    %v1482 = vsel %vm1465, %v1448, %v1481
    %1483 = vst [vmem:[#allocation3 + $0x28] sm:$0x44] %v1482
    %v1484 = vld [vmem:[#allocation3 + $0x30] sm:$0x44]
    %v1485 = vsel %vm1465, %v1450, %v1484
    %1486 = vst [vmem:[#allocation3 + $0x30] sm:$0x44] %v1485
    %v1487 = vld [vmem:[#allocation3 + $0x38] sm:$0x44]
    %v1488 = vsel %vm1465, %v1452, %v1487
    %1489 = vst [vmem:[#allocation3 + $0x38] sm:$0x44] %v1488
    %v1490 = vld [vmem:[#allocation2 + $0x1] sm:$0xff]
    %v1491 = vld [vmem:[#allocation2 + $0x9] sm:$0xff]
    %v1492 = vld [vmem:[#allocation2 + $0x11] sm:$0x1]
    %v1496 = vcombine.low %v1490, %v1490
    %v1498 = vunpack.c.l.s4 1935823168
    %v1499 = vunpack.c.0.s8 %v1498
    %v1500 = vlaneseq
    %v1501 = vshrl.u32 %v1500, 7
    %v1502 = vsub.s32 %v1499, %v1501
    %v1503 = vrot.slane %v1496, %v1502
    %v1505 = vunpack.c.l.s4 1935823168
    %v1506 = vunpack.c.0.s8 %v1505
    %v1507 = vlaneseq
    %v1508 = vshrl.u32 %v1507, 7
    %v1509 = vsub.s32 %v1506, %v1508
    %v1510 = vrot.slane %v1490, %v1509
    %v1511 = vcombine.low %v1503, %v1503
    %v1512 = vcombine.low %v1510, %v1510
    %v1514 = vunpack.c.l.s4 1935823168
    %v1515 = vunpack.c.0.s8 %v1514
    %v1516 = vlaneseq
    %v1517 = vshrl.u32 %v1516, 7
    %v1518 = vsub.s32 %v1515, %v1517
    %v1519 = vrot.slane %v1511, %v1518
    %v1521 = vunpack.c.l.s4 1935823168
    %v1522 = vunpack.c.0.s8 %v1521
    %v1523 = vlaneseq
    %v1524 = vshrl.u32 %v1523, 7
    %v1525 = vsub.s32 %v1522, %v1524
    %v1526 = vrot.slane %v1503, %v1525
    %v1528 = vunpack.c.l.s4 1935823168
    %v1529 = vunpack.c.0.s8 %v1528
    %v1530 = vlaneseq
    %v1531 = vshrl.u32 %v1530, 7
    %v1532 = vsub.s32 %v1529, %v1531
    %v1533 = vrot.slane %v1512, %v1532
    %v1535 = vunpack.c.l.s4 1935823168
    %v1536 = vunpack.c.0.s8 %v1535
    %v1537 = vlaneseq
    %v1538 = vshrl.u32 %v1537, 7
    %v1539 = vsub.s32 %v1536, %v1538
    %v1540 = vrot.slane %v1510, %v1539
    %v1541 = vcombine.low %v1491, %v1491
    %v1543 = vunpack.c.l.s4 1935823168
    %v1544 = vunpack.c.0.s8 %v1543
    %v1545 = vlaneseq
    %v1546 = vshrl.u32 %v1545, 7
    %v1547 = vsub.s32 %v1544, %v1546
    %v1548 = vrot.slane %v1541, %v1547
    %v1550 = vunpack.c.l.s4 1935823168
    %v1551 = vunpack.c.0.s8 %v1550
    %v1552 = vlaneseq
    %v1553 = vshrl.u32 %v1552, 7
    %v1554 = vsub.s32 %v1551, %v1553
    %v1555 = vrot.slane %v1491, %v1554
    %v1556 = vcombine.low %v1548, %v1548
    %v1557 = vcombine.low %v1555, %v1555
    %v1559 = vunpack.c.l.s4 1935823168
    %v1560 = vunpack.c.0.s8 %v1559
    %v1561 = vlaneseq
    %v1562 = vshrl.u32 %v1561, 7
    %v1563 = vsub.s32 %v1560, %v1562
    %v1564 = vrot.slane %v1556, %v1563
    %v1566 = vunpack.c.l.s4 1935823168
    %v1567 = vunpack.c.0.s8 %v1566
    %v1568 = vlaneseq
    %v1569 = vshrl.u32 %v1568, 7
    %v1570 = vsub.s32 %v1567, %v1569
    %v1571 = vrot.slane %v1548, %v1570
    %v1573 = vunpack.c.l.s4 1935823168
    %v1574 = vunpack.c.0.s8 %v1573
    %v1575 = vlaneseq
    %v1576 = vshrl.u32 %v1575, 7
    %v1577 = vsub.s32 %v1574, %v1576
    %v1578 = vrot.slane %v1557, %v1577
    %v1580 = vunpack.c.l.s4 1935823168
    %v1581 = vunpack.c.0.s8 %v1580
    %v1582 = vlaneseq
    %v1583 = vshrl.u32 %v1582, 7
    %v1584 = vsub.s32 %v1581, %v1583
    %v1585 = vrot.slane %v1555, %v1584
    %v1586 = vcombine.low %v1492, %v1492
    %v1588 = vunpack.c.l.s4 1935823168
    %v1589 = vunpack.c.0.s8 %v1588
    %v1590 = vlaneseq
    %v1591 = vshrl.u32 %v1590, 7
    %v1592 = vsub.s32 %v1589, %v1591
    %v1593 = vrot.slane %v1586, %v1592
    %v1594 = vcombine.low %v1593, %v1593
    %v1596 = vunpack.c.l.s4 1935823168
    %v1597 = vunpack.c.0.s8 %v1596
    %v1598 = vlaneseq
    %v1599 = vshrl.u32 %v1598, 7
    %v1600 = vsub.s32 %v1597, %v1599
    %v1601 = vrot.slane %v1594, %v1600
    %1602 = vrot.lane.b32.xlu0 %v1519, 66
    %v1603 = vpop.permute.xlu0 %1602
    %1604 = vrot.lane.b32.xlu0 %v1526, 66
    %v1605 = vpop.permute.xlu0 %1604
    %1606 = vrot.lane.b32.xlu0 %v1533, 66
    %v1607 = vpop.permute.xlu0 %1606
    %1608 = vrot.lane.b32.xlu0 %v1540, 66
    %v1609 = vpop.permute.xlu0 %1608
    %1610 = vrot.lane.b32.xlu0 %v1564, 66
    %v1611 = vpop.permute.xlu0 %1610
    %1612 = vrot.lane.b32.xlu0 %v1571, 66
    %v1613 = vpop.permute.xlu0 %1612
    %1614 = vrot.lane.b32.xlu0 %v1578, 66
    %v1615 = vpop.permute.xlu0 %1614
    %1616 = vrot.lane.b32.xlu0 %v1585, 66
    %v1617 = vpop.permute.xlu0 %1616
    %1618 = vrot.lane.b32.xlu0 %v1601, 66
    %v1619 = vpop.permute.xlu0 %1618
    %v1620 = vrot.slane %v1603, 4
    %v1621 = vrot.slane %v1605, 4
    %v1622 = vrot.slane %v1607, 4
    %v1623 = vrot.slane %v1609, 4
    %v1624 = vrot.slane %v1611, 4
    %v1625 = vrot.slane %v1613, 4
    %v1626 = vrot.slane %v1615, 4
    %v1627 = vrot.slane %v1617, 4
    %v1628 = vrot.slane %v1619, 4
    %v1629 = vsel %vm452, %v1620, %v1621
    %vm1630 = vcmask 539648
    %v1631 = vsel %vm1630, %v1603, %v1629
    %v1632 = vsel %vm452, %v1621, %v1622
    %v1633 = vsel %vm1630, %v1605, %v1632
    %v1634 = vsel %vm452, %v1622, %v1623
    %v1635 = vsel %vm1630, %v1607, %v1634
    %v1636 = vsel %vm452, %v1623, %v1624
    %v1637 = vsel %vm1630, %v1609, %v1636
    %v1638 = vsel %vm452, %v1624, %v1625
    %v1639 = vsel %vm1630, %v1611, %v1638
    %v1640 = vsel %vm452, %v1625, %v1626
    %v1641 = vsel %vm1630, %v1613, %v1640
    %v1642 = vsel %vm452, %v1626, %v1627
    %v1643 = vsel %vm1630, %v1615, %v1642
    %v1644 = vsel %vm452, %v1627, %v1628
    %v1645 = vsel %vm1630, %v1617, %v1644
    %vm1654 = vmor %vm307, %vm291
    %v1655 = vld [vmem:[#allocation3] sm:$0x88]
    %v1656 = vsel %vm1654, %v1631, %v1655
    %1657 = vst [vmem:[#allocation3] sm:$0x88] %v1656
    %v1658 = vld [vmem:[#allocation3 + $0x8] sm:$0x88]
    %v1659 = vsel %vm1654, %v1633, %v1658
    %1660 = vst [vmem:[#allocation3 + $0x8] sm:$0x88] %v1659
    %v1661 = vld [vmem:[#allocation3 + $0x10] sm:$0x88]
    %v1662 = vsel %vm1654, %v1635, %v1661
    %1663 = vst [vmem:[#allocation3 + $0x10] sm:$0x88] %v1662
    %v1664 = vld [vmem:[#allocation3 + $0x18] sm:$0x88]
    %v1665 = vsel %vm1654, %v1637, %v1664
    %1666 = vst [vmem:[#allocation3 + $0x18] sm:$0x88] %v1665
    %v1667 = vld [vmem:[#allocation3 + $0x20] sm:$0x88]
    %v1668 = vsel %vm1654, %v1639, %v1667
    %1669 = vst [vmem:[#allocation3 + $0x20] sm:$0x88] %v1668
    %v1670 = vld [vmem:[#allocation3 + $0x28] sm:$0x88]
    %v1671 = vsel %vm1654, %v1641, %v1670
    %1672 = vst [vmem:[#allocation3 + $0x28] sm:$0x88] %v1671
    %v1673 = vld [vmem:[#allocation3 + $0x30] sm:$0x88]
    %v1674 = vsel %vm1654, %v1643, %v1673
    %1675 = vst [vmem:[#allocation3 + $0x30] sm:$0x88] %v1674
    %v1676 = vld [vmem:[#allocation3 + $0x38] sm:$0x88]
    %v1677 = vsel %vm1654, %v1645, %v1676
    %1678 = vst [vmem:[#allocation3 + $0x38] sm:$0x88] %v1677
    %v1679 = vld [vmem:[#allocation2 + $0x1] sm:$0xff]
    %v1680 = vld [vmem:[#allocation2 + $0x9] sm:$0xff]
    %v1681 = vld [vmem:[#allocation2 + $0x11] sm:$0x1]
    %v1685 = vcombine.high %v1679, %v1679
    %v1687 = vunpack.c.l.s4 1935823168
    %v1688 = vunpack.c.0.s8 %v1687
    %v1689 = vlaneseq
    %v1690 = vshrl.u32 %v1689, 7
    %v1691 = vsub.s32 %v1688, %v1690
    %v1692 = vrot.slane %v1679, %v1691
    %v1694 = vunpack.c.l.s4 1935823168
    %v1695 = vunpack.c.0.s8 %v1694
    %v1696 = vlaneseq
    %v1697 = vshrl.u32 %v1696, 7
    %v1698 = vsub.s32 %v1695, %v1697
    %v1699 = vrot.slane %v1685, %v1698
    %v1700 = vcombine.high %v1692, %v1692
    %v1701 = vcombine.high %v1699, %v1699
    %v1703 = vunpack.c.l.s4 1935823168
    %v1704 = vunpack.c.0.s8 %v1703
    %v1705 = vlaneseq
    %v1706 = vshrl.u32 %v1705, 7
    %v1707 = vsub.s32 %v1704, %v1706
    %v1708 = vrot.slane %v1692, %v1707
    %v1710 = vunpack.c.l.s4 1935823168
    %v1711 = vunpack.c.0.s8 %v1710
    %v1712 = vlaneseq
    %v1713 = vshrl.u32 %v1712, 7
    %v1714 = vsub.s32 %v1711, %v1713
    %v1715 = vrot.slane %v1700, %v1714
    %v1717 = vunpack.c.l.s4 1935823168
    %v1718 = vunpack.c.0.s8 %v1717
    %v1719 = vlaneseq
    %v1720 = vshrl.u32 %v1719, 7
    %v1721 = vsub.s32 %v1718, %v1720
    %v1722 = vrot.slane %v1699, %v1721
    %v1724 = vunpack.c.l.s4 1935823168
    %v1725 = vunpack.c.0.s8 %v1724
    %v1726 = vlaneseq
    %v1727 = vshrl.u32 %v1726, 7
    %v1728 = vsub.s32 %v1725, %v1727
    %v1729 = vrot.slane %v1701, %v1728
    %v1730 = vcombine.high %v1680, %v1680
    %v1732 = vunpack.c.l.s4 1935823168
    %v1733 = vunpack.c.0.s8 %v1732
    %v1734 = vlaneseq
    %v1735 = vshrl.u32 %v1734, 7
    %v1736 = vsub.s32 %v1733, %v1735
    %v1737 = vrot.slane %v1680, %v1736
    %v1739 = vunpack.c.l.s4 1935823168
    %v1740 = vunpack.c.0.s8 %v1739
    %v1741 = vlaneseq
    %v1742 = vshrl.u32 %v1741, 7
    %v1743 = vsub.s32 %v1740, %v1742
    %v1744 = vrot.slane %v1730, %v1743
    %v1745 = vcombine.high %v1737, %v1737
    %v1746 = vcombine.high %v1744, %v1744
    %v1748 = vunpack.c.l.s4 1935823168
    %v1749 = vunpack.c.0.s8 %v1748
    %v1750 = vlaneseq
    %v1751 = vshrl.u32 %v1750, 7
    %v1752 = vsub.s32 %v1749, %v1751
    %v1753 = vrot.slane %v1737, %v1752
    %v1755 = vunpack.c.l.s4 1935823168
    %v1756 = vunpack.c.0.s8 %v1755
    %v1757 = vlaneseq
    %v1758 = vshrl.u32 %v1757, 7
    %v1759 = vsub.s32 %v1756, %v1758
    %v1760 = vrot.slane %v1745, %v1759
    %v1762 = vunpack.c.l.s4 1935823168
    %v1763 = vunpack.c.0.s8 %v1762
    %v1764 = vlaneseq
    %v1765 = vshrl.u32 %v1764, 7
    %v1766 = vsub.s32 %v1763, %v1765
    %v1767 = vrot.slane %v1744, %v1766
    %v1769 = vunpack.c.l.s4 1935823168
    %v1770 = vunpack.c.0.s8 %v1769
    %v1771 = vlaneseq
    %v1772 = vshrl.u32 %v1771, 7
    %v1773 = vsub.s32 %v1770, %v1772
    %v1774 = vrot.slane %v1746, %v1773
    %v1776 = vunpack.c.l.s4 1935823168
    %v1777 = vunpack.c.0.s8 %v1776
    %v1778 = vlaneseq
    %v1779 = vshrl.u32 %v1778, 7
    %v1780 = vsub.s32 %v1777, %v1779
    %v1781 = vrot.slane %v1681, %v1780
    %v1783 = vunpack.c.l.s4 1935823168
    %v1784 = vunpack.c.0.s8 %v1783
    %v1785 = vlaneseq
    %v1786 = vshrl.u32 %v1785, 7
    %v1787 = vsub.s32 %v1784, %v1786
    %v1788 = vrot.slane %v1781, %v1787
    %v1790 = vshll.u32 %v1708, 16
    %v1792 = vrot.slane %v1790, 5
    %v1794 = vshll.u32 %v1715, 16
    %v1796 = vrot.slane %v1794, 5
    %v1798 = vshll.u32 %v1722, 16
    %v1800 = vrot.slane %v1798, 5
    %v1802 = vshll.u32 %v1729, 16
    %v1804 = vrot.slane %v1802, 5
    %v1806 = vshll.u32 %v1753, 16
    %v1808 = vrot.slane %v1806, 5
    %v1810 = vshll.u32 %v1760, 16
    %v1812 = vrot.slane %v1810, 5
    %v1814 = vshll.u32 %v1767, 16
    %v1816 = vrot.slane %v1814, 5
    %v1818 = vshll.u32 %v1774, 16
    %v1820 = vrot.slane %v1818, 5
    %v1822 = vshll.u32 %v1788, 16
    %v1824 = vrot.slane %v1822, 5
    %1825 = vrot.lane.b32.xlu0 %v1792, 64
    %v1826 = vpop.permute.xlu0 %1825
    %1827 = vrot.lane.b32.xlu0 %v1796, 64
    %v1828 = vpop.permute.xlu0 %1827
    %1829 = vrot.lane.b32.xlu0 %v1800, 64
    %v1830 = vpop.permute.xlu0 %1829
    %1831 = vrot.lane.b32.xlu0 %v1804, 64
    %v1832 = vpop.permute.xlu0 %1831
    %1833 = vrot.lane.b32.xlu0 %v1808, 64
    %v1834 = vpop.permute.xlu0 %1833
    %1835 = vrot.lane.b32.xlu0 %v1812, 64
    %v1836 = vpop.permute.xlu0 %1835
    %1837 = vrot.lane.b32.xlu0 %v1816, 64
    %v1838 = vpop.permute.xlu0 %1837
    %1839 = vrot.lane.b32.xlu0 %v1820, 64
    %v1840 = vpop.permute.xlu0 %1839
    %1841 = vrot.lane.b32.xlu0 %v1824, 64
    %v1842 = vpop.permute.xlu0 %1841
    %v1843 = vrot.slane %v1826, 4
    %v1844 = vrot.slane %v1828, 4
    %v1845 = vrot.slane %v1830, 4
    %v1846 = vrot.slane %v1832, 4
    %v1847 = vrot.slane %v1834, 4
    %v1848 = vrot.slane %v1836, 4
    %v1849 = vrot.slane %v1838, 4
    %v1850 = vrot.slane %v1840, 4
    %v1851 = vrot.slane %v1842, 4
    %v1852 = vsel %vm452, %v1843, %v1844
    %vm1853 = vcmask 523264
    %v1854 = vsel %vm1853, %v1826, %v1852
    %v1855 = vsel %vm452, %v1844, %v1845
    %v1856 = vsel %vm1853, %v1828, %v1855
    %v1857 = vsel %vm452, %v1845, %v1846
    %v1858 = vsel %vm1853, %v1830, %v1857
    %v1859 = vsel %vm452, %v1846, %v1847
    %v1860 = vsel %vm1853, %v1832, %v1859
    %v1861 = vsel %vm452, %v1847, %v1848
    %v1862 = vsel %vm1853, %v1834, %v1861
    %v1863 = vsel %vm452, %v1848, %v1849
    %v1864 = vsel %vm1853, %v1836, %v1863
    %v1865 = vsel %vm452, %v1849, %v1850
    %v1866 = vsel %vm1853, %v1838, %v1865
    %v1867 = vsel %vm452, %v1850, %v1851
    %v1868 = vsel %vm1853, %v1840, %v1867
    %vm1877 = vsmask.f32 7950
    %vm1878 = vmand %vm289, %vm1877
    %vm1879 = vsmask.f32 7966
    %vm1880 = vmand %vm305, %vm1879
    %vm1881 = vmor %vm1880, %vm1878
    %v1882 = vld [vmem:[#allocation3] sm:$0x88]
    %v1883 = vsel %vm1881, %v1854, %v1882
    %1884 = vst [vmem:[#allocation3] sm:$0x88] %v1883
    %v1885 = vld [vmem:[#allocation3 + $0x8] sm:$0x88]
    %v1886 = vsel %vm1881, %v1856, %v1885
    %1887 = vst [vmem:[#allocation3 + $0x8] sm:$0x88] %v1886
    %v1888 = vld [vmem:[#allocation3 + $0x10] sm:$0x88]
    %v1889 = vsel %vm1881, %v1858, %v1888
    %1890 = vst [vmem:[#allocation3 + $0x10] sm:$0x88] %v1889
    %v1891 = vld [vmem:[#allocation3 + $0x18] sm:$0x88]
    %v1892 = vsel %vm1881, %v1860, %v1891
    %1893 = vst [vmem:[#allocation3 + $0x18] sm:$0x88] %v1892
    %v1894 = vld [vmem:[#allocation3 + $0x20] sm:$0x88]
    %v1895 = vsel %vm1881, %v1862, %v1894
    %1896 = vst [vmem:[#allocation3 + $0x20] sm:$0x88] %v1895
    %v1897 = vld [vmem:[#allocation3 + $0x28] sm:$0x88]
    %v1898 = vsel %vm1881, %v1864, %v1897
    %1899 = vst [vmem:[#allocation3 + $0x28] sm:$0x88] %v1898
    %v1900 = vld [vmem:[#allocation3 + $0x30] sm:$0x88]
    %v1901 = vsel %vm1881, %v1866, %v1900
    %1902 = vst [vmem:[#allocation3 + $0x30] sm:$0x88] %v1901
    %v1903 = vld [vmem:[#allocation3 + $0x38] sm:$0x88]
    %v1904 = vsel %vm1881, %v1868, %v1903
    %1905 = vst [vmem:[#allocation3 + $0x38] sm:$0x88] %v1904
    %v1906 = vld [vmem:[#allocation2 + $0x1] sm:$0xff]
    %v1907 = vld [vmem:[#allocation2 + $0x9] sm:$0xff]
    %v1908 = vld [vmem:[#allocation2 + $0x11] sm:$0x1]
    %v1912 = vcombine.high %v1906, %v1906
    %v1914 = vunpack.c.l.s4 1935823168
    %v1915 = vunpack.c.0.s8 %v1914
    %v1916 = vlaneseq
    %v1917 = vshrl.u32 %v1916, 7
    %v1918 = vsub.s32 %v1915, %v1917
    %v1919 = vrot.slane %v1906, %v1918
    %v1921 = vunpack.c.l.s4 1935823168
    %v1922 = vunpack.c.0.s8 %v1921
    %v1923 = vlaneseq
    %v1924 = vshrl.u32 %v1923, 7
    %v1925 = vsub.s32 %v1922, %v1924
    %v1926 = vrot.slane %v1912, %v1925
    %v1927 = vcombine.high %v1919, %v1919
    %v1928 = vcombine.high %v1926, %v1926
    %v1930 = vunpack.c.l.s4 1935823168
    %v1931 = vunpack.c.0.s8 %v1930
    %v1932 = vlaneseq
    %v1933 = vshrl.u32 %v1932, 7
    %v1934 = vsub.s32 %v1931, %v1933
    %v1935 = vrot.slane %v1919, %v1934
    %v1937 = vunpack.c.l.s4 1935823168
    %v1938 = vunpack.c.0.s8 %v1937
    %v1939 = vlaneseq
    %v1940 = vshrl.u32 %v1939, 7
    %v1941 = vsub.s32 %v1938, %v1940
    %v1942 = vrot.slane %v1927, %v1941
    %v1944 = vunpack.c.l.s4 1935823168
    %v1945 = vunpack.c.0.s8 %v1944
    %v1946 = vlaneseq
    %v1947 = vshrl.u32 %v1946, 7
    %v1948 = vsub.s32 %v1945, %v1947
    %v1949 = vrot.slane %v1926, %v1948
    %v1951 = vunpack.c.l.s4 1935823168
    %v1952 = vunpack.c.0.s8 %v1951
    %v1953 = vlaneseq
    %v1954 = vshrl.u32 %v1953, 7
    %v1955 = vsub.s32 %v1952, %v1954
    %v1956 = vrot.slane %v1928, %v1955
    %v1957 = vcombine.high %v1907, %v1907
    %v1959 = vunpack.c.l.s4 1935823168
    %v1960 = vunpack.c.0.s8 %v1959
    %v1961 = vlaneseq
    %v1962 = vshrl.u32 %v1961, 7
    %v1963 = vsub.s32 %v1960, %v1962
    %v1964 = vrot.slane %v1907, %v1963
    %v1966 = vunpack.c.l.s4 1935823168
    %v1967 = vunpack.c.0.s8 %v1966
    %v1968 = vlaneseq
    %v1969 = vshrl.u32 %v1968, 7
    %v1970 = vsub.s32 %v1967, %v1969
    %v1971 = vrot.slane %v1957, %v1970
    %v1972 = vcombine.high %v1964, %v1964
    %v1973 = vcombine.high %v1971, %v1971
    %v1975 = vunpack.c.l.s4 1935823168
    %v1976 = vunpack.c.0.s8 %v1975
    %v1977 = vlaneseq
    %v1978 = vshrl.u32 %v1977, 7
    %v1979 = vsub.s32 %v1976, %v1978
    %v1980 = vrot.slane %v1964, %v1979
    %v1982 = vunpack.c.l.s4 1935823168
    %v1983 = vunpack.c.0.s8 %v1982
    %v1984 = vlaneseq
    %v1985 = vshrl.u32 %v1984, 7
    %v1986 = vsub.s32 %v1983, %v1985
    %v1987 = vrot.slane %v1972, %v1986
    %v1989 = vunpack.c.l.s4 1935823168
    %v1990 = vunpack.c.0.s8 %v1989
    %v1991 = vlaneseq
    %v1992 = vshrl.u32 %v1991, 7
    %v1993 = vsub.s32 %v1990, %v1992
    %v1994 = vrot.slane %v1971, %v1993
    %v1996 = vunpack.c.l.s4 1935823168
    %v1997 = vunpack.c.0.s8 %v1996
    %v1998 = vlaneseq
    %v1999 = vshrl.u32 %v1998, 7
    %v2000 = vsub.s32 %v1997, %v1999
    %v2001 = vrot.slane %v1973, %v2000
    %v2003 = vunpack.c.l.s4 1935823168
    %v2004 = vunpack.c.0.s8 %v2003
    %v2005 = vlaneseq
    %v2006 = vshrl.u32 %v2005, 7
    %v2007 = vsub.s32 %v2004, %v2006
    %v2008 = vrot.slane %v1908, %v2007
    %v2010 = vunpack.c.l.s4 1935823168
    %v2011 = vunpack.c.0.s8 %v2010
    %v2012 = vlaneseq
    %v2013 = vshrl.u32 %v2012, 7
    %v2014 = vsub.s32 %v2011, %v2013
    %v2015 = vrot.slane %v2008, %v2014
    %2016 = vrot.lane.b32.xlu0 %v1935, 62
    %v2017 = vpop.permute.xlu0 %2016
    %2018 = vrot.lane.b32.xlu0 %v1942, 62
    %v2019 = vpop.permute.xlu0 %2018
    %2020 = vrot.lane.b32.xlu0 %v1949, 62
    %v2021 = vpop.permute.xlu0 %2020
    %2022 = vrot.lane.b32.xlu0 %v1956, 62
    %v2023 = vpop.permute.xlu0 %2022
    %2024 = vrot.lane.b32.xlu0 %v1980, 62
    %v2025 = vpop.permute.xlu0 %2024
    %2026 = vrot.lane.b32.xlu0 %v1987, 62
    %v2027 = vpop.permute.xlu0 %2026
    %2028 = vrot.lane.b32.xlu0 %v1994, 62
    %v2029 = vpop.permute.xlu0 %2028
    %2030 = vrot.lane.b32.xlu0 %v2001, 62
    %v2031 = vpop.permute.xlu0 %2030
    %2032 = vrot.lane.b32.xlu0 %v2015, 62
    %v2033 = vpop.permute.xlu0 %2032
    %v2034 = vrot.slane %v2017, 4
    %v2035 = vrot.slane %v2019, 4
    %v2036 = vrot.slane %v2021, 4
    %v2037 = vrot.slane %v2023, 4
    %v2038 = vrot.slane %v2025, 4
    %v2039 = vrot.slane %v2027, 4
    %v2040 = vrot.slane %v2029, 4
    %v2041 = vrot.slane %v2031, 4
    %v2042 = vrot.slane %v2033, 4
    %v2043 = vsel %vm452, %v2034, %v2035
    %vm2044 = vcmask 506880
    %v2045 = vsel %vm2044, %v2017, %v2043
    %v2046 = vsel %vm452, %v2035, %v2036
    %v2047 = vsel %vm2044, %v2019, %v2046
    %v2048 = vsel %vm452, %v2036, %v2037
    %v2049 = vsel %vm2044, %v2021, %v2048
    %v2050 = vsel %vm452, %v2037, %v2038
    %v2051 = vsel %vm2044, %v2023, %v2050
    %v2052 = vsel %vm452, %v2038, %v2039
    %v2053 = vsel %vm2044, %v2025, %v2052
    %v2054 = vsel %vm452, %v2039, %v2040
    %v2055 = vsel %vm2044, %v2027, %v2054
    %v2056 = vsel %vm452, %v2040, %v2041
    %v2057 = vsel %vm2044, %v2029, %v2056
    %v2058 = vsel %vm452, %v2041, %v2042
    %v2059 = vsel %vm2044, %v2031, %v2058
    %v2068 = vld [vmem:[#allocation3 + $0x40] sm:$0x11]
    %v2069 = vsel %vm478, %v2045, %v2068
    %2070 = vst [vmem:[#allocation3 + $0x40] sm:$0x11] %v2069
    %v2071 = vld [vmem:[#allocation3 + $0x48] sm:$0x11]
    %v2072 = vsel %vm478, %v2047, %v2071
    %2073 = vst [vmem:[#allocation3 + $0x48] sm:$0x11] %v2072
    %v2074 = vld [vmem:[#allocation3 + $0x50] sm:$0x11]
    %v2075 = vsel %vm478, %v2049, %v2074
    %2076 = vst [vmem:[#allocation3 + $0x50] sm:$0x11] %v2075
    %v2077 = vld [vmem:[#allocation3 + $0x58] sm:$0x11]
    %v2078 = vsel %vm478, %v2051, %v2077
    %2079 = vst [vmem:[#allocation3 + $0x58] sm:$0x11] %v2078
    %v2080 = vld [vmem:[#allocation3 + $0x60] sm:$0x11]
    %v2081 = vsel %vm478, %v2053, %v2080
    %2082 = vst [vmem:[#allocation3 + $0x60] sm:$0x11] %v2081
    %v2083 = vld [vmem:[#allocation3 + $0x68] sm:$0x11]
    %v2084 = vsel %vm478, %v2055, %v2083
    %2085 = vst [vmem:[#allocation3 + $0x68] sm:$0x11] %v2084
    %v2086 = vld [vmem:[#allocation3 + $0x70] sm:$0x11]
    %v2087 = vsel %vm478, %v2057, %v2086
    %2088 = vst [vmem:[#allocation3 + $0x70] sm:$0x11] %v2087
    %v2089 = vld [vmem:[#allocation3 + $0x78] sm:$0x11]
    %v2090 = vsel %vm478, %v2059, %v2089
    %2091 = vst [vmem:[#allocation3 + $0x78] sm:$0x11] %v2090
    %v2092 = vld [vmem:[#allocation2 + $0x1] sm:$0xff]
    %v2093 = vld [vmem:[#allocation2 + $0x9] sm:$0xff]
    %v2094 = vld [vmem:[#allocation2 + $0x11] sm:$0x1]
    %v2098 = vcombine.high %v2092, %v2092
    %v2100 = vunpack.c.l.s4 1935823168
    %v2101 = vunpack.c.0.s8 %v2100
    %v2102 = vlaneseq
    %v2103 = vshrl.u32 %v2102, 7
    %v2104 = vsub.s32 %v2101, %v2103
    %v2105 = vrot.slane %v2092, %v2104
    %v2107 = vunpack.c.l.s4 1935823168
    %v2108 = vunpack.c.0.s8 %v2107
    %v2109 = vlaneseq
    %v2110 = vshrl.u32 %v2109, 7
    %v2111 = vsub.s32 %v2108, %v2110
    %v2112 = vrot.slane %v2098, %v2111
    %v2113 = vcombine.high %v2105, %v2105
    %v2114 = vcombine.high %v2112, %v2112
    %v2116 = vunpack.c.l.s4 1935823168
    %v2117 = vunpack.c.0.s8 %v2116
    %v2118 = vlaneseq
    %v2119 = vshrl.u32 %v2118, 7
    %v2120 = vsub.s32 %v2117, %v2119
    %v2121 = vrot.slane %v2105, %v2120
    %v2123 = vunpack.c.l.s4 1935823168
    %v2124 = vunpack.c.0.s8 %v2123
    %v2125 = vlaneseq
    %v2126 = vshrl.u32 %v2125, 7
    %v2127 = vsub.s32 %v2124, %v2126
    %v2128 = vrot.slane %v2113, %v2127
    %v2130 = vunpack.c.l.s4 1935823168
    %v2131 = vunpack.c.0.s8 %v2130
    %v2132 = vlaneseq
    %v2133 = vshrl.u32 %v2132, 7
    %v2134 = vsub.s32 %v2131, %v2133
    %v2135 = vrot.slane %v2112, %v2134
    %v2137 = vunpack.c.l.s4 1935823168
    %v2138 = vunpack.c.0.s8 %v2137
    %v2139 = vlaneseq
    %v2140 = vshrl.u32 %v2139, 7
    %v2141 = vsub.s32 %v2138, %v2140
    %v2142 = vrot.slane %v2114, %v2141
    %v2143 = vcombine.high %v2093, %v2093
    %v2145 = vunpack.c.l.s4 1935823168
    %v2146 = vunpack.c.0.s8 %v2145
    %v2147 = vlaneseq
    %v2148 = vshrl.u32 %v2147, 7
    %v2149 = vsub.s32 %v2146, %v2148
    %v2150 = vrot.slane %v2093, %v2149
    %v2152 = vunpack.c.l.s4 1935823168
    %v2153 = vunpack.c.0.s8 %v2152
    %v2154 = vlaneseq
    %v2155 = vshrl.u32 %v2154, 7
    %v2156 = vsub.s32 %v2153, %v2155
    %v2157 = vrot.slane %v2143, %v2156
    %v2158 = vcombine.high %v2150, %v2150
    %v2159 = vcombine.high %v2157, %v2157
    %v2161 = vunpack.c.l.s4 1935823168
    %v2162 = vunpack.c.0.s8 %v2161
    %v2163 = vlaneseq
    %v2164 = vshrl.u32 %v2163, 7
    %v2165 = vsub.s32 %v2162, %v2164
    %v2166 = vrot.slane %v2150, %v2165
    %v2168 = vunpack.c.l.s4 1935823168
    %v2169 = vunpack.c.0.s8 %v2168
    %v2170 = vlaneseq
    %v2171 = vshrl.u32 %v2170, 7
    %v2172 = vsub.s32 %v2169, %v2171
    %v2173 = vrot.slane %v2158, %v2172
    %v2175 = vunpack.c.l.s4 1935823168
    %v2176 = vunpack.c.0.s8 %v2175
    %v2177 = vlaneseq
    %v2178 = vshrl.u32 %v2177, 7
    %v2179 = vsub.s32 %v2176, %v2178
    %v2180 = vrot.slane %v2157, %v2179
    %v2182 = vunpack.c.l.s4 1935823168
    %v2183 = vunpack.c.0.s8 %v2182
    %v2184 = vlaneseq
    %v2185 = vshrl.u32 %v2184, 7
    %v2186 = vsub.s32 %v2183, %v2185
    %v2187 = vrot.slane %v2159, %v2186
    %v2189 = vunpack.c.l.s4 1935823168
    %v2190 = vunpack.c.0.s8 %v2189
    %v2191 = vlaneseq
    %v2192 = vshrl.u32 %v2191, 7
    %v2193 = vsub.s32 %v2190, %v2192
    %v2194 = vrot.slane %v2094, %v2193
    %v2196 = vunpack.c.l.s4 1935823168
    %v2197 = vunpack.c.0.s8 %v2196
    %v2198 = vlaneseq
    %v2199 = vshrl.u32 %v2198, 7
    %v2200 = vsub.s32 %v2197, %v2199
    %v2201 = vrot.slane %v2194, %v2200
    %v2203 = vshll.u32 %v2121, 16
    %v2206 = vshll.u32 %v2128, 16
    %v2209 = vshll.u32 %v2135, 16
    %v2212 = vshll.u32 %v2142, 16
    %v2215 = vshll.u32 %v2166, 16
    %v2218 = vshll.u32 %v2173, 16
    %v2221 = vshll.u32 %v2180, 16
    %v2224 = vshll.u32 %v2187, 16
    %v2227 = vshll.u32 %v2201, 16
    %2229 = vrot.lane.b32.xlu0 %v2203, 60
    %v2230 = vpop.permute.xlu0 %2229
    %2231 = vrot.lane.b32.xlu0 %v2206, 60
    %v2232 = vpop.permute.xlu0 %2231
    %2233 = vrot.lane.b32.xlu0 %v2209, 60
    %v2234 = vpop.permute.xlu0 %2233
    %2235 = vrot.lane.b32.xlu0 %v2212, 60
    %v2236 = vpop.permute.xlu0 %2235
    %2237 = vrot.lane.b32.xlu0 %v2215, 60
    %v2238 = vpop.permute.xlu0 %2237
    %2239 = vrot.lane.b32.xlu0 %v2218, 60
    %v2240 = vpop.permute.xlu0 %2239
    %2241 = vrot.lane.b32.xlu0 %v2221, 60
    %v2242 = vpop.permute.xlu0 %2241
    %2243 = vrot.lane.b32.xlu0 %v2224, 60
    %v2244 = vpop.permute.xlu0 %2243
    %2245 = vrot.lane.b32.xlu0 %v2227, 60
    %v2246 = vpop.permute.xlu0 %2245
    %v2247 = vrot.slane %v2230, 4
    %v2248 = vrot.slane %v2232, 4
    %v2249 = vrot.slane %v2234, 4
    %v2250 = vrot.slane %v2236, 4
    %v2251 = vrot.slane %v2238, 4
    %v2252 = vrot.slane %v2240, 4
    %v2253 = vrot.slane %v2242, 4
    %v2254 = vrot.slane %v2244, 4
    %v2255 = vrot.slane %v2246, 4
    %v2256 = vsel %vm452, %v2247, %v2248
    %vm2257 = vcmask 490496
    %v2258 = vsel %vm2257, %v2230, %v2256
    %v2259 = vsel %vm452, %v2248, %v2249
    %v2260 = vsel %vm2257, %v2232, %v2259
    %v2261 = vsel %vm452, %v2249, %v2250
    %v2262 = vsel %vm2257, %v2234, %v2261
    %v2263 = vsel %vm452, %v2250, %v2251
    %v2264 = vsel %vm2257, %v2236, %v2263
    %v2265 = vsel %vm452, %v2251, %v2252
    %v2266 = vsel %vm2257, %v2238, %v2265
    %v2267 = vsel %vm452, %v2252, %v2253
    %v2268 = vsel %vm2257, %v2240, %v2267
    %v2269 = vsel %vm452, %v2253, %v2254
    %v2270 = vsel %vm2257, %v2242, %v2269
    %v2271 = vsel %vm452, %v2254, %v2255
    %v2272 = vsel %vm2257, %v2244, %v2271
    %v2281 = vld [vmem:[#allocation3 + $0x40] sm:$0x11]
    %v2282 = vsel %vm696, %v2258, %v2281
    %2283 = vst [vmem:[#allocation3 + $0x40] sm:$0x11] %v2282
    %v2284 = vld [vmem:[#allocation3 + $0x48] sm:$0x11]
    %v2285 = vsel %vm696, %v2260, %v2284
    %2286 = vst [vmem:[#allocation3 + $0x48] sm:$0x11] %v2285
    %v2287 = vld [vmem:[#allocation3 + $0x50] sm:$0x11]
    %v2288 = vsel %vm696, %v2262, %v2287
    %2289 = vst [vmem:[#allocation3 + $0x50] sm:$0x11] %v2288
    %v2290 = vld [vmem:[#allocation3 + $0x58] sm:$0x11]
    %v2291 = vsel %vm696, %v2264, %v2290
    %2292 = vst [vmem:[#allocation3 + $0x58] sm:$0x11] %v2291
    %v2293 = vld [vmem:[#allocation3 + $0x60] sm:$0x11]
    %v2294 = vsel %vm696, %v2266, %v2293
    %2295 = vst [vmem:[#allocation3 + $0x60] sm:$0x11] %v2294
    %v2296 = vld [vmem:[#allocation3 + $0x68] sm:$0x11]
    %v2297 = vsel %vm696, %v2268, %v2296
    %2298 = vst [vmem:[#allocation3 + $0x68] sm:$0x11] %v2297
    %v2299 = vld [vmem:[#allocation3 + $0x70] sm:$0x11]
    %v2300 = vsel %vm696, %v2270, %v2299
    %2301 = vst [vmem:[#allocation3 + $0x70] sm:$0x11] %v2300
    %v2302 = vld [vmem:[#allocation3 + $0x78] sm:$0x11]
    %v2303 = vsel %vm696, %v2272, %v2302
    %2304 = vst [vmem:[#allocation3 + $0x78] sm:$0x11] %v2303
    %v2305 = vld [vmem:[#allocation2 + $0x1] sm:$0xff]
    %v2306 = vld [vmem:[#allocation2 + $0x9] sm:$0xff]
    %v2307 = vld [vmem:[#allocation2 + $0x11] sm:$0x1]
    %v2311 = vcombine.high %v2305, %v2305
    %v2313 = vunpack.c.l.s4 1935823168
    %v2314 = vunpack.c.0.s8 %v2313
    %v2315 = vlaneseq
    %v2316 = vshrl.u32 %v2315, 7
    %v2317 = vsub.s32 %v2314, %v2316
    %v2318 = vrot.slane %v2305, %v2317
    %v2320 = vunpack.c.l.s4 1935823168
    %v2321 = vunpack.c.0.s8 %v2320
    %v2322 = vlaneseq
    %v2323 = vshrl.u32 %v2322, 7
    %v2324 = vsub.s32 %v2321, %v2323
    %v2325 = vrot.slane %v2311, %v2324
    %v2326 = vcombine.low %v2318, %v2318
    %v2327 = vcombine.low %v2325, %v2325
    %v2329 = vunpack.c.l.s4 1935823168
    %v2330 = vunpack.c.0.s8 %v2329
    %v2331 = vlaneseq
    %v2332 = vshrl.u32 %v2331, 7
    %v2333 = vsub.s32 %v2330, %v2332
    %v2334 = vrot.slane %v2326, %v2333
    %v2336 = vunpack.c.l.s4 1935823168
    %v2337 = vunpack.c.0.s8 %v2336
    %v2338 = vlaneseq
    %v2339 = vshrl.u32 %v2338, 7
    %v2340 = vsub.s32 %v2337, %v2339
    %v2341 = vrot.slane %v2318, %v2340
    %v2343 = vunpack.c.l.s4 1935823168
    %v2344 = vunpack.c.0.s8 %v2343
    %v2345 = vlaneseq
    %v2346 = vshrl.u32 %v2345, 7
    %v2347 = vsub.s32 %v2344, %v2346
    %v2348 = vrot.slane %v2327, %v2347
    %v2350 = vunpack.c.l.s4 1935823168
    %v2351 = vunpack.c.0.s8 %v2350
    %v2352 = vlaneseq
    %v2353 = vshrl.u32 %v2352, 7
    %v2354 = vsub.s32 %v2351, %v2353
    %v2355 = vrot.slane %v2325, %v2354
    %v2356 = vcombine.high %v2306, %v2306
    %v2358 = vunpack.c.l.s4 1935823168
    %v2359 = vunpack.c.0.s8 %v2358
    %v2360 = vlaneseq
    %v2361 = vshrl.u32 %v2360, 7
    %v2362 = vsub.s32 %v2359, %v2361
    %v2363 = vrot.slane %v2306, %v2362
    %v2365 = vunpack.c.l.s4 1935823168
    %v2366 = vunpack.c.0.s8 %v2365
    %v2367 = vlaneseq
    %v2368 = vshrl.u32 %v2367, 7
    %v2369 = vsub.s32 %v2366, %v2368
    %v2370 = vrot.slane %v2356, %v2369
    %v2371 = vcombine.low %v2363, %v2363
    %v2372 = vcombine.low %v2370, %v2370
    %v2374 = vunpack.c.l.s4 1935823168
    %v2375 = vunpack.c.0.s8 %v2374
    %v2376 = vlaneseq
    %v2377 = vshrl.u32 %v2376, 7
    %v2378 = vsub.s32 %v2375, %v2377
    %v2379 = vrot.slane %v2371, %v2378
    %v2381 = vunpack.c.l.s4 1935823168
    %v2382 = vunpack.c.0.s8 %v2381
    %v2383 = vlaneseq
    %v2384 = vshrl.u32 %v2383, 7
    %v2385 = vsub.s32 %v2382, %v2384
    %v2386 = vrot.slane %v2363, %v2385
    %v2388 = vunpack.c.l.s4 1935823168
    %v2389 = vunpack.c.0.s8 %v2388
    %v2390 = vlaneseq
    %v2391 = vshrl.u32 %v2390, 7
    %v2392 = vsub.s32 %v2389, %v2391
    %v2393 = vrot.slane %v2372, %v2392
    %v2395 = vunpack.c.l.s4 1935823168
    %v2396 = vunpack.c.0.s8 %v2395
    %v2397 = vlaneseq
    %v2398 = vshrl.u32 %v2397, 7
    %v2399 = vsub.s32 %v2396, %v2398
    %v2400 = vrot.slane %v2370, %v2399
    %v2402 = vunpack.c.l.s4 1935823168
    %v2403 = vunpack.c.0.s8 %v2402
    %v2404 = vlaneseq
    %v2405 = vshrl.u32 %v2404, 7
    %v2406 = vsub.s32 %v2403, %v2405
    %v2407 = vrot.slane %v2307, %v2406
    %v2408 = vcombine.low %v2407, %v2407
    %v2410 = vunpack.c.l.s4 1935823168
    %v2411 = vunpack.c.0.s8 %v2410
    %v2412 = vlaneseq
    %v2413 = vshrl.u32 %v2412, 7
    %v2414 = vsub.s32 %v2411, %v2413
    %v2415 = vrot.slane %v2408, %v2414
    %2416 = vrot.lane.b32.xlu0 %v2334, 4
    %v2417 = vpop.permute.xlu0 %2416
    %2418 = vrot.lane.b32.xlu0 %v2341, 4
    %v2419 = vpop.permute.xlu0 %2418
    %2420 = vrot.lane.b32.xlu0 %v2348, 4
    %v2421 = vpop.permute.xlu0 %2420
    %2422 = vrot.lane.b32.xlu0 %v2355, 4
    %v2423 = vpop.permute.xlu0 %2422
    %2424 = vrot.lane.b32.xlu0 %v2379, 4
    %v2425 = vpop.permute.xlu0 %2424
    %2426 = vrot.lane.b32.xlu0 %v2386, 4
    %v2427 = vpop.permute.xlu0 %2426
    %2428 = vrot.lane.b32.xlu0 %v2393, 4
    %v2429 = vpop.permute.xlu0 %2428
    %2430 = vrot.lane.b32.xlu0 %v2400, 4
    %v2431 = vpop.permute.xlu0 %2430
    %2432 = vrot.lane.b32.xlu0 %v2415, 4
    %v2433 = vpop.permute.xlu0 %2432
    %v2434 = vrot.slane %v2417, 4
    %v2435 = vrot.slane %v2419, 4
    %v2436 = vrot.slane %v2421, 4
    %v2437 = vrot.slane %v2423, 4
    %v2438 = vrot.slane %v2425, 4
    %v2439 = vrot.slane %v2427, 4
    %v2440 = vrot.slane %v2429, 4
    %v2441 = vrot.slane %v2431, 4
    %v2442 = vrot.slane %v2433, 4
    %v2443 = vsel %vm452, %v2434, %v2435
    %v2444 = vsel %vm454, %v2417, %v2443
    %v2445 = vsel %vm452, %v2435, %v2436
    %v2446 = vsel %vm454, %v2419, %v2445
    %v2447 = vsel %vm452, %v2436, %v2437
    %v2448 = vsel %vm454, %v2421, %v2447
    %v2449 = vsel %vm452, %v2437, %v2438
    %v2450 = vsel %vm454, %v2423, %v2449
    %v2451 = vsel %vm452, %v2438, %v2439
    %v2452 = vsel %vm454, %v2425, %v2451
    %v2453 = vsel %vm452, %v2439, %v2440
    %v2454 = vsel %vm454, %v2427, %v2453
    %v2455 = vsel %vm452, %v2440, %v2441
    %v2456 = vsel %vm454, %v2429, %v2455
    %v2457 = vsel %vm452, %v2441, %v2442
    %v2458 = vsel %vm454, %v2431, %v2457
    %v2467 = vld [vmem:[#allocation3 + $0x40] sm:$0x22]
    %v2468 = vsel %vm823, %v2444, %v2467
    %2469 = vst [vmem:[#allocation3 + $0x40] sm:$0x22] %v2468
    %v2470 = vld [vmem:[#allocation3 + $0x48] sm:$0x22]
    %v2471 = vsel %vm823, %v2446, %v2470
    %2472 = vst [vmem:[#allocation3 + $0x48] sm:$0x22] %v2471
    %v2473 = vld [vmem:[#allocation3 + $0x50] sm:$0x22]
    %v2474 = vsel %vm823, %v2448, %v2473
    %2475 = vst [vmem:[#allocation3 + $0x50] sm:$0x22] %v2474
    %v2476 = vld [vmem:[#allocation3 + $0x58] sm:$0x22]
    %v2477 = vsel %vm823, %v2450, %v2476
    %2478 = vst [vmem:[#allocation3 + $0x58] sm:$0x22] %v2477
    %v2479 = vld [vmem:[#allocation3 + $0x60] sm:$0x22]
    %v2480 = vsel %vm823, %v2452, %v2479
    %2481 = vst [vmem:[#allocation3 + $0x60] sm:$0x22] %v2480
    %v2482 = vld [vmem:[#allocation3 + $0x68] sm:$0x22]
    %v2483 = vsel %vm823, %v2454, %v2482
    %2484 = vst [vmem:[#allocation3 + $0x68] sm:$0x22] %v2483
    %v2485 = vld [vmem:[#allocation3 + $0x70] sm:$0x22]
    %v2486 = vsel %vm823, %v2456, %v2485
    %2487 = vst [vmem:[#allocation3 + $0x70] sm:$0x22] %v2486
    %v2488 = vld [vmem:[#allocation3 + $0x78] sm:$0x22]
    %v2489 = vsel %vm823, %v2458, %v2488
    %2490 = vst [vmem:[#allocation3 + $0x78] sm:$0x22] %v2489
    %v2491 = vld [vmem:[#allocation2 + $0x1] sm:$0xff]
    %v2492 = vld [vmem:[#allocation2 + $0x9] sm:$0xff]
    %v2493 = vld [vmem:[#allocation2 + $0x11] sm:$0x1]
    %v2497 = vcombine.high %v2491, %v2491
    %v2499 = vunpack.c.l.s4 1935823168
    %v2500 = vunpack.c.0.s8 %v2499
    %v2501 = vlaneseq
    %v2502 = vshrl.u32 %v2501, 7
    %v2503 = vsub.s32 %v2500, %v2502
    %v2504 = vrot.slane %v2491, %v2503
    %v2506 = vunpack.c.l.s4 1935823168
    %v2507 = vunpack.c.0.s8 %v2506
    %v2508 = vlaneseq
    %v2509 = vshrl.u32 %v2508, 7
    %v2510 = vsub.s32 %v2507, %v2509
    %v2511 = vrot.slane %v2497, %v2510
    %v2512 = vcombine.high %v2504, %v2504
    %v2513 = vcombine.high %v2511, %v2511
    %v2515 = vunpack.c.l.s4 1935823168
    %v2516 = vunpack.c.0.s8 %v2515
    %v2517 = vlaneseq
    %v2518 = vshrl.u32 %v2517, 7
    %v2519 = vsub.s32 %v2516, %v2518
    %v2520 = vrot.slane %v2504, %v2519
    %v2522 = vunpack.c.l.s4 1935823168
    %v2523 = vunpack.c.0.s8 %v2522
    %v2524 = vlaneseq
    %v2525 = vshrl.u32 %v2524, 7
    %v2526 = vsub.s32 %v2523, %v2525
    %v2527 = vrot.slane %v2512, %v2526
    %v2529 = vunpack.c.l.s4 1935823168
    %v2530 = vunpack.c.0.s8 %v2529
    %v2531 = vlaneseq
    %v2532 = vshrl.u32 %v2531, 7
    %v2533 = vsub.s32 %v2530, %v2532
    %v2534 = vrot.slane %v2511, %v2533
    %v2536 = vunpack.c.l.s4 1935823168
    %v2537 = vunpack.c.0.s8 %v2536
    %v2538 = vlaneseq
    %v2539 = vshrl.u32 %v2538, 7
    %v2540 = vsub.s32 %v2537, %v2539
    %v2541 = vrot.slane %v2513, %v2540
    %v2542 = vcombine.high %v2492, %v2492
    %v2544 = vunpack.c.l.s4 1935823168
    %v2545 = vunpack.c.0.s8 %v2544
    %v2546 = vlaneseq
    %v2547 = vshrl.u32 %v2546, 7
    %v2548 = vsub.s32 %v2545, %v2547
    %v2549 = vrot.slane %v2492, %v2548
    %v2551 = vunpack.c.l.s4 1935823168
    %v2552 = vunpack.c.0.s8 %v2551
    %v2553 = vlaneseq
    %v2554 = vshrl.u32 %v2553, 7
    %v2555 = vsub.s32 %v2552, %v2554
    %v2556 = vrot.slane %v2542, %v2555
    %v2557 = vcombine.high %v2549, %v2549
    %v2558 = vcombine.high %v2556, %v2556
    %v2560 = vunpack.c.l.s4 1935823168
    %v2561 = vunpack.c.0.s8 %v2560
    %v2562 = vlaneseq
    %v2563 = vshrl.u32 %v2562, 7
    %v2564 = vsub.s32 %v2561, %v2563
    %v2565 = vrot.slane %v2549, %v2564
    %v2567 = vunpack.c.l.s4 1935823168
    %v2568 = vunpack.c.0.s8 %v2567
    %v2569 = vlaneseq
    %v2570 = vshrl.u32 %v2569, 7
    %v2571 = vsub.s32 %v2568, %v2570
    %v2572 = vrot.slane %v2557, %v2571
    %v2574 = vunpack.c.l.s4 1935823168
    %v2575 = vunpack.c.0.s8 %v2574
    %v2576 = vlaneseq
    %v2577 = vshrl.u32 %v2576, 7
    %v2578 = vsub.s32 %v2575, %v2577
    %v2579 = vrot.slane %v2556, %v2578
    %v2581 = vunpack.c.l.s4 1935823168
    %v2582 = vunpack.c.0.s8 %v2581
    %v2583 = vlaneseq
    %v2584 = vshrl.u32 %v2583, 7
    %v2585 = vsub.s32 %v2582, %v2584
    %v2586 = vrot.slane %v2558, %v2585
    %v2588 = vunpack.c.l.s4 1935823168
    %v2589 = vunpack.c.0.s8 %v2588
    %v2590 = vlaneseq
    %v2591 = vshrl.u32 %v2590, 7
    %v2592 = vsub.s32 %v2589, %v2591
    %v2593 = vrot.slane %v2493, %v2592
    %v2595 = vunpack.c.l.s4 1935823168
    %v2596 = vunpack.c.0.s8 %v2595
    %v2597 = vlaneseq
    %v2598 = vshrl.u32 %v2597, 7
    %v2599 = vsub.s32 %v2596, %v2598
    %v2600 = vrot.slane %v2593, %v2599
    %v2602 = vshll.u32 %v2520, 16
    %v2604 = vrot.slane %v2602, 7
    %v2606 = vshll.u32 %v2527, 16
    %v2608 = vrot.slane %v2606, 7
    %v2610 = vshll.u32 %v2534, 16
    %v2612 = vrot.slane %v2610, 7
    %v2614 = vshll.u32 %v2541, 16
    %v2616 = vrot.slane %v2614, 7
    %v2618 = vshll.u32 %v2565, 16
    %v2620 = vrot.slane %v2618, 7
    %v2622 = vshll.u32 %v2572, 16
    %v2624 = vrot.slane %v2622, 7
    %v2626 = vshll.u32 %v2579, 16
    %v2628 = vrot.slane %v2626, 7
    %v2630 = vshll.u32 %v2586, 16
    %v2632 = vrot.slane %v2630, 7
    %v2634 = vshll.u32 %v2600, 16
    %v2636 = vrot.slane %v2634, 7
    %2637 = vrot.lane.b32.xlu0 %v2604, 2
    %v2638 = vpop.permute.xlu0 %2637
    %2639 = vrot.lane.b32.xlu0 %v2608, 2
    %v2640 = vpop.permute.xlu0 %2639
    %2641 = vrot.lane.b32.xlu0 %v2612, 2
    %v2642 = vpop.permute.xlu0 %2641
    %2643 = vrot.lane.b32.xlu0 %v2616, 2
    %v2644 = vpop.permute.xlu0 %2643
    %2645 = vrot.lane.b32.xlu0 %v2620, 2
    %v2646 = vpop.permute.xlu0 %2645
    %2647 = vrot.lane.b32.xlu0 %v2624, 2
    %v2648 = vpop.permute.xlu0 %2647
    %2649 = vrot.lane.b32.xlu0 %v2628, 2
    %v2650 = vpop.permute.xlu0 %2649
    %2651 = vrot.lane.b32.xlu0 %v2632, 2
    %v2652 = vpop.permute.xlu0 %2651
    %2653 = vrot.lane.b32.xlu0 %v2636, 2
    %v2654 = vpop.permute.xlu0 %2653
    %v2655 = vrot.slane %v2638, 4
    %v2656 = vrot.slane %v2640, 4
    %v2657 = vrot.slane %v2642, 4
    %v2658 = vrot.slane %v2644, 4
    %v2659 = vrot.slane %v2646, 4
    %v2660 = vrot.slane %v2648, 4
    %v2661 = vrot.slane %v2650, 4
    %v2662 = vrot.slane %v2652, 4
    %v2663 = vrot.slane %v2654, 4
    %v2664 = vsel %vm452, %v2655, %v2656
    %v2665 = vsel %vm668, %v2638, %v2664
    %v2666 = vsel %vm452, %v2656, %v2657
    %v2667 = vsel %vm668, %v2640, %v2666
    %v2668 = vsel %vm452, %v2657, %v2658
    %v2669 = vsel %vm668, %v2642, %v2668
    %v2670 = vsel %vm452, %v2658, %v2659
    %v2671 = vsel %vm668, %v2644, %v2670
    %v2672 = vsel %vm452, %v2659, %v2660
    %v2673 = vsel %vm668, %v2646, %v2672
    %v2674 = vsel %vm452, %v2660, %v2661
    %v2675 = vsel %vm668, %v2648, %v2674
    %v2676 = vsel %vm452, %v2661, %v2662
    %v2677 = vsel %vm668, %v2650, %v2676
    %v2678 = vsel %vm452, %v2662, %v2663
    %v2679 = vsel %vm668, %v2652, %v2678
    %v2688 = vld [vmem:[#allocation3 + $0x40] sm:$0x22]
    %v2689 = vsel %vm1050, %v2665, %v2688
    %2690 = vst [vmem:[#allocation3 + $0x40] sm:$0x22] %v2689
    %v2691 = vld [vmem:[#allocation3 + $0x48] sm:$0x22]
    %v2692 = vsel %vm1050, %v2667, %v2691
    %2693 = vst [vmem:[#allocation3 + $0x48] sm:$0x22] %v2692
    %v2694 = vld [vmem:[#allocation3 + $0x50] sm:$0x22]
    %v2695 = vsel %vm1050, %v2669, %v2694
    %2696 = vst [vmem:[#allocation3 + $0x50] sm:$0x22] %v2695
    %v2697 = vld [vmem:[#allocation3 + $0x58] sm:$0x22]
    %v2698 = vsel %vm1050, %v2671, %v2697
    %2699 = vst [vmem:[#allocation3 + $0x58] sm:$0x22] %v2698
    %v2700 = vld [vmem:[#allocation3 + $0x60] sm:$0x22]
    %v2701 = vsel %vm1050, %v2673, %v2700
    %2702 = vst [vmem:[#allocation3 + $0x60] sm:$0x22] %v2701
    %v2703 = vld [vmem:[#allocation3 + $0x68] sm:$0x22]
    %v2704 = vsel %vm1050, %v2675, %v2703
    %2705 = vst [vmem:[#allocation3 + $0x68] sm:$0x22] %v2704
    %v2706 = vld [vmem:[#allocation3 + $0x70] sm:$0x22]
    %v2707 = vsel %vm1050, %v2677, %v2706
    %2708 = vst [vmem:[#allocation3 + $0x70] sm:$0x22] %v2707
    %v2709 = vld [vmem:[#allocation3 + $0x78] sm:$0x22]
    %v2710 = vsel %vm1050, %v2679, %v2709
    %2711 = vst [vmem:[#allocation3 + $0x78] sm:$0x22] %v2710
    %v2712 = vld [vmem:[#allocation2 + $0x2] sm:$0xff]
    %v2713 = vld [vmem:[#allocation2 + $0xa] sm:$0xff]
    %v2716 = vcombine.low %v2712, %v2712
    %v2718 = vunpack.c.l.s4 1935823168
    %v2719 = vunpack.c.0.s8 %v2718
    %v2720 = vlaneseq
    %v2721 = vshrl.u32 %v2720, 7
    %v2722 = vsub.s32 %v2719, %v2721
    %v2723 = vrot.slane %v2716, %v2722
    %v2725 = vunpack.c.l.s4 1935823168
    %v2726 = vunpack.c.0.s8 %v2725
    %v2727 = vlaneseq
    %v2728 = vshrl.u32 %v2727, 7
    %v2729 = vsub.s32 %v2726, %v2728
    %v2730 = vrot.slane %v2712, %v2729
    %v2731 = vcombine.high %v2723, %v2723
    %v2732 = vcombine.high %v2730, %v2730
    %v2734 = vunpack.c.l.s4 1935823168
    %v2735 = vunpack.c.0.s8 %v2734
    %v2736 = vlaneseq
    %v2737 = vshrl.u32 %v2736, 7
    %v2738 = vsub.s32 %v2735, %v2737
    %v2739 = vrot.slane %v2723, %v2738
    %v2741 = vunpack.c.l.s4 1935823168
    %v2742 = vunpack.c.0.s8 %v2741
    %v2743 = vlaneseq
    %v2744 = vshrl.u32 %v2743, 7
    %v2745 = vsub.s32 %v2742, %v2744
    %v2746 = vrot.slane %v2731, %v2745
    %v2748 = vunpack.c.l.s4 1935823168
    %v2749 = vunpack.c.0.s8 %v2748
    %v2750 = vlaneseq
    %v2751 = vshrl.u32 %v2750, 7
    %v2752 = vsub.s32 %v2749, %v2751
    %v2753 = vrot.slane %v2730, %v2752
    %v2755 = vunpack.c.l.s4 1935823168
    %v2756 = vunpack.c.0.s8 %v2755
    %v2757 = vlaneseq
    %v2758 = vshrl.u32 %v2757, 7
    %v2759 = vsub.s32 %v2756, %v2758
    %v2760 = vrot.slane %v2732, %v2759
    %v2761 = vcombine.low %v2713, %v2713
    %v2763 = vunpack.c.l.s4 1935823168
    %v2764 = vunpack.c.0.s8 %v2763
    %v2765 = vlaneseq
    %v2766 = vshrl.u32 %v2765, 7
    %v2767 = vsub.s32 %v2764, %v2766
    %v2768 = vrot.slane %v2761, %v2767
    %v2770 = vunpack.c.l.s4 1935823168
    %v2771 = vunpack.c.0.s8 %v2770
    %v2772 = vlaneseq
    %v2773 = vshrl.u32 %v2772, 7
    %v2774 = vsub.s32 %v2771, %v2773
    %v2775 = vrot.slane %v2713, %v2774
    %v2776 = vcombine.high %v2768, %v2768
    %v2777 = vcombine.high %v2775, %v2775
    %v2779 = vunpack.c.l.s4 1935823168
    %v2780 = vunpack.c.0.s8 %v2779
    %v2781 = vlaneseq
    %v2782 = vshrl.u32 %v2781, 7
    %v2783 = vsub.s32 %v2780, %v2782
    %v2784 = vrot.slane %v2768, %v2783
    %v2786 = vunpack.c.l.s4 1935823168
    %v2787 = vunpack.c.0.s8 %v2786
    %v2788 = vlaneseq
    %v2789 = vshrl.u32 %v2788, 7
    %v2790 = vsub.s32 %v2787, %v2789
    %v2791 = vrot.slane %v2776, %v2790
    %v2793 = vunpack.c.l.s4 1935823168
    %v2794 = vunpack.c.0.s8 %v2793
    %v2795 = vlaneseq
    %v2796 = vshrl.u32 %v2795, 7
    %v2797 = vsub.s32 %v2794, %v2796
    %v2798 = vrot.slane %v2775, %v2797
    %v2800 = vunpack.c.l.s4 1935823168
    %v2801 = vunpack.c.0.s8 %v2800
    %v2802 = vlaneseq
    %v2803 = vshrl.u32 %v2802, 7
    %v2804 = vsub.s32 %v2801, %v2803
    %v2805 = vrot.slane %v2777, %v2804
    %v2814 = vld [vmem:[#allocation3 + $0x40] sm:$0x44]
    %v2815 = vsel %vm1238, %v2739, %v2814
    %2816 = vst [vmem:[#allocation3 + $0x40] sm:$0x44] %v2815
    %v2817 = vld [vmem:[#allocation3 + $0x48] sm:$0x44]
    %v2818 = vsel %vm1238, %v2746, %v2817
    %2819 = vst [vmem:[#allocation3 + $0x48] sm:$0x44] %v2818
    %v2820 = vld [vmem:[#allocation3 + $0x50] sm:$0x44]
    %v2821 = vsel %vm1238, %v2753, %v2820
    %2822 = vst [vmem:[#allocation3 + $0x50] sm:$0x44] %v2821
    %v2823 = vld [vmem:[#allocation3 + $0x58] sm:$0x44]
    %v2824 = vsel %vm1238, %v2760, %v2823
    %2825 = vst [vmem:[#allocation3 + $0x58] sm:$0x44] %v2824
    %v2826 = vld [vmem:[#allocation3 + $0x60] sm:$0x44]
    %v2827 = vsel %vm1238, %v2784, %v2826
    %2828 = vst [vmem:[#allocation3 + $0x60] sm:$0x44] %v2827
    %v2829 = vld [vmem:[#allocation3 + $0x68] sm:$0x44]
    %v2830 = vsel %vm1238, %v2791, %v2829
    %2831 = vst [vmem:[#allocation3 + $0x68] sm:$0x44] %v2830
    %v2832 = vld [vmem:[#allocation3 + $0x70] sm:$0x44]
    %v2833 = vsel %vm1238, %v2798, %v2832
    %2834 = vst [vmem:[#allocation3 + $0x70] sm:$0x44] %v2833
    %v2835 = vld [vmem:[#allocation3 + $0x78] sm:$0x44]
    %v2836 = vsel %vm1238, %v2805, %v2835
    %2837 = vst [vmem:[#allocation3 + $0x78] sm:$0x44] %v2836
    %v2838 = vld [vmem:[#allocation2 + $0x2] sm:$0xff]
    %v2839 = vld [vmem:[#allocation2 + $0xa] sm:$0xff]
    %v2840 = vld [vmem:[#allocation2 + $0x12] sm:$0x1]
    %v2844 = vcombine.high %v2838, %v2838
    %v2846 = vunpack.c.l.s4 1935823168
    %v2847 = vunpack.c.0.s8 %v2846
    %v2848 = vlaneseq
    %v2849 = vshrl.u32 %v2848, 7
    %v2850 = vsub.s32 %v2847, %v2849
    %v2851 = vrot.slane %v2838, %v2850
    %v2853 = vunpack.c.l.s4 1935823168
    %v2854 = vunpack.c.0.s8 %v2853
    %v2855 = vlaneseq
    %v2856 = vshrl.u32 %v2855, 7
    %v2857 = vsub.s32 %v2854, %v2856
    %v2858 = vrot.slane %v2844, %v2857
    %v2859 = vcombine.high %v2851, %v2851
    %v2860 = vcombine.high %v2858, %v2858
    %v2862 = vunpack.c.l.s4 1935823168
    %v2863 = vunpack.c.0.s8 %v2862
    %v2864 = vlaneseq
    %v2865 = vshrl.u32 %v2864, 7
    %v2866 = vsub.s32 %v2863, %v2865
    %v2867 = vrot.slane %v2851, %v2866
    %v2869 = vunpack.c.l.s4 1935823168
    %v2870 = vunpack.c.0.s8 %v2869
    %v2871 = vlaneseq
    %v2872 = vshrl.u32 %v2871, 7
    %v2873 = vsub.s32 %v2870, %v2872
    %v2874 = vrot.slane %v2859, %v2873
    %v2876 = vunpack.c.l.s4 1935823168
    %v2877 = vunpack.c.0.s8 %v2876
    %v2878 = vlaneseq
    %v2879 = vshrl.u32 %v2878, 7
    %v2880 = vsub.s32 %v2877, %v2879
    %v2881 = vrot.slane %v2858, %v2880
    %v2883 = vunpack.c.l.s4 1935823168
    %v2884 = vunpack.c.0.s8 %v2883
    %v2885 = vlaneseq
    %v2886 = vshrl.u32 %v2885, 7
    %v2887 = vsub.s32 %v2884, %v2886
    %v2888 = vrot.slane %v2860, %v2887
    %v2889 = vcombine.high %v2839, %v2839
    %v2891 = vunpack.c.l.s4 1935823168
    %v2892 = vunpack.c.0.s8 %v2891
    %v2893 = vlaneseq
    %v2894 = vshrl.u32 %v2893, 7
    %v2895 = vsub.s32 %v2892, %v2894
    %v2896 = vrot.slane %v2839, %v2895
    %v2898 = vunpack.c.l.s4 1935823168
    %v2899 = vunpack.c.0.s8 %v2898
    %v2900 = vlaneseq
    %v2901 = vshrl.u32 %v2900, 7
    %v2902 = vsub.s32 %v2899, %v2901
    %v2903 = vrot.slane %v2889, %v2902
    %v2904 = vcombine.high %v2896, %v2896
    %v2905 = vcombine.high %v2903, %v2903
    %v2907 = vunpack.c.l.s4 1935823168
    %v2908 = vunpack.c.0.s8 %v2907
    %v2909 = vlaneseq
    %v2910 = vshrl.u32 %v2909, 7
    %v2911 = vsub.s32 %v2908, %v2910
    %v2912 = vrot.slane %v2896, %v2911
    %v2914 = vunpack.c.l.s4 1935823168
    %v2915 = vunpack.c.0.s8 %v2914
    %v2916 = vlaneseq
    %v2917 = vshrl.u32 %v2916, 7
    %v2918 = vsub.s32 %v2915, %v2917
    %v2919 = vrot.slane %v2904, %v2918
    %v2921 = vunpack.c.l.s4 1935823168
    %v2922 = vunpack.c.0.s8 %v2921
    %v2923 = vlaneseq
    %v2924 = vshrl.u32 %v2923, 7
    %v2925 = vsub.s32 %v2922, %v2924
    %v2926 = vrot.slane %v2903, %v2925
    %v2928 = vunpack.c.l.s4 1935823168
    %v2929 = vunpack.c.0.s8 %v2928
    %v2930 = vlaneseq
    %v2931 = vshrl.u32 %v2930, 7
    %v2932 = vsub.s32 %v2929, %v2931
    %v2933 = vrot.slane %v2905, %v2932
    %v2935 = vunpack.c.l.s4 1935823168
    %v2936 = vunpack.c.0.s8 %v2935
    %v2937 = vlaneseq
    %v2938 = vshrl.u32 %v2937, 7
    %v2939 = vsub.s32 %v2936, %v2938
    %v2940 = vrot.slane %v2840, %v2939
    %v2942 = vunpack.c.l.s4 1935823168
    %v2943 = vunpack.c.0.s8 %v2942
    %v2944 = vlaneseq
    %v2945 = vshrl.u32 %v2944, 7
    %v2946 = vsub.s32 %v2943, %v2945
    %v2947 = vrot.slane %v2940, %v2946
    %v2949 = vshll.u32 %v2867, 16
    %v2951 = vrot.slane %v2949, 6
    %v2953 = vshll.u32 %v2874, 16
    %v2955 = vrot.slane %v2953, 6
    %v2957 = vshll.u32 %v2881, 16
    %v2959 = vrot.slane %v2957, 6
    %v2961 = vshll.u32 %v2888, 16
    %v2963 = vrot.slane %v2961, 6
    %v2965 = vshll.u32 %v2912, 16
    %v2967 = vrot.slane %v2965, 6
    %v2969 = vshll.u32 %v2919, 16
    %v2971 = vrot.slane %v2969, 6
    %v2973 = vshll.u32 %v2926, 16
    %v2975 = vrot.slane %v2973, 6
    %v2977 = vshll.u32 %v2933, 16
    %v2979 = vrot.slane %v2977, 6
    %v2981 = vshll.u32 %v2947, 16
    %v2983 = vrot.slane %v2981, 6
    %2984 = vrot.lane.b32.xlu0 %v2951, 126
    %v2985 = vpop.permute.xlu0 %2984
    %2986 = vrot.lane.b32.xlu0 %v2955, 126
    %v2987 = vpop.permute.xlu0 %2986
    %2988 = vrot.lane.b32.xlu0 %v2959, 126
    %v2989 = vpop.permute.xlu0 %2988
    %2990 = vrot.lane.b32.xlu0 %v2963, 126
    %v2991 = vpop.permute.xlu0 %2990
    %2992 = vrot.lane.b32.xlu0 %v2967, 126
    %v2993 = vpop.permute.xlu0 %2992
    %2994 = vrot.lane.b32.xlu0 %v2971, 126
    %v2995 = vpop.permute.xlu0 %2994
    %2996 = vrot.lane.b32.xlu0 %v2975, 126
    %v2997 = vpop.permute.xlu0 %2996
    %2998 = vrot.lane.b32.xlu0 %v2979, 126
    %v2999 = vpop.permute.xlu0 %2998
    %3000 = vrot.lane.b32.xlu0 %v2983, 126
    %v3001 = vpop.permute.xlu0 %3000
    %v3002 = vrot.slane %v2985, 4
    %v3003 = vrot.slane %v2987, 4
    %v3004 = vrot.slane %v2989, 4
    %v3005 = vrot.slane %v2991, 4
    %v3006 = vrot.slane %v2993, 4
    %v3007 = vrot.slane %v2995, 4
    %v3008 = vrot.slane %v2997, 4
    %v3009 = vrot.slane %v2999, 4
    %v3010 = vrot.slane %v3001, 4
    %v3011 = vsel %vm452, %v3002, %v3003
    %v3012 = vsel %vm1022, %v2985, %v3011
    %v3013 = vsel %vm452, %v3003, %v3004
    %v3014 = vsel %vm1022, %v2987, %v3013
    %v3015 = vsel %vm452, %v3004, %v3005
    %v3016 = vsel %vm1022, %v2989, %v3015
    %v3017 = vsel %vm452, %v3005, %v3006
    %v3018 = vsel %vm1022, %v2991, %v3017
    %v3019 = vsel %vm452, %v3006, %v3007
    %v3020 = vsel %vm1022, %v2993, %v3019
    %v3021 = vsel %vm452, %v3007, %v3008
    %v3022 = vsel %vm1022, %v2995, %v3021
    %v3023 = vsel %vm452, %v3008, %v3009
    %v3024 = vsel %vm1022, %v2997, %v3023
    %v3025 = vsel %vm452, %v3009, %v3010
    %v3026 = vsel %vm1022, %v2999, %v3025
    %v3035 = vld [vmem:[#allocation3 + $0x40] sm:$0x44]
    %v3036 = vsel %vm1465, %v3012, %v3035
    %3037 = vst [vmem:[#allocation3 + $0x40] sm:$0x44] %v3036
    %v3038 = vld [vmem:[#allocation3 + $0x48] sm:$0x44]
    %v3039 = vsel %vm1465, %v3014, %v3038
    %3040 = vst [vmem:[#allocation3 + $0x48] sm:$0x44] %v3039
    %v3041 = vld [vmem:[#allocation3 + $0x50] sm:$0x44]
    %v3042 = vsel %vm1465, %v3016, %v3041
    %3043 = vst [vmem:[#allocation3 + $0x50] sm:$0x44] %v3042
    %v3044 = vld [vmem:[#allocation3 + $0x58] sm:$0x44]
    %v3045 = vsel %vm1465, %v3018, %v3044
    %3046 = vst [vmem:[#allocation3 + $0x58] sm:$0x44] %v3045
    %v3047 = vld [vmem:[#allocation3 + $0x60] sm:$0x44]
    %v3048 = vsel %vm1465, %v3020, %v3047
    %3049 = vst [vmem:[#allocation3 + $0x60] sm:$0x44] %v3048
    %v3050 = vld [vmem:[#allocation3 + $0x68] sm:$0x44]
    %v3051 = vsel %vm1465, %v3022, %v3050
    %3052 = vst [vmem:[#allocation3 + $0x68] sm:$0x44] %v3051
    %v3053 = vld [vmem:[#allocation3 + $0x70] sm:$0x44]
    %v3054 = vsel %vm1465, %v3024, %v3053
    %3055 = vst [vmem:[#allocation3 + $0x70] sm:$0x44] %v3054
    %v3056 = vld [vmem:[#allocation3 + $0x78] sm:$0x44]
    %v3057 = vsel %vm1465, %v3026, %v3056
    %3058 = vst [vmem:[#allocation3 + $0x78] sm:$0x44] %v3057
    %v3059 = vld [vmem:[#allocation2 + $0x2] sm:$0xff]
    %v3060 = vld [vmem:[#allocation2 + $0xa] sm:$0xff]
    %v3061 = vld [vmem:[#allocation2 + $0x12] sm:$0x1]
    %v3065 = vcombine.low %v3059, %v3059
    %v3067 = vunpack.c.l.s4 1935823168
    %v3068 = vunpack.c.0.s8 %v3067
    %v3069 = vlaneseq
    %v3070 = vshrl.u32 %v3069, 7
    %v3071 = vsub.s32 %v3068, %v3070
    %v3072 = vrot.slane %v3065, %v3071
    %v3074 = vunpack.c.l.s4 1935823168
    %v3075 = vunpack.c.0.s8 %v3074
    %v3076 = vlaneseq
    %v3077 = vshrl.u32 %v3076, 7
    %v3078 = vsub.s32 %v3075, %v3077
    %v3079 = vrot.slane %v3059, %v3078
    %v3080 = vcombine.low %v3072, %v3072
    %v3081 = vcombine.low %v3079, %v3079
    %v3083 = vunpack.c.l.s4 1935823168
    %v3084 = vunpack.c.0.s8 %v3083
    %v3085 = vlaneseq
    %v3086 = vshrl.u32 %v3085, 7
    %v3087 = vsub.s32 %v3084, %v3086
    %v3088 = vrot.slane %v3080, %v3087
    %v3090 = vunpack.c.l.s4 1935823168
    %v3091 = vunpack.c.0.s8 %v3090
    %v3092 = vlaneseq
    %v3093 = vshrl.u32 %v3092, 7
    %v3094 = vsub.s32 %v3091, %v3093
    %v3095 = vrot.slane %v3072, %v3094
    %v3097 = vunpack.c.l.s4 1935823168
    %v3098 = vunpack.c.0.s8 %v3097
    %v3099 = vlaneseq
    %v3100 = vshrl.u32 %v3099, 7
    %v3101 = vsub.s32 %v3098, %v3100
    %v3102 = vrot.slane %v3081, %v3101
    %v3104 = vunpack.c.l.s4 1935823168
    %v3105 = vunpack.c.0.s8 %v3104
    %v3106 = vlaneseq
    %v3107 = vshrl.u32 %v3106, 7
    %v3108 = vsub.s32 %v3105, %v3107
    %v3109 = vrot.slane %v3079, %v3108
    %v3110 = vcombine.low %v3060, %v3060
    %v3112 = vunpack.c.l.s4 1935823168
    %v3113 = vunpack.c.0.s8 %v3112
    %v3114 = vlaneseq
    %v3115 = vshrl.u32 %v3114, 7
    %v3116 = vsub.s32 %v3113, %v3115
    %v3117 = vrot.slane %v3110, %v3116
    %v3119 = vunpack.c.l.s4 1935823168
    %v3120 = vunpack.c.0.s8 %v3119
    %v3121 = vlaneseq
    %v3122 = vshrl.u32 %v3121, 7
    %v3123 = vsub.s32 %v3120, %v3122
    %v3124 = vrot.slane %v3060, %v3123
    %v3125 = vcombine.low %v3117, %v3117
    %v3126 = vcombine.low %v3124, %v3124
    %v3128 = vunpack.c.l.s4 1935823168
    %v3129 = vunpack.c.0.s8 %v3128
    %v3130 = vlaneseq
    %v3131 = vshrl.u32 %v3130, 7
    %v3132 = vsub.s32 %v3129, %v3131
    %v3133 = vrot.slane %v3125, %v3132
    %v3135 = vunpack.c.l.s4 1935823168
    %v3136 = vunpack.c.0.s8 %v3135
    %v3137 = vlaneseq
    %v3138 = vshrl.u32 %v3137, 7
    %v3139 = vsub.s32 %v3136, %v3138
    %v3140 = vrot.slane %v3117, %v3139
    %v3142 = vunpack.c.l.s4 1935823168
    %v3143 = vunpack.c.0.s8 %v3142
    %v3144 = vlaneseq
    %v3145 = vshrl.u32 %v3144, 7
    %v3146 = vsub.s32 %v3143, %v3145
    %v3147 = vrot.slane %v3126, %v3146
    %v3149 = vunpack.c.l.s4 1935823168
    %v3150 = vunpack.c.0.s8 %v3149
    %v3151 = vlaneseq
    %v3152 = vshrl.u32 %v3151, 7
    %v3153 = vsub.s32 %v3150, %v3152
    %v3154 = vrot.slane %v3124, %v3153
    %v3155 = vcombine.low %v3061, %v3061
    %v3157 = vunpack.c.l.s4 1935823168
    %v3158 = vunpack.c.0.s8 %v3157
    %v3159 = vlaneseq
    %v3160 = vshrl.u32 %v3159, 7
    %v3161 = vsub.s32 %v3158, %v3160
    %v3162 = vrot.slane %v3155, %v3161
    %v3163 = vcombine.low %v3162, %v3162
    %v3165 = vunpack.c.l.s4 1935823168
    %v3166 = vunpack.c.0.s8 %v3165
    %v3167 = vlaneseq
    %v3168 = vshrl.u32 %v3167, 7
    %v3169 = vsub.s32 %v3166, %v3168
    %v3170 = vrot.slane %v3163, %v3169
    %3171 = vrot.lane.b32.xlu0 %v3088, 124
    %v3172 = vpop.permute.xlu0 %3171
    %3173 = vrot.lane.b32.xlu0 %v3095, 124
    %v3174 = vpop.permute.xlu0 %3173
    %3175 = vrot.lane.b32.xlu0 %v3102, 124
    %v3176 = vpop.permute.xlu0 %3175
    %3177 = vrot.lane.b32.xlu0 %v3109, 124
    %v3178 = vpop.permute.xlu0 %3177
    %3179 = vrot.lane.b32.xlu0 %v3133, 124
    %v3180 = vpop.permute.xlu0 %3179
    %3181 = vrot.lane.b32.xlu0 %v3140, 124
    %v3182 = vpop.permute.xlu0 %3181
    %3183 = vrot.lane.b32.xlu0 %v3147, 124
    %v3184 = vpop.permute.xlu0 %3183
    %3185 = vrot.lane.b32.xlu0 %v3154, 124
    %v3186 = vpop.permute.xlu0 %3185
    %3187 = vrot.lane.b32.xlu0 %v3170, 124
    %v3188 = vpop.permute.xlu0 %3187
    %v3189 = vrot.slane %v3172, 4
    %v3190 = vrot.slane %v3174, 4
    %v3191 = vrot.slane %v3176, 4
    %v3192 = vrot.slane %v3178, 4
    %v3193 = vrot.slane %v3180, 4
    %v3194 = vrot.slane %v3182, 4
    %v3195 = vrot.slane %v3184, 4
    %v3196 = vrot.slane %v3186, 4
    %v3197 = vrot.slane %v3188, 4
    %v3198 = vsel %vm452, %v3189, %v3190
    %v3199 = vsel %vm1214, %v3172, %v3198
    %v3200 = vsel %vm452, %v3190, %v3191
    %v3201 = vsel %vm1214, %v3174, %v3200
    %v3202 = vsel %vm452, %v3191, %v3192
    %v3203 = vsel %vm1214, %v3176, %v3202
    %v3204 = vsel %vm452, %v3192, %v3193
    %v3205 = vsel %vm1214, %v3178, %v3204
    %v3206 = vsel %vm452, %v3193, %v3194
    %v3207 = vsel %vm1214, %v3180, %v3206
    %v3208 = vsel %vm452, %v3194, %v3195
    %v3209 = vsel %vm1214, %v3182, %v3208
    %v3210 = vsel %vm452, %v3195, %v3196
    %v3211 = vsel %vm1214, %v3184, %v3210
    %v3212 = vsel %vm452, %v3196, %v3197
    %v3213 = vsel %vm1214, %v3186, %v3212
    %v3222 = vld [vmem:[#allocation3 + $0x40] sm:$0x88]
    %v3223 = vsel %vm1654, %v3199, %v3222
    %3224 = vst [vmem:[#allocation3 + $0x40] sm:$0x88] %v3223
    %v3225 = vld [vmem:[#allocation3 + $0x48] sm:$0x88]
    %v3226 = vsel %vm1654, %v3201, %v3225
    %3227 = vst [vmem:[#allocation3 + $0x48] sm:$0x88] %v3226
    %v3228 = vld [vmem:[#allocation3 + $0x50] sm:$0x88]
    %v3229 = vsel %vm1654, %v3203, %v3228
    %3230 = vst [vmem:[#allocation3 + $0x50] sm:$0x88] %v3229
    %v3231 = vld [vmem:[#allocation3 + $0x58] sm:$0x88]
    %v3232 = vsel %vm1654, %v3205, %v3231
    %3233 = vst [vmem:[#allocation3 + $0x58] sm:$0x88] %v3232
    %v3234 = vld [vmem:[#allocation3 + $0x60] sm:$0x88]
    %v3235 = vsel %vm1654, %v3207, %v3234
    %3236 = vst [vmem:[#allocation3 + $0x60] sm:$0x88] %v3235
    %v3237 = vld [vmem:[#allocation3 + $0x68] sm:$0x88]
    %v3238 = vsel %vm1654, %v3209, %v3237
    %3239 = vst [vmem:[#allocation3 + $0x68] sm:$0x88] %v3238
    %v3240 = vld [vmem:[#allocation3 + $0x70] sm:$0x88]
    %v3241 = vsel %vm1654, %v3211, %v3240
    %3242 = vst [vmem:[#allocation3 + $0x70] sm:$0x88] %v3241
    %v3243 = vld [vmem:[#allocation3 + $0x78] sm:$0x88]
    %v3244 = vsel %vm1654, %v3213, %v3243
    %3245 = vst [vmem:[#allocation3 + $0x78] sm:$0x88] %v3244
    %v3246 = vld [vmem:[#allocation2 + $0x2] sm:$0xff]
    %v3247 = vld [vmem:[#allocation2 + $0xa] sm:$0xff]
    %v3248 = vld [vmem:[#allocation2 + $0x12] sm:$0x1]
    %v3252 = vcombine.high %v3246, %v3246
    %v3254 = vunpack.c.l.s4 1935823168
    %v3255 = vunpack.c.0.s8 %v3254
    %v3256 = vlaneseq
    %v3257 = vshrl.u32 %v3256, 7
    %v3258 = vsub.s32 %v3255, %v3257
    %v3259 = vrot.slane %v3246, %v3258
    %v3261 = vunpack.c.l.s4 1935823168
    %v3262 = vunpack.c.0.s8 %v3261
    %v3263 = vlaneseq
    %v3264 = vshrl.u32 %v3263, 7
    %v3265 = vsub.s32 %v3262, %v3264
    %v3266 = vrot.slane %v3252, %v3265
    %v3267 = vcombine.high %v3259, %v3259
    %v3268 = vcombine.high %v3266, %v3266
    %v3270 = vunpack.c.l.s4 1935823168
    %v3271 = vunpack.c.0.s8 %v3270
    %v3272 = vlaneseq
    %v3273 = vshrl.u32 %v3272, 7
    %v3274 = vsub.s32 %v3271, %v3273
    %v3275 = vrot.slane %v3259, %v3274
    %v3277 = vunpack.c.l.s4 1935823168
    %v3278 = vunpack.c.0.s8 %v3277
    %v3279 = vlaneseq
    %v3280 = vshrl.u32 %v3279, 7
    %v3281 = vsub.s32 %v3278, %v3280
    %v3282 = vrot.slane %v3267, %v3281
    %v3284 = vunpack.c.l.s4 1935823168
    %v3285 = vunpack.c.0.s8 %v3284
    %v3286 = vlaneseq
    %v3287 = vshrl.u32 %v3286, 7
    %v3288 = vsub.s32 %v3285, %v3287
    %v3289 = vrot.slane %v3266, %v3288
    %v3291 = vunpack.c.l.s4 1935823168
    %v3292 = vunpack.c.0.s8 %v3291
    %v3293 = vlaneseq
    %v3294 = vshrl.u32 %v3293, 7
    %v3295 = vsub.s32 %v3292, %v3294
    %v3296 = vrot.slane %v3268, %v3295
    %v3297 = vcombine.high %v3247, %v3247
    %v3299 = vunpack.c.l.s4 1935823168
    %v3300 = vunpack.c.0.s8 %v3299
    %v3301 = vlaneseq
    %v3302 = vshrl.u32 %v3301, 7
    %v3303 = vsub.s32 %v3300, %v3302
    %v3304 = vrot.slane %v3247, %v3303
    %v3306 = vunpack.c.l.s4 1935823168
    %v3307 = vunpack.c.0.s8 %v3306
    %v3308 = vlaneseq
    %v3309 = vshrl.u32 %v3308, 7
    %v3310 = vsub.s32 %v3307, %v3309
    %v3311 = vrot.slane %v3297, %v3310
    %v3312 = vcombine.high %v3304, %v3304
    %v3313 = vcombine.high %v3311, %v3311
    %v3315 = vunpack.c.l.s4 1935823168
    %v3316 = vunpack.c.0.s8 %v3315
    %v3317 = vlaneseq
    %v3318 = vshrl.u32 %v3317, 7
    %v3319 = vsub.s32 %v3316, %v3318
    %v3320 = vrot.slane %v3304, %v3319
    %v3322 = vunpack.c.l.s4 1935823168
    %v3323 = vunpack.c.0.s8 %v3322
    %v3324 = vlaneseq
    %v3325 = vshrl.u32 %v3324, 7
    %v3326 = vsub.s32 %v3323, %v3325
    %v3327 = vrot.slane %v3312, %v3326
    %v3329 = vunpack.c.l.s4 1935823168
    %v3330 = vunpack.c.0.s8 %v3329
    %v3331 = vlaneseq
    %v3332 = vshrl.u32 %v3331, 7
    %v3333 = vsub.s32 %v3330, %v3332
    %v3334 = vrot.slane %v3311, %v3333
    %v3336 = vunpack.c.l.s4 1935823168
    %v3337 = vunpack.c.0.s8 %v3336
    %v3338 = vlaneseq
    %v3339 = vshrl.u32 %v3338, 7
    %v3340 = vsub.s32 %v3337, %v3339
    %v3341 = vrot.slane %v3313, %v3340
    %v3343 = vunpack.c.l.s4 1935823168
    %v3344 = vunpack.c.0.s8 %v3343
    %v3345 = vlaneseq
    %v3346 = vshrl.u32 %v3345, 7
    %v3347 = vsub.s32 %v3344, %v3346
    %v3348 = vrot.slane %v3248, %v3347
    %v3350 = vunpack.c.l.s4 1935823168
    %v3351 = vunpack.c.0.s8 %v3350
    %v3352 = vlaneseq
    %v3353 = vshrl.u32 %v3352, 7
    %v3354 = vsub.s32 %v3351, %v3353
    %v3355 = vrot.slane %v3348, %v3354
    %v3357 = vshll.u32 %v3275, 16
    %v3359 = vrot.slane %v3357, 5
    %v3361 = vshll.u32 %v3282, 16
    %v3363 = vrot.slane %v3361, 5
    %v3365 = vshll.u32 %v3289, 16
    %v3367 = vrot.slane %v3365, 5
    %v3369 = vshll.u32 %v3296, 16
    %v3371 = vrot.slane %v3369, 5
    %v3373 = vshll.u32 %v3320, 16
    %v3375 = vrot.slane %v3373, 5
    %v3377 = vshll.u32 %v3327, 16
    %v3379 = vrot.slane %v3377, 5
    %v3381 = vshll.u32 %v3334, 16
    %v3383 = vrot.slane %v3381, 5
    %v3385 = vshll.u32 %v3341, 16
    %v3387 = vrot.slane %v3385, 5
    %v3389 = vshll.u32 %v3355, 16
    %v3391 = vrot.slane %v3389, 5
    %3392 = vrot.lane.b32.xlu0 %v3359, 68
    %v3393 = vpop.permute.xlu0 %3392
    %3394 = vrot.lane.b32.xlu0 %v3363, 68
    %v3395 = vpop.permute.xlu0 %3394
    %3396 = vrot.lane.b32.xlu0 %v3367, 68
    %v3397 = vpop.permute.xlu0 %3396
    %3398 = vrot.lane.b32.xlu0 %v3371, 68
    %v3399 = vpop.permute.xlu0 %3398
    %3400 = vrot.lane.b32.xlu0 %v3375, 68
    %v3401 = vpop.permute.xlu0 %3400
    %3402 = vrot.lane.b32.xlu0 %v3379, 68
    %v3403 = vpop.permute.xlu0 %3402
    %3404 = vrot.lane.b32.xlu0 %v3383, 68
    %v3405 = vpop.permute.xlu0 %3404
    %3406 = vrot.lane.b32.xlu0 %v3387, 68
    %v3407 = vpop.permute.xlu0 %3406
    %3408 = vrot.lane.b32.xlu0 %v3391, 68
    %v3409 = vpop.permute.xlu0 %3408
    %v3410 = vrot.slane %v3393, 4
    %v3411 = vrot.slane %v3395, 4
    %v3412 = vrot.slane %v3397, 4
    %v3413 = vrot.slane %v3399, 4
    %v3414 = vrot.slane %v3401, 4
    %v3415 = vrot.slane %v3403, 4
    %v3416 = vrot.slane %v3405, 4
    %v3417 = vrot.slane %v3407, 4
    %v3418 = vrot.slane %v3409, 4
    %v3419 = vsel %vm452, %v3410, %v3411
    %v3420 = vsel %vm1437, %v3393, %v3419
    %v3421 = vsel %vm452, %v3411, %v3412
    %v3422 = vsel %vm1437, %v3395, %v3421
    %v3423 = vsel %vm452, %v3412, %v3413
    %v3424 = vsel %vm1437, %v3397, %v3423
    %v3425 = vsel %vm452, %v3413, %v3414
    %v3426 = vsel %vm1437, %v3399, %v3425
    %v3427 = vsel %vm452, %v3414, %v3415
    %v3428 = vsel %vm1437, %v3401, %v3427
    %v3429 = vsel %vm452, %v3415, %v3416
    %v3430 = vsel %vm1437, %v3403, %v3429
    %v3431 = vsel %vm452, %v3416, %v3417
    %v3432 = vsel %vm1437, %v3405, %v3431
    %v3433 = vsel %vm452, %v3417, %v3418
    %v3434 = vsel %vm1437, %v3407, %v3433
    %v3443 = vld [vmem:[#allocation3 + $0x40] sm:$0x88]
    %v3444 = vsel %vm1881, %v3420, %v3443
    %3445 = vst [vmem:[#allocation3 + $0x40] sm:$0x88] %v3444
    %v3446 = vld [vmem:[#allocation3 + $0x48] sm:$0x88]
    %v3447 = vsel %vm1881, %v3422, %v3446
    %3448 = vst [vmem:[#allocation3 + $0x48] sm:$0x88] %v3447
    %v3449 = vld [vmem:[#allocation3 + $0x50] sm:$0x88]
    %v3450 = vsel %vm1881, %v3424, %v3449
    %3451 = vst [vmem:[#allocation3 + $0x50] sm:$0x88] %v3450
    %v3452 = vld [vmem:[#allocation3 + $0x58] sm:$0x88]
    %v3453 = vsel %vm1881, %v3426, %v3452
    %3454 = vst [vmem:[#allocation3 + $0x58] sm:$0x88] %v3453
    %v3455 = vld [vmem:[#allocation3 + $0x60] sm:$0x88]
    %v3456 = vsel %vm1881, %v3428, %v3455
    %3457 = vst [vmem:[#allocation3 + $0x60] sm:$0x88] %v3456
    %v3458 = vld [vmem:[#allocation3 + $0x68] sm:$0x88]
    %v3459 = vsel %vm1881, %v3430, %v3458
    %3460 = vst [vmem:[#allocation3 + $0x68] sm:$0x88] %v3459
    %v3461 = vld [vmem:[#allocation3 + $0x70] sm:$0x88]
    %v3462 = vsel %vm1881, %v3432, %v3461
    %3463 = vst [vmem:[#allocation3 + $0x70] sm:$0x88] %v3462
    %v3464 = vld [vmem:[#allocation3 + $0x78] sm:$0x88]
    %v3465 = vsel %vm1881, %v3434, %v3464
    %3466 = vst [vmem:[#allocation3 + $0x78] sm:$0x88] %v3465
    %v3467 = vld [vmem:[#allocation2 + $0x2] sm:$0xff]
    %v3468 = vld [vmem:[#allocation2 + $0xa] sm:$0xff]
    %v3469 = vld [vmem:[#allocation2 + $0x12] sm:$0x1]
    %v3473 = vcombine.high %v3467, %v3467
    %v3475 = vunpack.c.l.s4 1935823168
    %v3476 = vunpack.c.0.s8 %v3475
    %v3477 = vlaneseq
    %v3478 = vshrl.u32 %v3477, 7
    %v3479 = vsub.s32 %v3476, %v3478
    %v3480 = vrot.slane %v3467, %v3479
    %v3482 = vunpack.c.l.s4 1935823168
    %v3483 = vunpack.c.0.s8 %v3482
    %v3484 = vlaneseq
    %v3485 = vshrl.u32 %v3484, 7
    %v3486 = vsub.s32 %v3483, %v3485
    %v3487 = vrot.slane %v3473, %v3486
    %v3488 = vcombine.high %v3480, %v3480
    %v3489 = vcombine.high %v3487, %v3487
    %v3491 = vunpack.c.l.s4 1935823168
    %v3492 = vunpack.c.0.s8 %v3491
    %v3493 = vlaneseq
    %v3494 = vshrl.u32 %v3493, 7
    %v3495 = vsub.s32 %v3492, %v3494
    %v3496 = vrot.slane %v3480, %v3495
    %v3498 = vunpack.c.l.s4 1935823168
    %v3499 = vunpack.c.0.s8 %v3498
    %v3500 = vlaneseq
    %v3501 = vshrl.u32 %v3500, 7
    %v3502 = vsub.s32 %v3499, %v3501
    %v3503 = vrot.slane %v3488, %v3502
    %v3505 = vunpack.c.l.s4 1935823168
    %v3506 = vunpack.c.0.s8 %v3505
    %v3507 = vlaneseq
    %v3508 = vshrl.u32 %v3507, 7
    %v3509 = vsub.s32 %v3506, %v3508
    %v3510 = vrot.slane %v3487, %v3509
    %v3512 = vunpack.c.l.s4 1935823168
    %v3513 = vunpack.c.0.s8 %v3512
    %v3514 = vlaneseq
    %v3515 = vshrl.u32 %v3514, 7
    %v3516 = vsub.s32 %v3513, %v3515
    %v3517 = vrot.slane %v3489, %v3516
    %v3518 = vcombine.high %v3468, %v3468
    %v3520 = vunpack.c.l.s4 1935823168
    %v3521 = vunpack.c.0.s8 %v3520
    %v3522 = vlaneseq
    %v3523 = vshrl.u32 %v3522, 7
    %v3524 = vsub.s32 %v3521, %v3523
    %v3525 = vrot.slane %v3468, %v3524
    %v3527 = vunpack.c.l.s4 1935823168
    %v3528 = vunpack.c.0.s8 %v3527
    %v3529 = vlaneseq
    %v3530 = vshrl.u32 %v3529, 7
    %v3531 = vsub.s32 %v3528, %v3530
    %v3532 = vrot.slane %v3518, %v3531
    %v3533 = vcombine.high %v3525, %v3525
    %v3534 = vcombine.high %v3532, %v3532
    %v3536 = vunpack.c.l.s4 1935823168
    %v3537 = vunpack.c.0.s8 %v3536
    %v3538 = vlaneseq
    %v3539 = vshrl.u32 %v3538, 7
    %v3540 = vsub.s32 %v3537, %v3539
    %v3541 = vrot.slane %v3525, %v3540
    %v3543 = vunpack.c.l.s4 1935823168
    %v3544 = vunpack.c.0.s8 %v3543
    %v3545 = vlaneseq
    %v3546 = vshrl.u32 %v3545, 7
    %v3547 = vsub.s32 %v3544, %v3546
    %v3548 = vrot.slane %v3533, %v3547
    %v3550 = vunpack.c.l.s4 1935823168
    %v3551 = vunpack.c.0.s8 %v3550
    %v3552 = vlaneseq
    %v3553 = vshrl.u32 %v3552, 7
    %v3554 = vsub.s32 %v3551, %v3553
    %v3555 = vrot.slane %v3532, %v3554
    %v3557 = vunpack.c.l.s4 1935823168
    %v3558 = vunpack.c.0.s8 %v3557
    %v3559 = vlaneseq
    %v3560 = vshrl.u32 %v3559, 7
    %v3561 = vsub.s32 %v3558, %v3560
    %v3562 = vrot.slane %v3534, %v3561
    %v3564 = vunpack.c.l.s4 1935823168
    %v3565 = vunpack.c.0.s8 %v3564
    %v3566 = vlaneseq
    %v3567 = vshrl.u32 %v3566, 7
    %v3568 = vsub.s32 %v3565, %v3567
    %v3569 = vrot.slane %v3469, %v3568
    %v3571 = vunpack.c.l.s4 1935823168
    %v3572 = vunpack.c.0.s8 %v3571
    %v3573 = vlaneseq
    %v3574 = vshrl.u32 %v3573, 7
    %v3575 = vsub.s32 %v3572, %v3574
    %v3576 = vrot.slane %v3569, %v3575
    %3577 = vrot.lane.b32.xlu0 %v3496, 66
    %v3578 = vpop.permute.xlu0 %3577
    %3579 = vrot.lane.b32.xlu0 %v3503, 66
    %v3580 = vpop.permute.xlu0 %3579
    %3581 = vrot.lane.b32.xlu0 %v3510, 66
    %v3582 = vpop.permute.xlu0 %3581
    %3583 = vrot.lane.b32.xlu0 %v3517, 66
    %v3584 = vpop.permute.xlu0 %3583
    %3585 = vrot.lane.b32.xlu0 %v3541, 66
    %v3586 = vpop.permute.xlu0 %3585
    %3587 = vrot.lane.b32.xlu0 %v3548, 66
    %v3588 = vpop.permute.xlu0 %3587
    %3589 = vrot.lane.b32.xlu0 %v3555, 66
    %v3590 = vpop.permute.xlu0 %3589
    %3591 = vrot.lane.b32.xlu0 %v3562, 66
    %v3592 = vpop.permute.xlu0 %3591
    %3593 = vrot.lane.b32.xlu0 %v3576, 66
    %v3594 = vpop.permute.xlu0 %3593
    %v3595 = vrot.slane %v3578, 4
    %v3596 = vrot.slane %v3580, 4
    %v3597 = vrot.slane %v3582, 4
    %v3598 = vrot.slane %v3584, 4
    %v3599 = vrot.slane %v3586, 4
    %v3600 = vrot.slane %v3588, 4
    %v3601 = vrot.slane %v3590, 4
    %v3602 = vrot.slane %v3592, 4
    %v3603 = vrot.slane %v3594, 4
    %v3604 = vsel %vm452, %v3595, %v3596
    %v3605 = vsel %vm1630, %v3578, %v3604
    %v3606 = vsel %vm452, %v3596, %v3597
    %v3607 = vsel %vm1630, %v3580, %v3606
    %v3608 = vsel %vm452, %v3597, %v3598
    %v3609 = vsel %vm1630, %v3582, %v3608
    %v3610 = vsel %vm452, %v3598, %v3599
    %v3611 = vsel %vm1630, %v3584, %v3610
    %v3612 = vsel %vm452, %v3599, %v3600
    %v3613 = vsel %vm1630, %v3586, %v3612
    %v3614 = vsel %vm452, %v3600, %v3601
    %v3615 = vsel %vm1630, %v3588, %v3614
    %v3616 = vsel %vm452, %v3601, %v3602
    %v3617 = vsel %vm1630, %v3590, %v3616
    %v3618 = vsel %vm452, %v3602, %v3603
    %v3619 = vsel %vm1630, %v3592, %v3618
    %v3628 = vld [vmem:[#allocation3 + $0x80] sm:$0x11]
    %v3629 = vsel %vm478, %v3605, %v3628
    %3630 = vst [vmem:[#allocation3 + $0x80] sm:$0x11] %v3629
    %v3631 = vld [vmem:[#allocation3 + $0x88] sm:$0x11]
    %v3632 = vsel %vm478, %v3607, %v3631
    %3633 = vst [vmem:[#allocation3 + $0x88] sm:$0x11] %v3632
    %v3634 = vld [vmem:[#allocation3 + $0x90] sm:$0x11]
    %v3635 = vsel %vm478, %v3609, %v3634
    %3636 = vst [vmem:[#allocation3 + $0x90] sm:$0x11] %v3635
    %v3637 = vld [vmem:[#allocation3 + $0x98] sm:$0x11]
    %v3638 = vsel %vm478, %v3611, %v3637
    %3639 = vst [vmem:[#allocation3 + $0x98] sm:$0x11] %v3638
    %v3640 = vld [vmem:[#allocation3 + $0xa0] sm:$0x11]
    %v3641 = vsel %vm478, %v3613, %v3640
    %3642 = vst [vmem:[#allocation3 + $0xa0] sm:$0x11] %v3641
    %v3643 = vld [vmem:[#allocation3 + $0xa8] sm:$0x11]
    %v3644 = vsel %vm478, %v3615, %v3643
    %3645 = vst [vmem:[#allocation3 + $0xa8] sm:$0x11] %v3644
    %v3646 = vld [vmem:[#allocation3 + $0xb0] sm:$0x11]
    %v3647 = vsel %vm478, %v3617, %v3646
    %3648 = vst [vmem:[#allocation3 + $0xb0] sm:$0x11] %v3647
    %v3649 = vld [vmem:[#allocation3 + $0xb8] sm:$0x11]
    %v3650 = vsel %vm478, %v3619, %v3649
    %3651 = vst [vmem:[#allocation3 + $0xb8] sm:$0x11] %v3650
    %v3652 = vld [vmem:[#allocation2 + $0x2] sm:$0xff]
    %v3653 = vld [vmem:[#allocation2 + $0xa] sm:$0xff]
    %v3654 = vld [vmem:[#allocation2 + $0x12] sm:$0x1]
    %v3658 = vcombine.high %v3652, %v3652
    %v3660 = vunpack.c.l.s4 1935823168
    %v3661 = vunpack.c.0.s8 %v3660
    %v3662 = vlaneseq
    %v3663 = vshrl.u32 %v3662, 7
    %v3664 = vsub.s32 %v3661, %v3663
    %v3665 = vrot.slane %v3652, %v3664
    %v3667 = vunpack.c.l.s4 1935823168
    %v3668 = vunpack.c.0.s8 %v3667
    %v3669 = vlaneseq
    %v3670 = vshrl.u32 %v3669, 7
    %v3671 = vsub.s32 %v3668, %v3670
    %v3672 = vrot.slane %v3658, %v3671
    %v3673 = vcombine.high %v3665, %v3665
    %v3674 = vcombine.high %v3672, %v3672
    %v3676 = vunpack.c.l.s4 1935823168
    %v3677 = vunpack.c.0.s8 %v3676
    %v3678 = vlaneseq
    %v3679 = vshrl.u32 %v3678, 7
    %v3680 = vsub.s32 %v3677, %v3679
    %v3681 = vrot.slane %v3665, %v3680
    %v3683 = vunpack.c.l.s4 1935823168
    %v3684 = vunpack.c.0.s8 %v3683
    %v3685 = vlaneseq
    %v3686 = vshrl.u32 %v3685, 7
    %v3687 = vsub.s32 %v3684, %v3686
    %v3688 = vrot.slane %v3673, %v3687
    %v3690 = vunpack.c.l.s4 1935823168
    %v3691 = vunpack.c.0.s8 %v3690
    %v3692 = vlaneseq
    %v3693 = vshrl.u32 %v3692, 7
    %v3694 = vsub.s32 %v3691, %v3693
    %v3695 = vrot.slane %v3672, %v3694
    %v3697 = vunpack.c.l.s4 1935823168
    %v3698 = vunpack.c.0.s8 %v3697
    %v3699 = vlaneseq
    %v3700 = vshrl.u32 %v3699, 7
    %v3701 = vsub.s32 %v3698, %v3700
    %v3702 = vrot.slane %v3674, %v3701
    %v3703 = vcombine.high %v3653, %v3653
    %v3705 = vunpack.c.l.s4 1935823168
    %v3706 = vunpack.c.0.s8 %v3705
    %v3707 = vlaneseq
    %v3708 = vshrl.u32 %v3707, 7
    %v3709 = vsub.s32 %v3706, %v3708
    %v3710 = vrot.slane %v3653, %v3709
    %v3712 = vunpack.c.l.s4 1935823168
    %v3713 = vunpack.c.0.s8 %v3712
    %v3714 = vlaneseq
    %v3715 = vshrl.u32 %v3714, 7
    %v3716 = vsub.s32 %v3713, %v3715
    %v3717 = vrot.slane %v3703, %v3716
    %v3718 = vcombine.high %v3710, %v3710
    %v3719 = vcombine.high %v3717, %v3717
    %v3721 = vunpack.c.l.s4 1935823168
    %v3722 = vunpack.c.0.s8 %v3721
    %v3723 = vlaneseq
    %v3724 = vshrl.u32 %v3723, 7
    %v3725 = vsub.s32 %v3722, %v3724
    %v3726 = vrot.slane %v3710, %v3725
    %v3728 = vunpack.c.l.s4 1935823168
    %v3729 = vunpack.c.0.s8 %v3728
    %v3730 = vlaneseq
    %v3731 = vshrl.u32 %v3730, 7
    %v3732 = vsub.s32 %v3729, %v3731
    %v3733 = vrot.slane %v3718, %v3732
    %v3735 = vunpack.c.l.s4 1935823168
    %v3736 = vunpack.c.0.s8 %v3735
    %v3737 = vlaneseq
    %v3738 = vshrl.u32 %v3737, 7
    %v3739 = vsub.s32 %v3736, %v3738
    %v3740 = vrot.slane %v3717, %v3739
    %v3742 = vunpack.c.l.s4 1935823168
    %v3743 = vunpack.c.0.s8 %v3742
    %v3744 = vlaneseq
    %v3745 = vshrl.u32 %v3744, 7
    %v3746 = vsub.s32 %v3743, %v3745
    %v3747 = vrot.slane %v3719, %v3746
    %v3749 = vunpack.c.l.s4 1935823168
    %v3750 = vunpack.c.0.s8 %v3749
    %v3751 = vlaneseq
    %v3752 = vshrl.u32 %v3751, 7
    %v3753 = vsub.s32 %v3750, %v3752
    %v3754 = vrot.slane %v3654, %v3753
    %v3756 = vunpack.c.l.s4 1935823168
    %v3757 = vunpack.c.0.s8 %v3756
    %v3758 = vlaneseq
    %v3759 = vshrl.u32 %v3758, 7
    %v3760 = vsub.s32 %v3757, %v3759
    %v3761 = vrot.slane %v3754, %v3760
    %v3763 = vshll.u32 %v3681, 16
    %v3766 = vshll.u32 %v3688, 16
    %v3769 = vshll.u32 %v3695, 16
    %v3772 = vshll.u32 %v3702, 16
    %v3775 = vshll.u32 %v3726, 16
    %v3778 = vshll.u32 %v3733, 16
    %v3781 = vshll.u32 %v3740, 16
    %v3784 = vshll.u32 %v3747, 16
    %v3787 = vshll.u32 %v3761, 16
    %3789 = vrot.lane.b32.xlu0 %v3763, 64
    %v3790 = vpop.permute.xlu0 %3789
    %3791 = vrot.lane.b32.xlu0 %v3766, 64
    %v3792 = vpop.permute.xlu0 %3791
    %3793 = vrot.lane.b32.xlu0 %v3769, 64
    %v3794 = vpop.permute.xlu0 %3793
    %3795 = vrot.lane.b32.xlu0 %v3772, 64
    %v3796 = vpop.permute.xlu0 %3795
    %3797 = vrot.lane.b32.xlu0 %v3775, 64
    %v3798 = vpop.permute.xlu0 %3797
    %3799 = vrot.lane.b32.xlu0 %v3778, 64
    %v3800 = vpop.permute.xlu0 %3799
    %3801 = vrot.lane.b32.xlu0 %v3781, 64
    %v3802 = vpop.permute.xlu0 %3801
    %3803 = vrot.lane.b32.xlu0 %v3784, 64
    %v3804 = vpop.permute.xlu0 %3803
    %3805 = vrot.lane.b32.xlu0 %v3787, 64
    %v3806 = vpop.permute.xlu0 %3805
    %v3807 = vrot.slane %v3790, 4
    %v3808 = vrot.slane %v3792, 4
    %v3809 = vrot.slane %v3794, 4
    %v3810 = vrot.slane %v3796, 4
    %v3811 = vrot.slane %v3798, 4
    %v3812 = vrot.slane %v3800, 4
    %v3813 = vrot.slane %v3802, 4
    %v3814 = vrot.slane %v3804, 4
    %v3815 = vrot.slane %v3806, 4
    %v3816 = vsel %vm452, %v3807, %v3808
    %v3817 = vsel %vm1853, %v3790, %v3816
    %v3818 = vsel %vm452, %v3808, %v3809
    %v3819 = vsel %vm1853, %v3792, %v3818
    %v3820 = vsel %vm452, %v3809, %v3810
    %v3821 = vsel %vm1853, %v3794, %v3820
    %v3822 = vsel %vm452, %v3810, %v3811
    %v3823 = vsel %vm1853, %v3796, %v3822
    %v3824 = vsel %vm452, %v3811, %v3812
    %v3825 = vsel %vm1853, %v3798, %v3824
    %v3826 = vsel %vm452, %v3812, %v3813
    %v3827 = vsel %vm1853, %v3800, %v3826
    %v3828 = vsel %vm452, %v3813, %v3814
    %v3829 = vsel %vm1853, %v3802, %v3828
    %v3830 = vsel %vm452, %v3814, %v3815
    %v3831 = vsel %vm1853, %v3804, %v3830
    %v3840 = vld [vmem:[#allocation3 + $0x80] sm:$0x11]
    %v3841 = vsel %vm696, %v3817, %v3840
    %3842 = vst [vmem:[#allocation3 + $0x80] sm:$0x11] %v3841
    %v3843 = vld [vmem:[#allocation3 + $0x88] sm:$0x11]
    %v3844 = vsel %vm696, %v3819, %v3843
    %3845 = vst [vmem:[#allocation3 + $0x88] sm:$0x11] %v3844
    %v3846 = vld [vmem:[#allocation3 + $0x90] sm:$0x11]
    %v3847 = vsel %vm696, %v3821, %v3846
    %3848 = vst [vmem:[#allocation3 + $0x90] sm:$0x11] %v3847
    %v3849 = vld [vmem:[#allocation3 + $0x98] sm:$0x11]
    %v3850 = vsel %vm696, %v3823, %v3849
    %3851 = vst [vmem:[#allocation3 + $0x98] sm:$0x11] %v3850
    %v3852 = vld [vmem:[#allocation3 + $0xa0] sm:$0x11]
    %v3853 = vsel %vm696, %v3825, %v3852
    %3854 = vst [vmem:[#allocation3 + $0xa0] sm:$0x11] %v3853
    %v3855 = vld [vmem:[#allocation3 + $0xa8] sm:$0x11]
    %v3856 = vsel %vm696, %v3827, %v3855
    %3857 = vst [vmem:[#allocation3 + $0xa8] sm:$0x11] %v3856
    %v3858 = vld [vmem:[#allocation3 + $0xb0] sm:$0x11]
    %v3859 = vsel %vm696, %v3829, %v3858
    %3860 = vst [vmem:[#allocation3 + $0xb0] sm:$0x11] %v3859
    %v3861 = vld [vmem:[#allocation3 + $0xb8] sm:$0x11]
    %v3862 = vsel %vm696, %v3831, %v3861
    %3863 = vst [vmem:[#allocation3 + $0xb8] sm:$0x11] %v3862
    %v3864 = vld [vmem:[#allocation2 + $0x2] sm:$0xff]
    %v3865 = vld [vmem:[#allocation2 + $0xa] sm:$0xff]
    %v3866 = vld [vmem:[#allocation2 + $0x12] sm:$0x1]
    %v3870 = vcombine.high %v3864, %v3864
    %v3872 = vunpack.c.l.s4 1935823168
    %v3873 = vunpack.c.0.s8 %v3872
    %v3874 = vlaneseq
    %v3875 = vshrl.u32 %v3874, 7
    %v3876 = vsub.s32 %v3873, %v3875
    %v3877 = vrot.slane %v3864, %v3876
    %v3879 = vunpack.c.l.s4 1935823168
    %v3880 = vunpack.c.0.s8 %v3879
    %v3881 = vlaneseq
    %v3882 = vshrl.u32 %v3881, 7
    %v3883 = vsub.s32 %v3880, %v3882
    %v3884 = vrot.slane %v3870, %v3883
    %v3885 = vcombine.low %v3877, %v3877
    %v3886 = vcombine.low %v3884, %v3884
    %v3888 = vunpack.c.l.s4 1935823168
    %v3889 = vunpack.c.0.s8 %v3888
    %v3890 = vlaneseq
    %v3891 = vshrl.u32 %v3890, 7
    %v3892 = vsub.s32 %v3889, %v3891
    %v3893 = vrot.slane %v3885, %v3892
    %v3895 = vunpack.c.l.s4 1935823168
    %v3896 = vunpack.c.0.s8 %v3895
    %v3897 = vlaneseq
    %v3898 = vshrl.u32 %v3897, 7
    %v3899 = vsub.s32 %v3896, %v3898
    %v3900 = vrot.slane %v3877, %v3899
    %v3902 = vunpack.c.l.s4 1935823168
    %v3903 = vunpack.c.0.s8 %v3902
    %v3904 = vlaneseq
    %v3905 = vshrl.u32 %v3904, 7
    %v3906 = vsub.s32 %v3903, %v3905
    %v3907 = vrot.slane %v3886, %v3906
    %v3909 = vunpack.c.l.s4 1935823168
    %v3910 = vunpack.c.0.s8 %v3909
    %v3911 = vlaneseq
    %v3912 = vshrl.u32 %v3911, 7
    %v3913 = vsub.s32 %v3910, %v3912
    %v3914 = vrot.slane %v3884, %v3913
    %v3915 = vcombine.high %v3865, %v3865
    %v3917 = vunpack.c.l.s4 1935823168
    %v3918 = vunpack.c.0.s8 %v3917
    %v3919 = vlaneseq
    %v3920 = vshrl.u32 %v3919, 7
    %v3921 = vsub.s32 %v3918, %v3920
    %v3922 = vrot.slane %v3865, %v3921
    %v3924 = vunpack.c.l.s4 1935823168
    %v3925 = vunpack.c.0.s8 %v3924
    %v3926 = vlaneseq
    %v3927 = vshrl.u32 %v3926, 7
    %v3928 = vsub.s32 %v3925, %v3927
    %v3929 = vrot.slane %v3915, %v3928
    %v3930 = vcombine.low %v3922, %v3922
    %v3931 = vcombine.low %v3929, %v3929
    %v3933 = vunpack.c.l.s4 1935823168
    %v3934 = vunpack.c.0.s8 %v3933
    %v3935 = vlaneseq
    %v3936 = vshrl.u32 %v3935, 7
    %v3937 = vsub.s32 %v3934, %v3936
    %v3938 = vrot.slane %v3930, %v3937
    %v3940 = vunpack.c.l.s4 1935823168
    %v3941 = vunpack.c.0.s8 %v3940
    %v3942 = vlaneseq
    %v3943 = vshrl.u32 %v3942, 7
    %v3944 = vsub.s32 %v3941, %v3943
    %v3945 = vrot.slane %v3922, %v3944
    %v3947 = vunpack.c.l.s4 1935823168
    %v3948 = vunpack.c.0.s8 %v3947
    %v3949 = vlaneseq
    %v3950 = vshrl.u32 %v3949, 7
    %v3951 = vsub.s32 %v3948, %v3950
    %v3952 = vrot.slane %v3931, %v3951
    %v3954 = vunpack.c.l.s4 1935823168
    %v3955 = vunpack.c.0.s8 %v3954
    %v3956 = vlaneseq
    %v3957 = vshrl.u32 %v3956, 7
    %v3958 = vsub.s32 %v3955, %v3957
    %v3959 = vrot.slane %v3929, %v3958
    %v3961 = vunpack.c.l.s4 1935823168
    %v3962 = vunpack.c.0.s8 %v3961
    %v3963 = vlaneseq
    %v3964 = vshrl.u32 %v3963, 7
    %v3965 = vsub.s32 %v3962, %v3964
    %v3966 = vrot.slane %v3866, %v3965
    %v3967 = vcombine.low %v3966, %v3966
    %v3969 = vunpack.c.l.s4 1935823168
    %v3970 = vunpack.c.0.s8 %v3969
    %v3971 = vlaneseq
    %v3972 = vshrl.u32 %v3971, 7
    %v3973 = vsub.s32 %v3970, %v3972
    %v3974 = vrot.slane %v3967, %v3973
    %3975 = vrot.lane.b32.xlu0 %v3893, 62
    %v3976 = vpop.permute.xlu0 %3975
    %3977 = vrot.lane.b32.xlu0 %v3900, 62
    %v3978 = vpop.permute.xlu0 %3977
    %3979 = vrot.lane.b32.xlu0 %v3907, 62
    %v3980 = vpop.permute.xlu0 %3979
    %3981 = vrot.lane.b32.xlu0 %v3914, 62
    %v3982 = vpop.permute.xlu0 %3981
    %3983 = vrot.lane.b32.xlu0 %v3938, 62
    %v3984 = vpop.permute.xlu0 %3983
    %3985 = vrot.lane.b32.xlu0 %v3945, 62
    %v3986 = vpop.permute.xlu0 %3985
    %3987 = vrot.lane.b32.xlu0 %v3952, 62
    %v3988 = vpop.permute.xlu0 %3987
    %3989 = vrot.lane.b32.xlu0 %v3959, 62
    %v3990 = vpop.permute.xlu0 %3989
    %3991 = vrot.lane.b32.xlu0 %v3974, 62
    %v3992 = vpop.permute.xlu0 %3991
    %v3993 = vrot.slane %v3976, 4
    %v3994 = vrot.slane %v3978, 4
    %v3995 = vrot.slane %v3980, 4
    %v3996 = vrot.slane %v3982, 4
    %v3997 = vrot.slane %v3984, 4
    %v3998 = vrot.slane %v3986, 4
    %v3999 = vrot.slane %v3988, 4
    %v4000 = vrot.slane %v3990, 4
    %v4001 = vrot.slane %v3992, 4
    %v4002 = vsel %vm452, %v3993, %v3994
    %v4003 = vsel %vm2044, %v3976, %v4002
    %v4004 = vsel %vm452, %v3994, %v3995
    %v4005 = vsel %vm2044, %v3978, %v4004
    %v4006 = vsel %vm452, %v3995, %v3996
    %v4007 = vsel %vm2044, %v3980, %v4006
    %v4008 = vsel %vm452, %v3996, %v3997
    %v4009 = vsel %vm2044, %v3982, %v4008
    %v4010 = vsel %vm452, %v3997, %v3998
    %v4011 = vsel %vm2044, %v3984, %v4010
    %v4012 = vsel %vm452, %v3998, %v3999
    %v4013 = vsel %vm2044, %v3986, %v4012
    %v4014 = vsel %vm452, %v3999, %v4000
    %v4015 = vsel %vm2044, %v3988, %v4014
    %v4016 = vsel %vm452, %v4000, %v4001
    %v4017 = vsel %vm2044, %v3990, %v4016
    %v4026 = vld [vmem:[#allocation3 + $0x80] sm:$0x22]
    %v4027 = vsel %vm823, %v4003, %v4026
    %4028 = vst [vmem:[#allocation3 + $0x80] sm:$0x22] %v4027
    %v4029 = vld [vmem:[#allocation3 + $0x88] sm:$0x22]
    %v4030 = vsel %vm823, %v4005, %v4029
    %4031 = vst [vmem:[#allocation3 + $0x88] sm:$0x22] %v4030
    %v4032 = vld [vmem:[#allocation3 + $0x90] sm:$0x22]
    %v4033 = vsel %vm823, %v4007, %v4032
    %4034 = vst [vmem:[#allocation3 + $0x90] sm:$0x22] %v4033
    %v4035 = vld [vmem:[#allocation3 + $0x98] sm:$0x22]
    %v4036 = vsel %vm823, %v4009, %v4035
    %4037 = vst [vmem:[#allocation3 + $0x98] sm:$0x22] %v4036
    %v4038 = vld [vmem:[#allocation3 + $0xa0] sm:$0x22]
    %v4039 = vsel %vm823, %v4011, %v4038
    %4040 = vst [vmem:[#allocation3 + $0xa0] sm:$0x22] %v4039
    %v4041 = vld [vmem:[#allocation3 + $0xa8] sm:$0x22]
    %v4042 = vsel %vm823, %v4013, %v4041
    %4043 = vst [vmem:[#allocation3 + $0xa8] sm:$0x22] %v4042
    %v4044 = vld [vmem:[#allocation3 + $0xb0] sm:$0x22]
    %v4045 = vsel %vm823, %v4015, %v4044
    %4046 = vst [vmem:[#allocation3 + $0xb0] sm:$0x22] %v4045
    %v4047 = vld [vmem:[#allocation3 + $0xb8] sm:$0x22]
    %v4048 = vsel %vm823, %v4017, %v4047
    %4049 = vst [vmem:[#allocation3 + $0xb8] sm:$0x22] %v4048
    %v4050 = vld [vmem:[#allocation2 + $0x2] sm:$0xff]
    %v4051 = vld [vmem:[#allocation2 + $0xa] sm:$0xff]
    %v4052 = vld [vmem:[#allocation2 + $0x12] sm:$0x1]
    %v4056 = vcombine.high %v4050, %v4050
    %v4058 = vunpack.c.l.s4 1935823168
    %v4059 = vunpack.c.0.s8 %v4058
    %v4060 = vlaneseq
    %v4061 = vshrl.u32 %v4060, 7
    %v4062 = vsub.s32 %v4059, %v4061
    %v4063 = vrot.slane %v4050, %v4062
    %v4065 = vunpack.c.l.s4 1935823168
    %v4066 = vunpack.c.0.s8 %v4065
    %v4067 = vlaneseq
    %v4068 = vshrl.u32 %v4067, 7
    %v4069 = vsub.s32 %v4066, %v4068
    %v4070 = vrot.slane %v4056, %v4069
    %v4071 = vcombine.high %v4063, %v4063
    %v4072 = vcombine.high %v4070, %v4070
    %v4074 = vunpack.c.l.s4 1935823168
    %v4075 = vunpack.c.0.s8 %v4074
    %v4076 = vlaneseq
    %v4077 = vshrl.u32 %v4076, 7
    %v4078 = vsub.s32 %v4075, %v4077
    %v4079 = vrot.slane %v4063, %v4078
    %v4081 = vunpack.c.l.s4 1935823168
    %v4082 = vunpack.c.0.s8 %v4081
    %v4083 = vlaneseq
    %v4084 = vshrl.u32 %v4083, 7
    %v4085 = vsub.s32 %v4082, %v4084
    %v4086 = vrot.slane %v4071, %v4085
    %v4088 = vunpack.c.l.s4 1935823168
    %v4089 = vunpack.c.0.s8 %v4088
    %v4090 = vlaneseq
    %v4091 = vshrl.u32 %v4090, 7
    %v4092 = vsub.s32 %v4089, %v4091
    %v4093 = vrot.slane %v4070, %v4092
    %v4095 = vunpack.c.l.s4 1935823168
    %v4096 = vunpack.c.0.s8 %v4095
    %v4097 = vlaneseq
    %v4098 = vshrl.u32 %v4097, 7
    %v4099 = vsub.s32 %v4096, %v4098
    %v4100 = vrot.slane %v4072, %v4099
    %v4101 = vcombine.high %v4051, %v4051
    %v4103 = vunpack.c.l.s4 1935823168
    %v4104 = vunpack.c.0.s8 %v4103
    %v4105 = vlaneseq
    %v4106 = vshrl.u32 %v4105, 7
    %v4107 = vsub.s32 %v4104, %v4106
    %v4108 = vrot.slane %v4051, %v4107
    %v4110 = vunpack.c.l.s4 1935823168
    %v4111 = vunpack.c.0.s8 %v4110
    %v4112 = vlaneseq
    %v4113 = vshrl.u32 %v4112, 7
    %v4114 = vsub.s32 %v4111, %v4113
    %v4115 = vrot.slane %v4101, %v4114
    %v4116 = vcombine.high %v4108, %v4108
    %v4117 = vcombine.high %v4115, %v4115
    %v4119 = vunpack.c.l.s4 1935823168
    %v4120 = vunpack.c.0.s8 %v4119
    %v4121 = vlaneseq
    %v4122 = vshrl.u32 %v4121, 7
    %v4123 = vsub.s32 %v4120, %v4122
    %v4124 = vrot.slane %v4108, %v4123
    %v4126 = vunpack.c.l.s4 1935823168
    %v4127 = vunpack.c.0.s8 %v4126
    %v4128 = vlaneseq
    %v4129 = vshrl.u32 %v4128, 7
    %v4130 = vsub.s32 %v4127, %v4129
    %v4131 = vrot.slane %v4116, %v4130
    %v4133 = vunpack.c.l.s4 1935823168
    %v4134 = vunpack.c.0.s8 %v4133
    %v4135 = vlaneseq
    %v4136 = vshrl.u32 %v4135, 7
    %v4137 = vsub.s32 %v4134, %v4136
    %v4138 = vrot.slane %v4115, %v4137
    %v4140 = vunpack.c.l.s4 1935823168
    %v4141 = vunpack.c.0.s8 %v4140
    %v4142 = vlaneseq
    %v4143 = vshrl.u32 %v4142, 7
    %v4144 = vsub.s32 %v4141, %v4143
    %v4145 = vrot.slane %v4117, %v4144
    %v4147 = vunpack.c.l.s4 1935823168
    %v4148 = vunpack.c.0.s8 %v4147
    %v4149 = vlaneseq
    %v4150 = vshrl.u32 %v4149, 7
    %v4151 = vsub.s32 %v4148, %v4150
    %v4152 = vrot.slane %v4052, %v4151
    %v4154 = vunpack.c.l.s4 1935823168
    %v4155 = vunpack.c.0.s8 %v4154
    %v4156 = vlaneseq
    %v4157 = vshrl.u32 %v4156, 7
    %v4158 = vsub.s32 %v4155, %v4157
    %v4159 = vrot.slane %v4152, %v4158
    %v4161 = vshll.u32 %v4079, 16
    %v4163 = vrot.slane %v4161, 7
    %v4165 = vshll.u32 %v4086, 16
    %v4167 = vrot.slane %v4165, 7
    %v4169 = vshll.u32 %v4093, 16
    %v4171 = vrot.slane %v4169, 7
    %v4173 = vshll.u32 %v4100, 16
    %v4175 = vrot.slane %v4173, 7
    %v4177 = vshll.u32 %v4124, 16
    %v4179 = vrot.slane %v4177, 7
    %v4181 = vshll.u32 %v4131, 16
    %v4183 = vrot.slane %v4181, 7
    %v4185 = vshll.u32 %v4138, 16
    %v4187 = vrot.slane %v4185, 7
    %v4189 = vshll.u32 %v4145, 16
    %v4191 = vrot.slane %v4189, 7
    %v4193 = vshll.u32 %v4159, 16
    %v4195 = vrot.slane %v4193, 7
    %4196 = vrot.lane.b32.xlu0 %v4163, 60
    %v4197 = vpop.permute.xlu0 %4196
    %4198 = vrot.lane.b32.xlu0 %v4167, 60
    %v4199 = vpop.permute.xlu0 %4198
    %4200 = vrot.lane.b32.xlu0 %v4171, 60
    %v4201 = vpop.permute.xlu0 %4200
    %4202 = vrot.lane.b32.xlu0 %v4175, 60
    %v4203 = vpop.permute.xlu0 %4202
    %4204 = vrot.lane.b32.xlu0 %v4179, 60
    %v4205 = vpop.permute.xlu0 %4204
    %4206 = vrot.lane.b32.xlu0 %v4183, 60
    %v4207 = vpop.permute.xlu0 %4206
    %4208 = vrot.lane.b32.xlu0 %v4187, 60
    %v4209 = vpop.permute.xlu0 %4208
    %4210 = vrot.lane.b32.xlu0 %v4191, 60
    %v4211 = vpop.permute.xlu0 %4210
    %4212 = vrot.lane.b32.xlu0 %v4195, 60
    %v4213 = vpop.permute.xlu0 %4212
    %v4214 = vrot.slane %v4197, 4
    %v4215 = vrot.slane %v4199, 4
    %v4216 = vrot.slane %v4201, 4
    %v4217 = vrot.slane %v4203, 4
    %v4218 = vrot.slane %v4205, 4
    %v4219 = vrot.slane %v4207, 4
    %v4220 = vrot.slane %v4209, 4
    %v4221 = vrot.slane %v4211, 4
    %v4222 = vrot.slane %v4213, 4
    %v4223 = vsel %vm452, %v4214, %v4215
    %v4224 = vsel %vm2257, %v4197, %v4223
    %v4225 = vsel %vm452, %v4215, %v4216
    %v4226 = vsel %vm2257, %v4199, %v4225
    %v4227 = vsel %vm452, %v4216, %v4217
    %v4228 = vsel %vm2257, %v4201, %v4227
    %v4229 = vsel %vm452, %v4217, %v4218
    %v4230 = vsel %vm2257, %v4203, %v4229
    %v4231 = vsel %vm452, %v4218, %v4219
    %v4232 = vsel %vm2257, %v4205, %v4231
    %v4233 = vsel %vm452, %v4219, %v4220
    %v4234 = vsel %vm2257, %v4207, %v4233
    %v4235 = vsel %vm452, %v4220, %v4221
    %v4236 = vsel %vm2257, %v4209, %v4235
    %v4237 = vsel %vm452, %v4221, %v4222
    %v4238 = vsel %vm2257, %v4211, %v4237
    %v4247 = vld [vmem:[#allocation3 + $0x80] sm:$0x22]
    %v4248 = vsel %vm1050, %v4224, %v4247
    %4249 = vst [vmem:[#allocation3 + $0x80] sm:$0x22] %v4248
    %v4250 = vld [vmem:[#allocation3 + $0x88] sm:$0x22]
    %v4251 = vsel %vm1050, %v4226, %v4250
    %4252 = vst [vmem:[#allocation3 + $0x88] sm:$0x22] %v4251
    %v4253 = vld [vmem:[#allocation3 + $0x90] sm:$0x22]
    %v4254 = vsel %vm1050, %v4228, %v4253
    %4255 = vst [vmem:[#allocation3 + $0x90] sm:$0x22] %v4254
    %v4256 = vld [vmem:[#allocation3 + $0x98] sm:$0x22]
    %v4257 = vsel %vm1050, %v4230, %v4256
    %4258 = vst [vmem:[#allocation3 + $0x98] sm:$0x22] %v4257
    %v4259 = vld [vmem:[#allocation3 + $0xa0] sm:$0x22]
    %v4260 = vsel %vm1050, %v4232, %v4259
    %4261 = vst [vmem:[#allocation3 + $0xa0] sm:$0x22] %v4260
    %v4262 = vld [vmem:[#allocation3 + $0xa8] sm:$0x22]
    %v4263 = vsel %vm1050, %v4234, %v4262
    %4264 = vst [vmem:[#allocation3 + $0xa8] sm:$0x22] %v4263
    %v4265 = vld [vmem:[#allocation3 + $0xb0] sm:$0x22]
    %v4266 = vsel %vm1050, %v4236, %v4265
    %4267 = vst [vmem:[#allocation3 + $0xb0] sm:$0x22] %v4266
    %v4268 = vld [vmem:[#allocation3 + $0xb8] sm:$0x22]
    %v4269 = vsel %vm1050, %v4238, %v4268
    %4270 = vst [vmem:[#allocation3 + $0xb8] sm:$0x22] %v4269
    %v4271 = vld [vmem:[#allocation2 + $0x2] sm:$0xff]
    %v4272 = vld [vmem:[#allocation2 + $0xa] sm:$0xff]
    %v4273 = vld [vmem:[#allocation2 + $0x12] sm:$0x1]
    %v4277 = vcombine.low %v4271, %v4271
    %v4279 = vunpack.c.l.s4 1935823168
    %v4280 = vunpack.c.0.s8 %v4279
    %v4281 = vlaneseq
    %v4282 = vshrl.u32 %v4281, 7
    %v4283 = vsub.s32 %v4280, %v4282
    %v4284 = vrot.slane %v4277, %v4283
    %v4286 = vunpack.c.l.s4 1935823168
    %v4287 = vunpack.c.0.s8 %v4286
    %v4288 = vlaneseq
    %v4289 = vshrl.u32 %v4288, 7
    %v4290 = vsub.s32 %v4287, %v4289
    %v4291 = vrot.slane %v4271, %v4290
    %v4292 = vcombine.high %v4284, %v4284
    %v4293 = vcombine.high %v4291, %v4291
    %v4295 = vunpack.c.l.s4 1935823168
    %v4296 = vunpack.c.0.s8 %v4295
    %v4297 = vlaneseq
    %v4298 = vshrl.u32 %v4297, 7
    %v4299 = vsub.s32 %v4296, %v4298
    %v4300 = vrot.slane %v4284, %v4299
    %v4302 = vunpack.c.l.s4 1935823168
    %v4303 = vunpack.c.0.s8 %v4302
    %v4304 = vlaneseq
    %v4305 = vshrl.u32 %v4304, 7
    %v4306 = vsub.s32 %v4303, %v4305
    %v4307 = vrot.slane %v4292, %v4306
    %v4309 = vunpack.c.l.s4 1935823168
    %v4310 = vunpack.c.0.s8 %v4309
    %v4311 = vlaneseq
    %v4312 = vshrl.u32 %v4311, 7
    %v4313 = vsub.s32 %v4310, %v4312
    %v4314 = vrot.slane %v4291, %v4313
    %v4316 = vunpack.c.l.s4 1935823168
    %v4317 = vunpack.c.0.s8 %v4316
    %v4318 = vlaneseq
    %v4319 = vshrl.u32 %v4318, 7
    %v4320 = vsub.s32 %v4317, %v4319
    %v4321 = vrot.slane %v4293, %v4320
    %v4322 = vcombine.low %v4272, %v4272
    %v4324 = vunpack.c.l.s4 1935823168
    %v4325 = vunpack.c.0.s8 %v4324
    %v4326 = vlaneseq
    %v4327 = vshrl.u32 %v4326, 7
    %v4328 = vsub.s32 %v4325, %v4327
    %v4329 = vrot.slane %v4322, %v4328
    %v4331 = vunpack.c.l.s4 1935823168
    %v4332 = vunpack.c.0.s8 %v4331
    %v4333 = vlaneseq
    %v4334 = vshrl.u32 %v4333, 7
    %v4335 = vsub.s32 %v4332, %v4334
    %v4336 = vrot.slane %v4272, %v4335
    %v4337 = vcombine.high %v4329, %v4329
    %v4338 = vcombine.high %v4336, %v4336
    %v4340 = vunpack.c.l.s4 1935823168
    %v4341 = vunpack.c.0.s8 %v4340
    %v4342 = vlaneseq
    %v4343 = vshrl.u32 %v4342, 7
    %v4344 = vsub.s32 %v4341, %v4343
    %v4345 = vrot.slane %v4329, %v4344
    %v4347 = vunpack.c.l.s4 1935823168
    %v4348 = vunpack.c.0.s8 %v4347
    %v4349 = vlaneseq
    %v4350 = vshrl.u32 %v4349, 7
    %v4351 = vsub.s32 %v4348, %v4350
    %v4352 = vrot.slane %v4337, %v4351
    %v4354 = vunpack.c.l.s4 1935823168
    %v4355 = vunpack.c.0.s8 %v4354
    %v4356 = vlaneseq
    %v4357 = vshrl.u32 %v4356, 7
    %v4358 = vsub.s32 %v4355, %v4357
    %v4359 = vrot.slane %v4336, %v4358
    %v4361 = vunpack.c.l.s4 1935823168
    %v4362 = vunpack.c.0.s8 %v4361
    %v4363 = vlaneseq
    %v4364 = vshrl.u32 %v4363, 7
    %v4365 = vsub.s32 %v4362, %v4364
    %v4366 = vrot.slane %v4338, %v4365
    %v4367 = vcombine.low %v4273, %v4273
    %v4369 = vunpack.c.l.s4 1935823168
    %v4370 = vunpack.c.0.s8 %v4369
    %v4371 = vlaneseq
    %v4372 = vshrl.u32 %v4371, 7
    %v4373 = vsub.s32 %v4370, %v4372
    %v4374 = vrot.slane %v4367, %v4373
    %v4376 = vunpack.c.l.s4 1935823168
    %v4377 = vunpack.c.0.s8 %v4376
    %v4378 = vlaneseq
    %v4379 = vshrl.u32 %v4378, 7
    %v4380 = vsub.s32 %v4377, %v4379
    %v4381 = vrot.slane %v4374, %v4380
    %4382 = vrot.lane.b32.xlu0 %v4300, 4
    %v4383 = vpop.permute.xlu0 %4382
    %4384 = vrot.lane.b32.xlu0 %v4307, 4
    %v4385 = vpop.permute.xlu0 %4384
    %4386 = vrot.lane.b32.xlu0 %v4314, 4
    %v4387 = vpop.permute.xlu0 %4386
    %4388 = vrot.lane.b32.xlu0 %v4321, 4
    %v4389 = vpop.permute.xlu0 %4388
    %4390 = vrot.lane.b32.xlu0 %v4345, 4
    %v4391 = vpop.permute.xlu0 %4390
    %4392 = vrot.lane.b32.xlu0 %v4352, 4
    %v4393 = vpop.permute.xlu0 %4392
    %4394 = vrot.lane.b32.xlu0 %v4359, 4
    %v4395 = vpop.permute.xlu0 %4394
    %4396 = vrot.lane.b32.xlu0 %v4366, 4
    %v4397 = vpop.permute.xlu0 %4396
    %4398 = vrot.lane.b32.xlu0 %v4381, 4
    %v4399 = vpop.permute.xlu0 %4398
    %v4400 = vrot.slane %v4383, 4
    %v4401 = vrot.slane %v4385, 4
    %v4402 = vrot.slane %v4387, 4
    %v4403 = vrot.slane %v4389, 4
    %v4404 = vrot.slane %v4391, 4
    %v4405 = vrot.slane %v4393, 4
    %v4406 = vrot.slane %v4395, 4
    %v4407 = vrot.slane %v4397, 4
    %v4408 = vrot.slane %v4399, 4
    %v4409 = vsel %vm452, %v4400, %v4401
    %v4410 = vsel %vm454, %v4383, %v4409
    %v4411 = vsel %vm452, %v4401, %v4402
    %v4412 = vsel %vm454, %v4385, %v4411
    %v4413 = vsel %vm452, %v4402, %v4403
    %v4414 = vsel %vm454, %v4387, %v4413
    %v4415 = vsel %vm452, %v4403, %v4404
    %v4416 = vsel %vm454, %v4389, %v4415
    %v4417 = vsel %vm452, %v4404, %v4405
    %v4418 = vsel %vm454, %v4391, %v4417
    %v4419 = vsel %vm452, %v4405, %v4406
    %v4420 = vsel %vm454, %v4393, %v4419
    %v4421 = vsel %vm452, %v4406, %v4407
    %v4422 = vsel %vm454, %v4395, %v4421
    %v4423 = vsel %vm452, %v4407, %v4408
    %v4424 = vsel %vm454, %v4397, %v4423
    %v4433 = vld [vmem:[#allocation3 + $0x80] sm:$0x44]
    %v4434 = vsel %vm1238, %v4410, %v4433
    %4435 = vst [vmem:[#allocation3 + $0x80] sm:$0x44] %v4434
    %v4436 = vld [vmem:[#allocation3 + $0x88] sm:$0x44]
    %v4437 = vsel %vm1238, %v4412, %v4436
    %4438 = vst [vmem:[#allocation3 + $0x88] sm:$0x44] %v4437
    %v4439 = vld [vmem:[#allocation3 + $0x90] sm:$0x44]
    %v4440 = vsel %vm1238, %v4414, %v4439
    %4441 = vst [vmem:[#allocation3 + $0x90] sm:$0x44] %v4440
    %v4442 = vld [vmem:[#allocation3 + $0x98] sm:$0x44]
    %v4443 = vsel %vm1238, %v4416, %v4442
    %4444 = vst [vmem:[#allocation3 + $0x98] sm:$0x44] %v4443
    %v4445 = vld [vmem:[#allocation3 + $0xa0] sm:$0x44]
    %v4446 = vsel %vm1238, %v4418, %v4445
    %4447 = vst [vmem:[#allocation3 + $0xa0] sm:$0x44] %v4446
    %v4448 = vld [vmem:[#allocation3 + $0xa8] sm:$0x44]
    %v4449 = vsel %vm1238, %v4420, %v4448
    %4450 = vst [vmem:[#allocation3 + $0xa8] sm:$0x44] %v4449
    %v4451 = vld [vmem:[#allocation3 + $0xb0] sm:$0x44]
    %v4452 = vsel %vm1238, %v4422, %v4451
    %4453 = vst [vmem:[#allocation3 + $0xb0] sm:$0x44] %v4452
    %v4454 = vld [vmem:[#allocation3 + $0xb8] sm:$0x44]
    %v4455 = vsel %vm1238, %v4424, %v4454
    %4456 = vst [vmem:[#allocation3 + $0xb8] sm:$0x44] %v4455
    %v4457 = vld [vmem:[#allocation2 + $0x2] sm:$0xff]
    %v4458 = vld [vmem:[#allocation2 + $0xa] sm:$0xff]
    %v4459 = vld [vmem:[#allocation2 + $0x12] sm:$0x1]
    %v4463 = vcombine.high %v4457, %v4457
    %v4465 = vunpack.c.l.s4 1935823168
    %v4466 = vunpack.c.0.s8 %v4465
    %v4467 = vlaneseq
    %v4468 = vshrl.u32 %v4467, 7
    %v4469 = vsub.s32 %v4466, %v4468
    %v4470 = vrot.slane %v4457, %v4469
    %v4472 = vunpack.c.l.s4 1935823168
    %v4473 = vunpack.c.0.s8 %v4472
    %v4474 = vlaneseq
    %v4475 = vshrl.u32 %v4474, 7
    %v4476 = vsub.s32 %v4473, %v4475
    %v4477 = vrot.slane %v4463, %v4476
    %v4478 = vcombine.high %v4470, %v4470
    %v4479 = vcombine.high %v4477, %v4477
    %v4481 = vunpack.c.l.s4 1935823168
    %v4482 = vunpack.c.0.s8 %v4481
    %v4483 = vlaneseq
    %v4484 = vshrl.u32 %v4483, 7
    %v4485 = vsub.s32 %v4482, %v4484
    %v4486 = vrot.slane %v4470, %v4485
    %v4488 = vunpack.c.l.s4 1935823168
    %v4489 = vunpack.c.0.s8 %v4488
    %v4490 = vlaneseq
    %v4491 = vshrl.u32 %v4490, 7
    %v4492 = vsub.s32 %v4489, %v4491
    %v4493 = vrot.slane %v4478, %v4492
    %v4495 = vunpack.c.l.s4 1935823168
    %v4496 = vunpack.c.0.s8 %v4495
    %v4497 = vlaneseq
    %v4498 = vshrl.u32 %v4497, 7
    %v4499 = vsub.s32 %v4496, %v4498
    %v4500 = vrot.slane %v4477, %v4499
    %v4502 = vunpack.c.l.s4 1935823168
    %v4503 = vunpack.c.0.s8 %v4502
    %v4504 = vlaneseq
    %v4505 = vshrl.u32 %v4504, 7
    %v4506 = vsub.s32 %v4503, %v4505
    %v4507 = vrot.slane %v4479, %v4506
    %v4508 = vcombine.high %v4458, %v4458
    %v4510 = vunpack.c.l.s4 1935823168
    %v4511 = vunpack.c.0.s8 %v4510
    %v4512 = vlaneseq
    %v4513 = vshrl.u32 %v4512, 7
    %v4514 = vsub.s32 %v4511, %v4513
    %v4515 = vrot.slane %v4458, %v4514
    %v4517 = vunpack.c.l.s4 1935823168
    %v4518 = vunpack.c.0.s8 %v4517
    %v4519 = vlaneseq
    %v4520 = vshrl.u32 %v4519, 7
    %v4521 = vsub.s32 %v4518, %v4520
    %v4522 = vrot.slane %v4508, %v4521
    %v4523 = vcombine.high %v4515, %v4515
    %v4524 = vcombine.high %v4522, %v4522
    %v4526 = vunpack.c.l.s4 1935823168
    %v4527 = vunpack.c.0.s8 %v4526
    %v4528 = vlaneseq
    %v4529 = vshrl.u32 %v4528, 7
    %v4530 = vsub.s32 %v4527, %v4529
    %v4531 = vrot.slane %v4515, %v4530
    %v4533 = vunpack.c.l.s4 1935823168
    %v4534 = vunpack.c.0.s8 %v4533
    %v4535 = vlaneseq
    %v4536 = vshrl.u32 %v4535, 7
    %v4537 = vsub.s32 %v4534, %v4536
    %v4538 = vrot.slane %v4523, %v4537
    %v4540 = vunpack.c.l.s4 1935823168
    %v4541 = vunpack.c.0.s8 %v4540
    %v4542 = vlaneseq
    %v4543 = vshrl.u32 %v4542, 7
    %v4544 = vsub.s32 %v4541, %v4543
    %v4545 = vrot.slane %v4522, %v4544
    %v4547 = vunpack.c.l.s4 1935823168
    %v4548 = vunpack.c.0.s8 %v4547
    %v4549 = vlaneseq
    %v4550 = vshrl.u32 %v4549, 7
    %v4551 = vsub.s32 %v4548, %v4550
    %v4552 = vrot.slane %v4524, %v4551
    %v4554 = vunpack.c.l.s4 1935823168
    %v4555 = vunpack.c.0.s8 %v4554
    %v4556 = vlaneseq
    %v4557 = vshrl.u32 %v4556, 7
    %v4558 = vsub.s32 %v4555, %v4557
    %v4559 = vrot.slane %v4459, %v4558
    %v4561 = vunpack.c.l.s4 1935823168
    %v4562 = vunpack.c.0.s8 %v4561
    %v4563 = vlaneseq
    %v4564 = vshrl.u32 %v4563, 7
    %v4565 = vsub.s32 %v4562, %v4564
    %v4566 = vrot.slane %v4559, %v4565
    %v4568 = vshll.u32 %v4486, 16
    %v4570 = vrot.slane %v4568, 6
    %v4572 = vshll.u32 %v4493, 16
    %v4574 = vrot.slane %v4572, 6
    %v4576 = vshll.u32 %v4500, 16
    %v4578 = vrot.slane %v4576, 6
    %v4580 = vshll.u32 %v4507, 16
    %v4582 = vrot.slane %v4580, 6
    %v4584 = vshll.u32 %v4531, 16
    %v4586 = vrot.slane %v4584, 6
    %v4588 = vshll.u32 %v4538, 16
    %v4590 = vrot.slane %v4588, 6
    %v4592 = vshll.u32 %v4545, 16
    %v4594 = vrot.slane %v4592, 6
    %v4596 = vshll.u32 %v4552, 16
    %v4598 = vrot.slane %v4596, 6
    %v4600 = vshll.u32 %v4566, 16
    %v4602 = vrot.slane %v4600, 6
    %4603 = vrot.lane.b32.xlu0 %v4570, 2
    %v4604 = vpop.permute.xlu0 %4603
    %4605 = vrot.lane.b32.xlu0 %v4574, 2
    %v4606 = vpop.permute.xlu0 %4605
    %4607 = vrot.lane.b32.xlu0 %v4578, 2
    %v4608 = vpop.permute.xlu0 %4607
    %4609 = vrot.lane.b32.xlu0 %v4582, 2
    %v4610 = vpop.permute.xlu0 %4609
    %4611 = vrot.lane.b32.xlu0 %v4586, 2
    %v4612 = vpop.permute.xlu0 %4611
    %4613 = vrot.lane.b32.xlu0 %v4590, 2
    %v4614 = vpop.permute.xlu0 %4613
    %4615 = vrot.lane.b32.xlu0 %v4594, 2
    %v4616 = vpop.permute.xlu0 %4615
    %4617 = vrot.lane.b32.xlu0 %v4598, 2
    %v4618 = vpop.permute.xlu0 %4617
    %4619 = vrot.lane.b32.xlu0 %v4602, 2
    %v4620 = vpop.permute.xlu0 %4619
    %v4621 = vrot.slane %v4604, 4
    %v4622 = vrot.slane %v4606, 4
    %v4623 = vrot.slane %v4608, 4
    %v4624 = vrot.slane %v4610, 4
    %v4625 = vrot.slane %v4612, 4
    %v4626 = vrot.slane %v4614, 4
    %v4627 = vrot.slane %v4616, 4
    %v4628 = vrot.slane %v4618, 4
    %v4629 = vrot.slane %v4620, 4
    %v4630 = vsel %vm452, %v4621, %v4622
    %v4631 = vsel %vm668, %v4604, %v4630
    %v4632 = vsel %vm452, %v4622, %v4623
    %v4633 = vsel %vm668, %v4606, %v4632
    %v4634 = vsel %vm452, %v4623, %v4624
    %v4635 = vsel %vm668, %v4608, %v4634
    %v4636 = vsel %vm452, %v4624, %v4625
    %v4637 = vsel %vm668, %v4610, %v4636
    %v4638 = vsel %vm452, %v4625, %v4626
    %v4639 = vsel %vm668, %v4612, %v4638
    %v4640 = vsel %vm452, %v4626, %v4627
    %v4641 = vsel %vm668, %v4614, %v4640
    %v4642 = vsel %vm452, %v4627, %v4628
    %v4643 = vsel %vm668, %v4616, %v4642
    %v4644 = vsel %vm452, %v4628, %v4629
    %v4645 = vsel %vm668, %v4618, %v4644
    %v4654 = vld [vmem:[#allocation3 + $0x80] sm:$0x44]
    %v4655 = vsel %vm1465, %v4631, %v4654
    %4656 = vst [vmem:[#allocation3 + $0x80] sm:$0x44] %v4655
    %v4657 = vld [vmem:[#allocation3 + $0x88] sm:$0x44]
    %v4658 = vsel %vm1465, %v4633, %v4657
    %4659 = vst [vmem:[#allocation3 + $0x88] sm:$0x44] %v4658
    %v4660 = vld [vmem:[#allocation3 + $0x90] sm:$0x44]
    %v4661 = vsel %vm1465, %v4635, %v4660
    %4662 = vst [vmem:[#allocation3 + $0x90] sm:$0x44] %v4661
    %v4663 = vld [vmem:[#allocation3 + $0x98] sm:$0x44]
    %v4664 = vsel %vm1465, %v4637, %v4663
    %4665 = vst [vmem:[#allocation3 + $0x98] sm:$0x44] %v4664
    %v4666 = vld [vmem:[#allocation3 + $0xa0] sm:$0x44]
    %v4667 = vsel %vm1465, %v4639, %v4666
    %4668 = vst [vmem:[#allocation3 + $0xa0] sm:$0x44] %v4667
    %v4669 = vld [vmem:[#allocation3 + $0xa8] sm:$0x44]
    %v4670 = vsel %vm1465, %v4641, %v4669
    %4671 = vst [vmem:[#allocation3 + $0xa8] sm:$0x44] %v4670
    %v4672 = vld [vmem:[#allocation3 + $0xb0] sm:$0x44]
    %v4673 = vsel %vm1465, %v4643, %v4672
    %4674 = vst [vmem:[#allocation3 + $0xb0] sm:$0x44] %v4673
    %v4675 = vld [vmem:[#allocation3 + $0xb8] sm:$0x44]
    %v4676 = vsel %vm1465, %v4645, %v4675
    %4677 = vst [vmem:[#allocation3 + $0xb8] sm:$0x44] %v4676
    %v4678 = vld [vmem:[#allocation2 + $0x3] sm:$0xff]
    %v4679 = vld [vmem:[#allocation2 + $0xb] sm:$0xff]
    %v4682 = vcombine.low %v4678, %v4678
    %v4684 = vunpack.c.l.s4 1935823168
    %v4685 = vunpack.c.0.s8 %v4684
    %v4686 = vlaneseq
    %v4687 = vshrl.u32 %v4686, 7
    %v4688 = vsub.s32 %v4685, %v4687
    %v4689 = vrot.slane %v4682, %v4688
    %v4691 = vunpack.c.l.s4 1935823168
    %v4692 = vunpack.c.0.s8 %v4691
    %v4693 = vlaneseq
    %v4694 = vshrl.u32 %v4693, 7
    %v4695 = vsub.s32 %v4692, %v4694
    %v4696 = vrot.slane %v4678, %v4695
    %v4697 = vcombine.low %v4689, %v4689
    %v4698 = vcombine.low %v4696, %v4696
    %v4700 = vunpack.c.l.s4 1935823168
    %v4701 = vunpack.c.0.s8 %v4700
    %v4702 = vlaneseq
    %v4703 = vshrl.u32 %v4702, 7
    %v4704 = vsub.s32 %v4701, %v4703
    %v4705 = vrot.slane %v4697, %v4704
    %v4707 = vunpack.c.l.s4 1935823168
    %v4708 = vunpack.c.0.s8 %v4707
    %v4709 = vlaneseq
    %v4710 = vshrl.u32 %v4709, 7
    %v4711 = vsub.s32 %v4708, %v4710
    %v4712 = vrot.slane %v4689, %v4711
    %v4714 = vunpack.c.l.s4 1935823168
    %v4715 = vunpack.c.0.s8 %v4714
    %v4716 = vlaneseq
    %v4717 = vshrl.u32 %v4716, 7
    %v4718 = vsub.s32 %v4715, %v4717
    %v4719 = vrot.slane %v4698, %v4718
    %v4721 = vunpack.c.l.s4 1935823168
    %v4722 = vunpack.c.0.s8 %v4721
    %v4723 = vlaneseq
    %v4724 = vshrl.u32 %v4723, 7
    %v4725 = vsub.s32 %v4722, %v4724
    %v4726 = vrot.slane %v4696, %v4725
    %v4727 = vcombine.low %v4679, %v4679
    %v4729 = vunpack.c.l.s4 1935823168
    %v4730 = vunpack.c.0.s8 %v4729
    %v4731 = vlaneseq
    %v4732 = vshrl.u32 %v4731, 7
    %v4733 = vsub.s32 %v4730, %v4732
    %v4734 = vrot.slane %v4727, %v4733
    %v4736 = vunpack.c.l.s4 1935823168
    %v4737 = vunpack.c.0.s8 %v4736
    %v4738 = vlaneseq
    %v4739 = vshrl.u32 %v4738, 7
    %v4740 = vsub.s32 %v4737, %v4739
    %v4741 = vrot.slane %v4679, %v4740
    %v4742 = vcombine.low %v4734, %v4734
    %v4743 = vcombine.low %v4741, %v4741
    %v4745 = vunpack.c.l.s4 1935823168
    %v4746 = vunpack.c.0.s8 %v4745
    %v4747 = vlaneseq
    %v4748 = vshrl.u32 %v4747, 7
    %v4749 = vsub.s32 %v4746, %v4748
    %v4750 = vrot.slane %v4742, %v4749
    %v4752 = vunpack.c.l.s4 1935823168
    %v4753 = vunpack.c.0.s8 %v4752
    %v4754 = vlaneseq
    %v4755 = vshrl.u32 %v4754, 7
    %v4756 = vsub.s32 %v4753, %v4755
    %v4757 = vrot.slane %v4734, %v4756
    %v4759 = vunpack.c.l.s4 1935823168
    %v4760 = vunpack.c.0.s8 %v4759
    %v4761 = vlaneseq
    %v4762 = vshrl.u32 %v4761, 7
    %v4763 = vsub.s32 %v4760, %v4762
    %v4764 = vrot.slane %v4743, %v4763
    %v4766 = vunpack.c.l.s4 1935823168
    %v4767 = vunpack.c.0.s8 %v4766
    %v4768 = vlaneseq
    %v4769 = vshrl.u32 %v4768, 7
    %v4770 = vsub.s32 %v4767, %v4769
    %v4771 = vrot.slane %v4741, %v4770
    %v4780 = vld [vmem:[#allocation3 + $0x80] sm:$0x88]
    %v4781 = vsel %vm1654, %v4705, %v4780
    %4782 = vst [vmem:[#allocation3 + $0x80] sm:$0x88] %v4781
    %v4783 = vld [vmem:[#allocation3 + $0x88] sm:$0x88]
    %v4784 = vsel %vm1654, %v4712, %v4783
    %4785 = vst [vmem:[#allocation3 + $0x88] sm:$0x88] %v4784
    %v4786 = vld [vmem:[#allocation3 + $0x90] sm:$0x88]
    %v4787 = vsel %vm1654, %v4719, %v4786
    %4788 = vst [vmem:[#allocation3 + $0x90] sm:$0x88] %v4787
    %v4789 = vld [vmem:[#allocation3 + $0x98] sm:$0x88]
    %v4790 = vsel %vm1654, %v4726, %v4789
    %4791 = vst [vmem:[#allocation3 + $0x98] sm:$0x88] %v4790
    %v4792 = vld [vmem:[#allocation3 + $0xa0] sm:$0x88]
    %v4793 = vsel %vm1654, %v4750, %v4792
    %4794 = vst [vmem:[#allocation3 + $0xa0] sm:$0x88] %v4793
    %v4795 = vld [vmem:[#allocation3 + $0xa8] sm:$0x88]
    %v4796 = vsel %vm1654, %v4757, %v4795
    %4797 = vst [vmem:[#allocation3 + $0xa8] sm:$0x88] %v4796
    %v4798 = vld [vmem:[#allocation3 + $0xb0] sm:$0x88]
    %v4799 = vsel %vm1654, %v4764, %v4798
    %4800 = vst [vmem:[#allocation3 + $0xb0] sm:$0x88] %v4799
    %v4801 = vld [vmem:[#allocation3 + $0xb8] sm:$0x88]
    %v4802 = vsel %vm1654, %v4771, %v4801
    %4803 = vst [vmem:[#allocation3 + $0xb8] sm:$0x88] %v4802
    %v4804 = vld [vmem:[#allocation2 + $0x3] sm:$0xff]
    %v4805 = vld [vmem:[#allocation2 + $0xb] sm:$0xff]
    %v4806 = vld [vmem:[#allocation2 + $0x13] sm:$0x1]
    %v4810 = vcombine.high %v4804, %v4804
    %v4812 = vunpack.c.l.s4 1935823168
    %v4813 = vunpack.c.0.s8 %v4812
    %v4814 = vlaneseq
    %v4815 = vshrl.u32 %v4814, 7
    %v4816 = vsub.s32 %v4813, %v4815
    %v4817 = vrot.slane %v4804, %v4816
    %v4819 = vunpack.c.l.s4 1935823168
    %v4820 = vunpack.c.0.s8 %v4819
    %v4821 = vlaneseq
    %v4822 = vshrl.u32 %v4821, 7
    %v4823 = vsub.s32 %v4820, %v4822
    %v4824 = vrot.slane %v4810, %v4823
    %v4825 = vcombine.high %v4817, %v4817
    %v4826 = vcombine.high %v4824, %v4824
    %v4828 = vunpack.c.l.s4 1935823168
    %v4829 = vunpack.c.0.s8 %v4828
    %v4830 = vlaneseq
    %v4831 = vshrl.u32 %v4830, 7
    %v4832 = vsub.s32 %v4829, %v4831
    %v4833 = vrot.slane %v4817, %v4832
    %v4835 = vunpack.c.l.s4 1935823168
    %v4836 = vunpack.c.0.s8 %v4835
    %v4837 = vlaneseq
    %v4838 = vshrl.u32 %v4837, 7
    %v4839 = vsub.s32 %v4836, %v4838
    %v4840 = vrot.slane %v4825, %v4839
    %v4842 = vunpack.c.l.s4 1935823168
    %v4843 = vunpack.c.0.s8 %v4842
    %v4844 = vlaneseq
    %v4845 = vshrl.u32 %v4844, 7
    %v4846 = vsub.s32 %v4843, %v4845
    %v4847 = vrot.slane %v4824, %v4846
    %v4849 = vunpack.c.l.s4 1935823168
    %v4850 = vunpack.c.0.s8 %v4849
    %v4851 = vlaneseq
    %v4852 = vshrl.u32 %v4851, 7
    %v4853 = vsub.s32 %v4850, %v4852
    %v4854 = vrot.slane %v4826, %v4853
    %v4855 = vcombine.high %v4805, %v4805
    %v4857 = vunpack.c.l.s4 1935823168
    %v4858 = vunpack.c.0.s8 %v4857
    %v4859 = vlaneseq
    %v4860 = vshrl.u32 %v4859, 7
    %v4861 = vsub.s32 %v4858, %v4860
    %v4862 = vrot.slane %v4805, %v4861
    %v4864 = vunpack.c.l.s4 1935823168
    %v4865 = vunpack.c.0.s8 %v4864
    %v4866 = vlaneseq
    %v4867 = vshrl.u32 %v4866, 7
    %v4868 = vsub.s32 %v4865, %v4867
    %v4869 = vrot.slane %v4855, %v4868
    %v4870 = vcombine.high %v4862, %v4862
    %v4871 = vcombine.high %v4869, %v4869
    %v4873 = vunpack.c.l.s4 1935823168
    %v4874 = vunpack.c.0.s8 %v4873
    %v4875 = vlaneseq
    %v4876 = vshrl.u32 %v4875, 7
    %v4877 = vsub.s32 %v4874, %v4876
    %v4878 = vrot.slane %v4862, %v4877
    %v4880 = vunpack.c.l.s4 1935823168
    %v4881 = vunpack.c.0.s8 %v4880
    %v4882 = vlaneseq
    %v4883 = vshrl.u32 %v4882, 7
    %v4884 = vsub.s32 %v4881, %v4883
    %v4885 = vrot.slane %v4870, %v4884
    %v4887 = vunpack.c.l.s4 1935823168
    %v4888 = vunpack.c.0.s8 %v4887
    %v4889 = vlaneseq
    %v4890 = vshrl.u32 %v4889, 7
    %v4891 = vsub.s32 %v4888, %v4890
    %v4892 = vrot.slane %v4869, %v4891
    %v4894 = vunpack.c.l.s4 1935823168
    %v4895 = vunpack.c.0.s8 %v4894
    %v4896 = vlaneseq
    %v4897 = vshrl.u32 %v4896, 7
    %v4898 = vsub.s32 %v4895, %v4897
    %v4899 = vrot.slane %v4871, %v4898
    %v4901 = vunpack.c.l.s4 1935823168
    %v4902 = vunpack.c.0.s8 %v4901
    %v4903 = vlaneseq
    %v4904 = vshrl.u32 %v4903, 7
    %v4905 = vsub.s32 %v4902, %v4904
    %v4906 = vrot.slane %v4806, %v4905
    %v4908 = vunpack.c.l.s4 1935823168
    %v4909 = vunpack.c.0.s8 %v4908
    %v4910 = vlaneseq
    %v4911 = vshrl.u32 %v4910, 7
    %v4912 = vsub.s32 %v4909, %v4911
    %v4913 = vrot.slane %v4906, %v4912
    %v4915 = vshll.u32 %v4833, 16
    %v4917 = vrot.slane %v4915, 5
    %v4919 = vshll.u32 %v4840, 16
    %v4921 = vrot.slane %v4919, 5
    %v4923 = vshll.u32 %v4847, 16
    %v4925 = vrot.slane %v4923, 5
    %v4927 = vshll.u32 %v4854, 16
    %v4929 = vrot.slane %v4927, 5
    %v4931 = vshll.u32 %v4878, 16
    %v4933 = vrot.slane %v4931, 5
    %v4935 = vshll.u32 %v4885, 16
    %v4937 = vrot.slane %v4935, 5
    %v4939 = vshll.u32 %v4892, 16
    %v4941 = vrot.slane %v4939, 5
    %v4943 = vshll.u32 %v4899, 16
    %v4945 = vrot.slane %v4943, 5
    %v4947 = vshll.u32 %v4913, 16
    %v4949 = vrot.slane %v4947, 5
    %4950 = vrot.lane.b32.xlu0 %v4917, 126
    %v4951 = vpop.permute.xlu0 %4950
    %4952 = vrot.lane.b32.xlu0 %v4921, 126
    %v4953 = vpop.permute.xlu0 %4952
    %4954 = vrot.lane.b32.xlu0 %v4925, 126
    %v4955 = vpop.permute.xlu0 %4954
    %4956 = vrot.lane.b32.xlu0 %v4929, 126
    %v4957 = vpop.permute.xlu0 %4956
    %4958 = vrot.lane.b32.xlu0 %v4933, 126
    %v4959 = vpop.permute.xlu0 %4958
    %4960 = vrot.lane.b32.xlu0 %v4937, 126
    %v4961 = vpop.permute.xlu0 %4960
    %4962 = vrot.lane.b32.xlu0 %v4941, 126
    %v4963 = vpop.permute.xlu0 %4962
    %4964 = vrot.lane.b32.xlu0 %v4945, 126
    %v4965 = vpop.permute.xlu0 %4964
    %4966 = vrot.lane.b32.xlu0 %v4949, 126
    %v4967 = vpop.permute.xlu0 %4966
    %v4968 = vrot.slane %v4951, 4
    %v4969 = vrot.slane %v4953, 4
    %v4970 = vrot.slane %v4955, 4
    %v4971 = vrot.slane %v4957, 4
    %v4972 = vrot.slane %v4959, 4
    %v4973 = vrot.slane %v4961, 4
    %v4974 = vrot.slane %v4963, 4
    %v4975 = vrot.slane %v4965, 4
    %v4976 = vrot.slane %v4967, 4
    %v4977 = vsel %vm452, %v4968, %v4969
    %v4978 = vsel %vm1022, %v4951, %v4977
    %v4979 = vsel %vm452, %v4969, %v4970
    %v4980 = vsel %vm1022, %v4953, %v4979
    %v4981 = vsel %vm452, %v4970, %v4971
    %v4982 = vsel %vm1022, %v4955, %v4981
    %v4983 = vsel %vm452, %v4971, %v4972
    %v4984 = vsel %vm1022, %v4957, %v4983
    %v4985 = vsel %vm452, %v4972, %v4973
    %v4986 = vsel %vm1022, %v4959, %v4985
    %v4987 = vsel %vm452, %v4973, %v4974
    %v4988 = vsel %vm1022, %v4961, %v4987
    %v4989 = vsel %vm452, %v4974, %v4975
    %v4990 = vsel %vm1022, %v4963, %v4989
    %v4991 = vsel %vm452, %v4975, %v4976
    %v4992 = vsel %vm1022, %v4965, %v4991
    %v5001 = vld [vmem:[#allocation3 + $0x80] sm:$0x88]
    %v5002 = vsel %vm1881, %v4978, %v5001
    %5003 = vst [vmem:[#allocation3 + $0x80] sm:$0x88] %v5002
    %v5004 = vld [vmem:[#allocation3 + $0x88] sm:$0x88]
    %v5005 = vsel %vm1881, %v4980, %v5004
    %5006 = vst [vmem:[#allocation3 + $0x88] sm:$0x88] %v5005
    %v5007 = vld [vmem:[#allocation3 + $0x90] sm:$0x88]
    %v5008 = vsel %vm1881, %v4982, %v5007
    %5009 = vst [vmem:[#allocation3 + $0x90] sm:$0x88] %v5008
    %v5010 = vld [vmem:[#allocation3 + $0x98] sm:$0x88]
    %v5011 = vsel %vm1881, %v4984, %v5010
    %5012 = vst [vmem:[#allocation3 + $0x98] sm:$0x88] %v5011
    %v5013 = vld [vmem:[#allocation3 + $0xa0] sm:$0x88]
    %v5014 = vsel %vm1881, %v4986, %v5013
    %5015 = vst [vmem:[#allocation3 + $0xa0] sm:$0x88] %v5014
    %v5016 = vld [vmem:[#allocation3 + $0xa8] sm:$0x88]
    %v5017 = vsel %vm1881, %v4988, %v5016
    %5018 = vst [vmem:[#allocation3 + $0xa8] sm:$0x88] %v5017
    %v5019 = vld [vmem:[#allocation3 + $0xb0] sm:$0x88]
    %v5020 = vsel %vm1881, %v4990, %v5019
    %5021 = vst [vmem:[#allocation3 + $0xb0] sm:$0x88] %v5020
    %v5022 = vld [vmem:[#allocation3 + $0xb8] sm:$0x88]
    %v5023 = vsel %vm1881, %v4992, %v5022
    %5024 = vst [vmem:[#allocation3 + $0xb8] sm:$0x88] %v5023
    %v5025 = vld [vmem:[#allocation2 + $0x3] sm:$0xff]
    %v5026 = vld [vmem:[#allocation2 + $0xb] sm:$0xff]
    %v5027 = vld [vmem:[#allocation2 + $0x13] sm:$0x1]
    %v5031 = vcombine.high %v5025, %v5025
    %v5033 = vunpack.c.l.s4 1935823168
    %v5034 = vunpack.c.0.s8 %v5033
    %v5035 = vlaneseq
    %v5036 = vshrl.u32 %v5035, 7
    %v5037 = vsub.s32 %v5034, %v5036
    %v5038 = vrot.slane %v5025, %v5037
    %v5040 = vunpack.c.l.s4 1935823168
    %v5041 = vunpack.c.0.s8 %v5040
    %v5042 = vlaneseq
    %v5043 = vshrl.u32 %v5042, 7
    %v5044 = vsub.s32 %v5041, %v5043
    %v5045 = vrot.slane %v5031, %v5044
    %v5046 = vcombine.high %v5038, %v5038
    %v5047 = vcombine.high %v5045, %v5045
    %v5049 = vunpack.c.l.s4 1935823168
    %v5050 = vunpack.c.0.s8 %v5049
    %v5051 = vlaneseq
    %v5052 = vshrl.u32 %v5051, 7
    %v5053 = vsub.s32 %v5050, %v5052
    %v5054 = vrot.slane %v5038, %v5053
    %v5056 = vunpack.c.l.s4 1935823168
    %v5057 = vunpack.c.0.s8 %v5056
    %v5058 = vlaneseq
    %v5059 = vshrl.u32 %v5058, 7
    %v5060 = vsub.s32 %v5057, %v5059
    %v5061 = vrot.slane %v5046, %v5060
    %v5063 = vunpack.c.l.s4 1935823168
    %v5064 = vunpack.c.0.s8 %v5063
    %v5065 = vlaneseq
    %v5066 = vshrl.u32 %v5065, 7
    %v5067 = vsub.s32 %v5064, %v5066
    %v5068 = vrot.slane %v5045, %v5067
    %v5070 = vunpack.c.l.s4 1935823168
    %v5071 = vunpack.c.0.s8 %v5070
    %v5072 = vlaneseq
    %v5073 = vshrl.u32 %v5072, 7
    %v5074 = vsub.s32 %v5071, %v5073
    %v5075 = vrot.slane %v5047, %v5074
    %v5076 = vcombine.high %v5026, %v5026
    %v5078 = vunpack.c.l.s4 1935823168
    %v5079 = vunpack.c.0.s8 %v5078
    %v5080 = vlaneseq
    %v5081 = vshrl.u32 %v5080, 7
    %v5082 = vsub.s32 %v5079, %v5081
    %v5083 = vrot.slane %v5026, %v5082
    %v5085 = vunpack.c.l.s4 1935823168
    %v5086 = vunpack.c.0.s8 %v5085
    %v5087 = vlaneseq
    %v5088 = vshrl.u32 %v5087, 7
    %v5089 = vsub.s32 %v5086, %v5088
    %v5090 = vrot.slane %v5076, %v5089
    %v5091 = vcombine.high %v5083, %v5083
    %v5092 = vcombine.high %v5090, %v5090
    %v5094 = vunpack.c.l.s4 1935823168
    %v5095 = vunpack.c.0.s8 %v5094
    %v5096 = vlaneseq
    %v5097 = vshrl.u32 %v5096, 7
    %v5098 = vsub.s32 %v5095, %v5097
    %v5099 = vrot.slane %v5083, %v5098
    %v5101 = vunpack.c.l.s4 1935823168
    %v5102 = vunpack.c.0.s8 %v5101
    %v5103 = vlaneseq
    %v5104 = vshrl.u32 %v5103, 7
    %v5105 = vsub.s32 %v5102, %v5104
    %v5106 = vrot.slane %v5091, %v5105
    %v5108 = vunpack.c.l.s4 1935823168
    %v5109 = vunpack.c.0.s8 %v5108
    %v5110 = vlaneseq
    %v5111 = vshrl.u32 %v5110, 7
    %v5112 = vsub.s32 %v5109, %v5111
    %v5113 = vrot.slane %v5090, %v5112
    %v5115 = vunpack.c.l.s4 1935823168
    %v5116 = vunpack.c.0.s8 %v5115
    %v5117 = vlaneseq
    %v5118 = vshrl.u32 %v5117, 7
    %v5119 = vsub.s32 %v5116, %v5118
    %v5120 = vrot.slane %v5092, %v5119
    %v5122 = vunpack.c.l.s4 1935823168
    %v5123 = vunpack.c.0.s8 %v5122
    %v5124 = vlaneseq
    %v5125 = vshrl.u32 %v5124, 7
    %v5126 = vsub.s32 %v5123, %v5125
    %v5127 = vrot.slane %v5027, %v5126
    %v5129 = vunpack.c.l.s4 1935823168
    %v5130 = vunpack.c.0.s8 %v5129
    %v5131 = vlaneseq
    %v5132 = vshrl.u32 %v5131, 7
    %v5133 = vsub.s32 %v5130, %v5132
    %v5134 = vrot.slane %v5127, %v5133
    %5135 = vrot.lane.b32.xlu0 %v5054, 124
    %v5136 = vpop.permute.xlu0 %5135
    %5137 = vrot.lane.b32.xlu0 %v5061, 124
    %v5138 = vpop.permute.xlu0 %5137
    %5139 = vrot.lane.b32.xlu0 %v5068, 124
    %v5140 = vpop.permute.xlu0 %5139
    %5141 = vrot.lane.b32.xlu0 %v5075, 124
    %v5142 = vpop.permute.xlu0 %5141
    %5143 = vrot.lane.b32.xlu0 %v5099, 124
    %v5144 = vpop.permute.xlu0 %5143
    %5145 = vrot.lane.b32.xlu0 %v5106, 124
    %v5146 = vpop.permute.xlu0 %5145
    %5147 = vrot.lane.b32.xlu0 %v5113, 124
    %v5148 = vpop.permute.xlu0 %5147
    %5149 = vrot.lane.b32.xlu0 %v5120, 124
    %v5150 = vpop.permute.xlu0 %5149
    %5151 = vrot.lane.b32.xlu0 %v5134, 124
    %v5152 = vpop.permute.xlu0 %5151
    %v5153 = vrot.slane %v5136, 4
    %v5154 = vrot.slane %v5138, 4
    %v5155 = vrot.slane %v5140, 4
    %v5156 = vrot.slane %v5142, 4
    %v5157 = vrot.slane %v5144, 4
    %v5158 = vrot.slane %v5146, 4
    %v5159 = vrot.slane %v5148, 4
    %v5160 = vrot.slane %v5150, 4
    %v5161 = vrot.slane %v5152, 4
    %v5162 = vsel %vm452, %v5153, %v5154
    %v5163 = vsel %vm1214, %v5136, %v5162
    %v5164 = vsel %vm452, %v5154, %v5155
    %v5165 = vsel %vm1214, %v5138, %v5164
    %v5166 = vsel %vm452, %v5155, %v5156
    %v5167 = vsel %vm1214, %v5140, %v5166
    %v5168 = vsel %vm452, %v5156, %v5157
    %v5169 = vsel %vm1214, %v5142, %v5168
    %v5170 = vsel %vm452, %v5157, %v5158
    %v5171 = vsel %vm1214, %v5144, %v5170
    %v5172 = vsel %vm452, %v5158, %v5159
    %v5173 = vsel %vm1214, %v5146, %v5172
    %v5174 = vsel %vm452, %v5159, %v5160
    %v5175 = vsel %vm1214, %v5148, %v5174
    %v5176 = vsel %vm452, %v5160, %v5161
    %v5177 = vsel %vm1214, %v5150, %v5176
    %v5186 = vld [vmem:[#allocation3 + $0xc0] sm:$0x11]
    %v5187 = vsel %vm478, %v5163, %v5186
    %5188 = vst [vmem:[#allocation3 + $0xc0] sm:$0x11] %v5187
    %v5189 = vld [vmem:[#allocation3 + $0xc8] sm:$0x11]
    %v5190 = vsel %vm478, %v5165, %v5189
    %5191 = vst [vmem:[#allocation3 + $0xc8] sm:$0x11] %v5190
    %v5192 = vld [vmem:[#allocation3 + $0xd0] sm:$0x11]
    %v5193 = vsel %vm478, %v5167, %v5192
    %5194 = vst [vmem:[#allocation3 + $0xd0] sm:$0x11] %v5193
    %v5195 = vld [vmem:[#allocation3 + $0xd8] sm:$0x11]
    %v5196 = vsel %vm478, %v5169, %v5195
    %5197 = vst [vmem:[#allocation3 + $0xd8] sm:$0x11] %v5196
    %v5198 = vld [vmem:[#allocation3 + $0xe0] sm:$0x11]
    %v5199 = vsel %vm478, %v5171, %v5198
    %5200 = vst [vmem:[#allocation3 + $0xe0] sm:$0x11] %v5199
    %v5201 = vld [vmem:[#allocation3 + $0xe8] sm:$0x11]
    %v5202 = vsel %vm478, %v5173, %v5201
    %5203 = vst [vmem:[#allocation3 + $0xe8] sm:$0x11] %v5202
    %v5204 = vld [vmem:[#allocation3 + $0xf0] sm:$0x11]
    %v5205 = vsel %vm478, %v5175, %v5204
    %5206 = vst [vmem:[#allocation3 + $0xf0] sm:$0x11] %v5205
    %v5207 = vld [vmem:[#allocation3 + $0xf8] sm:$0x11]
    %v5208 = vsel %vm478, %v5177, %v5207
    %5209 = vst [vmem:[#allocation3 + $0xf8] sm:$0x11] %v5208
    %v5210 = vld [vmem:[%s1] sm:$0xf]
    %v5211 = vld [vmem:[%s1 + $0x4] sm:$0xf]
    %v5212 = vld [vmem:[#allocation3] sm:$0xff]
    %v5213 = vld [vmem:[#allocation3 + $0x8] sm:$0xff]
    %v5214 = vld [vmem:[#allocation3 + $0x10] sm:$0xff]
    %v5215 = vld [vmem:[#allocation3 + $0x18] sm:$0xff]
    %v5216 = vld [vmem:[#allocation3 + $0x20] sm:$0xff]
    %v5217 = vld [vmem:[#allocation3 + $0x28] sm:$0xff]
    %v5218 = vld [vmem:[#allocation3 + $0x30] sm:$0xff]
    %v5219 = vld [vmem:[#allocation3 + $0x38] sm:$0xff]
    %v5220 = vld [vmem:[#allocation3 + $0x40] sm:$0xff]
    %v5221 = vld [vmem:[#allocation3 + $0x48] sm:$0xff]
    %v5222 = vld [vmem:[#allocation3 + $0x50] sm:$0xff]
    %v5223 = vld [vmem:[#allocation3 + $0x58] sm:$0xff]
    %v5224 = vld [vmem:[#allocation3 + $0x60] sm:$0xff]
    %v5225 = vld [vmem:[#allocation3 + $0x68] sm:$0xff]
    %v5226 = vld [vmem:[#allocation3 + $0x70] sm:$0xff]
    %v5227 = vld [vmem:[#allocation3 + $0x78] sm:$0xff]
    %v5228 = vld [vmem:[#allocation3 + $0x80] sm:$0xff]
    %v5229 = vld [vmem:[#allocation3 + $0x88] sm:$0xff]
    %v5230 = vld [vmem:[#allocation3 + $0x90] sm:$0xff]
    %v5231 = vld [vmem:[#allocation3 + $0x98] sm:$0xff]
    %v5232 = vld [vmem:[#allocation3 + $0xa0] sm:$0xff]
    %v5233 = vld [vmem:[#allocation3 + $0xa8] sm:$0xff]
    %v5234 = vld [vmem:[#allocation3 + $0xb0] sm:$0xff]
    %v5235 = vld [vmem:[#allocation3 + $0xb8] sm:$0xff]
    %v5236 = vld [vmem:[#allocation3 + $0xc0] sm:$0x11]
    %v5237 = vld [vmem:[#allocation3 + $0xc8] sm:$0x11]
    %v5238 = vld [vmem:[#allocation3 + $0xd0] sm:$0x11]
    %v5239 = vld [vmem:[#allocation3 + $0xd8] sm:$0x11]
    %v5240 = vld [vmem:[#allocation3 + $0xe0] sm:$0x11]
    %v5241 = vld [vmem:[#allocation3 + $0xe8] sm:$0x11]
    %v5242 = vld [vmem:[#allocation3 + $0xf0] sm:$0x11]
    %v5243 = vld [vmem:[#allocation3 + $0xf8] sm:$0x11]
    %v5244 = vld [vmem:[%s2] sm:$0xff]
    %v5245 = vld [vmem:[%s2 + $0x8] sm:$0xff]
    %5247 = vset.pattern.permute.xlu0 0
    %5248 = vperm.xlu0 %5247, %v5244
    %v5249 = vpop.permute.xlu0 %5248
    %5252 = vset.pattern.permute.xlu0 0
    %5253 = vperm.xlu0 %5252, %v5245
    %v5254 = vpop.permute.xlu0 %5253
    %v5258 = vunpack.c.l.b16 %v5210
    %v5259 = vunpack.c.l.b16 %v5211
    %v5260 = vpack.c.b16 %v5259, %v5258
    %v5293 = vunpack.c.l.b16 %v5212
    %v5294 = vunpack.c.h.b16 %v5212
    %v5295 = vunpack.c.l.b16 %v5213
    %v5296 = vunpack.c.h.b16 %v5213
    %v5297 = vunpack.c.l.b16 %v5214
    %v5298 = vunpack.c.h.b16 %v5214
    %v5299 = vunpack.c.l.b16 %v5215
    %v5300 = vunpack.c.h.b16 %v5215
    %v5301 = vunpack.c.l.b16 %v5216
    %v5302 = vunpack.c.h.b16 %v5216
    %v5303 = vunpack.c.l.b16 %v5217
    %v5304 = vunpack.c.h.b16 %v5217
    %v5305 = vunpack.c.l.b16 %v5218
    %v5306 = vunpack.c.h.b16 %v5218
    %v5307 = vunpack.c.l.b16 %v5219
    %v5308 = vunpack.c.h.b16 %v5219
    %v5309 = vunpack.c.l.b16 %v5220
    %v5310 = vunpack.c.h.b16 %v5220
    %v5311 = vunpack.c.l.b16 %v5221
    %v5312 = vunpack.c.h.b16 %v5221
    %v5313 = vunpack.c.l.b16 %v5222
    %v5314 = vunpack.c.h.b16 %v5222
    %v5315 = vunpack.c.l.b16 %v5223
    %v5316 = vunpack.c.h.b16 %v5223
    %v5317 = vunpack.c.l.b16 %v5224
    %v5318 = vunpack.c.h.b16 %v5224
    %v5319 = vunpack.c.l.b16 %v5225
    %v5320 = vunpack.c.h.b16 %v5225
    %v5321 = vunpack.c.l.b16 %v5226
    %v5322 = vunpack.c.h.b16 %v5226
    %v5323 = vunpack.c.l.b16 %v5227
    %v5324 = vunpack.c.h.b16 %v5227
    %v5325 = vunpack.c.l.b16 %v5228
    %v5326 = vunpack.c.h.b16 %v5228
    %v5327 = vunpack.c.l.b16 %v5229
    %v5328 = vunpack.c.h.b16 %v5229
    %v5329 = vunpack.c.l.b16 %v5230
    %v5330 = vunpack.c.h.b16 %v5230
    %v5331 = vunpack.c.l.b16 %v5231
    %v5332 = vunpack.c.h.b16 %v5231
    %v5333 = vunpack.c.l.b16 %v5232
    %v5334 = vunpack.c.h.b16 %v5232
    %v5335 = vunpack.c.l.b16 %v5233
    %v5336 = vunpack.c.h.b16 %v5233
    %v5337 = vunpack.c.l.b16 %v5234
    %v5338 = vunpack.c.h.b16 %v5234
    %v5339 = vunpack.c.l.b16 %v5235
    %v5340 = vunpack.c.h.b16 %v5235
    %v5341 = vunpack.c.l.b16 %v5236
    %v5342 = vunpack.c.h.b16 %v5236
    %v5343 = vunpack.c.l.b16 %v5237
    %v5344 = vunpack.c.h.b16 %v5237
    %v5345 = vunpack.c.l.b16 %v5238
    %v5346 = vunpack.c.h.b16 %v5238
    %v5347 = vunpack.c.l.b16 %v5239
    %v5348 = vunpack.c.h.b16 %v5239
    %v5349 = vunpack.c.l.b16 %v5240
    %v5350 = vunpack.c.h.b16 %v5240
    %v5351 = vunpack.c.l.b16 %v5241
    %v5352 = vunpack.c.h.b16 %v5241
    %v5353 = vunpack.c.l.b16 %v5242
    %v5354 = vunpack.c.h.b16 %v5242
    %v5355 = vunpack.c.l.b16 %v5243
    %v5356 = vunpack.c.h.b16 %v5243
    %v5357 = vpack.c.b16 %v5309, %v5293
    %v5358 = vpack.c.b16 %v5310, %v5294
    %v5359 = vpack.c.b16 %v5311, %v5295
    %v5360 = vpack.c.b16 %v5312, %v5296
    %v5361 = vpack.c.b16 %v5313, %v5297
    %v5362 = vpack.c.b16 %v5314, %v5298
    %v5363 = vpack.c.b16 %v5315, %v5299
    %v5364 = vpack.c.b16 %v5316, %v5300
    %v5365 = vpack.c.b16 %v5317, %v5301
    %v5366 = vpack.c.b16 %v5318, %v5302
    %v5367 = vpack.c.b16 %v5319, %v5303
    %v5368 = vpack.c.b16 %v5320, %v5304
    %v5369 = vpack.c.b16 %v5321, %v5305
    %v5370 = vpack.c.b16 %v5322, %v5306
    %v5371 = vpack.c.b16 %v5323, %v5307
    %v5372 = vpack.c.b16 %v5324, %v5308
    %v5373 = vpack.c.b16 %v5341, %v5325
    %v5374 = vpack.c.b16 %v5342, %v5326
    %v5375 = vpack.c.b16 %v5343, %v5327
    %v5376 = vpack.c.b16 %v5344, %v5328
    %v5377 = vpack.c.b16 %v5345, %v5329
    %v5378 = vpack.c.b16 %v5346, %v5330
    %v5379 = vpack.c.b16 %v5347, %v5331
    %v5380 = vpack.c.b16 %v5348, %v5332
    %v5381 = vpack.c.b16 %v5349, %v5333
    %v5382 = vpack.c.b16 %v5350, %v5334
    %v5383 = vpack.c.b16 %v5351, %v5335
    %v5384 = vpack.c.b16 %v5352, %v5336
    %v5385 = vpack.c.b16 %v5353, %v5337
    %v5386 = vpack.c.b16 %v5354, %v5338
    %v5387 = vpack.c.b16 %v5355, %v5339
    %v5388 = vpack.c.b16 %v5356, %v5340
    %vm5405 = vcmask 203776
    %v5407 = vsel %vm5405, %v5260, 0
    %vm5409 = vcmask 1043456
    %vm5410 = vcmask 1044480
    %v5411 = vsel %vm5409, 4294967295, 65535
    %v5412 = vsel %vm5410, %v5411, 0
    %v5414 = vand.u32 %v5373, %v5412
    %v5417 = vand.u32 %v5374, %v5412
    %v5420 = vand.u32 %v5375, %v5412
    %v5423 = vand.u32 %v5376, %v5412
    %v5426 = vand.u32 %v5377, %v5412
    %v5429 = vand.u32 %v5378, %v5412
    %v5432 = vand.u32 %v5379, %v5412
    %v5435 = vand.u32 %v5380, %v5412
    %v5438 = vand.u32 %v5381, %v5412
    %v5441 = vand.u32 %v5382, %v5412
    %v5444 = vand.u32 %v5383, %v5412
    %v5447 = vand.u32 %v5384, %v5412
    %v5450 = vand.u32 %v5385, %v5412
    %v5453 = vand.u32 %v5386, %v5412
    %v5456 = vand.u32 %v5387, %v5412
    %v5459 = vand.u32 %v5388, %v5412
    %5461 = vmatprep.subr.bf16.mxu0 %v5358
    %5462 = vmatpush1.bf16.msra.mxu0 %v5357
    %5463 = vmatprep.subr.bf16.mxu0 %v5417
    %5464 = vmatpush1.bf16.msra.mxu0 %v5414
    %5465 = vmatprep.subr.bf16.mxu0 0
    %5466 = vmatpush1.bf16.msra.mxu0 0
    %5467 = vmatprep.subr.bf16.mxu0 0
    %5468 = vmatpush1.bf16.msra.mxu0 0
    %5469 = vmatprep.subr.bf16.mxu0 0
    %5470 = vmatpush1.bf16.msra.mxu0 0
    %5471 = vmatprep.subr.bf16.mxu0 0
    %5472 = vmatpush1.bf16.msra.mxu0 0
    %5473 = vmatprep.subr.bf16.mxu0 0
    %5474 = vmatpush1.bf16.msra.mxu0 0
    %5475 = vmatprep.subr.bf16.mxu0 0
    %5476 = vmatpush1.bf16.msra.mxu0 0
    %5477 = vmatprep.subr.bf16.mxu0 0
    %5478 = vmatpush1.bf16.msra.mxu0 0
    %5479 = vmatprep.subr.bf16.mxu0 0
    %5480 = vmatpush1.bf16.msra.mxu0 0
    %5481 = vmatprep.subr.bf16.mxu0 0
    %5482 = vmatpush1.bf16.msra.mxu0 0
    %5483 = vmatprep.subr.bf16.mxu0 0
    %5484 = vmatpush1.bf16.msra.mxu0 0
    %5485 = vmatprep.subr.bf16.mxu0 0
    %5486 = vmatpush1.bf16.msra.mxu0 0
    %5487 = vmatprep.subr.bf16.mxu0 0
    %5488 = vmatpush1.bf16.msra.mxu0 0
    %5489 = vmatprep.subr.bf16.mxu0 0
    %5490 = vmatpush1.bf16.msra.mxu0 0
    %5491 = vmatprep.subr.bf16.mxu0 0
    %5492 = vmatpush1.bf16.msra.mxu0 0
    %5493 = vmatprep.mubr.bf16.mxu0 0
    %5494 = vmatmul.mubr.bf16.gmra.mrb[0].mxu0 %v5407
    %v5495 = vpop.f32.mrb[0].mxu0
    %v5496 = vadd.f32 %v5249, %v5495
    %v5497 = vpop.f32.mrb[0].mxu0
    %v5498 = vadd.f32 %v5249, %v5497
    %v5499 = vpop.f32.mrb[0].mxu0
    %v5500 = vadd.f32 %v5254, %v5499
    %v5501 = vpop.f32.mrb[0].mxu0
    %v5502 = vadd.f32 %v5254, %v5501
    %5503 = vdwg.mxu0
    %5504 = vmatprep.subr.bf16.mxu0 %v5360
    %5505 = vmatpush1.bf16.msra.mxu0 %v5359
    %5506 = vmatprep.subr.bf16.mxu0 %v5423
    %5507 = vmatpush1.bf16.msra.mxu0 %v5420
    %5508 = vmatprep.subr.bf16.mxu0 0
    %5509 = vmatpush1.bf16.msra.mxu0 0
    %5510 = vmatprep.subr.bf16.mxu0 0
    %5511 = vmatpush1.bf16.msra.mxu0 0
    %5512 = vmatprep.subr.bf16.mxu0 0
    %5513 = vmatpush1.bf16.msra.mxu0 0
    %5514 = vmatprep.subr.bf16.mxu0 0
    %5515 = vmatpush1.bf16.msra.mxu0 0
    %5516 = vmatprep.subr.bf16.mxu0 0
    %5517 = vmatpush1.bf16.msra.mxu0 0
    %5518 = vmatprep.subr.bf16.mxu0 0
    %5519 = vmatpush1.bf16.msra.mxu0 0
    %5520 = vmatprep.subr.bf16.mxu0 0
    %5521 = vmatpush1.bf16.msra.mxu0 0
    %5522 = vmatprep.subr.bf16.mxu0 0
    %5523 = vmatpush1.bf16.msra.mxu0 0
    %5524 = vmatprep.subr.bf16.mxu0 0
    %5525 = vmatpush1.bf16.msra.mxu0 0
    %5526 = vmatprep.subr.bf16.mxu0 0
    %5527 = vmatpush1.bf16.msra.mxu0 0
    %5528 = vmatprep.subr.bf16.mxu0 0
    %5529 = vmatpush1.bf16.msra.mxu0 0
    %5530 = vmatprep.subr.bf16.mxu0 0
    %5531 = vmatpush1.bf16.msra.mxu0 0
    %5532 = vmatprep.subr.bf16.mxu0 0
    %5533 = vmatpush1.bf16.msra.mxu0 0
    %5534 = vmatprep.subr.bf16.mxu0 0
    %5535 = vmatpush1.bf16.msra.mxu0 0
    %5536 = vmatprep.mubr.bf16.mxu0 0
    %5537 = vmatmul.mubr.bf16.gmra.mrb[0].mxu0 %v5407
    %v5538 = vpop.f32.mrb[0].mxu0
    %v5539 = vadd.f32 %v5249, %v5538
    %v5540 = vpop.f32.mrb[0].mxu0
    %v5541 = vadd.f32 %v5249, %v5540
    %v5542 = vpop.f32.mrb[0].mxu0
    %v5543 = vadd.f32 %v5254, %v5542
    %v5544 = vpop.f32.mrb[0].mxu0
    %v5545 = vadd.f32 %v5254, %v5544
    %5546 = vdwg.mxu0
    %5547 = vmatprep.subr.bf16.mxu0 %v5362
    %5548 = vmatpush1.bf16.msra.mxu0 %v5361
    %5549 = vmatprep.subr.bf16.mxu0 %v5429
    %5550 = vmatpush1.bf16.msra.mxu0 %v5426
    %5551 = vmatprep.subr.bf16.mxu0 0
    %5552 = vmatpush1.bf16.msra.mxu0 0
    %5553 = vmatprep.subr.bf16.mxu0 0
    %5554 = vmatpush1.bf16.msra.mxu0 0
    %5555 = vmatprep.subr.bf16.mxu0 0
    %5556 = vmatpush1.bf16.msra.mxu0 0
    %5557 = vmatprep.subr.bf16.mxu0 0
    %5558 = vmatpush1.bf16.msra.mxu0 0
    %5559 = vmatprep.subr.bf16.mxu0 0
    %5560 = vmatpush1.bf16.msra.mxu0 0
    %5561 = vmatprep.subr.bf16.mxu0 0
    %5562 = vmatpush1.bf16.msra.mxu0 0
    %5563 = vmatprep.subr.bf16.mxu0 0
    %5564 = vmatpush1.bf16.msra.mxu0 0
    %5565 = vmatprep.subr.bf16.mxu0 0
    %5566 = vmatpush1.bf16.msra.mxu0 0
    %5567 = vmatprep.subr.bf16.mxu0 0
    %5568 = vmatpush1.bf16.msra.mxu0 0
    %5569 = vmatprep.subr.bf16.mxu0 0
    %5570 = vmatpush1.bf16.msra.mxu0 0
    %5571 = vmatprep.subr.bf16.mxu0 0
    %5572 = vmatpush1.bf16.msra.mxu0 0
    %5573 = vmatprep.subr.bf16.mxu0 0
    %5574 = vmatpush1.bf16.msra.mxu0 0
    %5575 = vmatprep.subr.bf16.mxu0 0
    %5576 = vmatpush1.bf16.msra.mxu0 0
    %5577 = vmatprep.subr.bf16.mxu0 0
    %5578 = vmatpush1.bf16.msra.mxu0 0
    %5579 = vmatprep.mubr.bf16.mxu0 0
    %5580 = vmatmul.mubr.bf16.gmra.mrb[0].mxu0 %v5407
    %v5581 = vpop.f32.mrb[0].mxu0
    %v5582 = vadd.f32 %v5249, %v5581
    %v5583 = vpop.f32.mrb[0].mxu0
    %v5584 = vadd.f32 %v5249, %v5583
    %v5585 = vpop.f32.mrb[0].mxu0
    %v5586 = vadd.f32 %v5254, %v5585
    %v5587 = vpop.f32.mrb[0].mxu0
    %v5588 = vadd.f32 %v5254, %v5587
    %5589 = vdwg.mxu0
    %5590 = vmatprep.subr.bf16.mxu0 %v5364
    %5591 = vmatpush1.bf16.msra.mxu0 %v5363
    %5592 = vmatprep.subr.bf16.mxu0 %v5435
    %5593 = vmatpush1.bf16.msra.mxu0 %v5432
    %5594 = vmatprep.subr.bf16.mxu0 0
    %5595 = vmatpush1.bf16.msra.mxu0 0
    %5596 = vmatprep.subr.bf16.mxu0 0
    %5597 = vmatpush1.bf16.msra.mxu0 0
    %5598 = vmatprep.subr.bf16.mxu0 0
    %5599 = vmatpush1.bf16.msra.mxu0 0
    %5600 = vmatprep.subr.bf16.mxu0 0
    %5601 = vmatpush1.bf16.msra.mxu0 0
    %5602 = vmatprep.subr.bf16.mxu0 0
    %5603 = vmatpush1.bf16.msra.mxu0 0
    %5604 = vmatprep.subr.bf16.mxu0 0
    %5605 = vmatpush1.bf16.msra.mxu0 0
    %5606 = vmatprep.subr.bf16.mxu0 0
    %5607 = vmatpush1.bf16.msra.mxu0 0
    %5608 = vmatprep.subr.bf16.mxu0 0
    %5609 = vmatpush1.bf16.msra.mxu0 0
    %5610 = vmatprep.subr.bf16.mxu0 0
    %5611 = vmatpush1.bf16.msra.mxu0 0
    %5612 = vmatprep.subr.bf16.mxu0 0
    %5613 = vmatpush1.bf16.msra.mxu0 0
    %5614 = vmatprep.subr.bf16.mxu0 0
    %5615 = vmatpush1.bf16.msra.mxu0 0
    %5616 = vmatprep.subr.bf16.mxu0 0
    %5617 = vmatpush1.bf16.msra.mxu0 0
    %5618 = vmatprep.subr.bf16.mxu0 0
    %5619 = vmatpush1.bf16.msra.mxu0 0
    %5620 = vmatprep.subr.bf16.mxu0 0
    %5621 = vmatpush1.bf16.msra.mxu0 0
    %5622 = vmatprep.mubr.bf16.mxu0 0
    %5623 = vmatmul.mubr.bf16.gmra.mrb[0].mxu0 %v5407
    %v5624 = vpop.f32.mrb[0].mxu0
    %v5625 = vadd.f32 %v5249, %v5624
    %v5626 = vpop.f32.mrb[0].mxu0
    %v5627 = vadd.f32 %v5249, %v5626
    %v5628 = vpop.f32.mrb[0].mxu0
    %v5629 = vadd.f32 %v5254, %v5628
    %v5630 = vpop.f32.mrb[0].mxu0
    %v5631 = vadd.f32 %v5254, %v5630
    %5632 = vdwg.mxu0
    %5633 = vmatprep.subr.bf16.mxu0 %v5366
    %5634 = vmatpush1.bf16.msra.mxu0 %v5365
    %5635 = vmatprep.subr.bf16.mxu0 %v5441
    %5636 = vmatpush1.bf16.msra.mxu0 %v5438
    %5637 = vmatprep.subr.bf16.mxu0 0
    %5638 = vmatpush1.bf16.msra.mxu0 0
    %5639 = vmatprep.subr.bf16.mxu0 0
    %5640 = vmatpush1.bf16.msra.mxu0 0
    %5641 = vmatprep.subr.bf16.mxu0 0
    %5642 = vmatpush1.bf16.msra.mxu0 0
    %5643 = vmatprep.subr.bf16.mxu0 0
    %5644 = vmatpush1.bf16.msra.mxu0 0
    %5645 = vmatprep.subr.bf16.mxu0 0
    %5646 = vmatpush1.bf16.msra.mxu0 0
    %5647 = vmatprep.subr.bf16.mxu0 0
    %5648 = vmatpush1.bf16.msra.mxu0 0
    %5649 = vmatprep.subr.bf16.mxu0 0
    %5650 = vmatpush1.bf16.msra.mxu0 0
    %5651 = vmatprep.subr.bf16.mxu0 0
    %5652 = vmatpush1.bf16.msra.mxu0 0
    %5653 = vmatprep.subr.bf16.mxu0 0
    %5654 = vmatpush1.bf16.msra.mxu0 0
    %5655 = vmatprep.subr.bf16.mxu0 0
    %5656 = vmatpush1.bf16.msra.mxu0 0
    %5657 = vmatprep.subr.bf16.mxu0 0
    %5658 = vmatpush1.bf16.msra.mxu0 0
    %5659 = vmatprep.subr.bf16.mxu0 0
    %5660 = vmatpush1.bf16.msra.mxu0 0
    %5661 = vmatprep.subr.bf16.mxu0 0
    %5662 = vmatpush1.bf16.msra.mxu0 0
    %5663 = vmatprep.subr.bf16.mxu0 0
    %5664 = vmatpush1.bf16.msra.mxu0 0
    %5665 = vmatprep.mubr.bf16.mxu0 0
    %5666 = vmatmul.mubr.bf16.gmra.mrb[0].mxu0 %v5407
    %v5667 = vpop.f32.mrb[0].mxu0
    %v5668 = vadd.f32 %v5249, %v5667
    %v5669 = vpop.f32.mrb[0].mxu0
    %v5670 = vadd.f32 %v5249, %v5669
    %v5671 = vpop.f32.mrb[0].mxu0
    %v5672 = vadd.f32 %v5254, %v5671
    %v5673 = vpop.f32.mrb[0].mxu0
    %v5674 = vadd.f32 %v5254, %v5673
    %5675 = vdwg.mxu0
    %5676 = vmatprep.subr.bf16.mxu0 %v5368
    %5677 = vmatpush1.bf16.msra.mxu0 %v5367
    %5678 = vmatprep.subr.bf16.mxu0 %v5447
    %5679 = vmatpush1.bf16.msra.mxu0 %v5444
    %5680 = vmatprep.subr.bf16.mxu0 0
    %5681 = vmatpush1.bf16.msra.mxu0 0
    %5682 = vmatprep.subr.bf16.mxu0 0
    %5683 = vmatpush1.bf16.msra.mxu0 0
    %5684 = vmatprep.subr.bf16.mxu0 0
    %5685 = vmatpush1.bf16.msra.mxu0 0
    %5686 = vmatprep.subr.bf16.mxu0 0
    %5687 = vmatpush1.bf16.msra.mxu0 0
    %5688 = vmatprep.subr.bf16.mxu0 0
    %5689 = vmatpush1.bf16.msra.mxu0 0
    %5690 = vmatprep.subr.bf16.mxu0 0
    %5691 = vmatpush1.bf16.msra.mxu0 0
    %5692 = vmatprep.subr.bf16.mxu0 0
    %5693 = vmatpush1.bf16.msra.mxu0 0
    %5694 = vmatprep.subr.bf16.mxu0 0
    %5695 = vmatpush1.bf16.msra.mxu0 0
    %5696 = vmatprep.subr.bf16.mxu0 0
    %5697 = vmatpush1.bf16.msra.mxu0 0
    %5698 = vmatprep.subr.bf16.mxu0 0
    %5699 = vmatpush1.bf16.msra.mxu0 0
    %5700 = vmatprep.subr.bf16.mxu0 0
    %5701 = vmatpush1.bf16.msra.mxu0 0
    %5702 = vmatprep.subr.bf16.mxu0 0
    %5703 = vmatpush1.bf16.msra.mxu0 0
    %5704 = vmatprep.subr.bf16.mxu0 0
    %5705 = vmatpush1.bf16.msra.mxu0 0
    %5706 = vmatprep.subr.bf16.mxu0 0
    %5707 = vmatpush1.bf16.msra.mxu0 0
    %5708 = vmatprep.mubr.bf16.mxu0 0
    %5709 = vmatmul.mubr.bf16.gmra.mrb[0].mxu0 %v5407
    %v5710 = vpop.f32.mrb[0].mxu0
    %v5711 = vadd.f32 %v5249, %v5710
    %v5712 = vpop.f32.mrb[0].mxu0
    %v5713 = vadd.f32 %v5249, %v5712
    %v5714 = vpop.f32.mrb[0].mxu0
    %v5715 = vadd.f32 %v5254, %v5714
    %v5716 = vpop.f32.mrb[0].mxu0
    %v5717 = vadd.f32 %v5254, %v5716
    %5718 = vdwg.mxu0
    %5719 = vmatprep.subr.bf16.mxu0 %v5370
    %5720 = vmatpush1.bf16.msra.mxu0 %v5369
    %5721 = vmatprep.subr.bf16.mxu0 %v5453
    %5722 = vmatpush1.bf16.msra.mxu0 %v5450
    %5723 = vmatprep.subr.bf16.mxu0 0
    %5724 = vmatpush1.bf16.msra.mxu0 0
    %5725 = vmatprep.subr.bf16.mxu0 0
    %5726 = vmatpush1.bf16.msra.mxu0 0
    %5727 = vmatprep.subr.bf16.mxu0 0
    %5728 = vmatpush1.bf16.msra.mxu0 0
    %5729 = vmatprep.subr.bf16.mxu0 0
    %5730 = vmatpush1.bf16.msra.mxu0 0
    %5731 = vmatprep.subr.bf16.mxu0 0
    %5732 = vmatpush1.bf16.msra.mxu0 0
    %5733 = vmatprep.subr.bf16.mxu0 0
    %5734 = vmatpush1.bf16.msra.mxu0 0
    %5735 = vmatprep.subr.bf16.mxu0 0
    %5736 = vmatpush1.bf16.msra.mxu0 0
    %5737 = vmatprep.subr.bf16.mxu0 0
    %5738 = vmatpush1.bf16.msra.mxu0 0
    %5739 = vmatprep.subr.bf16.mxu0 0
    %5740 = vmatpush1.bf16.msra.mxu0 0
    %5741 = vmatprep.subr.bf16.mxu0 0
    %5742 = vmatpush1.bf16.msra.mxu0 0
    %5743 = vmatprep.subr.bf16.mxu0 0
    %5744 = vmatpush1.bf16.msra.mxu0 0
    %5745 = vmatprep.subr.bf16.mxu0 0
    %5746 = vmatpush1.bf16.msra.mxu0 0
    %5747 = vmatprep.subr.bf16.mxu0 0
    %5748 = vmatpush1.bf16.msra.mxu0 0
    %5749 = vmatprep.subr.bf16.mxu0 0
    %5750 = vmatpush1.bf16.msra.mxu0 0
    %5751 = vmatprep.mubr.bf16.mxu0 0
    %5752 = vmatmul.mubr.bf16.gmra.mrb[0].mxu0 %v5407
    %v5753 = vpop.f32.mrb[0].mxu0
    %v5754 = vadd.f32 %v5249, %v5753
    %v5755 = vpop.f32.mrb[0].mxu0
    %v5756 = vadd.f32 %v5249, %v5755
    %v5757 = vpop.f32.mrb[0].mxu0
    %v5758 = vadd.f32 %v5254, %v5757
    %v5759 = vpop.f32.mrb[0].mxu0
    %v5760 = vadd.f32 %v5254, %v5759
    %5761 = vdwg.mxu0
    %5762 = vmatprep.subr.bf16.mxu0 %v5372
    %5763 = vmatpush1.bf16.msra.mxu0 %v5371
    %5764 = vmatprep.subr.bf16.mxu0 %v5459
    %5765 = vmatpush1.bf16.msra.mxu0 %v5456
    %5766 = vmatprep.subr.bf16.mxu0 0
    %5767 = vmatpush1.bf16.msra.mxu0 0
    %5768 = vmatprep.subr.bf16.mxu0 0
    %5769 = vmatpush1.bf16.msra.mxu0 0
    %5770 = vmatprep.subr.bf16.mxu0 0
    %5771 = vmatpush1.bf16.msra.mxu0 0
    %5772 = vmatprep.subr.bf16.mxu0 0
    %5773 = vmatpush1.bf16.msra.mxu0 0
    %5774 = vmatprep.subr.bf16.mxu0 0
    %5775 = vmatpush1.bf16.msra.mxu0 0
    %5776 = vmatprep.subr.bf16.mxu0 0
    %5777 = vmatpush1.bf16.msra.mxu0 0
    %5778 = vmatprep.subr.bf16.mxu0 0
    %5779 = vmatpush1.bf16.msra.mxu0 0
    %5780 = vmatprep.subr.bf16.mxu0 0
    %5781 = vmatpush1.bf16.msra.mxu0 0
    %5782 = vmatprep.subr.bf16.mxu0 0
    %5783 = vmatpush1.bf16.msra.mxu0 0
    %5784 = vmatprep.subr.bf16.mxu0 0
    %5785 = vmatpush1.bf16.msra.mxu0 0
    %5786 = vmatprep.subr.bf16.mxu0 0
    %5787 = vmatpush1.bf16.msra.mxu0 0
    %5788 = vmatprep.subr.bf16.mxu0 0
    %5789 = vmatpush1.bf16.msra.mxu0 0
    %5790 = vmatprep.subr.bf16.mxu0 0
    %5791 = vmatpush1.bf16.msra.mxu0 0
    %5792 = vmatprep.subr.bf16.mxu0 0
    %5793 = vmatpush1.bf16.msra.mxu0 0
    %5794 = vmatprep.mubr.bf16.mxu0 0
    %5795 = vmatmul.mubr.bf16.gmra.mrb[0].mxu0 %v5407
    %v5796 = vpop.f32.mrb[0].mxu0
    %v5797 = vadd.f32 %v5249, %v5796
    %v5798 = vpop.f32.mrb[0].mxu0
    %v5799 = vadd.f32 %v5249, %v5798
    %v5800 = vpop.f32.mrb[0].mxu0
    %v5801 = vadd.f32 %v5254, %v5800
    %v5802 = vpop.f32.mrb[0].mxu0
    %v5803 = vadd.f32 %v5254, %v5802
    %5804 = vdwg.mxu0
    %v5805 = vmax.f32 %v5496, 0.0
    %v5806 = vmax.f32 %v5498, 0.0
    %v5807 = vmax.f32 %v5539, 0.0
    %v5808 = vmax.f32 %v5541, 0.0
    %v5809 = vmax.f32 %v5582, 0.0
    %v5810 = vmax.f32 %v5584, 0.0
    %v5811 = vmax.f32 %v5625, 0.0
    %v5812 = vmax.f32 %v5627, 0.0
    %v5813 = vmax.f32 %v5668, 0.0
    %v5814 = vmax.f32 %v5670, 0.0
    %v5815 = vmax.f32 %v5711, 0.0
    %v5816 = vmax.f32 %v5713, 0.0
    %v5817 = vmax.f32 %v5754, 0.0
    %v5818 = vmax.f32 %v5756, 0.0
    %v5819 = vmax.f32 %v5797, 0.0
    %v5820 = vmax.f32 %v5799, 0.0
    %v5821 = vmax.f32 %v5500, 0.0
    %v5822 = vmax.f32 %v5502, 0.0
    %v5823 = vmax.f32 %v5543, 0.0
    %v5824 = vmax.f32 %v5545, 0.0
    %v5825 = vmax.f32 %v5586, 0.0
    %v5826 = vmax.f32 %v5588, 0.0
    %v5827 = vmax.f32 %v5629, 0.0
    %v5828 = vmax.f32 %v5631, 0.0
    %v5829 = vmax.f32 %v5672, 0.0
    %v5830 = vmax.f32 %v5674, 0.0
    %v5831 = vmax.f32 %v5715, 0.0
    %v5832 = vmax.f32 %v5717, 0.0
    %v5833 = vmax.f32 %v5758, 0.0
    %v5834 = vmax.f32 %v5760, 0.0
    %v5835 = vmax.f32 %v5801, 0.0
    %v5836 = vmax.f32 %v5803, 0.0
    %5870 = vrot.lane.b32.xlu0 %v5805, 126
    %v5871 = vpop.permute.xlu0 %5870
    %5872 = vrot.lane.b32.xlu0 %v5806, 126
    %v5873 = vpop.permute.xlu0 %5872
    %5874 = vrot.lane.b32.xlu0 %v5807, 126
    %v5875 = vpop.permute.xlu0 %5874
    %5876 = vrot.lane.b32.xlu0 %v5808, 126
    %v5877 = vpop.permute.xlu0 %5876
    %5878 = vrot.lane.b32.xlu0 %v5809, 126
    %v5879 = vpop.permute.xlu0 %5878
    %5880 = vrot.lane.b32.xlu0 %v5810, 126
    %v5881 = vpop.permute.xlu0 %5880
    %5882 = vrot.lane.b32.xlu0 %v5811, 126
    %v5883 = vpop.permute.xlu0 %5882
    %5884 = vrot.lane.b32.xlu0 %v5812, 126
    %v5885 = vpop.permute.xlu0 %5884
    %5886 = vrot.lane.b32.xlu0 %v5813, 126
    %v5887 = vpop.permute.xlu0 %5886
    %5888 = vrot.lane.b32.xlu0 %v5814, 126
    %v5889 = vpop.permute.xlu0 %5888
    %5890 = vrot.lane.b32.xlu0 %v5815, 126
    %v5891 = vpop.permute.xlu0 %5890
    %5892 = vrot.lane.b32.xlu0 %v5816, 126
    %v5893 = vpop.permute.xlu0 %5892
    %5894 = vrot.lane.b32.xlu0 %v5817, 126
    %v5895 = vpop.permute.xlu0 %5894
    %5896 = vrot.lane.b32.xlu0 %v5818, 126
    %v5897 = vpop.permute.xlu0 %5896
    %5898 = vrot.lane.b32.xlu0 %v5819, 126
    %v5899 = vpop.permute.xlu0 %5898
    %5900 = vrot.lane.b32.xlu0 %v5820, 126
    %v5901 = vpop.permute.xlu0 %5900
    %5902 = vrot.lane.b32.xlu0 0.0, 126
    %v5903 = vpop.permute.xlu0 %5902
    %5904 = vrot.lane.b32.xlu0 %v5821, 126
    %v5905 = vpop.permute.xlu0 %5904
    %5906 = vrot.lane.b32.xlu0 %v5822, 126
    %v5907 = vpop.permute.xlu0 %5906
    %5908 = vrot.lane.b32.xlu0 %v5823, 126
    %v5909 = vpop.permute.xlu0 %5908
    %5910 = vrot.lane.b32.xlu0 %v5824, 126
    %v5911 = vpop.permute.xlu0 %5910
    %5912 = vrot.lane.b32.xlu0 %v5825, 126
    %v5913 = vpop.permute.xlu0 %5912
    %5914 = vrot.lane.b32.xlu0 %v5826, 126
    %v5915 = vpop.permute.xlu0 %5914
    %5916 = vrot.lane.b32.xlu0 %v5827, 126
    %v5917 = vpop.permute.xlu0 %5916
    %5918 = vrot.lane.b32.xlu0 %v5828, 126
    %v5919 = vpop.permute.xlu0 %5918
    %5920 = vrot.lane.b32.xlu0 %v5829, 126
    %v5921 = vpop.permute.xlu0 %5920
    %5922 = vrot.lane.b32.xlu0 %v5830, 126
    %v5923 = vpop.permute.xlu0 %5922
    %5924 = vrot.lane.b32.xlu0 %v5831, 126
    %v5925 = vpop.permute.xlu0 %5924
    %5926 = vrot.lane.b32.xlu0 %v5832, 126
    %v5927 = vpop.permute.xlu0 %5926
    %5928 = vrot.lane.b32.xlu0 %v5833, 126
    %v5929 = vpop.permute.xlu0 %5928
    %5930 = vrot.lane.b32.xlu0 %v5834, 126
    %v5931 = vpop.permute.xlu0 %5930
    %5932 = vrot.lane.b32.xlu0 %v5835, 126
    %v5933 = vpop.permute.xlu0 %5932
    %5934 = vrot.lane.b32.xlu0 %v5836, 126
    %v5935 = vpop.permute.xlu0 %5934
    %vm5936 = vcmask 1031168
    %v5937 = vsel %vm5936, %v5871, %v5873
    %v5938 = vsel %vm5936, %v5873, %v5875
    %v5939 = vsel %vm5936, %v5875, %v5877
    %v5940 = vsel %vm5936, %v5877, %v5879
    %v5941 = vsel %vm5936, %v5879, %v5881
    %v5942 = vsel %vm5936, %v5881, %v5883
    %v5943 = vsel %vm5936, %v5883, %v5885
    %v5944 = vsel %vm5936, %v5885, %v5887
    %v5945 = vsel %vm5936, %v5887, %v5889
    %v5946 = vsel %vm5936, %v5889, %v5891
    %v5947 = vsel %vm5936, %v5891, %v5893
    %v5948 = vsel %vm5936, %v5893, %v5895
    %v5949 = vsel %vm5936, %v5895, %v5897
    %v5950 = vsel %vm5936, %v5897, %v5899
    %v5951 = vsel %vm5936, %v5899, %v5901
    %v5952 = vsel %vm5936, %v5901, %v5903
    %v5953 = vsel %vm5936, %v5905, %v5907
    %v5954 = vsel %vm5936, %v5907, %v5909
    %v5955 = vsel %vm5936, %v5909, %v5911
    %v5956 = vsel %vm5936, %v5911, %v5913
    %v5957 = vsel %vm5936, %v5913, %v5915
    %v5958 = vsel %vm5936, %v5915, %v5917
    %v5959 = vsel %vm5936, %v5917, %v5919
    %v5960 = vsel %vm5936, %v5919, %v5921
    %v5961 = vsel %vm5936, %v5921, %v5923
    %v5962 = vsel %vm5936, %v5923, %v5925
    %v5963 = vsel %vm5936, %v5925, %v5927
    %v5964 = vsel %vm5936, %v5927, %v5929
    %v5965 = vsel %vm5936, %v5929, %v5931
    %v5966 = vsel %vm5936, %v5931, %v5933
    %v5967 = vsel %vm5936, %v5933, %v5935
    %v5968 = vsel %vm5936, %v5935, %v5903
    %v6001 = vmax.f32 %v5805, %v5937
    %v6002 = vmax.f32 %v5806, %v5938
    %v6003 = vmax.f32 %v5807, %v5939
    %v6004 = vmax.f32 %v5808, %v5940
    %v6005 = vmax.f32 %v5809, %v5941
    %v6006 = vmax.f32 %v5810, %v5942
    %v6007 = vmax.f32 %v5811, %v5943
    %v6008 = vmax.f32 %v5812, %v5944
    %v6009 = vmax.f32 %v5813, %v5945
    %v6010 = vmax.f32 %v5814, %v5946
    %v6011 = vmax.f32 %v5815, %v5947
    %v6012 = vmax.f32 %v5816, %v5948
    %v6013 = vmax.f32 %v5817, %v5949
    %v6014 = vmax.f32 %v5818, %v5950
    %v6015 = vmax.f32 %v5819, %v5951
    %v6016 = vmax.f32 %v5820, %v5952
    %v6017 = vmax.f32 %v5821, %v5953
    %v6018 = vmax.f32 %v5822, %v5954
    %v6019 = vmax.f32 %v5823, %v5955
    %v6020 = vmax.f32 %v5824, %v5956
    %v6021 = vmax.f32 %v5825, %v5957
    %v6022 = vmax.f32 %v5826, %v5958
    %v6023 = vmax.f32 %v5827, %v5959
    %v6024 = vmax.f32 %v5828, %v5960
    %v6025 = vmax.f32 %v5829, %v5961
    %v6026 = vmax.f32 %v5830, %v5962
    %v6027 = vmax.f32 %v5831, %v5963
    %v6028 = vmax.f32 %v5832, %v5964
    %v6029 = vmax.f32 %v5833, %v5965
    %v6030 = vmax.f32 %v5834, %v5966
    %v6031 = vmax.f32 %v5835, %v5967
    %v6032 = vmax.f32 %v5836, %v5968
    %v6034 = vmax.f32 %v5903, 0.0
    %6068 = vrot.lane.b32.xlu0 %v6001, 64
    %v6069 = vpop.permute.xlu0 %6068
    %6070 = vrot.lane.b32.xlu0 %v6002, 64
    %v6071 = vpop.permute.xlu0 %6070
    %6072 = vrot.lane.b32.xlu0 %v6003, 64
    %v6073 = vpop.permute.xlu0 %6072
    %6074 = vrot.lane.b32.xlu0 %v6004, 64
    %v6075 = vpop.permute.xlu0 %6074
    %6076 = vrot.lane.b32.xlu0 %v6005, 64
    %v6077 = vpop.permute.xlu0 %6076
    %6078 = vrot.lane.b32.xlu0 %v6006, 64
    %v6079 = vpop.permute.xlu0 %6078
    %6080 = vrot.lane.b32.xlu0 %v6007, 64
    %v6081 = vpop.permute.xlu0 %6080
    %6082 = vrot.lane.b32.xlu0 %v6008, 64
    %v6083 = vpop.permute.xlu0 %6082
    %6084 = vrot.lane.b32.xlu0 %v6009, 64
    %v6085 = vpop.permute.xlu0 %6084
    %6086 = vrot.lane.b32.xlu0 %v6010, 64
    %v6087 = vpop.permute.xlu0 %6086
    %6088 = vrot.lane.b32.xlu0 %v6011, 64
    %v6089 = vpop.permute.xlu0 %6088
    %6090 = vrot.lane.b32.xlu0 %v6012, 64
    %v6091 = vpop.permute.xlu0 %6090
    %6092 = vrot.lane.b32.xlu0 %v6013, 64
    %v6093 = vpop.permute.xlu0 %6092
    %6094 = vrot.lane.b32.xlu0 %v6014, 64
    %v6095 = vpop.permute.xlu0 %6094
    %6096 = vrot.lane.b32.xlu0 %v6015, 64
    %v6097 = vpop.permute.xlu0 %6096
    %6098 = vrot.lane.b32.xlu0 %v6016, 64
    %v6099 = vpop.permute.xlu0 %6098
    %6100 = vrot.lane.b32.xlu0 %v6034, 64
    %v6101 = vpop.permute.xlu0 %6100
    %6102 = vrot.lane.b32.xlu0 %v6017, 64
    %v6103 = vpop.permute.xlu0 %6102
    %6104 = vrot.lane.b32.xlu0 %v6018, 64
    %v6105 = vpop.permute.xlu0 %6104
    %6106 = vrot.lane.b32.xlu0 %v6019, 64
    %v6107 = vpop.permute.xlu0 %6106
    %6108 = vrot.lane.b32.xlu0 %v6020, 64
    %v6109 = vpop.permute.xlu0 %6108
    %6110 = vrot.lane.b32.xlu0 %v6021, 64
    %v6111 = vpop.permute.xlu0 %6110
    %6112 = vrot.lane.b32.xlu0 %v6022, 64
    %v6113 = vpop.permute.xlu0 %6112
    %6114 = vrot.lane.b32.xlu0 %v6023, 64
    %v6115 = vpop.permute.xlu0 %6114
    %6116 = vrot.lane.b32.xlu0 %v6024, 64
    %v6117 = vpop.permute.xlu0 %6116
    %6118 = vrot.lane.b32.xlu0 %v6025, 64
    %v6119 = vpop.permute.xlu0 %6118
    %6120 = vrot.lane.b32.xlu0 %v6026, 64
    %v6121 = vpop.permute.xlu0 %6120
    %6122 = vrot.lane.b32.xlu0 %v6027, 64
    %v6123 = vpop.permute.xlu0 %6122
    %6124 = vrot.lane.b32.xlu0 %v6028, 64
    %v6125 = vpop.permute.xlu0 %6124
    %6126 = vrot.lane.b32.xlu0 %v6029, 64
    %v6127 = vpop.permute.xlu0 %6126
    %6128 = vrot.lane.b32.xlu0 %v6030, 64
    %v6129 = vpop.permute.xlu0 %6128
    %6130 = vrot.lane.b32.xlu0 %v6031, 64
    %v6131 = vpop.permute.xlu0 %6130
    %6132 = vrot.lane.b32.xlu0 %v6032, 64
    %v6133 = vpop.permute.xlu0 %6132
    %vm6134 = vcmask 523264
    %v6135 = vsel %vm6134, %v6069, %v6071
    %v6136 = vsel %vm6134, %v6071, %v6073
    %v6137 = vsel %vm6134, %v6073, %v6075
    %v6138 = vsel %vm6134, %v6075, %v6077
    %v6139 = vsel %vm6134, %v6077, %v6079
    %v6140 = vsel %vm6134, %v6079, %v6081
    %v6141 = vsel %vm6134, %v6081, %v6083
    %v6142 = vsel %vm6134, %v6083, %v6085
    %v6143 = vsel %vm6134, %v6085, %v6087
    %v6144 = vsel %vm6134, %v6087, %v6089
    %v6145 = vsel %vm6134, %v6089, %v6091
    %v6146 = vsel %vm6134, %v6091, %v6093
    %v6147 = vsel %vm6134, %v6093, %v6095
    %v6148 = vsel %vm6134, %v6095, %v6097
    %v6149 = vsel %vm6134, %v6097, %v6099
    %v6150 = vsel %vm6134, %v6099, %v6101
    %v6151 = vsel %vm6134, %v6103, %v6105
    %v6152 = vsel %vm6134, %v6105, %v6107
    %v6153 = vsel %vm6134, %v6107, %v6109
    %v6154 = vsel %vm6134, %v6109, %v6111
    %v6155 = vsel %vm6134, %v6111, %v6113
    %v6156 = vsel %vm6134, %v6113, %v6115
    %v6157 = vsel %vm6134, %v6115, %v6117
    %v6158 = vsel %vm6134, %v6117, %v6119
    %v6159 = vsel %vm6134, %v6119, %v6121
    %v6160 = vsel %vm6134, %v6121, %v6123
    %v6161 = vsel %vm6134, %v6123, %v6125
    %v6162 = vsel %vm6134, %v6125, %v6127
    %v6163 = vsel %vm6134, %v6127, %v6129
    %v6164 = vsel %vm6134, %v6129, %v6131
    %v6165 = vsel %vm6134, %v6131, %v6133
    %v6166 = vsel %vm6134, %v6133, %v6101
    %v6199 = vmax.f32 %v6001, %v6135
    %v6200 = vmax.f32 %v6002, %v6136
    %v6201 = vmax.f32 %v6003, %v6137
    %v6202 = vmax.f32 %v6004, %v6138
    %v6203 = vmax.f32 %v6005, %v6139
    %v6204 = vmax.f32 %v6006, %v6140
    %v6205 = vmax.f32 %v6007, %v6141
    %v6206 = vmax.f32 %v6008, %v6142
    %v6207 = vmax.f32 %v6009, %v6143
    %v6208 = vmax.f32 %v6010, %v6144
    %v6209 = vmax.f32 %v6011, %v6145
    %v6210 = vmax.f32 %v6012, %v6146
    %v6211 = vmax.f32 %v6013, %v6147
    %v6212 = vmax.f32 %v6014, %v6148
    %v6213 = vmax.f32 %v6015, %v6149
    %v6214 = vmax.f32 %v6016, %v6150
    %v6215 = vmax.f32 %v6017, %v6151
    %v6216 = vmax.f32 %v6018, %v6152
    %v6217 = vmax.f32 %v6019, %v6153
    %v6218 = vmax.f32 %v6020, %v6154
    %v6219 = vmax.f32 %v6021, %v6155
    %v6220 = vmax.f32 %v6022, %v6156
    %v6221 = vmax.f32 %v6023, %v6157
    %v6222 = vmax.f32 %v6024, %v6158
    %v6223 = vmax.f32 %v6025, %v6159
    %v6224 = vmax.f32 %v6026, %v6160
    %v6225 = vmax.f32 %v6027, %v6161
    %v6226 = vmax.f32 %v6028, %v6162
    %v6227 = vmax.f32 %v6029, %v6163
    %v6228 = vmax.f32 %v6030, %v6164
    %v6229 = vmax.f32 %v6031, %v6165
    %v6230 = vmax.f32 %v6032, %v6166
    %6233 = vrot.lane.b32.xlu0 %v6200, 64
    %v6234 = vpop.permute.xlu0 %6233
    %6235 = vrot.lane.b32.xlu0 %v6216, 64
    %v6236 = vpop.permute.xlu0 %6235
    %6241 = vrot.lane.b32.xlu0 %v6202, 64
    %v6242 = vpop.permute.xlu0 %6241
    %6243 = vrot.lane.b32.xlu0 %v6218, 64
    %v6244 = vpop.permute.xlu0 %6243
    %6249 = vrot.lane.b32.xlu0 %v6204, 64
    %v6250 = vpop.permute.xlu0 %6249
    %6251 = vrot.lane.b32.xlu0 %v6220, 64
    %v6252 = vpop.permute.xlu0 %6251
    %6257 = vrot.lane.b32.xlu0 %v6206, 64
    %v6258 = vpop.permute.xlu0 %6257
    %6259 = vrot.lane.b32.xlu0 %v6222, 64
    %v6260 = vpop.permute.xlu0 %6259
    %6265 = vrot.lane.b32.xlu0 %v6208, 64
    %v6266 = vpop.permute.xlu0 %6265
    %6267 = vrot.lane.b32.xlu0 %v6224, 64
    %v6268 = vpop.permute.xlu0 %6267
    %6273 = vrot.lane.b32.xlu0 %v6210, 64
    %v6274 = vpop.permute.xlu0 %6273
    %6275 = vrot.lane.b32.xlu0 %v6226, 64
    %v6276 = vpop.permute.xlu0 %6275
    %6281 = vrot.lane.b32.xlu0 %v6212, 64
    %v6282 = vpop.permute.xlu0 %6281
    %6283 = vrot.lane.b32.xlu0 %v6228, 64
    %v6284 = vpop.permute.xlu0 %6283
    %6289 = vrot.lane.b32.xlu0 %v6214, 64
    %v6290 = vpop.permute.xlu0 %6289
    %6291 = vrot.lane.b32.xlu0 %v6230, 64
    %v6292 = vpop.permute.xlu0 %6291
    %v6295 = vsel %vm6134, %v6199, %v6234
    %v6296 = vsel %vm6134, %v6215, %v6236
    %v6297 = vsel %vm6134, %v6201, %v6242
    %v6298 = vsel %vm6134, %v6217, %v6244
    %v6299 = vsel %vm6134, %v6203, %v6250
    %v6300 = vsel %vm6134, %v6219, %v6252
    %v6301 = vsel %vm6134, %v6205, %v6258
    %v6302 = vsel %vm6134, %v6221, %v6260
    %v6303 = vsel %vm6134, %v6207, %v6266
    %v6304 = vsel %vm6134, %v6223, %v6268
    %v6305 = vsel %vm6134, %v6209, %v6274
    %v6306 = vsel %vm6134, %v6225, %v6276
    %v6307 = vsel %vm6134, %v6211, %v6282
    %v6308 = vsel %vm6134, %v6227, %v6284
    %v6309 = vsel %vm6134, %v6213, %v6290
    %v6310 = vsel %vm6134, %v6229, %v6292
    %6311 = vst [vmem:[#allocation4] sm:$0xff] 0
    %6312 = vst [vmem:[#allocation4 + $0x8] sm:$0xff] 0
    %6313 = vst [vmem:[#allocation4 + $0x50] sm:$0xff] 0
    %6314 = vst [vmem:[#allocation4 + $0x58] sm:$0xff] 0
    %v6315 = vld [vmem:[%s5] sm:$0xff]
    %v6317 = vlaneseq
    %v6318 = vshrl.u32 %v6317, 7
    %v6319 = vsub.s32 0, %v6318
    %v6320 = vrot.slane %v6315, %v6319
    %v6321 = vlaneseq
    %v6322 = vshrl.u32 %v6321, 7
    %v6323 = vsub.s32 1, %v6322
    %v6324 = vrot.slane %v6315, %v6323
    %v6325 = vlaneseq
    %v6326 = vshrl.u32 %v6325, 7
    %v6327 = vsub.s32 2, %v6326
    %v6328 = vrot.slane %v6315, %v6327
    %v6329 = vlaneseq
    %v6330 = vshrl.u32 %v6329, 7
    %v6331 = vsub.s32 3, %v6330
    %v6332 = vrot.slane %v6315, %v6331
    %v6333 = vlaneseq
    %v6334 = vshrl.u32 %v6333, 7
    %v6335 = vsub.s32 4, %v6334
    %v6336 = vrot.slane %v6315, %v6335
    %v6337 = vlaneseq
    %v6338 = vshrl.u32 %v6337, 7
    %v6339 = vsub.s32 5, %v6338
    %v6340 = vrot.slane %v6315, %v6339
    %v6341 = vlaneseq
    %v6342 = vshrl.u32 %v6341, 7
    %v6343 = vsub.s32 6, %v6342
    %v6344 = vrot.slane %v6315, %v6343
    %v6345 = vlaneseq
    %v6346 = vshrl.u32 %v6345, 7
    %v6347 = vsub.s32 7, %v6346
    %v6348 = vrot.slane %v6315, %v6347
    %v6357 = vmul.f32 %v6295, %v6320
    %v6358 = vmul.f32 %v6297, %v6324
    %v6359 = vmul.f32 %v6299, %v6328
    %v6360 = vmul.f32 %v6301, %v6332
    %v6361 = vmul.f32 %v6303, %v6336
    %v6362 = vmul.f32 %v6305, %v6340
    %v6363 = vmul.f32 %v6307, %v6344
    %v6364 = vmul.f32 %v6309, %v6348
    %v6365 = vmul.f32 %v6296, %v6320
    %v6366 = vmul.f32 %v6298, %v6324
    %v6367 = vmul.f32 %v6300, %v6328
    %v6368 = vmul.f32 %v6302, %v6332
    %v6369 = vmul.f32 %v6304, %v6336
    %v6370 = vmul.f32 %v6306, %v6340
    %v6371 = vmul.f32 %v6308, %v6344
    %v6372 = vmul.f32 %v6310, %v6348
    %v6373 = vpack.c.bf16 %v6365, %v6357
    %v6374 = vpack.c.bf16 %v6366, %v6358
    %v6375 = vpack.c.bf16 %v6367, %v6359
    %v6376 = vpack.c.bf16 %v6368, %v6360
    %v6377 = vpack.c.bf16 %v6369, %v6361
    %v6378 = vpack.c.bf16 %v6370, %v6362
    %v6379 = vpack.c.bf16 %v6371, %v6363
    %v6380 = vpack.c.bf16 %v6372, %v6364
    %6381 = vst [vmem:[#allocation4 + $0x10] sm:$0xff] %v6373
    %6382 = vst [vmem:[#allocation4 + $0x18] sm:$0xff] %v6374
    %6383 = vst [vmem:[#allocation4 + $0x20] sm:$0xff] %v6375
    %6384 = vst [vmem:[#allocation4 + $0x28] sm:$0xff] %v6376
    %6385 = vst [vmem:[#allocation4 + $0x30] sm:$0xff] %v6377
    %6386 = vst [vmem:[#allocation4 + $0x38] sm:$0xff] %v6378
    %6387 = vst [vmem:[#allocation4 + $0x40] sm:$0xff] %v6379
    %6388 = vst [vmem:[#allocation4 + $0x48] sm:$0xff] %v6380
    %v6389 = vld [vmem:[#allocation4] sm:$0xff]
    %v6390 = vld [vmem:[#allocation4 + $0x8] sm:$0xff]
    %v6391 = vld [vmem:[#allocation4 + $0x10] sm:$0xff]
    %v6392 = vld [vmem:[#allocation4 + $0x18] sm:$0xff]
    %v6393 = vld [vmem:[#allocation4 + $0x20] sm:$0xff]
    %v6394 = vld [vmem:[#allocation4 + $0x28] sm:$0xff]
    %v6395 = vld [vmem:[#allocation4 + $0x30] sm:$0xff]
    %v6396 = vld [vmem:[#allocation4 + $0x38] sm:$0xff]
    %v6397 = vld [vmem:[#allocation4 + $0x40] sm:$0xff]
    %6407 = vrot.lane.b32.xlu0 %v6389, 8
    %v6408 = vpop.permute.xlu0 %6407
    %6409 = vrot.lane.b32.xlu0 %v6390, 8
    %v6410 = vpop.permute.xlu0 %6409
    %6411 = vrot.lane.b32.xlu0 %v6391, 8
    %v6412 = vpop.permute.xlu0 %6411
    %6413 = vrot.lane.b32.xlu0 %v6392, 8
    %v6414 = vpop.permute.xlu0 %6413
    %6415 = vrot.lane.b32.xlu0 %v6393, 8
    %v6416 = vpop.permute.xlu0 %6415
    %6417 = vrot.lane.b32.xlu0 %v6394, 8
    %v6418 = vpop.permute.xlu0 %6417
    %6419 = vrot.lane.b32.xlu0 %v6395, 8
    %v6420 = vpop.permute.xlu0 %6419
    %6421 = vrot.lane.b32.xlu0 %v6396, 8
    %v6422 = vpop.permute.xlu0 %6421
    %6423 = vrot.lane.b32.xlu0 %v6397, 8
    %v6424 = vpop.permute.xlu0 %6423
    %vm6425 = vcmask 64512
    %v6426 = vsel %vm6425, %v6408, %v6410
    %v6427 = vsel %vm6425, %v6410, %v6412
    %v6428 = vsel %vm6425, %v6412, %v6414
    %v6429 = vsel %vm6425, %v6414, %v6416
    %v6430 = vsel %vm6425, %v6416, %v6418
    %v6431 = vsel %vm6425, %v6418, %v6420
    %v6432 = vsel %vm6425, %v6420, %v6422
    %v6433 = vsel %vm6425, %v6422, %v6424
    %6442 = vst [vmem:[#allocation5] sm:$0xff] %v6426
    %6443 = vst [vmem:[#allocation5 + $0x8] sm:$0xff] %v6427
    %6444 = vst [vmem:[#allocation5 + $0x10] sm:$0xff] %v6428
    %6445 = vst [vmem:[#allocation5 + $0x18] sm:$0xff] %v6429
    %6446 = vst [vmem:[#allocation5 + $0x20] sm:$0xff] %v6430
    %6447 = vst [vmem:[#allocation5 + $0x28] sm:$0xff] %v6431
    %6448 = vst [vmem:[#allocation5 + $0x30] sm:$0xff] %v6432
    %6449 = vst [vmem:[#allocation5 + $0x38] sm:$0xff] %v6433
    %v6450 = vld [vmem:[#allocation4] sm:$0xff]
    %v6451 = vld [vmem:[#allocation4 + $0x8] sm:$0xff]
    %v6452 = vld [vmem:[#allocation4 + $0x10] sm:$0xff]
    %v6453 = vld [vmem:[#allocation4 + $0x18] sm:$0xff]
    %v6454 = vld [vmem:[#allocation4 + $0x20] sm:$0xff]
    %v6455 = vld [vmem:[#allocation4 + $0x28] sm:$0xff]
    %v6456 = vld [vmem:[#allocation4 + $0x30] sm:$0xff]
    %v6457 = vld [vmem:[#allocation4 + $0x38] sm:$0xff]
    %v6458 = vld [vmem:[#allocation4 + $0x40] sm:$0xff]
    %6468 = vrot.lane.b32.xlu0 %v6450, 4
    %v6469 = vpop.permute.xlu0 %6468
    %6470 = vrot.lane.b32.xlu0 %v6451, 4
    %v6471 = vpop.permute.xlu0 %6470
    %6472 = vrot.lane.b32.xlu0 %v6452, 4
    %v6473 = vpop.permute.xlu0 %6472
    %6474 = vrot.lane.b32.xlu0 %v6453, 4
    %v6475 = vpop.permute.xlu0 %6474
    %6476 = vrot.lane.b32.xlu0 %v6454, 4
    %v6477 = vpop.permute.xlu0 %6476
    %6478 = vrot.lane.b32.xlu0 %v6455, 4
    %v6479 = vpop.permute.xlu0 %6478
    %6480 = vrot.lane.b32.xlu0 %v6456, 4
    %v6481 = vpop.permute.xlu0 %6480
    %6482 = vrot.lane.b32.xlu0 %v6457, 4
    %v6483 = vpop.permute.xlu0 %6482
    %6484 = vrot.lane.b32.xlu0 %v6458, 4
    %v6485 = vpop.permute.xlu0 %6484
    %v6486 = vsel %vm454, %v6469, %v6471
    %v6487 = vsel %vm454, %v6471, %v6473
    %v6488 = vsel %vm454, %v6473, %v6475
    %v6489 = vsel %vm454, %v6475, %v6477
    %v6490 = vsel %vm454, %v6477, %v6479
    %v6491 = vsel %vm454, %v6479, %v6481
    %v6492 = vsel %vm454, %v6481, %v6483
    %v6493 = vsel %vm454, %v6483, %v6485
    %6502 = vst [vmem:[#allocation5 + $0x40] sm:$0xff] %v6486
    %6503 = vst [vmem:[#allocation5 + $0x48] sm:$0xff] %v6487
    %6504 = vst [vmem:[#allocation5 + $0x50] sm:$0xff] %v6488
    %6505 = vst [vmem:[#allocation5 + $0x58] sm:$0xff] %v6489
    %6506 = vst [vmem:[#allocation5 + $0x60] sm:$0xff] %v6490
    %6507 = vst [vmem:[#allocation5 + $0x68] sm:$0xff] %v6491
    %6508 = vst [vmem:[#allocation5 + $0x70] sm:$0xff] %v6492
    %6509 = vst [vmem:[#allocation5 + $0x78] sm:$0xff] %v6493
    %v6510 = vld [vmem:[#allocation4 + $0x8] sm:$0xff]
    %v6511 = vld [vmem:[#allocation4 + $0x10] sm:$0xff]
    %v6512 = vld [vmem:[#allocation4 + $0x18] sm:$0xff]
    %v6513 = vld [vmem:[#allocation4 + $0x20] sm:$0xff]
    %v6514 = vld [vmem:[#allocation4 + $0x28] sm:$0xff]
    %v6515 = vld [vmem:[#allocation4 + $0x30] sm:$0xff]
    %v6516 = vld [vmem:[#allocation4 + $0x38] sm:$0xff]
    %v6517 = vld [vmem:[#allocation4 + $0x40] sm:$0xff]
    %6518 = vst [vmem:[#allocation5 + $0x80] sm:$0xff] %v6510
    %6519 = vst [vmem:[#allocation5 + $0x88] sm:$0xff] %v6511
    %6520 = vst [vmem:[#allocation5 + $0x90] sm:$0xff] %v6512
    %6521 = vst [vmem:[#allocation5 + $0x98] sm:$0xff] %v6513
    %6522 = vst [vmem:[#allocation5 + $0xa0] sm:$0xff] %v6514
    %6523 = vst [vmem:[#allocation5 + $0xa8] sm:$0xff] %v6515
    %6524 = vst [vmem:[#allocation5 + $0xb0] sm:$0xff] %v6516
    %6525 = vst [vmem:[#allocation5 + $0xb8] sm:$0xff] %v6517
    %v6526 = vld [vmem:[#allocation4 + $0x8] sm:$0xff]
    %v6527 = vld [vmem:[#allocation4 + $0x10] sm:$0xff]
    %v6528 = vld [vmem:[#allocation4 + $0x18] sm:$0xff]
    %v6529 = vld [vmem:[#allocation4 + $0x20] sm:$0xff]
    %v6530 = vld [vmem:[#allocation4 + $0x28] sm:$0xff]
    %v6531 = vld [vmem:[#allocation4 + $0x30] sm:$0xff]
    %v6532 = vld [vmem:[#allocation4 + $0x38] sm:$0xff]
    %v6533 = vld [vmem:[#allocation4 + $0x40] sm:$0xff]
    %v6534 = vld [vmem:[#allocation4 + $0x48] sm:$0xff]
    %6544 = vrot.lane.b32.xlu0 %v6526, 124
    %v6545 = vpop.permute.xlu0 %6544
    %6546 = vrot.lane.b32.xlu0 %v6527, 124
    %v6547 = vpop.permute.xlu0 %6546
    %6548 = vrot.lane.b32.xlu0 %v6528, 124
    %v6549 = vpop.permute.xlu0 %6548
    %6550 = vrot.lane.b32.xlu0 %v6529, 124
    %v6551 = vpop.permute.xlu0 %6550
    %6552 = vrot.lane.b32.xlu0 %v6530, 124
    %v6553 = vpop.permute.xlu0 %6552
    %6554 = vrot.lane.b32.xlu0 %v6531, 124
    %v6555 = vpop.permute.xlu0 %6554
    %6556 = vrot.lane.b32.xlu0 %v6532, 124
    %v6557 = vpop.permute.xlu0 %6556
    %6558 = vrot.lane.b32.xlu0 %v6533, 124
    %v6559 = vpop.permute.xlu0 %6558
    %6560 = vrot.lane.b32.xlu0 %v6534, 124
    %v6561 = vpop.permute.xlu0 %6560
    %v6562 = vsel %vm1214, %v6545, %v6547
    %v6563 = vsel %vm1214, %v6547, %v6549
    %v6564 = vsel %vm1214, %v6549, %v6551
    %v6565 = vsel %vm1214, %v6551, %v6553
    %v6566 = vsel %vm1214, %v6553, %v6555
    %v6567 = vsel %vm1214, %v6555, %v6557
    %v6568 = vsel %vm1214, %v6557, %v6559
    %v6569 = vsel %vm1214, %v6559, %v6561
    %6578 = vst [vmem:[#allocation5 + $0xc0] sm:$0xff] %v6562
    %6579 = vst [vmem:[#allocation5 + $0xc8] sm:$0xff] %v6563
    %6580 = vst [vmem:[#allocation5 + $0xd0] sm:$0xff] %v6564
    %6581 = vst [vmem:[#allocation5 + $0xd8] sm:$0xff] %v6565
    %6582 = vst [vmem:[#allocation5 + $0xe0] sm:$0xff] %v6566
    %6583 = vst [vmem:[#allocation5 + $0xe8] sm:$0xff] %v6567
    %6584 = vst [vmem:[#allocation5 + $0xf0] sm:$0xff] %v6568
    %6585 = vst [vmem:[#allocation5 + $0xf8] sm:$0xff] %v6569
    %v6586 = vld [vmem:[#allocation4 + $0x8] sm:$0xff]
    %v6587 = vld [vmem:[#allocation4 + $0x10] sm:$0xff]
    %v6588 = vld [vmem:[#allocation4 + $0x18] sm:$0xff]
    %v6589 = vld [vmem:[#allocation4 + $0x20] sm:$0xff]
    %v6590 = vld [vmem:[#allocation4 + $0x28] sm:$0xff]
    %v6591 = vld [vmem:[#allocation4 + $0x30] sm:$0xff]
    %v6592 = vld [vmem:[#allocation4 + $0x38] sm:$0xff]
    %v6593 = vld [vmem:[#allocation4 + $0x40] sm:$0xff]
    %v6594 = vld [vmem:[#allocation4 + $0x48] sm:$0xff]
    %6604 = vrot.lane.b32.xlu0 %v6586, 120
    %v6605 = vpop.permute.xlu0 %6604
    %6606 = vrot.lane.b32.xlu0 %v6587, 120
    %v6607 = vpop.permute.xlu0 %6606
    %6608 = vrot.lane.b32.xlu0 %v6588, 120
    %v6609 = vpop.permute.xlu0 %6608
    %6610 = vrot.lane.b32.xlu0 %v6589, 120
    %v6611 = vpop.permute.xlu0 %6610
    %6612 = vrot.lane.b32.xlu0 %v6590, 120
    %v6613 = vpop.permute.xlu0 %6612
    %6614 = vrot.lane.b32.xlu0 %v6591, 120
    %v6615 = vpop.permute.xlu0 %6614
    %6616 = vrot.lane.b32.xlu0 %v6592, 120
    %v6617 = vpop.permute.xlu0 %6616
    %6618 = vrot.lane.b32.xlu0 %v6593, 120
    %v6619 = vpop.permute.xlu0 %6618
    %6620 = vrot.lane.b32.xlu0 %v6594, 120
    %v6621 = vpop.permute.xlu0 %6620
    %vm6622 = vcmask 982016
    %v6623 = vsel %vm6622, %v6605, %v6607
    %v6624 = vsel %vm6622, %v6607, %v6609
    %v6625 = vsel %vm6622, %v6609, %v6611
    %v6626 = vsel %vm6622, %v6611, %v6613
    %v6627 = vsel %vm6622, %v6613, %v6615
    %v6628 = vsel %vm6622, %v6615, %v6617
    %v6629 = vsel %vm6622, %v6617, %v6619
    %v6630 = vsel %vm6622, %v6619, %v6621
    %6639 = vst [vmem:[#allocation5 + $0x100] sm:$0xff] %v6623
    %6640 = vst [vmem:[#allocation5 + $0x108] sm:$0xff] %v6624
    %6641 = vst [vmem:[#allocation5 + $0x110] sm:$0xff] %v6625
    %6642 = vst [vmem:[#allocation5 + $0x118] sm:$0xff] %v6626
    %6643 = vst [vmem:[#allocation5 + $0x120] sm:$0xff] %v6627
    %6644 = vst [vmem:[#allocation5 + $0x128] sm:$0xff] %v6628
    %6645 = vst [vmem:[#allocation5 + $0x130] sm:$0xff] %v6629
    %6646 = vst [vmem:[#allocation5 + $0x138] sm:$0xff] %v6630
    %v6647 = vld [vmem:[#allocation4 + $0x8] sm:$0xff]
    %v6648 = vld [vmem:[#allocation4 + $0x10] sm:$0xff]
    %v6649 = vld [vmem:[#allocation4 + $0x18] sm:$0xff]
    %v6650 = vld [vmem:[#allocation4 + $0x20] sm:$0xff]
    %v6651 = vld [vmem:[#allocation4 + $0x28] sm:$0xff]
    %v6652 = vld [vmem:[#allocation4 + $0x30] sm:$0xff]
    %v6653 = vld [vmem:[#allocation4 + $0x38] sm:$0xff]
    %v6654 = vld [vmem:[#allocation4 + $0x40] sm:$0xff]
    %v6655 = vld [vmem:[#allocation4 + $0x48] sm:$0xff]
    %6665 = vrot.lane.b32.xlu0 %v6647, 72
    %v6666 = vpop.permute.xlu0 %6665
    %6667 = vrot.lane.b32.xlu0 %v6648, 72
    %v6668 = vpop.permute.xlu0 %6667
    %6669 = vrot.lane.b32.xlu0 %v6649, 72
    %v6670 = vpop.permute.xlu0 %6669
    %6671 = vrot.lane.b32.xlu0 %v6650, 72
    %v6672 = vpop.permute.xlu0 %6671
    %6673 = vrot.lane.b32.xlu0 %v6651, 72
    %v6674 = vpop.permute.xlu0 %6673
    %6675 = vrot.lane.b32.xlu0 %v6652, 72
    %v6676 = vpop.permute.xlu0 %6675
    %6677 = vrot.lane.b32.xlu0 %v6653, 72
    %v6678 = vpop.permute.xlu0 %6677
    %6679 = vrot.lane.b32.xlu0 %v6654, 72
    %v6680 = vpop.permute.xlu0 %6679
    %6681 = vrot.lane.b32.xlu0 %v6655, 72
    %v6682 = vpop.permute.xlu0 %6681
    %vm6683 = vcmask 588800
    %v6684 = vsel %vm6683, %v6666, %v6668
    %v6685 = vsel %vm6683, %v6668, %v6670
    %v6686 = vsel %vm6683, %v6670, %v6672
    %v6687 = vsel %vm6683, %v6672, %v6674
    %v6688 = vsel %vm6683, %v6674, %v6676
    %v6689 = vsel %vm6683, %v6676, %v6678
    %v6690 = vsel %vm6683, %v6678, %v6680
    %v6691 = vsel %vm6683, %v6680, %v6682
    %6700 = vst [vmem:[#allocation5 + $0x140] sm:$0xff] %v6684
    %6701 = vst [vmem:[#allocation5 + $0x148] sm:$0xff] %v6685
    %6702 = vst [vmem:[#allocation5 + $0x150] sm:$0xff] %v6686
    %6703 = vst [vmem:[#allocation5 + $0x158] sm:$0xff] %v6687
    %6704 = vst [vmem:[#allocation5 + $0x160] sm:$0xff] %v6688
    %6705 = vst [vmem:[#allocation5 + $0x168] sm:$0xff] %v6689
    %6706 = vst [vmem:[#allocation5 + $0x170] sm:$0xff] %v6690
    %6707 = vst [vmem:[#allocation5 + $0x178] sm:$0xff] %v6691
    %v6708 = vld [vmem:[#allocation4 + $0x8] sm:$0xff]
    %v6709 = vld [vmem:[#allocation4 + $0x10] sm:$0xff]
    %v6710 = vld [vmem:[#allocation4 + $0x18] sm:$0xff]
    %v6711 = vld [vmem:[#allocation4 + $0x20] sm:$0xff]
    %v6712 = vld [vmem:[#allocation4 + $0x28] sm:$0xff]
    %v6713 = vld [vmem:[#allocation4 + $0x30] sm:$0xff]
    %v6714 = vld [vmem:[#allocation4 + $0x38] sm:$0xff]
    %v6715 = vld [vmem:[#allocation4 + $0x40] sm:$0xff]
    %v6716 = vld [vmem:[#allocation4 + $0x48] sm:$0xff]
    %6726 = vrot.lane.b32.xlu0 %v6708, 68
    %v6727 = vpop.permute.xlu0 %6726
    %6728 = vrot.lane.b32.xlu0 %v6709, 68
    %v6729 = vpop.permute.xlu0 %6728
    %6730 = vrot.lane.b32.xlu0 %v6710, 68
    %v6731 = vpop.permute.xlu0 %6730
    %6732 = vrot.lane.b32.xlu0 %v6711, 68
    %v6733 = vpop.permute.xlu0 %6732
    %6734 = vrot.lane.b32.xlu0 %v6712, 68
    %v6735 = vpop.permute.xlu0 %6734
    %6736 = vrot.lane.b32.xlu0 %v6713, 68
    %v6737 = vpop.permute.xlu0 %6736
    %6738 = vrot.lane.b32.xlu0 %v6714, 68
    %v6739 = vpop.permute.xlu0 %6738
    %6740 = vrot.lane.b32.xlu0 %v6715, 68
    %v6741 = vpop.permute.xlu0 %6740
    %6742 = vrot.lane.b32.xlu0 %v6716, 68
    %v6743 = vpop.permute.xlu0 %6742
    %v6744 = vsel %vm1437, %v6727, %v6729
    %v6745 = vsel %vm1437, %v6729, %v6731
    %v6746 = vsel %vm1437, %v6731, %v6733
    %v6747 = vsel %vm1437, %v6733, %v6735
    %v6748 = vsel %vm1437, %v6735, %v6737
    %v6749 = vsel %vm1437, %v6737, %v6739
    %v6750 = vsel %vm1437, %v6739, %v6741
    %v6751 = vsel %vm1437, %v6741, %v6743
    %6760 = vst [vmem:[#allocation5 + $0x180] sm:$0xff] %v6744
    %6761 = vst [vmem:[#allocation5 + $0x188] sm:$0xff] %v6745
    %6762 = vst [vmem:[#allocation5 + $0x190] sm:$0xff] %v6746
    %6763 = vst [vmem:[#allocation5 + $0x198] sm:$0xff] %v6747
    %6764 = vst [vmem:[#allocation5 + $0x1a0] sm:$0xff] %v6748
    %6765 = vst [vmem:[#allocation5 + $0x1a8] sm:$0xff] %v6749
    %6766 = vst [vmem:[#allocation5 + $0x1b0] sm:$0xff] %v6750
    %6767 = vst [vmem:[#allocation5 + $0x1b8] sm:$0xff] %v6751
    %v6768 = vld [vmem:[#allocation4 + $0x8] sm:$0xff]
    %v6769 = vld [vmem:[#allocation4 + $0x10] sm:$0xff]
    %v6770 = vld [vmem:[#allocation4 + $0x18] sm:$0xff]
    %v6771 = vld [vmem:[#allocation4 + $0x20] sm:$0xff]
    %v6772 = vld [vmem:[#allocation4 + $0x28] sm:$0xff]
    %v6773 = vld [vmem:[#allocation4 + $0x30] sm:$0xff]
    %v6774 = vld [vmem:[#allocation4 + $0x38] sm:$0xff]
    %v6775 = vld [vmem:[#allocation4 + $0x40] sm:$0xff]
    %v6776 = vld [vmem:[#allocation4 + $0x48] sm:$0xff]
    %6786 = vrot.lane.b32.xlu0 %v6768, 64
    %v6787 = vpop.permute.xlu0 %6786
    %6788 = vrot.lane.b32.xlu0 %v6769, 64
    %v6789 = vpop.permute.xlu0 %6788
    %6790 = vrot.lane.b32.xlu0 %v6770, 64
    %v6791 = vpop.permute.xlu0 %6790
    %6792 = vrot.lane.b32.xlu0 %v6771, 64
    %v6793 = vpop.permute.xlu0 %6792
    %6794 = vrot.lane.b32.xlu0 %v6772, 64
    %v6795 = vpop.permute.xlu0 %6794
    %6796 = vrot.lane.b32.xlu0 %v6773, 64
    %v6797 = vpop.permute.xlu0 %6796
    %6798 = vrot.lane.b32.xlu0 %v6774, 64
    %v6799 = vpop.permute.xlu0 %6798
    %6800 = vrot.lane.b32.xlu0 %v6775, 64
    %v6801 = vpop.permute.xlu0 %6800
    %6802 = vrot.lane.b32.xlu0 %v6776, 64
    %v6803 = vpop.permute.xlu0 %6802
    %v6804 = vsel %vm1853, %v6787, %v6789
    %v6805 = vsel %vm1853, %v6789, %v6791
    %v6806 = vsel %vm1853, %v6791, %v6793
    %v6807 = vsel %vm1853, %v6793, %v6795
    %v6808 = vsel %vm1853, %v6795, %v6797
    %v6809 = vsel %vm1853, %v6797, %v6799
    %v6810 = vsel %vm1853, %v6799, %v6801
    %v6811 = vsel %vm1853, %v6801, %v6803
    %6820 = vst [vmem:[#allocation5 + $0x1c0] sm:$0xff] %v6804
    %6821 = vst [vmem:[#allocation5 + $0x1c8] sm:$0xff] %v6805
    %6822 = vst [vmem:[#allocation5 + $0x1d0] sm:$0xff] %v6806
    %6823 = vst [vmem:[#allocation5 + $0x1d8] sm:$0xff] %v6807
    %6824 = vst [vmem:[#allocation5 + $0x1e0] sm:$0xff] %v6808
    %6825 = vst [vmem:[#allocation5 + $0x1e8] sm:$0xff] %v6809
    %6826 = vst [vmem:[#allocation5 + $0x1f0] sm:$0xff] %v6810
    %6827 = vst [vmem:[#allocation5 + $0x1f8] sm:$0xff] %v6811
    %v6828 = vld [vmem:[#allocation4 + $0x8] sm:$0xff]
    %v6829 = vld [vmem:[#allocation4 + $0x10] sm:$0xff]
    %v6830 = vld [vmem:[#allocation4 + $0x18] sm:$0xff]
    %v6831 = vld [vmem:[#allocation4 + $0x20] sm:$0xff]
    %v6832 = vld [vmem:[#allocation4 + $0x28] sm:$0xff]
    %v6833 = vld [vmem:[#allocation4 + $0x30] sm:$0xff]
    %v6834 = vld [vmem:[#allocation4 + $0x38] sm:$0xff]
    %v6835 = vld [vmem:[#allocation4 + $0x40] sm:$0xff]
    %v6836 = vld [vmem:[#allocation4 + $0x48] sm:$0xff]
    %6846 = vrot.lane.b32.xlu0 %v6828, 60
    %v6847 = vpop.permute.xlu0 %6846
    %6848 = vrot.lane.b32.xlu0 %v6829, 60
    %v6849 = vpop.permute.xlu0 %6848
    %6850 = vrot.lane.b32.xlu0 %v6830, 60
    %v6851 = vpop.permute.xlu0 %6850
    %6852 = vrot.lane.b32.xlu0 %v6831, 60
    %v6853 = vpop.permute.xlu0 %6852
    %6854 = vrot.lane.b32.xlu0 %v6832, 60
    %v6855 = vpop.permute.xlu0 %6854
    %6856 = vrot.lane.b32.xlu0 %v6833, 60
    %v6857 = vpop.permute.xlu0 %6856
    %6858 = vrot.lane.b32.xlu0 %v6834, 60
    %v6859 = vpop.permute.xlu0 %6858
    %6860 = vrot.lane.b32.xlu0 %v6835, 60
    %v6861 = vpop.permute.xlu0 %6860
    %6862 = vrot.lane.b32.xlu0 %v6836, 60
    %v6863 = vpop.permute.xlu0 %6862
    %v6864 = vsel %vm2257, %v6847, %v6849
    %v6865 = vsel %vm2257, %v6849, %v6851
    %v6866 = vsel %vm2257, %v6851, %v6853
    %v6867 = vsel %vm2257, %v6853, %v6855
    %v6868 = vsel %vm2257, %v6855, %v6857
    %v6869 = vsel %vm2257, %v6857, %v6859
    %v6870 = vsel %vm2257, %v6859, %v6861
    %v6871 = vsel %vm2257, %v6861, %v6863
    %6880 = vst [vmem:[#allocation5 + $0x200] sm:$0xff] %v6864
    %6881 = vst [vmem:[#allocation5 + $0x208] sm:$0xff] %v6865
    %6882 = vst [vmem:[#allocation5 + $0x210] sm:$0xff] %v6866
    %6883 = vst [vmem:[#allocation5 + $0x218] sm:$0xff] %v6867
    %6884 = vst [vmem:[#allocation5 + $0x220] sm:$0xff] %v6868
    %6885 = vst [vmem:[#allocation5 + $0x228] sm:$0xff] %v6869
    %6886 = vst [vmem:[#allocation5 + $0x230] sm:$0xff] %v6870
    %6887 = vst [vmem:[#allocation5 + $0x238] sm:$0xff] %v6871
    %v6888 = vld [vmem:[#allocation4 + $0x8] sm:$0xff]
    %v6889 = vld [vmem:[#allocation4 + $0x10] sm:$0xff]
    %v6890 = vld [vmem:[#allocation4 + $0x18] sm:$0xff]
    %v6891 = vld [vmem:[#allocation4 + $0x20] sm:$0xff]
    %v6892 = vld [vmem:[#allocation4 + $0x28] sm:$0xff]
    %v6893 = vld [vmem:[#allocation4 + $0x30] sm:$0xff]
    %v6894 = vld [vmem:[#allocation4 + $0x38] sm:$0xff]
    %v6895 = vld [vmem:[#allocation4 + $0x40] sm:$0xff]
    %v6896 = vld [vmem:[#allocation4 + $0x48] sm:$0xff]
    %6906 = vrot.lane.b32.xlu0 %v6888, 56
    %v6907 = vpop.permute.xlu0 %6906
    %6908 = vrot.lane.b32.xlu0 %v6889, 56
    %v6909 = vpop.permute.xlu0 %6908
    %6910 = vrot.lane.b32.xlu0 %v6890, 56
    %v6911 = vpop.permute.xlu0 %6910
    %6912 = vrot.lane.b32.xlu0 %v6891, 56
    %v6913 = vpop.permute.xlu0 %6912
    %6914 = vrot.lane.b32.xlu0 %v6892, 56
    %v6915 = vpop.permute.xlu0 %6914
    %6916 = vrot.lane.b32.xlu0 %v6893, 56
    %v6917 = vpop.permute.xlu0 %6916
    %6918 = vrot.lane.b32.xlu0 %v6894, 56
    %v6919 = vpop.permute.xlu0 %6918
    %6920 = vrot.lane.b32.xlu0 %v6895, 56
    %v6921 = vpop.permute.xlu0 %6920
    %6922 = vrot.lane.b32.xlu0 %v6896, 56
    %v6923 = vpop.permute.xlu0 %6922
    %vm6924 = vcmask 457728
    %v6925 = vsel %vm6924, %v6907, %v6909
    %v6926 = vsel %vm6924, %v6909, %v6911
    %v6927 = vsel %vm6924, %v6911, %v6913
    %v6928 = vsel %vm6924, %v6913, %v6915
    %v6929 = vsel %vm6924, %v6915, %v6917
    %v6930 = vsel %vm6924, %v6917, %v6919
    %v6931 = vsel %vm6924, %v6919, %v6921
    %v6932 = vsel %vm6924, %v6921, %v6923
    %6941 = vst [vmem:[#allocation5 + $0x240] sm:$0xff] %v6925
    %6942 = vst [vmem:[#allocation5 + $0x248] sm:$0xff] %v6926
    %6943 = vst [vmem:[#allocation5 + $0x250] sm:$0xff] %v6927
    %6944 = vst [vmem:[#allocation5 + $0x258] sm:$0xff] %v6928
    %6945 = vst [vmem:[#allocation5 + $0x260] sm:$0xff] %v6929
    %6946 = vst [vmem:[#allocation5 + $0x268] sm:$0xff] %v6930
    %6947 = vst [vmem:[#allocation5 + $0x270] sm:$0xff] %v6931
    %6948 = vst [vmem:[#allocation5 + $0x278] sm:$0xff] %v6932
    %v6949 = vld [vmem:[#allocation4 + $0x8] sm:$0xff]
    %v6950 = vld [vmem:[#allocation4 + $0x10] sm:$0xff]
    %v6951 = vld [vmem:[#allocation4 + $0x18] sm:$0xff]
    %v6952 = vld [vmem:[#allocation4 + $0x20] sm:$0xff]
    %v6953 = vld [vmem:[#allocation4 + $0x28] sm:$0xff]
    %v6954 = vld [vmem:[#allocation4 + $0x30] sm:$0xff]
    %v6955 = vld [vmem:[#allocation4 + $0x38] sm:$0xff]
    %v6956 = vld [vmem:[#allocation4 + $0x40] sm:$0xff]
    %v6957 = vld [vmem:[#allocation4 + $0x48] sm:$0xff]
    %6967 = vrot.lane.b32.xlu0 %v6949, 8
    %v6968 = vpop.permute.xlu0 %6967
    %6969 = vrot.lane.b32.xlu0 %v6950, 8
    %v6970 = vpop.permute.xlu0 %6969
    %6971 = vrot.lane.b32.xlu0 %v6951, 8
    %v6972 = vpop.permute.xlu0 %6971
    %6973 = vrot.lane.b32.xlu0 %v6952, 8
    %v6974 = vpop.permute.xlu0 %6973
    %6975 = vrot.lane.b32.xlu0 %v6953, 8
    %v6976 = vpop.permute.xlu0 %6975
    %6977 = vrot.lane.b32.xlu0 %v6954, 8
    %v6978 = vpop.permute.xlu0 %6977
    %6979 = vrot.lane.b32.xlu0 %v6955, 8
    %v6980 = vpop.permute.xlu0 %6979
    %6981 = vrot.lane.b32.xlu0 %v6956, 8
    %v6982 = vpop.permute.xlu0 %6981
    %6983 = vrot.lane.b32.xlu0 %v6957, 8
    %v6984 = vpop.permute.xlu0 %6983
    %v6985 = vsel %vm6425, %v6968, %v6970
    %v6986 = vsel %vm6425, %v6970, %v6972
    %v6987 = vsel %vm6425, %v6972, %v6974
    %v6988 = vsel %vm6425, %v6974, %v6976
    %v6989 = vsel %vm6425, %v6976, %v6978
    %v6990 = vsel %vm6425, %v6978, %v6980
    %v6991 = vsel %vm6425, %v6980, %v6982
    %v6992 = vsel %vm6425, %v6982, %v6984
    %7001 = vst [vmem:[#allocation5 + $0x280] sm:$0xff] %v6985
    %7002 = vst [vmem:[#allocation5 + $0x288] sm:$0xff] %v6986
    %7003 = vst [vmem:[#allocation5 + $0x290] sm:$0xff] %v6987
    %7004 = vst [vmem:[#allocation5 + $0x298] sm:$0xff] %v6988
    %7005 = vst [vmem:[#allocation5 + $0x2a0] sm:$0xff] %v6989
    %7006 = vst [vmem:[#allocation5 + $0x2a8] sm:$0xff] %v6990
    %7007 = vst [vmem:[#allocation5 + $0x2b0] sm:$0xff] %v6991
    %7008 = vst [vmem:[#allocation5 + $0x2b8] sm:$0xff] %v6992
    %v7009 = vld [vmem:[#allocation4 + $0x8] sm:$0xff]
    %v7010 = vld [vmem:[#allocation4 + $0x10] sm:$0xff]
    %v7011 = vld [vmem:[#allocation4 + $0x18] sm:$0xff]
    %v7012 = vld [vmem:[#allocation4 + $0x20] sm:$0xff]
    %v7013 = vld [vmem:[#allocation4 + $0x28] sm:$0xff]
    %v7014 = vld [vmem:[#allocation4 + $0x30] sm:$0xff]
    %v7015 = vld [vmem:[#allocation4 + $0x38] sm:$0xff]
    %v7016 = vld [vmem:[#allocation4 + $0x40] sm:$0xff]
    %v7017 = vld [vmem:[#allocation4 + $0x48] sm:$0xff]
    %7027 = vrot.lane.b32.xlu0 %v7009, 4
    %v7028 = vpop.permute.xlu0 %7027
    %7029 = vrot.lane.b32.xlu0 %v7010, 4
    %v7030 = vpop.permute.xlu0 %7029
    %7031 = vrot.lane.b32.xlu0 %v7011, 4
    %v7032 = vpop.permute.xlu0 %7031
    %7033 = vrot.lane.b32.xlu0 %v7012, 4
    %v7034 = vpop.permute.xlu0 %7033
    %7035 = vrot.lane.b32.xlu0 %v7013, 4
    %v7036 = vpop.permute.xlu0 %7035
    %7037 = vrot.lane.b32.xlu0 %v7014, 4
    %v7038 = vpop.permute.xlu0 %7037
    %7039 = vrot.lane.b32.xlu0 %v7015, 4
    %v7040 = vpop.permute.xlu0 %7039
    %7041 = vrot.lane.b32.xlu0 %v7016, 4
    %v7042 = vpop.permute.xlu0 %7041
    %7043 = vrot.lane.b32.xlu0 %v7017, 4
    %v7044 = vpop.permute.xlu0 %7043
    %v7045 = vsel %vm454, %v7028, %v7030
    %v7046 = vsel %vm454, %v7030, %v7032
    %v7047 = vsel %vm454, %v7032, %v7034
    %v7048 = vsel %vm454, %v7034, %v7036
    %v7049 = vsel %vm454, %v7036, %v7038
    %v7050 = vsel %vm454, %v7038, %v7040
    %v7051 = vsel %vm454, %v7040, %v7042
    %v7052 = vsel %vm454, %v7042, %v7044
    %7061 = vst [vmem:[#allocation5 + $0x2c0] sm:$0xff] %v7045
    %7062 = vst [vmem:[#allocation5 + $0x2c8] sm:$0xff] %v7046
    %7063 = vst [vmem:[#allocation5 + $0x2d0] sm:$0xff] %v7047
    %7064 = vst [vmem:[#allocation5 + $0x2d8] sm:$0xff] %v7048
    %7065 = vst [vmem:[#allocation5 + $0x2e0] sm:$0xff] %v7049
    %7066 = vst [vmem:[#allocation5 + $0x2e8] sm:$0xff] %v7050
    %7067 = vst [vmem:[#allocation5 + $0x2f0] sm:$0xff] %v7051
    %7068 = vst [vmem:[#allocation5 + $0x2f8] sm:$0xff] %v7052
    %v7069 = vld [vmem:[#allocation4 + $0x10] sm:$0xff]
    %v7070 = vld [vmem:[#allocation4 + $0x18] sm:$0xff]
    %v7071 = vld [vmem:[#allocation4 + $0x20] sm:$0xff]
    %v7072 = vld [vmem:[#allocation4 + $0x28] sm:$0xff]
    %v7073 = vld [vmem:[#allocation4 + $0x30] sm:$0xff]
    %v7074 = vld [vmem:[#allocation4 + $0x38] sm:$0xff]
    %v7075 = vld [vmem:[#allocation4 + $0x40] sm:$0xff]
    %v7076 = vld [vmem:[#allocation4 + $0x48] sm:$0xff]
    %7077 = vst [vmem:[#allocation5 + $0x300] sm:$0xff] %v7069
    %7078 = vst [vmem:[#allocation5 + $0x308] sm:$0xff] %v7070
    %7079 = vst [vmem:[#allocation5 + $0x310] sm:$0xff] %v7071
    %7080 = vst [vmem:[#allocation5 + $0x318] sm:$0xff] %v7072
    %7081 = vst [vmem:[#allocation5 + $0x320] sm:$0xff] %v7073
    %7082 = vst [vmem:[#allocation5 + $0x328] sm:$0xff] %v7074
    %7083 = vst [vmem:[#allocation5 + $0x330] sm:$0xff] %v7075
    %7084 = vst [vmem:[#allocation5 + $0x338] sm:$0xff] %v7076
    %v7085 = vld [vmem:[#allocation4 + $0x10] sm:$0xff]
    %v7086 = vld [vmem:[#allocation4 + $0x18] sm:$0xff]
    %v7087 = vld [vmem:[#allocation4 + $0x20] sm:$0xff]
    %v7088 = vld [vmem:[#allocation4 + $0x28] sm:$0xff]
    %v7089 = vld [vmem:[#allocation4 + $0x30] sm:$0xff]
    %v7090 = vld [vmem:[#allocation4 + $0x38] sm:$0xff]
    %v7091 = vld [vmem:[#allocation4 + $0x40] sm:$0xff]
    %v7092 = vld [vmem:[#allocation4 + $0x48] sm:$0xff]
    %v7093 = vld [vmem:[#allocation4 + $0x50] sm:$0xff]
    %7103 = vrot.lane.b32.xlu0 %v7085, 124
    %v7104 = vpop.permute.xlu0 %7103
    %7105 = vrot.lane.b32.xlu0 %v7086, 124
    %v7106 = vpop.permute.xlu0 %7105
    %7107 = vrot.lane.b32.xlu0 %v7087, 124
    %v7108 = vpop.permute.xlu0 %7107
    %7109 = vrot.lane.b32.xlu0 %v7088, 124
    %v7110 = vpop.permute.xlu0 %7109
    %7111 = vrot.lane.b32.xlu0 %v7089, 124
    %v7112 = vpop.permute.xlu0 %7111
    %7113 = vrot.lane.b32.xlu0 %v7090, 124
    %v7114 = vpop.permute.xlu0 %7113
    %7115 = vrot.lane.b32.xlu0 %v7091, 124
    %v7116 = vpop.permute.xlu0 %7115
    %7117 = vrot.lane.b32.xlu0 %v7092, 124
    %v7118 = vpop.permute.xlu0 %7117
    %7119 = vrot.lane.b32.xlu0 %v7093, 124
    %v7120 = vpop.permute.xlu0 %7119
    %v7121 = vsel %vm1214, %v7104, %v7106
    %v7122 = vsel %vm1214, %v7106, %v7108
    %v7123 = vsel %vm1214, %v7108, %v7110
    %v7124 = vsel %vm1214, %v7110, %v7112
    %v7125 = vsel %vm1214, %v7112, %v7114
    %v7126 = vsel %vm1214, %v7114, %v7116
    %v7127 = vsel %vm1214, %v7116, %v7118
    %v7128 = vsel %vm1214, %v7118, %v7120
    %7137 = vst [vmem:[#allocation5 + $0x340] sm:$0xff] %v7121
    %7138 = vst [vmem:[#allocation5 + $0x348] sm:$0xff] %v7122
    %7139 = vst [vmem:[#allocation5 + $0x350] sm:$0xff] %v7123
    %7140 = vst [vmem:[#allocation5 + $0x358] sm:$0xff] %v7124
    %7141 = vst [vmem:[#allocation5 + $0x360] sm:$0xff] %v7125
    %7142 = vst [vmem:[#allocation5 + $0x368] sm:$0xff] %v7126
    %7143 = vst [vmem:[#allocation5 + $0x370] sm:$0xff] %v7127
    %7144 = vst [vmem:[#allocation5 + $0x378] sm:$0xff] %v7128
    %v7145 = vld [vmem:[#allocation4 + $0x10] sm:$0xff]
    %v7146 = vld [vmem:[#allocation4 + $0x18] sm:$0xff]
    %v7147 = vld [vmem:[#allocation4 + $0x20] sm:$0xff]
    %v7148 = vld [vmem:[#allocation4 + $0x28] sm:$0xff]
    %v7149 = vld [vmem:[#allocation4 + $0x30] sm:$0xff]
    %v7150 = vld [vmem:[#allocation4 + $0x38] sm:$0xff]
    %v7151 = vld [vmem:[#allocation4 + $0x40] sm:$0xff]
    %v7152 = vld [vmem:[#allocation4 + $0x48] sm:$0xff]
    %v7153 = vld [vmem:[#allocation4 + $0x50] sm:$0xff]
    %7163 = vrot.lane.b32.xlu0 %v7145, 120
    %v7164 = vpop.permute.xlu0 %7163
    %7165 = vrot.lane.b32.xlu0 %v7146, 120
    %v7166 = vpop.permute.xlu0 %7165
    %7167 = vrot.lane.b32.xlu0 %v7147, 120
    %v7168 = vpop.permute.xlu0 %7167
    %7169 = vrot.lane.b32.xlu0 %v7148, 120
    %v7170 = vpop.permute.xlu0 %7169
    %7171 = vrot.lane.b32.xlu0 %v7149, 120
    %v7172 = vpop.permute.xlu0 %7171
    %7173 = vrot.lane.b32.xlu0 %v7150, 120
    %v7174 = vpop.permute.xlu0 %7173
    %7175 = vrot.lane.b32.xlu0 %v7151, 120
    %v7176 = vpop.permute.xlu0 %7175
    %7177 = vrot.lane.b32.xlu0 %v7152, 120
    %v7178 = vpop.permute.xlu0 %7177
    %7179 = vrot.lane.b32.xlu0 %v7153, 120
    %v7180 = vpop.permute.xlu0 %7179
    %v7181 = vsel %vm6622, %v7164, %v7166
    %v7182 = vsel %vm6622, %v7166, %v7168
    %v7183 = vsel %vm6622, %v7168, %v7170
    %v7184 = vsel %vm6622, %v7170, %v7172
    %v7185 = vsel %vm6622, %v7172, %v7174
    %v7186 = vsel %vm6622, %v7174, %v7176
    %v7187 = vsel %vm6622, %v7176, %v7178
    %v7188 = vsel %vm6622, %v7178, %v7180
    %7197 = vst [vmem:[#allocation5 + $0x380] sm:$0xff] %v7181
    %7198 = vst [vmem:[#allocation5 + $0x388] sm:$0xff] %v7182
    %7199 = vst [vmem:[#allocation5 + $0x390] sm:$0xff] %v7183
    %7200 = vst [vmem:[#allocation5 + $0x398] sm:$0xff] %v7184
    %7201 = vst [vmem:[#allocation5 + $0x3a0] sm:$0xff] %v7185
    %7202 = vst [vmem:[#allocation5 + $0x3a8] sm:$0xff] %v7186
    %7203 = vst [vmem:[#allocation5 + $0x3b0] sm:$0xff] %v7187
    %7204 = vst [vmem:[#allocation5 + $0x3b8] sm:$0xff] %v7188
    %v7205 = vld [vmem:[#allocation4 + $0x10] sm:$0xff]
    %v7206 = vld [vmem:[#allocation4 + $0x18] sm:$0xff]
    %v7207 = vld [vmem:[#allocation4 + $0x20] sm:$0xff]
    %v7208 = vld [vmem:[#allocation4 + $0x28] sm:$0xff]
    %v7209 = vld [vmem:[#allocation4 + $0x30] sm:$0xff]
    %v7210 = vld [vmem:[#allocation4 + $0x38] sm:$0xff]
    %v7211 = vld [vmem:[#allocation4 + $0x40] sm:$0xff]
    %v7212 = vld [vmem:[#allocation4 + $0x48] sm:$0xff]
    %v7213 = vld [vmem:[#allocation4 + $0x50] sm:$0xff]
    %7223 = vrot.lane.b32.xlu0 %v7205, 72
    %v7224 = vpop.permute.xlu0 %7223
    %7225 = vrot.lane.b32.xlu0 %v7206, 72
    %v7226 = vpop.permute.xlu0 %7225
    %7227 = vrot.lane.b32.xlu0 %v7207, 72
    %v7228 = vpop.permute.xlu0 %7227
    %7229 = vrot.lane.b32.xlu0 %v7208, 72
    %v7230 = vpop.permute.xlu0 %7229
    %7231 = vrot.lane.b32.xlu0 %v7209, 72
    %v7232 = vpop.permute.xlu0 %7231
    %7233 = vrot.lane.b32.xlu0 %v7210, 72
    %v7234 = vpop.permute.xlu0 %7233
    %7235 = vrot.lane.b32.xlu0 %v7211, 72
    %v7236 = vpop.permute.xlu0 %7235
    %7237 = vrot.lane.b32.xlu0 %v7212, 72
    %v7238 = vpop.permute.xlu0 %7237
    %7239 = vrot.lane.b32.xlu0 %v7213, 72
    %v7240 = vpop.permute.xlu0 %7239
    %v7241 = vsel %vm6683, %v7224, %v7226
    %v7242 = vsel %vm6683, %v7226, %v7228
    %v7243 = vsel %vm6683, %v7228, %v7230
    %v7244 = vsel %vm6683, %v7230, %v7232
    %v7245 = vsel %vm6683, %v7232, %v7234
    %v7246 = vsel %vm6683, %v7234, %v7236
    %v7247 = vsel %vm6683, %v7236, %v7238
    %v7248 = vsel %vm6683, %v7238, %v7240
    %7257 = vst [vmem:[#allocation5 + $0x3c0] sm:$0xff] %v7241
    %7258 = vst [vmem:[#allocation5 + $0x3c8] sm:$0xff] %v7242
    %7259 = vst [vmem:[#allocation5 + $0x3d0] sm:$0xff] %v7243
    %7260 = vst [vmem:[#allocation5 + $0x3d8] sm:$0xff] %v7244
    %7261 = vst [vmem:[#allocation5 + $0x3e0] sm:$0xff] %v7245
    %7262 = vst [vmem:[#allocation5 + $0x3e8] sm:$0xff] %v7246
    %7263 = vst [vmem:[#allocation5 + $0x3f0] sm:$0xff] %v7247
    %7264 = vst [vmem:[#allocation5 + $0x3f8] sm:$0xff] %v7248
    %v7265 = vld [vmem:[#allocation4 + $0x10] sm:$0xff]
    %v7266 = vld [vmem:[#allocation4 + $0x18] sm:$0xff]
    %v7267 = vld [vmem:[#allocation4 + $0x20] sm:$0xff]
    %v7268 = vld [vmem:[#allocation4 + $0x28] sm:$0xff]
    %v7269 = vld [vmem:[#allocation4 + $0x30] sm:$0xff]
    %v7270 = vld [vmem:[#allocation4 + $0x38] sm:$0xff]
    %v7271 = vld [vmem:[#allocation4 + $0x40] sm:$0xff]
    %v7272 = vld [vmem:[#allocation4 + $0x48] sm:$0xff]
    %v7273 = vld [vmem:[#allocation4 + $0x50] sm:$0xff]
    %7283 = vrot.lane.b32.xlu0 %v7265, 68
    %v7284 = vpop.permute.xlu0 %7283
    %7285 = vrot.lane.b32.xlu0 %v7266, 68
    %v7286 = vpop.permute.xlu0 %7285
    %7287 = vrot.lane.b32.xlu0 %v7267, 68
    %v7288 = vpop.permute.xlu0 %7287
    %7289 = vrot.lane.b32.xlu0 %v7268, 68
    %v7290 = vpop.permute.xlu0 %7289
    %7291 = vrot.lane.b32.xlu0 %v7269, 68
    %v7292 = vpop.permute.xlu0 %7291
    %7293 = vrot.lane.b32.xlu0 %v7270, 68
    %v7294 = vpop.permute.xlu0 %7293
    %7295 = vrot.lane.b32.xlu0 %v7271, 68
    %v7296 = vpop.permute.xlu0 %7295
    %7297 = vrot.lane.b32.xlu0 %v7272, 68
    %v7298 = vpop.permute.xlu0 %7297
    %7299 = vrot.lane.b32.xlu0 %v7273, 68
    %v7300 = vpop.permute.xlu0 %7299
    %v7301 = vsel %vm1437, %v7284, %v7286
    %v7302 = vsel %vm1437, %v7286, %v7288
    %v7303 = vsel %vm1437, %v7288, %v7290
    %v7304 = vsel %vm1437, %v7290, %v7292
    %v7305 = vsel %vm1437, %v7292, %v7294
    %v7306 = vsel %vm1437, %v7294, %v7296
    %v7307 = vsel %vm1437, %v7296, %v7298
    %v7308 = vsel %vm1437, %v7298, %v7300
    %7317 = vst [vmem:[#allocation5 + $0x400] sm:$0xff] %v7301
    %7318 = vst [vmem:[#allocation5 + $0x408] sm:$0xff] %v7302
    %7319 = vst [vmem:[#allocation5 + $0x410] sm:$0xff] %v7303
    %7320 = vst [vmem:[#allocation5 + $0x418] sm:$0xff] %v7304
    %7321 = vst [vmem:[#allocation5 + $0x420] sm:$0xff] %v7305
    %7322 = vst [vmem:[#allocation5 + $0x428] sm:$0xff] %v7306
    %7323 = vst [vmem:[#allocation5 + $0x430] sm:$0xff] %v7307
    %7324 = vst [vmem:[#allocation5 + $0x438] sm:$0xff] %v7308
    %v7325 = vld [vmem:[#allocation4 + $0x10] sm:$0xff]
    %v7326 = vld [vmem:[#allocation4 + $0x18] sm:$0xff]
    %v7327 = vld [vmem:[#allocation4 + $0x20] sm:$0xff]
    %v7328 = vld [vmem:[#allocation4 + $0x28] sm:$0xff]
    %v7329 = vld [vmem:[#allocation4 + $0x30] sm:$0xff]
    %v7330 = vld [vmem:[#allocation4 + $0x38] sm:$0xff]
    %v7331 = vld [vmem:[#allocation4 + $0x40] sm:$0xff]
    %v7332 = vld [vmem:[#allocation4 + $0x48] sm:$0xff]
    %v7333 = vld [vmem:[#allocation4 + $0x50] sm:$0xff]
    %7343 = vrot.lane.b32.xlu0 %v7325, 64
    %v7344 = vpop.permute.xlu0 %7343
    %7345 = vrot.lane.b32.xlu0 %v7326, 64
    %v7346 = vpop.permute.xlu0 %7345
    %7347 = vrot.lane.b32.xlu0 %v7327, 64
    %v7348 = vpop.permute.xlu0 %7347
    %7349 = vrot.lane.b32.xlu0 %v7328, 64
    %v7350 = vpop.permute.xlu0 %7349
    %7351 = vrot.lane.b32.xlu0 %v7329, 64
    %v7352 = vpop.permute.xlu0 %7351
    %7353 = vrot.lane.b32.xlu0 %v7330, 64
    %v7354 = vpop.permute.xlu0 %7353
    %7355 = vrot.lane.b32.xlu0 %v7331, 64
    %v7356 = vpop.permute.xlu0 %7355
    %7357 = vrot.lane.b32.xlu0 %v7332, 64
    %v7358 = vpop.permute.xlu0 %7357
    %7359 = vrot.lane.b32.xlu0 %v7333, 64
    %v7360 = vpop.permute.xlu0 %7359
    %v7361 = vsel %vm1853, %v7344, %v7346
    %v7362 = vsel %vm1853, %v7346, %v7348
    %v7363 = vsel %vm1853, %v7348, %v7350
    %v7364 = vsel %vm1853, %v7350, %v7352
    %v7365 = vsel %vm1853, %v7352, %v7354
    %v7366 = vsel %vm1853, %v7354, %v7356
    %v7367 = vsel %vm1853, %v7356, %v7358
    %v7368 = vsel %vm1853, %v7358, %v7360
    %7377 = vst [vmem:[#allocation5 + $0x440] sm:$0xff] %v7361
    %7378 = vst [vmem:[#allocation5 + $0x448] sm:$0xff] %v7362
    %7379 = vst [vmem:[#allocation5 + $0x450] sm:$0xff] %v7363
    %7380 = vst [vmem:[#allocation5 + $0x458] sm:$0xff] %v7364
    %7381 = vst [vmem:[#allocation5 + $0x460] sm:$0xff] %v7365
    %7382 = vst [vmem:[#allocation5 + $0x468] sm:$0xff] %v7366
    %7383 = vst [vmem:[#allocation5 + $0x470] sm:$0xff] %v7367
    %7384 = vst [vmem:[#allocation5 + $0x478] sm:$0xff] %v7368
    %v7385 = vld [vmem:[#allocation4 + $0x10] sm:$0xff]
    %v7386 = vld [vmem:[#allocation4 + $0x18] sm:$0xff]
    %v7387 = vld [vmem:[#allocation4 + $0x20] sm:$0xff]
    %v7388 = vld [vmem:[#allocation4 + $0x28] sm:$0xff]
    %v7389 = vld [vmem:[#allocation4 + $0x30] sm:$0xff]
    %v7390 = vld [vmem:[#allocation4 + $0x38] sm:$0xff]
    %v7391 = vld [vmem:[#allocation4 + $0x40] sm:$0xff]
    %v7392 = vld [vmem:[#allocation4 + $0x48] sm:$0xff]
    %v7393 = vld [vmem:[#allocation4 + $0x50] sm:$0xff]
    %7403 = vrot.lane.b32.xlu0 %v7385, 60
    %v7404 = vpop.permute.xlu0 %7403
    %7405 = vrot.lane.b32.xlu0 %v7386, 60
    %v7406 = vpop.permute.xlu0 %7405
    %7407 = vrot.lane.b32.xlu0 %v7387, 60
    %v7408 = vpop.permute.xlu0 %7407
    %7409 = vrot.lane.b32.xlu0 %v7388, 60
    %v7410 = vpop.permute.xlu0 %7409
    %7411 = vrot.lane.b32.xlu0 %v7389, 60
    %v7412 = vpop.permute.xlu0 %7411
    %7413 = vrot.lane.b32.xlu0 %v7390, 60
    %v7414 = vpop.permute.xlu0 %7413
    %7415 = vrot.lane.b32.xlu0 %v7391, 60
    %v7416 = vpop.permute.xlu0 %7415
    %7417 = vrot.lane.b32.xlu0 %v7392, 60
    %v7418 = vpop.permute.xlu0 %7417
    %7419 = vrot.lane.b32.xlu0 %v7393, 60
    %v7420 = vpop.permute.xlu0 %7419
    %v7421 = vsel %vm2257, %v7404, %v7406
    %v7422 = vsel %vm2257, %v7406, %v7408
    %v7423 = vsel %vm2257, %v7408, %v7410
    %v7424 = vsel %vm2257, %v7410, %v7412
    %v7425 = vsel %vm2257, %v7412, %v7414
    %v7426 = vsel %vm2257, %v7414, %v7416
    %v7427 = vsel %vm2257, %v7416, %v7418
    %v7428 = vsel %vm2257, %v7418, %v7420
    %7437 = vst [vmem:[#allocation5 + $0x480] sm:$0xff] %v7421
    %7438 = vst [vmem:[#allocation5 + $0x488] sm:$0xff] %v7422
    %7439 = vst [vmem:[#allocation5 + $0x490] sm:$0xff] %v7423
    %7440 = vst [vmem:[#allocation5 + $0x498] sm:$0xff] %v7424
    %7441 = vst [vmem:[#allocation5 + $0x4a0] sm:$0xff] %v7425
    %7442 = vst [vmem:[#allocation5 + $0x4a8] sm:$0xff] %v7426
    %7443 = vst [vmem:[#allocation5 + $0x4b0] sm:$0xff] %v7427
    %7444 = vst [vmem:[#allocation5 + $0x4b8] sm:$0xff] %v7428
    %v7445 = vld [vmem:[#allocation4 + $0x10] sm:$0xff]
    %v7446 = vld [vmem:[#allocation4 + $0x18] sm:$0xff]
    %v7447 = vld [vmem:[#allocation4 + $0x20] sm:$0xff]
    %v7448 = vld [vmem:[#allocation4 + $0x28] sm:$0xff]
    %v7449 = vld [vmem:[#allocation4 + $0x30] sm:$0xff]
    %v7450 = vld [vmem:[#allocation4 + $0x38] sm:$0xff]
    %v7451 = vld [vmem:[#allocation4 + $0x40] sm:$0xff]
    %v7452 = vld [vmem:[#allocation4 + $0x48] sm:$0xff]
    %v7453 = vld [vmem:[#allocation4 + $0x50] sm:$0xff]
    %7463 = vrot.lane.b32.xlu0 %v7445, 56
    %v7464 = vpop.permute.xlu0 %7463
    %7465 = vrot.lane.b32.xlu0 %v7446, 56
    %v7466 = vpop.permute.xlu0 %7465
    %7467 = vrot.lane.b32.xlu0 %v7447, 56
    %v7468 = vpop.permute.xlu0 %7467
    %7469 = vrot.lane.b32.xlu0 %v7448, 56
    %v7470 = vpop.permute.xlu0 %7469
    %7471 = vrot.lane.b32.xlu0 %v7449, 56
    %v7472 = vpop.permute.xlu0 %7471
    %7473 = vrot.lane.b32.xlu0 %v7450, 56
    %v7474 = vpop.permute.xlu0 %7473
    %7475 = vrot.lane.b32.xlu0 %v7451, 56
    %v7476 = vpop.permute.xlu0 %7475
    %7477 = vrot.lane.b32.xlu0 %v7452, 56
    %v7478 = vpop.permute.xlu0 %7477
    %7479 = vrot.lane.b32.xlu0 %v7453, 56
    %v7480 = vpop.permute.xlu0 %7479
    %v7481 = vsel %vm6924, %v7464, %v7466
    %v7482 = vsel %vm6924, %v7466, %v7468
    %v7483 = vsel %vm6924, %v7468, %v7470
    %v7484 = vsel %vm6924, %v7470, %v7472
    %v7485 = vsel %vm6924, %v7472, %v7474
    %v7486 = vsel %vm6924, %v7474, %v7476
    %v7487 = vsel %vm6924, %v7476, %v7478
    %v7488 = vsel %vm6924, %v7478, %v7480
    %7497 = vst [vmem:[#allocation5 + $0x4c0] sm:$0xff] %v7481
    %7498 = vst [vmem:[#allocation5 + $0x4c8] sm:$0xff] %v7482
    %7499 = vst [vmem:[#allocation5 + $0x4d0] sm:$0xff] %v7483
    %7500 = vst [vmem:[#allocation5 + $0x4d8] sm:$0xff] %v7484
    %7501 = vst [vmem:[#allocation5 + $0x4e0] sm:$0xff] %v7485
    %7502 = vst [vmem:[#allocation5 + $0x4e8] sm:$0xff] %v7486
    %7503 = vst [vmem:[#allocation5 + $0x4f0] sm:$0xff] %v7487
    %7504 = vst [vmem:[#allocation5 + $0x4f8] sm:$0xff] %v7488
    %v7505 = vld [vmem:[#allocation4 + $0x10] sm:$0xff]
    %v7506 = vld [vmem:[#allocation4 + $0x18] sm:$0xff]
    %v7507 = vld [vmem:[#allocation4 + $0x20] sm:$0xff]
    %v7508 = vld [vmem:[#allocation4 + $0x28] sm:$0xff]
    %v7509 = vld [vmem:[#allocation4 + $0x30] sm:$0xff]
    %v7510 = vld [vmem:[#allocation4 + $0x38] sm:$0xff]
    %v7511 = vld [vmem:[#allocation4 + $0x40] sm:$0xff]
    %v7512 = vld [vmem:[#allocation4 + $0x48] sm:$0xff]
    %v7513 = vld [vmem:[#allocation4 + $0x50] sm:$0xff]
    %7523 = vrot.lane.b32.xlu0 %v7505, 8
    %v7524 = vpop.permute.xlu0 %7523
    %7525 = vrot.lane.b32.xlu0 %v7506, 8
    %v7526 = vpop.permute.xlu0 %7525
    %7527 = vrot.lane.b32.xlu0 %v7507, 8
    %v7528 = vpop.permute.xlu0 %7527
    %7529 = vrot.lane.b32.xlu0 %v7508, 8
    %v7530 = vpop.permute.xlu0 %7529
    %7531 = vrot.lane.b32.xlu0 %v7509, 8
    %v7532 = vpop.permute.xlu0 %7531
    %7533 = vrot.lane.b32.xlu0 %v7510, 8
    %v7534 = vpop.permute.xlu0 %7533
    %7535 = vrot.lane.b32.xlu0 %v7511, 8
    %v7536 = vpop.permute.xlu0 %7535
    %7537 = vrot.lane.b32.xlu0 %v7512, 8
    %v7538 = vpop.permute.xlu0 %7537
    %7539 = vrot.lane.b32.xlu0 %v7513, 8
    %v7540 = vpop.permute.xlu0 %7539
    %v7541 = vsel %vm6425, %v7524, %v7526
    %v7542 = vsel %vm6425, %v7526, %v7528
    %v7543 = vsel %vm6425, %v7528, %v7530
    %v7544 = vsel %vm6425, %v7530, %v7532
    %v7545 = vsel %vm6425, %v7532, %v7534
    %v7546 = vsel %vm6425, %v7534, %v7536
    %v7547 = vsel %vm6425, %v7536, %v7538
    %v7548 = vsel %vm6425, %v7538, %v7540
    %7557 = vst [vmem:[#allocation5 + $0x500] sm:$0xff] %v7541
    %7558 = vst [vmem:[#allocation5 + $0x508] sm:$0xff] %v7542
    %7559 = vst [vmem:[#allocation5 + $0x510] sm:$0xff] %v7543
    %7560 = vst [vmem:[#allocation5 + $0x518] sm:$0xff] %v7544
    %7561 = vst [vmem:[#allocation5 + $0x520] sm:$0xff] %v7545
    %7562 = vst [vmem:[#allocation5 + $0x528] sm:$0xff] %v7546
    %7563 = vst [vmem:[#allocation5 + $0x530] sm:$0xff] %v7547
    %7564 = vst [vmem:[#allocation5 + $0x538] sm:$0xff] %v7548
    %v7565 = vld [vmem:[#allocation4 + $0x10] sm:$0xff]
    %v7566 = vld [vmem:[#allocation4 + $0x18] sm:$0xff]
    %v7567 = vld [vmem:[#allocation4 + $0x20] sm:$0xff]
    %v7568 = vld [vmem:[#allocation4 + $0x28] sm:$0xff]
    %v7569 = vld [vmem:[#allocation4 + $0x30] sm:$0xff]
    %v7570 = vld [vmem:[#allocation4 + $0x38] sm:$0xff]
    %v7571 = vld [vmem:[#allocation4 + $0x40] sm:$0xff]
    %v7572 = vld [vmem:[#allocation4 + $0x48] sm:$0xff]
    %v7573 = vld [vmem:[#allocation4 + $0x50] sm:$0xff]
    %7583 = vrot.lane.b32.xlu0 %v7565, 4
    %v7584 = vpop.permute.xlu0 %7583
    %7585 = vrot.lane.b32.xlu0 %v7566, 4
    %v7586 = vpop.permute.xlu0 %7585
    %7587 = vrot.lane.b32.xlu0 %v7567, 4
    %v7588 = vpop.permute.xlu0 %7587
    %7589 = vrot.lane.b32.xlu0 %v7568, 4
    %v7590 = vpop.permute.xlu0 %7589
    %7591 = vrot.lane.b32.xlu0 %v7569, 4
    %v7592 = vpop.permute.xlu0 %7591
    %7593 = vrot.lane.b32.xlu0 %v7570, 4
    %v7594 = vpop.permute.xlu0 %7593
    %7595 = vrot.lane.b32.xlu0 %v7571, 4
    %v7596 = vpop.permute.xlu0 %7595
    %7597 = vrot.lane.b32.xlu0 %v7572, 4
    %v7598 = vpop.permute.xlu0 %7597
    %7599 = vrot.lane.b32.xlu0 %v7573, 4
    %v7600 = vpop.permute.xlu0 %7599
    %v7601 = vsel %vm454, %v7584, %v7586
    %v7602 = vsel %vm454, %v7586, %v7588
    %v7603 = vsel %vm454, %v7588, %v7590
    %v7604 = vsel %vm454, %v7590, %v7592
    %v7605 = vsel %vm454, %v7592, %v7594
    %v7606 = vsel %vm454, %v7594, %v7596
    %v7607 = vsel %vm454, %v7596, %v7598
    %v7608 = vsel %vm454, %v7598, %v7600
    %7617 = vst [vmem:[#allocation5 + $0x540] sm:$0xff] %v7601
    %7618 = vst [vmem:[#allocation5 + $0x548] sm:$0xff] %v7602
    %7619 = vst [vmem:[#allocation5 + $0x550] sm:$0xff] %v7603
    %7620 = vst [vmem:[#allocation5 + $0x558] sm:$0xff] %v7604
    %7621 = vst [vmem:[#allocation5 + $0x560] sm:$0xff] %v7605
    %7622 = vst [vmem:[#allocation5 + $0x568] sm:$0xff] %v7606
    %7623 = vst [vmem:[#allocation5 + $0x570] sm:$0xff] %v7607
    %7624 = vst [vmem:[#allocation5 + $0x578] sm:$0xff] %v7608
    %v7625 = vld [vmem:[#allocation4 + $0x18] sm:$0xff]
    %v7626 = vld [vmem:[#allocation4 + $0x20] sm:$0xff]
    %v7627 = vld [vmem:[#allocation4 + $0x28] sm:$0xff]
    %v7628 = vld [vmem:[#allocation4 + $0x30] sm:$0xff]
    %v7629 = vld [vmem:[#allocation4 + $0x38] sm:$0xff]
    %v7630 = vld [vmem:[#allocation4 + $0x40] sm:$0xff]
    %v7631 = vld [vmem:[#allocation4 + $0x48] sm:$0xff]
    %v7632 = vld [vmem:[#allocation4 + $0x50] sm:$0xff]
    %7633 = vst [vmem:[#allocation5 + $0x580] sm:$0xff] %v7625
    %7634 = vst [vmem:[#allocation5 + $0x588] sm:$0xff] %v7626
    %7635 = vst [vmem:[#allocation5 + $0x590] sm:$0xff] %v7627
    %7636 = vst [vmem:[#allocation5 + $0x598] sm:$0xff] %v7628
    %7637 = vst [vmem:[#allocation5 + $0x5a0] sm:$0xff] %v7629
    %7638 = vst [vmem:[#allocation5 + $0x5a8] sm:$0xff] %v7630
    %7639 = vst [vmem:[#allocation5 + $0x5b0] sm:$0xff] %v7631
    %7640 = vst [vmem:[#allocation5 + $0x5b8] sm:$0xff] %v7632
    %v7641 = vld [vmem:[#allocation4 + $0x18] sm:$0xff]
    %v7642 = vld [vmem:[#allocation4 + $0x20] sm:$0xff]
    %v7643 = vld [vmem:[#allocation4 + $0x28] sm:$0xff]
    %v7644 = vld [vmem:[#allocation4 + $0x30] sm:$0xff]
    %v7645 = vld [vmem:[#allocation4 + $0x38] sm:$0xff]
    %v7646 = vld [vmem:[#allocation4 + $0x40] sm:$0xff]
    %v7647 = vld [vmem:[#allocation4 + $0x48] sm:$0xff]
    %v7648 = vld [vmem:[#allocation4 + $0x50] sm:$0xff]
    %v7649 = vld [vmem:[#allocation4 + $0x58] sm:$0xff]
    %7659 = vrot.lane.b32.xlu0 %v7641, 124
    %v7660 = vpop.permute.xlu0 %7659
    %7661 = vrot.lane.b32.xlu0 %v7642, 124
    %v7662 = vpop.permute.xlu0 %7661
    %7663 = vrot.lane.b32.xlu0 %v7643, 124
    %v7664 = vpop.permute.xlu0 %7663
    %7665 = vrot.lane.b32.xlu0 %v7644, 124
    %v7666 = vpop.permute.xlu0 %7665
    %7667 = vrot.lane.b32.xlu0 %v7645, 124
    %v7668 = vpop.permute.xlu0 %7667
    %7669 = vrot.lane.b32.xlu0 %v7646, 124
    %v7670 = vpop.permute.xlu0 %7669
    %7671 = vrot.lane.b32.xlu0 %v7647, 124
    %v7672 = vpop.permute.xlu0 %7671
    %7673 = vrot.lane.b32.xlu0 %v7648, 124
    %v7674 = vpop.permute.xlu0 %7673
    %7675 = vrot.lane.b32.xlu0 %v7649, 124
    %v7676 = vpop.permute.xlu0 %7675
    %v7677 = vsel %vm1214, %v7660, %v7662
    %v7678 = vsel %vm1214, %v7662, %v7664
    %v7679 = vsel %vm1214, %v7664, %v7666
    %v7680 = vsel %vm1214, %v7666, %v7668
    %v7681 = vsel %vm1214, %v7668, %v7670
    %v7682 = vsel %vm1214, %v7670, %v7672
    %v7683 = vsel %vm1214, %v7672, %v7674
    %v7684 = vsel %vm1214, %v7674, %v7676
    %7693 = vst [vmem:[#allocation5 + $0x5c0] sm:$0xff] %v7677
    %7694 = vst [vmem:[#allocation5 + $0x5c8] sm:$0xff] %v7678
    %7695 = vst [vmem:[#allocation5 + $0x5d0] sm:$0xff] %v7679
    %7696 = vst [vmem:[#allocation5 + $0x5d8] sm:$0xff] %v7680
    %7697 = vst [vmem:[#allocation5 + $0x5e0] sm:$0xff] %v7681
    %7698 = vst [vmem:[#allocation5 + $0x5e8] sm:$0xff] %v7682
    %7699 = vst [vmem:[#allocation5 + $0x5f0] sm:$0xff] %v7683
    %7700 = vst [vmem:[#allocation5 + $0x5f8] sm:$0xff] %v7684
    %v7701 = vld [vmem:[#allocation4 + $0x18] sm:$0xff]
    %v7702 = vld [vmem:[#allocation4 + $0x20] sm:$0xff]
    %v7703 = vld [vmem:[#allocation4 + $0x28] sm:$0xff]
    %v7704 = vld [vmem:[#allocation4 + $0x30] sm:$0xff]
    %v7705 = vld [vmem:[#allocation4 + $0x38] sm:$0xff]
    %v7706 = vld [vmem:[#allocation4 + $0x40] sm:$0xff]
    %v7707 = vld [vmem:[#allocation4 + $0x48] sm:$0xff]
    %v7708 = vld [vmem:[#allocation4 + $0x50] sm:$0xff]
    %v7709 = vld [vmem:[#allocation4 + $0x58] sm:$0xff]
    %7719 = vrot.lane.b32.xlu0 %v7701, 120
    %v7720 = vpop.permute.xlu0 %7719
    %7721 = vrot.lane.b32.xlu0 %v7702, 120
    %v7722 = vpop.permute.xlu0 %7721
    %7723 = vrot.lane.b32.xlu0 %v7703, 120
    %v7724 = vpop.permute.xlu0 %7723
    %7725 = vrot.lane.b32.xlu0 %v7704, 120
    %v7726 = vpop.permute.xlu0 %7725
    %7727 = vrot.lane.b32.xlu0 %v7705, 120
    %v7728 = vpop.permute.xlu0 %7727
    %7729 = vrot.lane.b32.xlu0 %v7706, 120
    %v7730 = vpop.permute.xlu0 %7729
    %7731 = vrot.lane.b32.xlu0 %v7707, 120
    %v7732 = vpop.permute.xlu0 %7731
    %7733 = vrot.lane.b32.xlu0 %v7708, 120
    %v7734 = vpop.permute.xlu0 %7733
    %7735 = vrot.lane.b32.xlu0 %v7709, 120
    %v7736 = vpop.permute.xlu0 %7735
    %v7737 = vsel %vm6622, %v7720, %v7722
    %v7738 = vsel %vm6622, %v7722, %v7724
    %v7739 = vsel %vm6622, %v7724, %v7726
    %v7740 = vsel %vm6622, %v7726, %v7728
    %v7741 = vsel %vm6622, %v7728, %v7730
    %v7742 = vsel %vm6622, %v7730, %v7732
    %v7743 = vsel %vm6622, %v7732, %v7734
    %v7744 = vsel %vm6622, %v7734, %v7736
    %7753 = vst [vmem:[#allocation5 + $0x600] sm:$0xff] %v7737
    %7754 = vst [vmem:[#allocation5 + $0x608] sm:$0xff] %v7738
    %7755 = vst [vmem:[#allocation5 + $0x610] sm:$0xff] %v7739
    %7756 = vst [vmem:[#allocation5 + $0x618] sm:$0xff] %v7740
    %7757 = vst [vmem:[#allocation5 + $0x620] sm:$0xff] %v7741
    %7758 = vst [vmem:[#allocation5 + $0x628] sm:$0xff] %v7742
    %7759 = vst [vmem:[#allocation5 + $0x630] sm:$0xff] %v7743
    %7760 = vst [vmem:[#allocation5 + $0x638] sm:$0xff] %v7744
    %v7761 = vld [vmem:[%s3] sm:$0xff]
    %v7762 = vld [vmem:[%s3 + $0x8] sm:$0xff]
    %v7763 = vld [vmem:[%s3 + $0x10] sm:$0xff]
    %v7764 = vld [vmem:[%s3 + $0x18] sm:$0xff]
    %v7765 = vld [vmem:[%s3 + $0x20] sm:$0xff]
    %v7766 = vld [vmem:[%s3 + $0x28] sm:$0xff]
    %v7767 = vld [vmem:[%s3 + $0x30] sm:$0xff]
    %v7768 = vld [vmem:[%s3 + $0x38] sm:$0xff]
    %v7769 = vld [vmem:[#allocation5] sm:$0xff]
    %v7770 = vld [vmem:[#allocation5 + $0x8] sm:$0xff]
    %v7771 = vld [vmem:[#allocation5 + $0x10] sm:$0xff]
    %v7772 = vld [vmem:[#allocation5 + $0x18] sm:$0xff]
    %v7773 = vld [vmem:[#allocation5 + $0x20] sm:$0xff]
    %v7774 = vld [vmem:[#allocation5 + $0x28] sm:$0xff]
    %v7775 = vld [vmem:[#allocation5 + $0x30] sm:$0xff]
    %v7776 = vld [vmem:[#allocation5 + $0x38] sm:$0xff]
    %v7777 = vld [vmem:[#allocation5 + $0x40] sm:$0xff]
    %v7778 = vld [vmem:[#allocation5 + $0x48] sm:$0xff]
    %v7779 = vld [vmem:[#allocation5 + $0x50] sm:$0xff]
    %v7780 = vld [vmem:[#allocation5 + $0x58] sm:$0xff]
    %v7781 = vld [vmem:[#allocation5 + $0x60] sm:$0xff]
    %v7782 = vld [vmem:[#allocation5 + $0x68] sm:$0xff]
    %v7783 = vld [vmem:[#allocation5 + $0x70] sm:$0xff]
    %v7784 = vld [vmem:[#allocation5 + $0x78] sm:$0xff]
    %v7785 = vld [vmem:[#allocation5 + $0x80] sm:$0xff]
    %v7786 = vld [vmem:[#allocation5 + $0x88] sm:$0xff]
    %v7787 = vld [vmem:[#allocation5 + $0x90] sm:$0xff]
    %v7788 = vld [vmem:[#allocation5 + $0x98] sm:$0xff]
    %v7789 = vld [vmem:[#allocation5 + $0xa0] sm:$0xff]
    %v7790 = vld [vmem:[#allocation5 + $0xa8] sm:$0xff]
    %v7791 = vld [vmem:[#allocation5 + $0xb0] sm:$0xff]
    %v7792 = vld [vmem:[#allocation5 + $0xb8] sm:$0xff]
    %v7793 = vld [vmem:[#allocation5 + $0xc0] sm:$0xff]
    %v7794 = vld [vmem:[#allocation5 + $0xc8] sm:$0xff]
    %v7795 = vld [vmem:[#allocation5 + $0xd0] sm:$0xff]
    %v7796 = vld [vmem:[#allocation5 + $0xd8] sm:$0xff]
    %v7797 = vld [vmem:[#allocation5 + $0xe0] sm:$0xff]
    %v7798 = vld [vmem:[#allocation5 + $0xe8] sm:$0xff]
    %v7799 = vld [vmem:[#allocation5 + $0xf0] sm:$0xff]
    %v7800 = vld [vmem:[#allocation5 + $0xf8] sm:$0xff]
    %v7801 = vld [vmem:[#allocation5 + $0x100] sm:$0xff]
    %v7802 = vld [vmem:[#allocation5 + $0x108] sm:$0xff]
    %v7803 = vld [vmem:[#allocation5 + $0x110] sm:$0xff]
    %v7804 = vld [vmem:[#allocation5 + $0x118] sm:$0xff]
    %v7805 = vld [vmem:[#allocation5 + $0x120] sm:$0xff]
    %v7806 = vld [vmem:[#allocation5 + $0x128] sm:$0xff]
    %v7807 = vld [vmem:[#allocation5 + $0x130] sm:$0xff]
    %v7808 = vld [vmem:[#allocation5 + $0x138] sm:$0xff]
    %v7809 = vld [vmem:[#allocation5 + $0x140] sm:$0xff]
    %v7810 = vld [vmem:[#allocation5 + $0x148] sm:$0xff]
    %v7811 = vld [vmem:[#allocation5 + $0x150] sm:$0xff]
    %v7812 = vld [vmem:[#allocation5 + $0x158] sm:$0xff]
    %v7813 = vld [vmem:[#allocation5 + $0x160] sm:$0xff]
    %v7814 = vld [vmem:[#allocation5 + $0x168] sm:$0xff]
    %v7815 = vld [vmem:[#allocation5 + $0x170] sm:$0xff]
    %v7816 = vld [vmem:[#allocation5 + $0x178] sm:$0xff]
    %v7817 = vld [vmem:[#allocation5 + $0x180] sm:$0xff]
    %v7818 = vld [vmem:[#allocation5 + $0x188] sm:$0xff]
    %v7819 = vld [vmem:[#allocation5 + $0x190] sm:$0xff]
    %v7820 = vld [vmem:[#allocation5 + $0x198] sm:$0xff]
    %v7821 = vld [vmem:[#allocation5 + $0x1a0] sm:$0xff]
    %v7822 = vld [vmem:[#allocation5 + $0x1a8] sm:$0xff]
    %v7823 = vld [vmem:[#allocation5 + $0x1b0] sm:$0xff]
    %v7824 = vld [vmem:[#allocation5 + $0x1b8] sm:$0xff]
    %v7825 = vld [vmem:[#allocation5 + $0x1c0] sm:$0xff]
    %v7826 = vld [vmem:[#allocation5 + $0x1c8] sm:$0xff]
    %v7827 = vld [vmem:[#allocation5 + $0x1d0] sm:$0xff]
    %v7828 = vld [vmem:[#allocation5 + $0x1d8] sm:$0xff]
    %v7829 = vld [vmem:[#allocation5 + $0x1e0] sm:$0xff]
    %v7830 = vld [vmem:[#allocation5 + $0x1e8] sm:$0xff]
    %v7831 = vld [vmem:[#allocation5 + $0x1f0] sm:$0xff]
    %v7832 = vld [vmem:[#allocation5 + $0x1f8] sm:$0xff]
    %v7833 = vld [vmem:[#allocation5 + $0x200] sm:$0xff]
    %v7834 = vld [vmem:[#allocation5 + $0x208] sm:$0xff]
    %v7835 = vld [vmem:[#allocation5 + $0x210] sm:$0xff]
    %v7836 = vld [vmem:[#allocation5 + $0x218] sm:$0xff]
    %v7837 = vld [vmem:[#allocation5 + $0x220] sm:$0xff]
    %v7838 = vld [vmem:[#allocation5 + $0x228] sm:$0xff]
    %v7839 = vld [vmem:[#allocation5 + $0x230] sm:$0xff]
    %v7840 = vld [vmem:[#allocation5 + $0x238] sm:$0xff]
    %v7841 = vld [vmem:[#allocation5 + $0x240] sm:$0xff]
    %v7842 = vld [vmem:[#allocation5 + $0x248] sm:$0xff]
    %v7843 = vld [vmem:[#allocation5 + $0x250] sm:$0xff]
    %v7844 = vld [vmem:[#allocation5 + $0x258] sm:$0xff]
    %v7845 = vld [vmem:[#allocation5 + $0x260] sm:$0xff]
    %v7846 = vld [vmem:[#allocation5 + $0x268] sm:$0xff]
    %v7847 = vld [vmem:[#allocation5 + $0x270] sm:$0xff]
    %v7848 = vld [vmem:[#allocation5 + $0x278] sm:$0xff]
    %v7849 = vld [vmem:[#allocation5 + $0x280] sm:$0xff]
    %v7850 = vld [vmem:[#allocation5 + $0x288] sm:$0xff]
    %v7851 = vld [vmem:[#allocation5 + $0x290] sm:$0xff]
    %v7852 = vld [vmem:[#allocation5 + $0x298] sm:$0xff]
    %v7853 = vld [vmem:[#allocation5 + $0x2a0] sm:$0xff]
    %v7854 = vld [vmem:[#allocation5 + $0x2a8] sm:$0xff]
    %v7855 = vld [vmem:[#allocation5 + $0x2b0] sm:$0xff]
    %v7856 = vld [vmem:[#allocation5 + $0x2b8] sm:$0xff]
    %v7857 = vld [vmem:[#allocation5 + $0x2c0] sm:$0xff]
    %v7858 = vld [vmem:[#allocation5 + $0x2c8] sm:$0xff]
    %v7859 = vld [vmem:[#allocation5 + $0x2d0] sm:$0xff]
    %v7860 = vld [vmem:[#allocation5 + $0x2d8] sm:$0xff]
    %v7861 = vld [vmem:[#allocation5 + $0x2e0] sm:$0xff]
    %v7862 = vld [vmem:[#allocation5 + $0x2e8] sm:$0xff]
    %v7863 = vld [vmem:[#allocation5 + $0x2f0] sm:$0xff]
    %v7864 = vld [vmem:[#allocation5 + $0x2f8] sm:$0xff]
    %v7865 = vld [vmem:[#allocation5 + $0x300] sm:$0xff]
    %v7866 = vld [vmem:[#allocation5 + $0x308] sm:$0xff]
    %v7867 = vld [vmem:[#allocation5 + $0x310] sm:$0xff]
    %v7868 = vld [vmem:[#allocation5 + $0x318] sm:$0xff]
    %v7869 = vld [vmem:[#allocation5 + $0x320] sm:$0xff]
    %v7870 = vld [vmem:[#allocation5 + $0x328] sm:$0xff]
    %v7871 = vld [vmem:[#allocation5 + $0x330] sm:$0xff]
    %v7872 = vld [vmem:[#allocation5 + $0x338] sm:$0xff]
    %v7873 = vld [vmem:[#allocation5 + $0x340] sm:$0xff]
    %v7874 = vld [vmem:[#allocation5 + $0x348] sm:$0xff]
    %v7875 = vld [vmem:[#allocation5 + $0x350] sm:$0xff]
    %v7876 = vld [vmem:[#allocation5 + $0x358] sm:$0xff]
    %v7877 = vld [vmem:[#allocation5 + $0x360] sm:$0xff]
    %v7878 = vld [vmem:[#allocation5 + $0x368] sm:$0xff]
    %v7879 = vld [vmem:[#allocation5 + $0x370] sm:$0xff]
    %v7880 = vld [vmem:[#allocation5 + $0x378] sm:$0xff]
    %v7881 = vld [vmem:[#allocation5 + $0x380] sm:$0xff]
    %v7882 = vld [vmem:[#allocation5 + $0x388] sm:$0xff]
    %v7883 = vld [vmem:[#allocation5 + $0x390] sm:$0xff]
    %v7884 = vld [vmem:[#allocation5 + $0x398] sm:$0xff]
    %v7885 = vld [vmem:[#allocation5 + $0x3a0] sm:$0xff]
    %v7886 = vld [vmem:[#allocation5 + $0x3a8] sm:$0xff]
    %v7887 = vld [vmem:[#allocation5 + $0x3b0] sm:$0xff]
    %v7888 = vld [vmem:[#allocation5 + $0x3b8] sm:$0xff]
    %v7889 = vld [vmem:[#allocation5 + $0x3c0] sm:$0xff]
    %v7890 = vld [vmem:[#allocation5 + $0x3c8] sm:$0xff]
    %v7891 = vld [vmem:[#allocation5 + $0x3d0] sm:$0xff]
    %v7892 = vld [vmem:[#allocation5 + $0x3d8] sm:$0xff]
    %v7893 = vld [vmem:[#allocation5 + $0x3e0] sm:$0xff]
    %v7894 = vld [vmem:[#allocation5 + $0x3e8] sm:$0xff]
    %v7895 = vld [vmem:[#allocation5 + $0x3f0] sm:$0xff]
    %v7896 = vld [vmem:[#allocation5 + $0x3f8] sm:$0xff]
    %v7897 = vld [vmem:[#allocation5 + $0x400] sm:$0xff]
    %v7898 = vld [vmem:[#allocation5 + $0x408] sm:$0xff]
    %v7899 = vld [vmem:[#allocation5 + $0x410] sm:$0xff]
    %v7900 = vld [vmem:[#allocation5 + $0x418] sm:$0xff]
    %v7901 = vld [vmem:[#allocation5 + $0x420] sm:$0xff]
    %v7902 = vld [vmem:[#allocation5 + $0x428] sm:$0xff]
    %v7903 = vld [vmem:[#allocation5 + $0x430] sm:$0xff]
    %v7904 = vld [vmem:[#allocation5 + $0x438] sm:$0xff]
    %v7905 = vld [vmem:[#allocation5 + $0x440] sm:$0xff]
    %v7906 = vld [vmem:[#allocation5 + $0x448] sm:$0xff]
    %v7907 = vld [vmem:[#allocation5 + $0x450] sm:$0xff]
    %v7908 = vld [vmem:[#allocation5 + $0x458] sm:$0xff]
    %v7909 = vld [vmem:[#allocation5 + $0x460] sm:$0xff]
    %v7910 = vld [vmem:[#allocation5 + $0x468] sm:$0xff]
    %v7911 = vld [vmem:[#allocation5 + $0x470] sm:$0xff]
    %v7912 = vld [vmem:[#allocation5 + $0x478] sm:$0xff]
    %v7913 = vld [vmem:[#allocation5 + $0x480] sm:$0xff]
    %v7914 = vld [vmem:[#allocation5 + $0x488] sm:$0xff]
    %v7915 = vld [vmem:[#allocation5 + $0x490] sm:$0xff]
    %v7916 = vld [vmem:[#allocation5 + $0x498] sm:$0xff]
    %v7917 = vld [vmem:[#allocation5 + $0x4a0] sm:$0xff]
    %v7918 = vld [vmem:[#allocation5 + $0x4a8] sm:$0xff]
    %v7919 = vld [vmem:[#allocation5 + $0x4b0] sm:$0xff]
    %v7920 = vld [vmem:[#allocation5 + $0x4b8] sm:$0xff]
    %v7921 = vld [vmem:[#allocation5 + $0x4c0] sm:$0xff]
    %v7922 = vld [vmem:[#allocation5 + $0x4c8] sm:$0xff]
    %v7923 = vld [vmem:[#allocation5 + $0x4d0] sm:$0xff]
    %v7924 = vld [vmem:[#allocation5 + $0x4d8] sm:$0xff]
    %v7925 = vld [vmem:[#allocation5 + $0x4e0] sm:$0xff]
    %v7926 = vld [vmem:[#allocation5 + $0x4e8] sm:$0xff]
    %v7927 = vld [vmem:[#allocation5 + $0x4f0] sm:$0xff]
    %v7928 = vld [vmem:[#allocation5 + $0x4f8] sm:$0xff]
    %v7929 = vld [vmem:[#allocation5 + $0x500] sm:$0xff]
    %v7930 = vld [vmem:[#allocation5 + $0x508] sm:$0xff]
    %v7931 = vld [vmem:[#allocation5 + $0x510] sm:$0xff]
    %v7932 = vld [vmem:[#allocation5 + $0x518] sm:$0xff]
    %v7933 = vld [vmem:[#allocation5 + $0x520] sm:$0xff]
    %v7934 = vld [vmem:[#allocation5 + $0x528] sm:$0xff]
    %v7935 = vld [vmem:[#allocation5 + $0x530] sm:$0xff]
    %v7936 = vld [vmem:[#allocation5 + $0x538] sm:$0xff]
    %v7937 = vld [vmem:[#allocation5 + $0x540] sm:$0xff]
    %v7938 = vld [vmem:[#allocation5 + $0x548] sm:$0xff]
    %v7939 = vld [vmem:[#allocation5 + $0x550] sm:$0xff]
    %v7940 = vld [vmem:[#allocation5 + $0x558] sm:$0xff]
    %v7941 = vld [vmem:[#allocation5 + $0x560] sm:$0xff]
    %v7942 = vld [vmem:[#allocation5 + $0x568] sm:$0xff]
    %v7943 = vld [vmem:[#allocation5 + $0x570] sm:$0xff]
    %v7944 = vld [vmem:[#allocation5 + $0x578] sm:$0xff]
    %v7945 = vld [vmem:[#allocation5 + $0x580] sm:$0xff]
    %v7946 = vld [vmem:[#allocation5 + $0x588] sm:$0xff]
    %v7947 = vld [vmem:[#allocation5 + $0x590] sm:$0xff]
    %v7948 = vld [vmem:[#allocation5 + $0x598] sm:$0xff]
    %v7949 = vld [vmem:[#allocation5 + $0x5a0] sm:$0xff]
    %v7950 = vld [vmem:[#allocation5 + $0x5a8] sm:$0xff]
    %v7951 = vld [vmem:[#allocation5 + $0x5b0] sm:$0xff]
    %v7952 = vld [vmem:[#allocation5 + $0x5b8] sm:$0xff]
    %v7953 = vld [vmem:[#allocation5 + $0x5c0] sm:$0xff]
    %v7954 = vld [vmem:[#allocation5 + $0x5c8] sm:$0xff]
    %v7955 = vld [vmem:[#allocation5 + $0x5d0] sm:$0xff]
    %v7956 = vld [vmem:[#allocation5 + $0x5d8] sm:$0xff]
    %v7957 = vld [vmem:[#allocation5 + $0x5e0] sm:$0xff]
    %v7958 = vld [vmem:[#allocation5 + $0x5e8] sm:$0xff]
    %v7959 = vld [vmem:[#allocation5 + $0x5f0] sm:$0xff]
    %v7960 = vld [vmem:[#allocation5 + $0x5f8] sm:$0xff]
    %v7961 = vld [vmem:[#allocation5 + $0x600] sm:$0xff]
    %v7962 = vld [vmem:[#allocation5 + $0x608] sm:$0xff]
    %v7963 = vld [vmem:[#allocation5 + $0x610] sm:$0xff]
    %v7964 = vld [vmem:[#allocation5 + $0x618] sm:$0xff]
    %v7965 = vld [vmem:[#allocation5 + $0x620] sm:$0xff]
    %v7966 = vld [vmem:[#allocation5 + $0x628] sm:$0xff]
    %v7967 = vld [vmem:[#allocation5 + $0x630] sm:$0xff]
    %v7968 = vld [vmem:[#allocation5 + $0x638] sm:$0xff]
    %v7969 = vld [vmem:[%s4] sm:$0xff]
    %v7970 = vld [vmem:[%s4 + $0x8] sm:$0xff]
    %v7971 = vld [vmem:[%s4 + $0x10] sm:$0xff]
    %v7972 = vld [vmem:[%s4 + $0x18] sm:$0xff]
    %7974 = vset.pattern.permute.xlu0 0
    %7975 = vperm.xlu0 %7974, %v7969
    %v7976 = vpop.permute.xlu0 %7975
    %7979 = vset.pattern.permute.xlu0 0
    %7980 = vperm.xlu0 %7979, %v7970
    %v7981 = vpop.permute.xlu0 %7980
    %7984 = vset.pattern.permute.xlu0 0
    %7985 = vperm.xlu0 %7984, %v7971
    %v7986 = vpop.permute.xlu0 %7985
    %7989 = vset.pattern.permute.xlu0 0
    %7990 = vperm.xlu0 %7989, %v7972
    %v7991 = vpop.permute.xlu0 %7990
    %v8001 = vunpack.c.l.b16 %v7761
    %v8002 = vunpack.c.h.b16 %v7761
    %v8003 = vunpack.c.l.b16 %v7762
    %v8004 = vunpack.c.h.b16 %v7762
    %v8005 = vunpack.c.l.b16 %v7763
    %v8006 = vunpack.c.h.b16 %v7763
    %v8007 = vunpack.c.l.b16 %v7764
    %v8008 = vunpack.c.h.b16 %v7764
    %v8009 = vunpack.c.l.b16 %v7765
    %v8010 = vunpack.c.h.b16 %v7765
    %v8011 = vunpack.c.l.b16 %v7766
    %v8012 = vunpack.c.h.b16 %v7766
    %v8013 = vunpack.c.l.b16 %v7767
    %v8014 = vunpack.c.h.b16 %v7767
    %v8015 = vunpack.c.l.b16 %v7768
    %v8016 = vunpack.c.h.b16 %v7768
    %v8017 = vpack.c.b16 %v8005, %v8001
    %v8018 = vpack.c.b16 %v8006, %v8002
    %v8019 = vpack.c.b16 %v8007, %v8003
    %v8020 = vpack.c.b16 %v8008, %v8004
    %v8021 = vpack.c.b16 %v8013, %v8009
    %v8022 = vpack.c.b16 %v8014, %v8010
    %v8023 = vpack.c.b16 %v8015, %v8011
    %v8024 = vpack.c.b16 %v8016, %v8012
    %vm8031 = vcmask 130048
    %v8033 = vsel %vm8031, %v8020, 0
    %v8036 = vsel %vm8031, %v8024, 0
    %8038 = vmatprep.subr.bf16.mxu0 %v7770
    %8039 = vmatpush1.bf16.msra.mxu0 %v7769
    %8040 = vmatprep.subr.bf16.mxu0 %v7778
    %8041 = vmatpush1.bf16.msra.mxu0 %v7777
    %8042 = vmatprep.subr.bf16.mxu0 %v7786
    %8043 = vmatpush1.bf16.msra.mxu0 %v7785
    %8044 = vmatprep.subr.bf16.mxu0 %v7794
    %8045 = vmatpush1.bf16.msra.mxu0 %v7793
    %8046 = vmatprep.subr.bf16.mxu0 %v7802
    %8047 = vmatpush1.bf16.msra.mxu0 %v7801
    %8048 = vmatprep.subr.bf16.mxu0 %v7810
    %8049 = vmatpush1.bf16.msra.mxu0 %v7809
    %8050 = vmatprep.subr.bf16.mxu0 %v7818
    %8051 = vmatpush1.bf16.msra.mxu0 %v7817
    %8052 = vmatprep.subr.bf16.mxu0 %v7826
    %8053 = vmatpush1.bf16.msra.mxu0 %v7825
    %8054 = vmatprep.subr.bf16.mxu0 %v7834
    %8055 = vmatpush1.bf16.msra.mxu0 %v7833
    %8056 = vmatprep.subr.bf16.mxu0 %v7842
    %8057 = vmatpush1.bf16.msra.mxu0 %v7841
    %8058 = vmatprep.subr.bf16.mxu0 %v7850
    %8059 = vmatpush1.bf16.msra.mxu0 %v7849
    %8060 = vmatprep.subr.bf16.mxu0 %v7858
    %8061 = vmatpush1.bf16.msra.mxu0 %v7857
    %8062 = vmatprep.subr.bf16.mxu0 %v7866
    %8063 = vmatpush1.bf16.msra.mxu0 %v7865
    %8064 = vmatprep.subr.bf16.mxu0 %v7874
    %8065 = vmatpush1.bf16.msra.mxu0 %v7873
    %8066 = vmatprep.subr.bf16.mxu0 %v7882
    %8067 = vmatpush1.bf16.msra.mxu0 %v7881
    %8068 = vmatprep.subr.bf16.mxu0 %v7890
    %8069 = vmatpush1.bf16.msra.mxu0 %v7889
    %8070 = vmatprep.mubr.bf16.mxu0 %v8018
    %8071 = vmatmul.mubr.bf16.gmra.mrb[0].mxu0 %v8017
    %v8072 = vpop.f32.mrb[0].mxu0
    %v8073 = vadd.f32 %v7976, %v8072
    %v8074 = vpop.f32.mrb[0].mxu0
    %v8075 = vadd.f32 %v7976, %v8074
    %v8076 = vpop.f32.mrb[0].mxu0
    %v8077 = vadd.f32 %v7981, %v8076
    %v8078 = vpop.f32.mrb[0].mxu0
    %v8079 = vadd.f32 %v7981, %v8078
    %8080 = vmatprep.mubr.bf16.mxu0 %v8022
    %8081 = vmatmul.mubr.bf16.gmra.mrb[0].mxu0 %v8021
    %v8082 = vpop.f32.mrb[0].mxu0
    %v8083 = vadd.f32 %v7986, %v8082
    %v8084 = vpop.f32.mrb[0].mxu0
    %v8085 = vadd.f32 %v7986, %v8084
    %v8086 = vpop.f32.mrb[0].mxu0
    %v8087 = vadd.f32 %v7991, %v8086
    %v8088 = vpop.f32.mrb[0].mxu0
    %v8089 = vadd.f32 %v7991, %v8088
    %8090 = vdwg.mxu0
    %8091 = vmatprep.subr.bf16.mxu0 %v7898
    %8092 = vmatpush1.bf16.msra.mxu0 %v7897
    %8093 = vmatprep.subr.bf16.mxu0 %v7906
    %8094 = vmatpush1.bf16.msra.mxu0 %v7905
    %8095 = vmatprep.subr.bf16.mxu0 %v7914
    %8096 = vmatpush1.bf16.msra.mxu0 %v7913
    %8097 = vmatprep.subr.bf16.mxu0 %v7922
    %8098 = vmatpush1.bf16.msra.mxu0 %v7921
    %8099 = vmatprep.subr.bf16.mxu0 %v7930
    %8100 = vmatpush1.bf16.msra.mxu0 %v7929
    %8101 = vmatprep.subr.bf16.mxu0 %v7938
    %8102 = vmatpush1.bf16.msra.mxu0 %v7937
    %8103 = vmatprep.subr.bf16.mxu0 %v7946
    %8104 = vmatpush1.bf16.msra.mxu0 %v7945
    %8105 = vmatprep.subr.bf16.mxu0 %v7954
    %8106 = vmatpush1.bf16.msra.mxu0 %v7953
    %8107 = vmatprep.subr.bf16.mxu0 %v7962
    %8108 = vmatpush1.bf16.msra.mxu0 %v7961
    %8109 = vmatprep.subr.bf16.mxu0 0
    %8110 = vmatpush1.bf16.msra.mxu0 0
    %8111 = vmatprep.subr.bf16.mxu0 0
    %8112 = vmatpush1.bf16.msra.mxu0 0
    %8113 = vmatprep.subr.bf16.mxu0 0
    %8114 = vmatpush1.bf16.msra.mxu0 0
    %8115 = vmatprep.subr.bf16.mxu0 0
    %8116 = vmatpush1.bf16.msra.mxu0 0
    %8117 = vmatprep.subr.bf16.mxu0 0
    %8118 = vmatpush1.bf16.msra.mxu0 0
    %8119 = vmatprep.subr.bf16.mxu0 0
    %8120 = vmatpush1.bf16.msra.mxu0 0
    %8121 = vmatprep.subr.bf16.mxu0 0
    %8122 = vmatpush1.bf16.msra.mxu0 0
    %8123 = vmatprep.mubr.bf16.mxu0 %v8033
    %8124 = vmatmul.mubr.bf16.gmra.mrb[0].mxu0 %v8019
    %v8125 = vpop.f32.mrb[0].mxu0
    %v8126 = vadd.f32 %v8073, %v8125
    %v8127 = vpop.f32.mrb[0].mxu0
    %v8128 = vadd.f32 %v8075, %v8127
    %v8129 = vpop.f32.mrb[0].mxu0
    %v8130 = vadd.f32 %v8077, %v8129
    %v8131 = vpop.f32.mrb[0].mxu0
    %v8132 = vadd.f32 %v8079, %v8131
    %8133 = vmatprep.mubr.bf16.mxu0 %v8036
    %8134 = vmatmul.mubr.bf16.gmra.mrb[0].mxu0 %v8023
    %v8135 = vpop.f32.mrb[0].mxu0
    %v8136 = vadd.f32 %v8083, %v8135
    %v8137 = vpop.f32.mrb[0].mxu0
    %v8138 = vadd.f32 %v8085, %v8137
    %v8139 = vpop.f32.mrb[0].mxu0
    %v8140 = vadd.f32 %v8087, %v8139
    %v8141 = vpop.f32.mrb[0].mxu0
    %v8142 = vadd.f32 %v8089, %v8141
    %8143 = vdwg.mxu0
    %8144 = vmatprep.subr.bf16.mxu0 %v7772
    %8145 = vmatpush1.bf16.msra.mxu0 %v7771
    %8146 = vmatprep.subr.bf16.mxu0 %v7780
    %8147 = vmatpush1.bf16.msra.mxu0 %v7779
    %8148 = vmatprep.subr.bf16.mxu0 %v7788
    %8149 = vmatpush1.bf16.msra.mxu0 %v7787
    %8150 = vmatprep.subr.bf16.mxu0 %v7796
    %8151 = vmatpush1.bf16.msra.mxu0 %v7795
    %8152 = vmatprep.subr.bf16.mxu0 %v7804
    %8153 = vmatpush1.bf16.msra.mxu0 %v7803
    %8154 = vmatprep.subr.bf16.mxu0 %v7812
    %8155 = vmatpush1.bf16.msra.mxu0 %v7811
    %8156 = vmatprep.subr.bf16.mxu0 %v7820
    %8157 = vmatpush1.bf16.msra.mxu0 %v7819
    %8158 = vmatprep.subr.bf16.mxu0 %v7828
    %8159 = vmatpush1.bf16.msra.mxu0 %v7827
    %8160 = vmatprep.subr.bf16.mxu0 %v7836
    %8161 = vmatpush1.bf16.msra.mxu0 %v7835
    %8162 = vmatprep.subr.bf16.mxu0 %v7844
    %8163 = vmatpush1.bf16.msra.mxu0 %v7843
    %8164 = vmatprep.subr.bf16.mxu0 %v7852
    %8165 = vmatpush1.bf16.msra.mxu0 %v7851
    %8166 = vmatprep.subr.bf16.mxu0 %v7860
    %8167 = vmatpush1.bf16.msra.mxu0 %v7859
    %8168 = vmatprep.subr.bf16.mxu0 %v7868
    %8169 = vmatpush1.bf16.msra.mxu0 %v7867
    %8170 = vmatprep.subr.bf16.mxu0 %v7876
    %8171 = vmatpush1.bf16.msra.mxu0 %v7875
    %8172 = vmatprep.subr.bf16.mxu0 %v7884
    %8173 = vmatpush1.bf16.msra.mxu0 %v7883
    %8174 = vmatprep.subr.bf16.mxu0 %v7892
    %8175 = vmatpush1.bf16.msra.mxu0 %v7891
    %8176 = vmatprep.mubr.bf16.mxu0 %v8018
    %8177 = vmatmul.mubr.bf16.gmra.mrb[0].mxu0 %v8017
    %v8178 = vpop.f32.mrb[0].mxu0
    %v8179 = vadd.f32 %v7976, %v8178
    %v8180 = vpop.f32.mrb[0].mxu0
    %v8181 = vadd.f32 %v7976, %v8180
    %v8182 = vpop.f32.mrb[0].mxu0
    %v8183 = vadd.f32 %v7981, %v8182
    %v8184 = vpop.f32.mrb[0].mxu0
    %v8185 = vadd.f32 %v7981, %v8184
    %8186 = vmatprep.mubr.bf16.mxu0 %v8022
    %8187 = vmatmul.mubr.bf16.gmra.mrb[0].mxu0 %v8021
    %v8188 = vpop.f32.mrb[0].mxu0
    %v8189 = vadd.f32 %v7986, %v8188
    %v8190 = vpop.f32.mrb[0].mxu0
    %v8191 = vadd.f32 %v7986, %v8190
    %v8192 = vpop.f32.mrb[0].mxu0
    %v8193 = vadd.f32 %v7991, %v8192
    %v8194 = vpop.f32.mrb[0].mxu0
    %v8195 = vadd.f32 %v7991, %v8194
    %8196 = vdwg.mxu0
    %8197 = vmatprep.subr.bf16.mxu0 %v7900
    %8198 = vmatpush1.bf16.msra.mxu0 %v7899
    %8199 = vmatprep.subr.bf16.mxu0 %v7908
    %8200 = vmatpush1.bf16.msra.mxu0 %v7907
    %8201 = vmatprep.subr.bf16.mxu0 %v7916
    %8202 = vmatpush1.bf16.msra.mxu0 %v7915
    %8203 = vmatprep.subr.bf16.mxu0 %v7924
    %8204 = vmatpush1.bf16.msra.mxu0 %v7923
    %8205 = vmatprep.subr.bf16.mxu0 %v7932
    %8206 = vmatpush1.bf16.msra.mxu0 %v7931
    %8207 = vmatprep.subr.bf16.mxu0 %v7940
    %8208 = vmatpush1.bf16.msra.mxu0 %v7939
    %8209 = vmatprep.subr.bf16.mxu0 %v7948
    %8210 = vmatpush1.bf16.msra.mxu0 %v7947
    %8211 = vmatprep.subr.bf16.mxu0 %v7956
    %8212 = vmatpush1.bf16.msra.mxu0 %v7955
    %8213 = vmatprep.subr.bf16.mxu0 %v7964
    %8214 = vmatpush1.bf16.msra.mxu0 %v7963
    %8215 = vmatprep.subr.bf16.mxu0 0
    %8216 = vmatpush1.bf16.msra.mxu0 0
    %8217 = vmatprep.subr.bf16.mxu0 0
    %8218 = vmatpush1.bf16.msra.mxu0 0
    %8219 = vmatprep.subr.bf16.mxu0 0
    %8220 = vmatpush1.bf16.msra.mxu0 0
    %8221 = vmatprep.subr.bf16.mxu0 0
    %8222 = vmatpush1.bf16.msra.mxu0 0
    %8223 = vmatprep.subr.bf16.mxu0 0
    %8224 = vmatpush1.bf16.msra.mxu0 0
    %8225 = vmatprep.subr.bf16.mxu0 0
    %8226 = vmatpush1.bf16.msra.mxu0 0
    %8227 = vmatprep.subr.bf16.mxu0 0
    %8228 = vmatpush1.bf16.msra.mxu0 0
    %8229 = vmatprep.mubr.bf16.mxu0 %v8033
    %8230 = vmatmul.mubr.bf16.gmra.mrb[0].mxu0 %v8019
    %v8231 = vpop.f32.mrb[0].mxu0
    %v8232 = vadd.f32 %v8179, %v8231
    %v8233 = vpop.f32.mrb[0].mxu0
    %v8234 = vadd.f32 %v8181, %v8233
    %v8235 = vpop.f32.mrb[0].mxu0
    %v8236 = vadd.f32 %v8183, %v8235
    %v8237 = vpop.f32.mrb[0].mxu0
    %v8238 = vadd.f32 %v8185, %v8237
    %8239 = vmatprep.mubr.bf16.mxu0 %v8036
    %8240 = vmatmul.mubr.bf16.gmra.mrb[0].mxu0 %v8023
    %v8241 = vpop.f32.mrb[0].mxu0
    %v8242 = vadd.f32 %v8189, %v8241
    %v8243 = vpop.f32.mrb[0].mxu0
    %v8244 = vadd.f32 %v8191, %v8243
    %v8245 = vpop.f32.mrb[0].mxu0
    %v8246 = vadd.f32 %v8193, %v8245
    %v8247 = vpop.f32.mrb[0].mxu0
    %v8248 = vadd.f32 %v8195, %v8247
    %8249 = vdwg.mxu0
    %8250 = vmatprep.subr.bf16.mxu0 %v7774
    %8251 = vmatpush1.bf16.msra.mxu0 %v7773
    %8252 = vmatprep.subr.bf16.mxu0 %v7782
    %8253 = vmatpush1.bf16.msra.mxu0 %v7781
    %8254 = vmatprep.subr.bf16.mxu0 %v7790
    %8255 = vmatpush1.bf16.msra.mxu0 %v7789
    %8256 = vmatprep.subr.bf16.mxu0 %v7798
    %8257 = vmatpush1.bf16.msra.mxu0 %v7797
    %8258 = vmatprep.subr.bf16.mxu0 %v7806
    %8259 = vmatpush1.bf16.msra.mxu0 %v7805
    %8260 = vmatprep.subr.bf16.mxu0 %v7814
    %8261 = vmatpush1.bf16.msra.mxu0 %v7813
    %8262 = vmatprep.subr.bf16.mxu0 %v7822
    %8263 = vmatpush1.bf16.msra.mxu0 %v7821
    %8264 = vmatprep.subr.bf16.mxu0 %v7830
    %8265 = vmatpush1.bf16.msra.mxu0 %v7829
    %8266 = vmatprep.subr.bf16.mxu0 %v7838
    %8267 = vmatpush1.bf16.msra.mxu0 %v7837
    %8268 = vmatprep.subr.bf16.mxu0 %v7846
    %8269 = vmatpush1.bf16.msra.mxu0 %v7845
    %8270 = vmatprep.subr.bf16.mxu0 %v7854
    %8271 = vmatpush1.bf16.msra.mxu0 %v7853
    %8272 = vmatprep.subr.bf16.mxu0 %v7862
    %8273 = vmatpush1.bf16.msra.mxu0 %v7861
    %8274 = vmatprep.subr.bf16.mxu0 %v7870
    %8275 = vmatpush1.bf16.msra.mxu0 %v7869
    %8276 = vmatprep.subr.bf16.mxu0 %v7878
    %8277 = vmatpush1.bf16.msra.mxu0 %v7877
    %8278 = vmatprep.subr.bf16.mxu0 %v7886
    %8279 = vmatpush1.bf16.msra.mxu0 %v7885
    %8280 = vmatprep.subr.bf16.mxu0 %v7894
    %8281 = vmatpush1.bf16.msra.mxu0 %v7893
    %8282 = vmatprep.mubr.bf16.mxu0 %v8018
    %8283 = vmatmul.mubr.bf16.gmra.mrb[0].mxu0 %v8017
    %v8284 = vpop.f32.mrb[0].mxu0
    %v8285 = vadd.f32 %v7976, %v8284
    %v8286 = vpop.f32.mrb[0].mxu0
    %v8287 = vadd.f32 %v7976, %v8286
    %v8288 = vpop.f32.mrb[0].mxu0
    %v8289 = vadd.f32 %v7981, %v8288
    %v8290 = vpop.f32.mrb[0].mxu0
    %v8291 = vadd.f32 %v7981, %v8290
    %8292 = vmatprep.mubr.bf16.mxu0 %v8022
    %8293 = vmatmul.mubr.bf16.gmra.mrb[0].mxu0 %v8021
    %v8294 = vpop.f32.mrb[0].mxu0
    %v8295 = vadd.f32 %v7986, %v8294
    %v8296 = vpop.f32.mrb[0].mxu0
    %v8297 = vadd.f32 %v7986, %v8296
    %v8298 = vpop.f32.mrb[0].mxu0
    %v8299 = vadd.f32 %v7991, %v8298
    %v8300 = vpop.f32.mrb[0].mxu0
    %v8301 = vadd.f32 %v7991, %v8300
    %8302 = vdwg.mxu0
    %8303 = vmatprep.subr.bf16.mxu0 %v7902
    %8304 = vmatpush1.bf16.msra.mxu0 %v7901
    %8305 = vmatprep.subr.bf16.mxu0 %v7910
    %8306 = vmatpush1.bf16.msra.mxu0 %v7909
    %8307 = vmatprep.subr.bf16.mxu0 %v7918
    %8308 = vmatpush1.bf16.msra.mxu0 %v7917
    %8309 = vmatprep.subr.bf16.mxu0 %v7926
    %8310 = vmatpush1.bf16.msra.mxu0 %v7925
    %8311 = vmatprep.subr.bf16.mxu0 %v7934
    %8312 = vmatpush1.bf16.msra.mxu0 %v7933
    %8313 = vmatprep.subr.bf16.mxu0 %v7942
    %8314 = vmatpush1.bf16.msra.mxu0 %v7941
    %8315 = vmatprep.subr.bf16.mxu0 %v7950
    %8316 = vmatpush1.bf16.msra.mxu0 %v7949
    %8317 = vmatprep.subr.bf16.mxu0 %v7958
    %8318 = vmatpush1.bf16.msra.mxu0 %v7957
    %8319 = vmatprep.subr.bf16.mxu0 %v7966
    %8320 = vmatpush1.bf16.msra.mxu0 %v7965
    %8321 = vmatprep.subr.bf16.mxu0 0
    %8322 = vmatpush1.bf16.msra.mxu0 0
    %8323 = vmatprep.subr.bf16.mxu0 0
    %8324 = vmatpush1.bf16.msra.mxu0 0
    %8325 = vmatprep.subr.bf16.mxu0 0
    %8326 = vmatpush1.bf16.msra.mxu0 0
    %8327 = vmatprep.subr.bf16.mxu0 0
    %8328 = vmatpush1.bf16.msra.mxu0 0
    %8329 = vmatprep.subr.bf16.mxu0 0
    %8330 = vmatpush1.bf16.msra.mxu0 0
    %8331 = vmatprep.subr.bf16.mxu0 0
    %8332 = vmatpush1.bf16.msra.mxu0 0
    %8333 = vmatprep.subr.bf16.mxu0 0
    %8334 = vmatpush1.bf16.msra.mxu0 0
    %8335 = vmatprep.mubr.bf16.mxu0 %v8033
    %8336 = vmatmul.mubr.bf16.gmra.mrb[0].mxu0 %v8019
    %v8337 = vpop.f32.mrb[0].mxu0
    %v8338 = vadd.f32 %v8285, %v8337
    %v8339 = vpop.f32.mrb[0].mxu0
    %v8340 = vadd.f32 %v8287, %v8339
    %v8341 = vpop.f32.mrb[0].mxu0
    %v8342 = vadd.f32 %v8289, %v8341
    %v8343 = vpop.f32.mrb[0].mxu0
    %v8344 = vadd.f32 %v8291, %v8343
    %8345 = vmatprep.mubr.bf16.mxu0 %v8036
    %8346 = vmatmul.mubr.bf16.gmra.mrb[0].mxu0 %v8023
    %v8347 = vpop.f32.mrb[0].mxu0
    %v8348 = vadd.f32 %v8295, %v8347
    %v8349 = vpop.f32.mrb[0].mxu0
    %v8350 = vadd.f32 %v8297, %v8349
    %v8351 = vpop.f32.mrb[0].mxu0
    %v8352 = vadd.f32 %v8299, %v8351
    %v8353 = vpop.f32.mrb[0].mxu0
    %v8354 = vadd.f32 %v8301, %v8353
    %8355 = vdwg.mxu0
    %8356 = vmatprep.subr.bf16.mxu0 %v7776
    %8357 = vmatpush1.bf16.msra.mxu0 %v7775
    %8358 = vmatprep.subr.bf16.mxu0 %v7784
    %8359 = vmatpush1.bf16.msra.mxu0 %v7783
    %8360 = vmatprep.subr.bf16.mxu0 %v7792
    %8361 = vmatpush1.bf16.msra.mxu0 %v7791
    %8362 = vmatprep.subr.bf16.mxu0 %v7800
    %8363 = vmatpush1.bf16.msra.mxu0 %v7799
    %8364 = vmatprep.subr.bf16.mxu0 %v7808
    %8365 = vmatpush1.bf16.msra.mxu0 %v7807
    %8366 = vmatprep.subr.bf16.mxu0 %v7816
    %8367 = vmatpush1.bf16.msra.mxu0 %v7815
    %8368 = vmatprep.subr.bf16.mxu0 %v7824
    %8369 = vmatpush1.bf16.msra.mxu0 %v7823
    %8370 = vmatprep.subr.bf16.mxu0 %v7832
    %8371 = vmatpush1.bf16.msra.mxu0 %v7831
    %8372 = vmatprep.subr.bf16.mxu0 %v7840
    %8373 = vmatpush1.bf16.msra.mxu0 %v7839
    %8374 = vmatprep.subr.bf16.mxu0 %v7848
    %8375 = vmatpush1.bf16.msra.mxu0 %v7847
    %8376 = vmatprep.subr.bf16.mxu0 %v7856
    %8377 = vmatpush1.bf16.msra.mxu0 %v7855
    %8378 = vmatprep.subr.bf16.mxu0 %v7864
    %8379 = vmatpush1.bf16.msra.mxu0 %v7863
    %8380 = vmatprep.subr.bf16.mxu0 %v7872
    %8381 = vmatpush1.bf16.msra.mxu0 %v7871
    %8382 = vmatprep.subr.bf16.mxu0 %v7880
    %8383 = vmatpush1.bf16.msra.mxu0 %v7879
    %8384 = vmatprep.subr.bf16.mxu0 %v7888
    %8385 = vmatpush1.bf16.msra.mxu0 %v7887
    %8386 = vmatprep.subr.bf16.mxu0 %v7896
    %8387 = vmatpush1.bf16.msra.mxu0 %v7895
    %8388 = vmatprep.mubr.bf16.mxu0 %v8018
    %8389 = vmatmul.mubr.bf16.gmra.mrb[0].mxu0 %v8017
    %v8390 = vpop.f32.mrb[0].mxu0
    %v8391 = vadd.f32 %v7976, %v8390
    %v8392 = vpop.f32.mrb[0].mxu0
    %v8393 = vadd.f32 %v7976, %v8392
    %v8394 = vpop.f32.mrb[0].mxu0
    %v8395 = vadd.f32 %v7981, %v8394
    %v8396 = vpop.f32.mrb[0].mxu0
    %v8397 = vadd.f32 %v7981, %v8396
    %8398 = vmatprep.mubr.bf16.mxu0 %v8022
    %8399 = vmatmul.mubr.bf16.gmra.mrb[0].mxu0 %v8021
    %v8400 = vpop.f32.mrb[0].mxu0
    %v8401 = vadd.f32 %v7986, %v8400
    %v8402 = vpop.f32.mrb[0].mxu0
    %v8403 = vadd.f32 %v7986, %v8402
    %v8404 = vpop.f32.mrb[0].mxu0
    %v8405 = vadd.f32 %v7991, %v8404
    %v8406 = vpop.f32.mrb[0].mxu0
    %v8407 = vadd.f32 %v7991, %v8406
    %8408 = vdwg.mxu0
    %8409 = vmatprep.subr.bf16.mxu0 %v7904
    %8410 = vmatpush1.bf16.msra.mxu0 %v7903
    %8411 = vmatprep.subr.bf16.mxu0 %v7912
    %8412 = vmatpush1.bf16.msra.mxu0 %v7911
    %8413 = vmatprep.subr.bf16.mxu0 %v7920
    %8414 = vmatpush1.bf16.msra.mxu0 %v7919
    %8415 = vmatprep.subr.bf16.mxu0 %v7928
    %8416 = vmatpush1.bf16.msra.mxu0 %v7927
    %8417 = vmatprep.subr.bf16.mxu0 %v7936
    %8418 = vmatpush1.bf16.msra.mxu0 %v7935
    %8419 = vmatprep.subr.bf16.mxu0 %v7944
    %8420 = vmatpush1.bf16.msra.mxu0 %v7943
    %8421 = vmatprep.subr.bf16.mxu0 %v7952
    %8422 = vmatpush1.bf16.msra.mxu0 %v7951
    %8423 = vmatprep.subr.bf16.mxu0 %v7960
    %8424 = vmatpush1.bf16.msra.mxu0 %v7959
    %8425 = vmatprep.subr.bf16.mxu0 %v7968
    %8426 = vmatpush1.bf16.msra.mxu0 %v7967
    %8427 = vmatprep.subr.bf16.mxu0 0
    %8428 = vmatpush1.bf16.msra.mxu0 0
    %8429 = vmatprep.subr.bf16.mxu0 0
    %8430 = vmatpush1.bf16.msra.mxu0 0
    %8431 = vmatprep.subr.bf16.mxu0 0
    %8432 = vmatpush1.bf16.msra.mxu0 0
    %8433 = vmatprep.subr.bf16.mxu0 0
    %8434 = vmatpush1.bf16.msra.mxu0 0
    %8435 = vmatprep.subr.bf16.mxu0 0
    %8436 = vmatpush1.bf16.msra.mxu0 0
    %8437 = vmatprep.subr.bf16.mxu0 0
    %8438 = vmatpush1.bf16.msra.mxu0 0
    %8439 = vmatprep.subr.bf16.mxu0 0
    %8440 = vmatpush1.bf16.msra.mxu0 0
    %8441 = vmatprep.mubr.bf16.mxu0 %v8033
    %8442 = vmatmul.mubr.bf16.gmra.mrb[0].mxu0 %v8019
    %v8443 = vpop.f32.mrb[0].mxu0
    %v8444 = vadd.f32 %v8391, %v8443
    %v8445 = vpop.f32.mrb[0].mxu0
    %v8446 = vadd.f32 %v8393, %v8445
    %v8447 = vpop.f32.mrb[0].mxu0
    %v8448 = vadd.f32 %v8395, %v8447
    %v8449 = vpop.f32.mrb[0].mxu0
    %v8450 = vadd.f32 %v8397, %v8449
    %8451 = vmatprep.mubr.bf16.mxu0 %v8036
    %8452 = vmatmul.mubr.bf16.gmra.mrb[0].mxu0 %v8023
    %v8453 = vpop.f32.mrb[0].mxu0
    %v8454 = vadd.f32 %v8401, %v8453
    %v8455 = vpop.f32.mrb[0].mxu0
    %v8456 = vadd.f32 %v8403, %v8455
    %v8457 = vpop.f32.mrb[0].mxu0
    %v8458 = vadd.f32 %v8405, %v8457
    %v8459 = vpop.f32.mrb[0].mxu0
    %v8460 = vadd.f32 %v8407, %v8459
    %8461 = vdwg.mxu0
    %v8462 = vmax.f32 %v8126, 0.0
    %v8463 = vmax.f32 %v8128, 0.0
    %v8464 = vmax.f32 %v8232, 0.0
    %v8465 = vmax.f32 %v8234, 0.0
    %v8466 = vmax.f32 %v8338, 0.0
    %v8467 = vmax.f32 %v8340, 0.0
    %v8468 = vmax.f32 %v8444, 0.0
    %v8469 = vmax.f32 %v8446, 0.0
    %v8470 = vmax.f32 %v8130, 0.0
    %v8471 = vmax.f32 %v8132, 0.0
    %v8472 = vmax.f32 %v8236, 0.0
    %v8473 = vmax.f32 %v8238, 0.0
    %v8474 = vmax.f32 %v8342, 0.0
    %v8475 = vmax.f32 %v8344, 0.0
    %v8476 = vmax.f32 %v8448, 0.0
    %v8477 = vmax.f32 %v8450, 0.0
    %v8478 = vmax.f32 %v8136, 0.0
    %v8479 = vmax.f32 %v8138, 0.0
    %v8480 = vmax.f32 %v8242, 0.0
    %v8481 = vmax.f32 %v8244, 0.0
    %v8482 = vmax.f32 %v8348, 0.0
    %v8483 = vmax.f32 %v8350, 0.0
    %v8484 = vmax.f32 %v8454, 0.0
    %v8485 = vmax.f32 %v8456, 0.0
    %v8486 = vmax.f32 %v8140, 0.0
    %v8487 = vmax.f32 %v8142, 0.0
    %v8488 = vmax.f32 %v8246, 0.0
    %v8489 = vmax.f32 %v8248, 0.0
    %v8490 = vmax.f32 %v8352, 0.0
    %v8491 = vmax.f32 %v8354, 0.0
    %v8492 = vmax.f32 %v8458, 0.0
    %v8493 = vmax.f32 %v8460, 0.0
    %8526 = vrot.lane.b32.xlu0 %v8462, 124
    %v8527 = vpop.permute.xlu0 %8526
    %8528 = vrot.lane.b32.xlu0 %v8463, 124
    %v8529 = vpop.permute.xlu0 %8528
    %8530 = vrot.lane.b32.xlu0 %v8464, 124
    %v8531 = vpop.permute.xlu0 %8530
    %8532 = vrot.lane.b32.xlu0 %v8465, 124
    %v8533 = vpop.permute.xlu0 %8532
    %8534 = vrot.lane.b32.xlu0 %v8466, 124
    %v8535 = vpop.permute.xlu0 %8534
    %8536 = vrot.lane.b32.xlu0 %v8467, 124
    %v8537 = vpop.permute.xlu0 %8536
    %8538 = vrot.lane.b32.xlu0 %v8468, 124
    %v8539 = vpop.permute.xlu0 %8538
    %8540 = vrot.lane.b32.xlu0 %v8469, 124
    %v8541 = vpop.permute.xlu0 %8540
    %8542 = vrot.lane.b32.xlu0 %v8470, 124
    %v8543 = vpop.permute.xlu0 %8542
    %8544 = vrot.lane.b32.xlu0 %v8471, 124
    %v8545 = vpop.permute.xlu0 %8544
    %8546 = vrot.lane.b32.xlu0 %v8472, 124
    %v8547 = vpop.permute.xlu0 %8546
    %8548 = vrot.lane.b32.xlu0 %v8473, 124
    %v8549 = vpop.permute.xlu0 %8548
    %8550 = vrot.lane.b32.xlu0 %v8474, 124
    %v8551 = vpop.permute.xlu0 %8550
    %8552 = vrot.lane.b32.xlu0 %v8475, 124
    %v8553 = vpop.permute.xlu0 %8552
    %8554 = vrot.lane.b32.xlu0 %v8476, 124
    %v8555 = vpop.permute.xlu0 %8554
    %8556 = vrot.lane.b32.xlu0 %v8477, 124
    %v8557 = vpop.permute.xlu0 %8556
    %8558 = vrot.lane.b32.xlu0 %v8478, 124
    %v8559 = vpop.permute.xlu0 %8558
    %8560 = vrot.lane.b32.xlu0 %v8479, 124
    %v8561 = vpop.permute.xlu0 %8560
    %8562 = vrot.lane.b32.xlu0 %v8480, 124
    %v8563 = vpop.permute.xlu0 %8562
    %8564 = vrot.lane.b32.xlu0 %v8481, 124
    %v8565 = vpop.permute.xlu0 %8564
    %8566 = vrot.lane.b32.xlu0 %v8482, 124
    %v8567 = vpop.permute.xlu0 %8566
    %8568 = vrot.lane.b32.xlu0 %v8483, 124
    %v8569 = vpop.permute.xlu0 %8568
    %8570 = vrot.lane.b32.xlu0 %v8484, 124
    %v8571 = vpop.permute.xlu0 %8570
    %8572 = vrot.lane.b32.xlu0 %v8485, 124
    %v8573 = vpop.permute.xlu0 %8572
    %8574 = vrot.lane.b32.xlu0 %v8486, 124
    %v8575 = vpop.permute.xlu0 %8574
    %8576 = vrot.lane.b32.xlu0 %v8487, 124
    %v8577 = vpop.permute.xlu0 %8576
    %8578 = vrot.lane.b32.xlu0 %v8488, 124
    %v8579 = vpop.permute.xlu0 %8578
    %8580 = vrot.lane.b32.xlu0 %v8489, 124
    %v8581 = vpop.permute.xlu0 %8580
    %8582 = vrot.lane.b32.xlu0 %v8490, 124
    %v8583 = vpop.permute.xlu0 %8582
    %8584 = vrot.lane.b32.xlu0 %v8491, 124
    %v8585 = vpop.permute.xlu0 %8584
    %8586 = vrot.lane.b32.xlu0 %v8492, 124
    %v8587 = vpop.permute.xlu0 %8586
    %8588 = vrot.lane.b32.xlu0 %v8493, 124
    %v8589 = vpop.permute.xlu0 %8588
    %vm8590 = vcmask 1014784
    %v8591 = vsel %vm8590, %v8527, %v8529
    %v8592 = vsel %vm8590, %v8529, %v8531
    %v8593 = vsel %vm8590, %v8531, %v8533
    %v8594 = vsel %vm8590, %v8533, %v8535
    %v8595 = vsel %vm8590, %v8535, %v8537
    %v8596 = vsel %vm8590, %v8537, %v8539
    %v8597 = vsel %vm8590, %v8539, %v8541
    %v8598 = vsel %vm8590, %v8543, %v8545
    %v8599 = vsel %vm8590, %v8545, %v8547
    %v8600 = vsel %vm8590, %v8547, %v8549
    %v8601 = vsel %vm8590, %v8549, %v8551
    %v8602 = vsel %vm8590, %v8551, %v8553
    %v8603 = vsel %vm8590, %v8553, %v8555
    %v8604 = vsel %vm8590, %v8555, %v8557
    %v8605 = vsel %vm8590, %v8559, %v8561
    %v8606 = vsel %vm8590, %v8561, %v8563
    %v8607 = vsel %vm8590, %v8563, %v8565
    %v8608 = vsel %vm8590, %v8565, %v8567
    %v8609 = vsel %vm8590, %v8567, %v8569
    %v8610 = vsel %vm8590, %v8569, %v8571
    %v8611 = vsel %vm8590, %v8571, %v8573
    %v8612 = vsel %vm8590, %v8575, %v8577
    %v8613 = vsel %vm8590, %v8577, %v8579
    %v8614 = vsel %vm8590, %v8579, %v8581
    %v8615 = vsel %vm8590, %v8581, %v8583
    %v8616 = vsel %vm8590, %v8583, %v8585
    %v8617 = vsel %vm8590, %v8585, %v8587
    %v8618 = vsel %vm8590, %v8587, %v8589
    %v8647 = vmax.f32 %v8462, %v8591
    %v8648 = vmax.f32 %v8463, %v8592
    %v8649 = vmax.f32 %v8464, %v8593
    %v8650 = vmax.f32 %v8465, %v8594
    %v8651 = vmax.f32 %v8466, %v8595
    %v8652 = vmax.f32 %v8467, %v8596
    %v8653 = vmax.f32 %v8468, %v8597
    %v8654 = vmax.f32 %v8470, %v8598
    %v8655 = vmax.f32 %v8471, %v8599
    %v8656 = vmax.f32 %v8472, %v8600
    %v8657 = vmax.f32 %v8473, %v8601
    %v8658 = vmax.f32 %v8474, %v8602
    %v8659 = vmax.f32 %v8475, %v8603
    %v8660 = vmax.f32 %v8476, %v8604
    %v8661 = vmax.f32 %v8478, %v8605
    %v8662 = vmax.f32 %v8479, %v8606
    %v8663 = vmax.f32 %v8480, %v8607
    %v8664 = vmax.f32 %v8481, %v8608
    %v8665 = vmax.f32 %v8482, %v8609
    %v8666 = vmax.f32 %v8483, %v8610
    %v8667 = vmax.f32 %v8484, %v8611
    %v8668 = vmax.f32 %v8486, %v8612
    %v8669 = vmax.f32 %v8487, %v8613
    %v8670 = vmax.f32 %v8488, %v8614
    %v8671 = vmax.f32 %v8489, %v8615
    %v8672 = vmax.f32 %v8490, %v8616
    %v8673 = vmax.f32 %v8491, %v8617
    %v8674 = vmax.f32 %v8492, %v8618
    %8675 = vrot.lane.b32.xlu0 0.0, 124
    %v8676 = vpop.permute.xlu0 %8675
    %v8677 = vsel %vm8590, %v8541, %v8676
    %v8678 = vsel %vm8590, %v8557, %v8676
    %v8679 = vsel %vm8590, %v8573, %v8676
    %v8680 = vsel %vm8590, %v8589, %v8676
    %v8685 = vmax.f32 %v8469, %v8677
    %v8686 = vmax.f32 %v8477, %v8678
    %v8687 = vmax.f32 %v8485, %v8679
    %v8688 = vmax.f32 %v8493, %v8680
    %8721 = vrot.lane.b32.xlu0 %v8647, 64
    %v8722 = vpop.permute.xlu0 %8721
    %8723 = vrot.lane.b32.xlu0 %v8648, 64
    %v8724 = vpop.permute.xlu0 %8723
    %8725 = vrot.lane.b32.xlu0 %v8649, 64
    %v8726 = vpop.permute.xlu0 %8725
    %8727 = vrot.lane.b32.xlu0 %v8650, 64
    %v8728 = vpop.permute.xlu0 %8727
    %8729 = vrot.lane.b32.xlu0 %v8651, 64
    %v8730 = vpop.permute.xlu0 %8729
    %8731 = vrot.lane.b32.xlu0 %v8652, 64
    %v8732 = vpop.permute.xlu0 %8731
    %8733 = vrot.lane.b32.xlu0 %v8653, 64
    %v8734 = vpop.permute.xlu0 %8733
    %8735 = vrot.lane.b32.xlu0 %v8685, 64
    %v8736 = vpop.permute.xlu0 %8735
    %8737 = vrot.lane.b32.xlu0 %v8654, 64
    %v8738 = vpop.permute.xlu0 %8737
    %8739 = vrot.lane.b32.xlu0 %v8655, 64
    %v8740 = vpop.permute.xlu0 %8739
    %8741 = vrot.lane.b32.xlu0 %v8656, 64
    %v8742 = vpop.permute.xlu0 %8741
    %8743 = vrot.lane.b32.xlu0 %v8657, 64
    %v8744 = vpop.permute.xlu0 %8743
    %8745 = vrot.lane.b32.xlu0 %v8658, 64
    %v8746 = vpop.permute.xlu0 %8745
    %8747 = vrot.lane.b32.xlu0 %v8659, 64
    %v8748 = vpop.permute.xlu0 %8747
    %8749 = vrot.lane.b32.xlu0 %v8660, 64
    %v8750 = vpop.permute.xlu0 %8749
    %8751 = vrot.lane.b32.xlu0 %v8686, 64
    %v8752 = vpop.permute.xlu0 %8751
    %8753 = vrot.lane.b32.xlu0 %v8661, 64
    %v8754 = vpop.permute.xlu0 %8753
    %8755 = vrot.lane.b32.xlu0 %v8662, 64
    %v8756 = vpop.permute.xlu0 %8755
    %8757 = vrot.lane.b32.xlu0 %v8663, 64
    %v8758 = vpop.permute.xlu0 %8757
    %8759 = vrot.lane.b32.xlu0 %v8664, 64
    %v8760 = vpop.permute.xlu0 %8759
    %8761 = vrot.lane.b32.xlu0 %v8665, 64
    %v8762 = vpop.permute.xlu0 %8761
    %8763 = vrot.lane.b32.xlu0 %v8666, 64
    %v8764 = vpop.permute.xlu0 %8763
    %8765 = vrot.lane.b32.xlu0 %v8667, 64
    %v8766 = vpop.permute.xlu0 %8765
    %8767 = vrot.lane.b32.xlu0 %v8687, 64
    %v8768 = vpop.permute.xlu0 %8767
    %8769 = vrot.lane.b32.xlu0 %v8668, 64
    %v8770 = vpop.permute.xlu0 %8769
    %8771 = vrot.lane.b32.xlu0 %v8669, 64
    %v8772 = vpop.permute.xlu0 %8771
    %8773 = vrot.lane.b32.xlu0 %v8670, 64
    %v8774 = vpop.permute.xlu0 %8773
    %8775 = vrot.lane.b32.xlu0 %v8671, 64
    %v8776 = vpop.permute.xlu0 %8775
    %8777 = vrot.lane.b32.xlu0 %v8672, 64
    %v8778 = vpop.permute.xlu0 %8777
    %8779 = vrot.lane.b32.xlu0 %v8673, 64
    %v8780 = vpop.permute.xlu0 %8779
    %8781 = vrot.lane.b32.xlu0 %v8674, 64
    %v8782 = vpop.permute.xlu0 %8781
    %8783 = vrot.lane.b32.xlu0 %v8688, 64
    %v8784 = vpop.permute.xlu0 %8783
    %v8785 = vsel %vm6134, %v8722, %v8724
    %v8786 = vsel %vm6134, %v8724, %v8726
    %v8787 = vsel %vm6134, %v8726, %v8728
    %v8788 = vsel %vm6134, %v8728, %v8730
    %v8789 = vsel %vm6134, %v8730, %v8732
    %v8790 = vsel %vm6134, %v8732, %v8734
    %v8791 = vsel %vm6134, %v8734, %v8736
    %v8792 = vsel %vm6134, %v8738, %v8740
    %v8793 = vsel %vm6134, %v8740, %v8742
    %v8794 = vsel %vm6134, %v8742, %v8744
    %v8795 = vsel %vm6134, %v8744, %v8746
    %v8796 = vsel %vm6134, %v8746, %v8748
    %v8797 = vsel %vm6134, %v8748, %v8750
    %v8798 = vsel %vm6134, %v8750, %v8752
    %v8799 = vsel %vm6134, %v8754, %v8756
    %v8800 = vsel %vm6134, %v8756, %v8758
    %v8801 = vsel %vm6134, %v8758, %v8760
    %v8802 = vsel %vm6134, %v8760, %v8762
    %v8803 = vsel %vm6134, %v8762, %v8764
    %v8804 = vsel %vm6134, %v8764, %v8766
    %v8805 = vsel %vm6134, %v8766, %v8768
    %v8806 = vsel %vm6134, %v8770, %v8772
    %v8807 = vsel %vm6134, %v8772, %v8774
    %v8808 = vsel %vm6134, %v8774, %v8776
    %v8809 = vsel %vm6134, %v8776, %v8778
    %v8810 = vsel %vm6134, %v8778, %v8780
    %v8811 = vsel %vm6134, %v8780, %v8782
    %v8812 = vsel %vm6134, %v8782, %v8784
    %v8841 = vmax.f32 %v8647, %v8785
    %v8842 = vmax.f32 %v8648, %v8786
    %v8843 = vmax.f32 %v8649, %v8787
    %v8844 = vmax.f32 %v8650, %v8788
    %v8845 = vmax.f32 %v8651, %v8789
    %v8846 = vmax.f32 %v8652, %v8790
    %v8847 = vmax.f32 %v8653, %v8791
    %v8848 = vmax.f32 %v8654, %v8792
    %v8849 = vmax.f32 %v8655, %v8793
    %v8850 = vmax.f32 %v8656, %v8794
    %v8851 = vmax.f32 %v8657, %v8795
    %v8852 = vmax.f32 %v8658, %v8796
    %v8853 = vmax.f32 %v8659, %v8797
    %v8854 = vmax.f32 %v8660, %v8798
    %v8855 = vmax.f32 %v8661, %v8799
    %v8856 = vmax.f32 %v8662, %v8800
    %v8857 = vmax.f32 %v8663, %v8801
    %v8858 = vmax.f32 %v8664, %v8802
    %v8859 = vmax.f32 %v8665, %v8803
    %v8860 = vmax.f32 %v8666, %v8804
    %v8861 = vmax.f32 %v8667, %v8805
    %v8862 = vmax.f32 %v8668, %v8806
    %v8863 = vmax.f32 %v8669, %v8807
    %v8864 = vmax.f32 %v8670, %v8808
    %v8865 = vmax.f32 %v8671, %v8809
    %v8866 = vmax.f32 %v8672, %v8810
    %v8867 = vmax.f32 %v8673, %v8811
    %v8868 = vmax.f32 %v8674, %v8812
    %8873 = vrot.lane.b32.xlu0 %v8841, 120
    %v8874 = vpop.permute.xlu0 %8873
    %8875 = vrot.lane.b32.xlu0 %v8848, 120
    %v8876 = vpop.permute.xlu0 %8875
    %8877 = vrot.lane.b32.xlu0 %v8855, 120
    %v8878 = vpop.permute.xlu0 %8877
    %8879 = vrot.lane.b32.xlu0 %v8862, 120
    %v8880 = vpop.permute.xlu0 %8879
    %8885 = vrot.lane.b32.xlu0 %v8841, 112
    %v8886 = vpop.permute.xlu0 %8885
    %8887 = vrot.lane.b32.xlu0 %v8848, 112
    %v8888 = vpop.permute.xlu0 %8887
    %8889 = vrot.lane.b32.xlu0 %v8855, 112
    %v8890 = vpop.permute.xlu0 %8889
    %8891 = vrot.lane.b32.xlu0 %v8862, 112
    %v8892 = vpop.permute.xlu0 %8891
    %8897 = vrot.lane.b32.xlu0 %v8841, 104
    %v8898 = vpop.permute.xlu0 %8897
    %8899 = vrot.lane.b32.xlu0 %v8848, 104
    %v8900 = vpop.permute.xlu0 %8899
    %8901 = vrot.lane.b32.xlu0 %v8855, 104
    %v8902 = vpop.permute.xlu0 %8901
    %8903 = vrot.lane.b32.xlu0 %v8862, 104
    %v8904 = vpop.permute.xlu0 %8903
    %8909 = vrot.lane.b32.xlu0 %v8841, 96
    %v8910 = vpop.permute.xlu0 %8909
    %8911 = vrot.lane.b32.xlu0 %v8848, 96
    %v8912 = vpop.permute.xlu0 %8911
    %8913 = vrot.lane.b32.xlu0 %v8855, 96
    %v8914 = vpop.permute.xlu0 %8913
    %8915 = vrot.lane.b32.xlu0 %v8862, 96
    %v8916 = vpop.permute.xlu0 %8915
    %8921 = vrot.lane.b32.xlu0 %v8841, 88
    %v8922 = vpop.permute.xlu0 %8921
    %8923 = vrot.lane.b32.xlu0 %v8848, 88
    %v8924 = vpop.permute.xlu0 %8923
    %8925 = vrot.lane.b32.xlu0 %v8855, 88
    %v8926 = vpop.permute.xlu0 %8925
    %8927 = vrot.lane.b32.xlu0 %v8862, 88
    %v8928 = vpop.permute.xlu0 %8927
    %8933 = vrot.lane.b32.xlu0 %v8841, 80
    %v8934 = vpop.permute.xlu0 %8933
    %8935 = vrot.lane.b32.xlu0 %v8848, 80
    %v8936 = vpop.permute.xlu0 %8935
    %8937 = vrot.lane.b32.xlu0 %v8855, 80
    %v8938 = vpop.permute.xlu0 %8937
    %8939 = vrot.lane.b32.xlu0 %v8862, 80
    %v8940 = vpop.permute.xlu0 %8939
    %8949 = vrot.lane.b32.xlu0 %v8842, 120
    %v8950 = vpop.permute.xlu0 %8949
    %8951 = vrot.lane.b32.xlu0 %v8849, 120
    %v8952 = vpop.permute.xlu0 %8951
    %8953 = vrot.lane.b32.xlu0 %v8856, 120
    %v8954 = vpop.permute.xlu0 %8953
    %8955 = vrot.lane.b32.xlu0 %v8863, 120
    %v8956 = vpop.permute.xlu0 %8955
    %8961 = vrot.lane.b32.xlu0 %v8842, 112
    %v8962 = vpop.permute.xlu0 %8961
    %8963 = vrot.lane.b32.xlu0 %v8849, 112
    %v8964 = vpop.permute.xlu0 %8963
    %8965 = vrot.lane.b32.xlu0 %v8856, 112
    %v8966 = vpop.permute.xlu0 %8965
    %8967 = vrot.lane.b32.xlu0 %v8863, 112
    %v8968 = vpop.permute.xlu0 %8967
    %8973 = vrot.lane.b32.xlu0 %v8842, 104
    %v8974 = vpop.permute.xlu0 %8973
    %8975 = vrot.lane.b32.xlu0 %v8849, 104
    %v8976 = vpop.permute.xlu0 %8975
    %8977 = vrot.lane.b32.xlu0 %v8856, 104
    %v8978 = vpop.permute.xlu0 %8977
    %8979 = vrot.lane.b32.xlu0 %v8863, 104
    %v8980 = vpop.permute.xlu0 %8979
    %8985 = vrot.lane.b32.xlu0 %v8842, 96
    %v8986 = vpop.permute.xlu0 %8985
    %8987 = vrot.lane.b32.xlu0 %v8849, 96
    %v8988 = vpop.permute.xlu0 %8987
    %8989 = vrot.lane.b32.xlu0 %v8856, 96
    %v8990 = vpop.permute.xlu0 %8989
    %8991 = vrot.lane.b32.xlu0 %v8863, 96
    %v8992 = vpop.permute.xlu0 %8991
    %8997 = vrot.lane.b32.xlu0 %v8842, 88
    %v8998 = vpop.permute.xlu0 %8997
    %8999 = vrot.lane.b32.xlu0 %v8849, 88
    %v9000 = vpop.permute.xlu0 %8999
    %9001 = vrot.lane.b32.xlu0 %v8856, 88
    %v9002 = vpop.permute.xlu0 %9001
    %9003 = vrot.lane.b32.xlu0 %v8863, 88
    %v9004 = vpop.permute.xlu0 %9003
    %9009 = vrot.lane.b32.xlu0 %v8842, 80
    %v9010 = vpop.permute.xlu0 %9009
    %9011 = vrot.lane.b32.xlu0 %v8849, 80
    %v9012 = vpop.permute.xlu0 %9011
    %9013 = vrot.lane.b32.xlu0 %v8856, 80
    %v9014 = vpop.permute.xlu0 %9013
    %9015 = vrot.lane.b32.xlu0 %v8863, 80
    %v9016 = vpop.permute.xlu0 %9015
    %9025 = vrot.lane.b32.xlu0 %v8843, 120
    %v9026 = vpop.permute.xlu0 %9025
    %9027 = vrot.lane.b32.xlu0 %v8850, 120
    %v9028 = vpop.permute.xlu0 %9027
    %9029 = vrot.lane.b32.xlu0 %v8857, 120
    %v9030 = vpop.permute.xlu0 %9029
    %9031 = vrot.lane.b32.xlu0 %v8864, 120
    %v9032 = vpop.permute.xlu0 %9031
    %9037 = vrot.lane.b32.xlu0 %v8843, 112
    %v9038 = vpop.permute.xlu0 %9037
    %9039 = vrot.lane.b32.xlu0 %v8850, 112
    %v9040 = vpop.permute.xlu0 %9039
    %9041 = vrot.lane.b32.xlu0 %v8857, 112
    %v9042 = vpop.permute.xlu0 %9041
    %9043 = vrot.lane.b32.xlu0 %v8864, 112
    %v9044 = vpop.permute.xlu0 %9043
    %9045 = vrot.lane.b32.xlu0 %v8843, 104
    %v9046 = vpop.permute.xlu0 %9045
    %9047 = vrot.lane.b32.xlu0 %v8850, 104
    %v9048 = vpop.permute.xlu0 %9047
    %9049 = vrot.lane.b32.xlu0 %v8857, 104
    %v9050 = vpop.permute.xlu0 %9049
    %9051 = vrot.lane.b32.xlu0 %v8864, 104
    %v9052 = vpop.permute.xlu0 %9051
    %9053 = vrot.lane.b32.xlu0 %v8843, 96
    %v9054 = vpop.permute.xlu0 %9053
    %9055 = vrot.lane.b32.xlu0 %v8850, 96
    %v9056 = vpop.permute.xlu0 %9055
    %9057 = vrot.lane.b32.xlu0 %v8857, 96
    %v9058 = vpop.permute.xlu0 %9057
    %9059 = vrot.lane.b32.xlu0 %v8864, 96
    %v9060 = vpop.permute.xlu0 %9059
    %9065 = vrot.lane.b32.xlu0 %v8844, 16
    %v9066 = vpop.permute.xlu0 %9065
    %9067 = vrot.lane.b32.xlu0 %v8851, 16
    %v9068 = vpop.permute.xlu0 %9067
    %9069 = vrot.lane.b32.xlu0 %v8858, 16
    %v9070 = vpop.permute.xlu0 %9069
    %9071 = vrot.lane.b32.xlu0 %v8865, 16
    %v9072 = vpop.permute.xlu0 %9071
    %9073 = vrot.lane.b32.xlu0 %v8844, 8
    %v9074 = vpop.permute.xlu0 %9073
    %9075 = vrot.lane.b32.xlu0 %v8851, 8
    %v9076 = vpop.permute.xlu0 %9075
    %9077 = vrot.lane.b32.xlu0 %v8858, 8
    %v9078 = vpop.permute.xlu0 %9077
    %9079 = vrot.lane.b32.xlu0 %v8865, 8
    %v9080 = vpop.permute.xlu0 %9079
    %9081 = vrot.lane.b32.xlu0 %v8844, 120
    %v9082 = vpop.permute.xlu0 %9081
    %9083 = vrot.lane.b32.xlu0 %v8851, 120
    %v9084 = vpop.permute.xlu0 %9083
    %9085 = vrot.lane.b32.xlu0 %v8858, 120
    %v9086 = vpop.permute.xlu0 %9085
    %9087 = vrot.lane.b32.xlu0 %v8865, 120
    %v9088 = vpop.permute.xlu0 %9087
    %9089 = vrot.lane.b32.xlu0 %v8844, 112
    %v9090 = vpop.permute.xlu0 %9089
    %9091 = vrot.lane.b32.xlu0 %v8851, 112
    %v9092 = vpop.permute.xlu0 %9091
    %9093 = vrot.lane.b32.xlu0 %v8858, 112
    %v9094 = vpop.permute.xlu0 %9093
    %9095 = vrot.lane.b32.xlu0 %v8865, 112
    %v9096 = vpop.permute.xlu0 %9095
    %9097 = vrot.lane.b32.xlu0 %v8844, 104
    %v9098 = vpop.permute.xlu0 %9097
    %9099 = vrot.lane.b32.xlu0 %v8851, 104
    %v9100 = vpop.permute.xlu0 %9099
    %9101 = vrot.lane.b32.xlu0 %v8858, 104
    %v9102 = vpop.permute.xlu0 %9101
    %9103 = vrot.lane.b32.xlu0 %v8865, 104
    %v9104 = vpop.permute.xlu0 %9103
    %9105 = vrot.lane.b32.xlu0 %v8844, 96
    %v9106 = vpop.permute.xlu0 %9105
    %9107 = vrot.lane.b32.xlu0 %v8851, 96
    %v9108 = vpop.permute.xlu0 %9107
    %9109 = vrot.lane.b32.xlu0 %v8858, 96
    %v9110 = vpop.permute.xlu0 %9109
    %9111 = vrot.lane.b32.xlu0 %v8865, 96
    %v9112 = vpop.permute.xlu0 %9111
    %9117 = vrot.lane.b32.xlu0 %v8845, 16
    %v9118 = vpop.permute.xlu0 %9117
    %9119 = vrot.lane.b32.xlu0 %v8852, 16
    %v9120 = vpop.permute.xlu0 %9119
    %9121 = vrot.lane.b32.xlu0 %v8859, 16
    %v9122 = vpop.permute.xlu0 %9121
    %9123 = vrot.lane.b32.xlu0 %v8866, 16
    %v9124 = vpop.permute.xlu0 %9123
    %9125 = vrot.lane.b32.xlu0 %v8845, 8
    %v9126 = vpop.permute.xlu0 %9125
    %9127 = vrot.lane.b32.xlu0 %v8852, 8
    %v9128 = vpop.permute.xlu0 %9127
    %9129 = vrot.lane.b32.xlu0 %v8859, 8
    %v9130 = vpop.permute.xlu0 %9129
    %9131 = vrot.lane.b32.xlu0 %v8866, 8
    %v9132 = vpop.permute.xlu0 %9131
    %9133 = vrot.lane.b32.xlu0 %v8845, 120
    %v9134 = vpop.permute.xlu0 %9133
    %9135 = vrot.lane.b32.xlu0 %v8852, 120
    %v9136 = vpop.permute.xlu0 %9135
    %9137 = vrot.lane.b32.xlu0 %v8859, 120
    %v9138 = vpop.permute.xlu0 %9137
    %9139 = vrot.lane.b32.xlu0 %v8866, 120
    %v9140 = vpop.permute.xlu0 %9139
    %9141 = vrot.lane.b32.xlu0 %v8845, 112
    %v9142 = vpop.permute.xlu0 %9141
    %9143 = vrot.lane.b32.xlu0 %v8852, 112
    %v9144 = vpop.permute.xlu0 %9143
    %9145 = vrot.lane.b32.xlu0 %v8859, 112
    %v9146 = vpop.permute.xlu0 %9145
    %9147 = vrot.lane.b32.xlu0 %v8866, 112
    %v9148 = vpop.permute.xlu0 %9147
    %9153 = vrot.lane.b32.xlu0 %v8846, 32
    %v9154 = vpop.permute.xlu0 %9153
    %9155 = vrot.lane.b32.xlu0 %v8853, 32
    %v9156 = vpop.permute.xlu0 %9155
    %9157 = vrot.lane.b32.xlu0 %v8860, 32
    %v9158 = vpop.permute.xlu0 %9157
    %9159 = vrot.lane.b32.xlu0 %v8867, 32
    %v9160 = vpop.permute.xlu0 %9159
    %9161 = vrot.lane.b32.xlu0 %v8846, 24
    %v9162 = vpop.permute.xlu0 %9161
    %9163 = vrot.lane.b32.xlu0 %v8853, 24
    %v9164 = vpop.permute.xlu0 %9163
    %9165 = vrot.lane.b32.xlu0 %v8860, 24
    %v9166 = vpop.permute.xlu0 %9165
    %9167 = vrot.lane.b32.xlu0 %v8867, 24
    %v9168 = vpop.permute.xlu0 %9167
    %9169 = vrot.lane.b32.xlu0 %v8846, 16
    %v9170 = vpop.permute.xlu0 %9169
    %9171 = vrot.lane.b32.xlu0 %v8853, 16
    %v9172 = vpop.permute.xlu0 %9171
    %9173 = vrot.lane.b32.xlu0 %v8860, 16
    %v9174 = vpop.permute.xlu0 %9173
    %9175 = vrot.lane.b32.xlu0 %v8867, 16
    %v9176 = vpop.permute.xlu0 %9175
    %9177 = vrot.lane.b32.xlu0 %v8846, 8
    %v9178 = vpop.permute.xlu0 %9177
    %9179 = vrot.lane.b32.xlu0 %v8853, 8
    %v9180 = vpop.permute.xlu0 %9179
    %9181 = vrot.lane.b32.xlu0 %v8860, 8
    %v9182 = vpop.permute.xlu0 %9181
    %9183 = vrot.lane.b32.xlu0 %v8867, 8
    %v9184 = vpop.permute.xlu0 %9183
    %9185 = vrot.lane.b32.xlu0 %v8846, 120
    %v9186 = vpop.permute.xlu0 %9185
    %9187 = vrot.lane.b32.xlu0 %v8853, 120
    %v9188 = vpop.permute.xlu0 %9187
    %9189 = vrot.lane.b32.xlu0 %v8860, 120
    %v9190 = vpop.permute.xlu0 %9189
    %9191 = vrot.lane.b32.xlu0 %v8867, 120
    %v9192 = vpop.permute.xlu0 %9191
    %9193 = vrot.lane.b32.xlu0 %v8846, 112
    %v9194 = vpop.permute.xlu0 %9193
    %9195 = vrot.lane.b32.xlu0 %v8853, 112
    %v9196 = vpop.permute.xlu0 %9195
    %9197 = vrot.lane.b32.xlu0 %v8860, 112
    %v9198 = vpop.permute.xlu0 %9197
    %9199 = vrot.lane.b32.xlu0 %v8867, 112
    %v9200 = vpop.permute.xlu0 %9199
    %9205 = vrot.lane.b32.xlu0 %v8847, 32
    %v9206 = vpop.permute.xlu0 %9205
    %9207 = vrot.lane.b32.xlu0 %v8854, 32
    %v9208 = vpop.permute.xlu0 %9207
    %9209 = vrot.lane.b32.xlu0 %v8861, 32
    %v9210 = vpop.permute.xlu0 %9209
    %9211 = vrot.lane.b32.xlu0 %v8868, 32
    %v9212 = vpop.permute.xlu0 %9211
    %9213 = vrot.lane.b32.xlu0 %v8847, 24
    %v9214 = vpop.permute.xlu0 %9213
    %9215 = vrot.lane.b32.xlu0 %v8854, 24
    %v9216 = vpop.permute.xlu0 %9215
    %9217 = vrot.lane.b32.xlu0 %v8861, 24
    %v9218 = vpop.permute.xlu0 %9217
    %9219 = vrot.lane.b32.xlu0 %v8868, 24
    %v9220 = vpop.permute.xlu0 %9219
    %9221 = vrot.lane.b32.xlu0 %v8847, 16
    %v9222 = vpop.permute.xlu0 %9221
    %9223 = vrot.lane.b32.xlu0 %v8854, 16
    %v9224 = vpop.permute.xlu0 %9223
    %9225 = vrot.lane.b32.xlu0 %v8861, 16
    %v9226 = vpop.permute.xlu0 %9225
    %9227 = vrot.lane.b32.xlu0 %v8868, 16
    %v9228 = vpop.permute.xlu0 %9227
    %9229 = vrot.lane.b32.xlu0 %v8847, 8
    %v9230 = vpop.permute.xlu0 %9229
    %9231 = vrot.lane.b32.xlu0 %v8854, 8
    %v9232 = vpop.permute.xlu0 %9231
    %9233 = vrot.lane.b32.xlu0 %v8861, 8
    %v9234 = vpop.permute.xlu0 %9233
    %9235 = vrot.lane.b32.xlu0 %v8868, 8
    %v9236 = vpop.permute.xlu0 %9235
    %9237 = vrot.lane.b32.xlu0 %v8847, 120
    %v9238 = vpop.permute.xlu0 %9237
    %9239 = vrot.lane.b32.xlu0 %v8854, 120
    %v9240 = vpop.permute.xlu0 %9239
    %9241 = vrot.lane.b32.xlu0 %v8861, 120
    %v9242 = vpop.permute.xlu0 %9241
    %9243 = vrot.lane.b32.xlu0 %v8868, 120
    %v9244 = vpop.permute.xlu0 %9243
    %9245 = vrot.lane.b32.xlu0 %v9026, 112
    %v9246 = vpop.permute.xlu0 %9245
    %9247 = vrot.lane.b32.xlu0 %v9028, 112
    %v9248 = vpop.permute.xlu0 %9247
    %9249 = vrot.lane.b32.xlu0 %v9030, 112
    %v9250 = vpop.permute.xlu0 %9249
    %9251 = vrot.lane.b32.xlu0 %v9032, 112
    %v9252 = vpop.permute.xlu0 %9251
    %9253 = vrot.lane.b32.xlu0 %v9038, 112
    %v9254 = vpop.permute.xlu0 %9253
    %9255 = vrot.lane.b32.xlu0 %v9040, 112
    %v9256 = vpop.permute.xlu0 %9255
    %9257 = vrot.lane.b32.xlu0 %v9042, 112
    %v9258 = vpop.permute.xlu0 %9257
    %9259 = vrot.lane.b32.xlu0 %v9044, 112
    %v9260 = vpop.permute.xlu0 %9259
    %9261 = vrot.lane.b32.xlu0 %v9046, 112
    %v9262 = vpop.permute.xlu0 %9261
    %9263 = vrot.lane.b32.xlu0 %v9048, 112
    %v9264 = vpop.permute.xlu0 %9263
    %9265 = vrot.lane.b32.xlu0 %v9050, 112
    %v9266 = vpop.permute.xlu0 %9265
    %9267 = vrot.lane.b32.xlu0 %v9052, 112
    %v9268 = vpop.permute.xlu0 %9267
    %9269 = vrot.lane.b32.xlu0 %v9054, 112
    %v9270 = vpop.permute.xlu0 %9269
    %9271 = vrot.lane.b32.xlu0 %v9056, 112
    %v9272 = vpop.permute.xlu0 %9271
    %9273 = vrot.lane.b32.xlu0 %v9058, 112
    %v9274 = vpop.permute.xlu0 %9273
    %9275 = vrot.lane.b32.xlu0 %v9060, 112
    %v9276 = vpop.permute.xlu0 %9275
    %9277 = vrot.lane.b32.xlu0 %v9066, 112
    %v9278 = vpop.permute.xlu0 %9277
    %9279 = vrot.lane.b32.xlu0 %v9068, 112
    %v9280 = vpop.permute.xlu0 %9279
    %9281 = vrot.lane.b32.xlu0 %v9070, 112
    %v9282 = vpop.permute.xlu0 %9281
    %9283 = vrot.lane.b32.xlu0 %v9072, 112
    %v9284 = vpop.permute.xlu0 %9283
    %9285 = vrot.lane.b32.xlu0 %v9074, 112
    %v9286 = vpop.permute.xlu0 %9285
    %9287 = vrot.lane.b32.xlu0 %v9076, 112
    %v9288 = vpop.permute.xlu0 %9287
    %9289 = vrot.lane.b32.xlu0 %v9078, 112
    %v9290 = vpop.permute.xlu0 %9289
    %9291 = vrot.lane.b32.xlu0 %v9080, 112
    %v9292 = vpop.permute.xlu0 %9291
    %9293 = vrot.lane.b32.xlu0 %v9082, 112
    %v9294 = vpop.permute.xlu0 %9293
    %9295 = vrot.lane.b32.xlu0 %v9084, 112
    %v9296 = vpop.permute.xlu0 %9295
    %9297 = vrot.lane.b32.xlu0 %v9086, 112
    %v9298 = vpop.permute.xlu0 %9297
    %9299 = vrot.lane.b32.xlu0 %v9088, 112
    %v9300 = vpop.permute.xlu0 %9299
    %9301 = vrot.lane.b32.xlu0 %v9090, 112
    %v9302 = vpop.permute.xlu0 %9301
    %9303 = vrot.lane.b32.xlu0 %v9092, 112
    %v9304 = vpop.permute.xlu0 %9303
    %9305 = vrot.lane.b32.xlu0 %v9094, 112
    %v9306 = vpop.permute.xlu0 %9305
    %9307 = vrot.lane.b32.xlu0 %v9096, 112
    %v9308 = vpop.permute.xlu0 %9307
    %9309 = vrot.lane.b32.xlu0 %v9098, 112
    %v9310 = vpop.permute.xlu0 %9309
    %9311 = vrot.lane.b32.xlu0 %v9100, 112
    %v9312 = vpop.permute.xlu0 %9311
    %9313 = vrot.lane.b32.xlu0 %v9102, 112
    %v9314 = vpop.permute.xlu0 %9313
    %9315 = vrot.lane.b32.xlu0 %v9104, 112
    %v9316 = vpop.permute.xlu0 %9315
    %9317 = vrot.lane.b32.xlu0 %v9106, 112
    %v9318 = vpop.permute.xlu0 %9317
    %9319 = vrot.lane.b32.xlu0 %v9108, 112
    %v9320 = vpop.permute.xlu0 %9319
    %9321 = vrot.lane.b32.xlu0 %v9110, 112
    %v9322 = vpop.permute.xlu0 %9321
    %9323 = vrot.lane.b32.xlu0 %v9112, 112
    %v9324 = vpop.permute.xlu0 %9323
    %9325 = vrot.lane.b32.xlu0 %v9118, 112
    %v9326 = vpop.permute.xlu0 %9325
    %9327 = vrot.lane.b32.xlu0 %v9120, 112
    %v9328 = vpop.permute.xlu0 %9327
    %9329 = vrot.lane.b32.xlu0 %v9122, 112
    %v9330 = vpop.permute.xlu0 %9329
    %9331 = vrot.lane.b32.xlu0 %v9124, 112
    %v9332 = vpop.permute.xlu0 %9331
    %9333 = vrot.lane.b32.xlu0 %v9126, 112
    %v9334 = vpop.permute.xlu0 %9333
    %9335 = vrot.lane.b32.xlu0 %v9128, 112
    %v9336 = vpop.permute.xlu0 %9335
    %9337 = vrot.lane.b32.xlu0 %v9130, 112
    %v9338 = vpop.permute.xlu0 %9337
    %9339 = vrot.lane.b32.xlu0 %v9132, 112
    %v9340 = vpop.permute.xlu0 %9339
    %9341 = vrot.lane.b32.xlu0 %v9134, 112
    %v9342 = vpop.permute.xlu0 %9341
    %9343 = vrot.lane.b32.xlu0 %v9136, 112
    %v9344 = vpop.permute.xlu0 %9343
    %9345 = vrot.lane.b32.xlu0 %v9138, 112
    %v9346 = vpop.permute.xlu0 %9345
    %9347 = vrot.lane.b32.xlu0 %v9140, 112
    %v9348 = vpop.permute.xlu0 %9347
    %9413 = vrot.lane.b32.xlu0 %v8845, 96
    %v9414 = vpop.permute.xlu0 %9413
    %9415 = vrot.lane.b32.xlu0 %v8852, 96
    %v9416 = vpop.permute.xlu0 %9415
    %9417 = vrot.lane.b32.xlu0 %v8859, 96
    %v9418 = vpop.permute.xlu0 %9417
    %9419 = vrot.lane.b32.xlu0 %v8866, 96
    %v9420 = vpop.permute.xlu0 %9419
    %9421 = vrot.lane.b32.xlu0 %v9134, 96
    %v9422 = vpop.permute.xlu0 %9421
    %9423 = vrot.lane.b32.xlu0 %v9136, 96
    %v9424 = vpop.permute.xlu0 %9423
    %9425 = vrot.lane.b32.xlu0 %v9138, 96
    %v9426 = vpop.permute.xlu0 %9425
    %9427 = vrot.lane.b32.xlu0 %v9140, 96
    %v9428 = vpop.permute.xlu0 %9427
    %9429 = vrot.lane.b32.xlu0 %v9142, 96
    %v9430 = vpop.permute.xlu0 %9429
    %9431 = vrot.lane.b32.xlu0 %v9144, 96
    %v9432 = vpop.permute.xlu0 %9431
    %9433 = vrot.lane.b32.xlu0 %v9146, 96
    %v9434 = vpop.permute.xlu0 %9433
    %9435 = vrot.lane.b32.xlu0 %v9148, 96
    %v9436 = vpop.permute.xlu0 %9435
    %9437 = vrot.lane.b32.xlu0 %v9154, 96
    %v9438 = vpop.permute.xlu0 %9437
    %9439 = vrot.lane.b32.xlu0 %v9156, 96
    %v9440 = vpop.permute.xlu0 %9439
    %9441 = vrot.lane.b32.xlu0 %v9158, 96
    %v9442 = vpop.permute.xlu0 %9441
    %9443 = vrot.lane.b32.xlu0 %v9160, 96
    %v9444 = vpop.permute.xlu0 %9443
    %9445 = vrot.lane.b32.xlu0 %v9162, 96
    %v9446 = vpop.permute.xlu0 %9445
    %9447 = vrot.lane.b32.xlu0 %v9164, 96
    %v9448 = vpop.permute.xlu0 %9447
    %9449 = vrot.lane.b32.xlu0 %v9166, 96
    %v9450 = vpop.permute.xlu0 %9449
    %9451 = vrot.lane.b32.xlu0 %v9168, 96
    %v9452 = vpop.permute.xlu0 %9451
    %9453 = vrot.lane.b32.xlu0 %v9170, 96
    %v9454 = vpop.permute.xlu0 %9453
    %9455 = vrot.lane.b32.xlu0 %v9172, 96
    %v9456 = vpop.permute.xlu0 %9455
    %9457 = vrot.lane.b32.xlu0 %v9174, 96
    %v9458 = vpop.permute.xlu0 %9457
    %9459 = vrot.lane.b32.xlu0 %v9176, 96
    %v9460 = vpop.permute.xlu0 %9459
    %9461 = vrot.lane.b32.xlu0 %v9178, 96
    %v9462 = vpop.permute.xlu0 %9461
    %9463 = vrot.lane.b32.xlu0 %v9180, 96
    %v9464 = vpop.permute.xlu0 %9463
    %9465 = vrot.lane.b32.xlu0 %v9182, 96
    %v9466 = vpop.permute.xlu0 %9465
    %9467 = vrot.lane.b32.xlu0 %v9184, 96
    %v9468 = vpop.permute.xlu0 %9467
    %9469 = vrot.lane.b32.xlu0 %v8846, 96
    %v9470 = vpop.permute.xlu0 %9469
    %9471 = vrot.lane.b32.xlu0 %v8853, 96
    %v9472 = vpop.permute.xlu0 %9471
    %9473 = vrot.lane.b32.xlu0 %v8860, 96
    %v9474 = vpop.permute.xlu0 %9473
    %9475 = vrot.lane.b32.xlu0 %v8867, 96
    %v9476 = vpop.permute.xlu0 %9475
    %9477 = vrot.lane.b32.xlu0 %v9186, 96
    %v9478 = vpop.permute.xlu0 %9477
    %9479 = vrot.lane.b32.xlu0 %v9188, 96
    %v9480 = vpop.permute.xlu0 %9479
    %9481 = vrot.lane.b32.xlu0 %v9190, 96
    %v9482 = vpop.permute.xlu0 %9481
    %9483 = vrot.lane.b32.xlu0 %v9192, 96
    %v9484 = vpop.permute.xlu0 %9483
    %9485 = vrot.lane.b32.xlu0 %v9194, 96
    %v9486 = vpop.permute.xlu0 %9485
    %9487 = vrot.lane.b32.xlu0 %v9196, 96
    %v9488 = vpop.permute.xlu0 %9487
    %9489 = vrot.lane.b32.xlu0 %v9198, 96
    %v9490 = vpop.permute.xlu0 %9489
    %9491 = vrot.lane.b32.xlu0 %v9200, 96
    %v9492 = vpop.permute.xlu0 %9491
    %9493 = vrot.lane.b32.xlu0 %v9206, 96
    %v9494 = vpop.permute.xlu0 %9493
    %9495 = vrot.lane.b32.xlu0 %v9208, 96
    %v9496 = vpop.permute.xlu0 %9495
    %9497 = vrot.lane.b32.xlu0 %v9210, 96
    %v9498 = vpop.permute.xlu0 %9497
    %9499 = vrot.lane.b32.xlu0 %v9212, 96
    %v9500 = vpop.permute.xlu0 %9499
    %9501 = vrot.lane.b32.xlu0 %v9214, 96
    %v9502 = vpop.permute.xlu0 %9501
    %9503 = vrot.lane.b32.xlu0 %v9216, 96
    %v9504 = vpop.permute.xlu0 %9503
    %9505 = vrot.lane.b32.xlu0 %v9218, 96
    %v9506 = vpop.permute.xlu0 %9505
    %9507 = vrot.lane.b32.xlu0 %v9220, 96
    %v9508 = vpop.permute.xlu0 %9507
    %9509 = vrot.lane.b32.xlu0 %v9222, 96
    %v9510 = vpop.permute.xlu0 %9509
    %9511 = vrot.lane.b32.xlu0 %v9224, 96
    %v9512 = vpop.permute.xlu0 %9511
    %9513 = vrot.lane.b32.xlu0 %v9226, 96
    %v9514 = vpop.permute.xlu0 %9513
    %9515 = vrot.lane.b32.xlu0 %v9228, 96
    %v9516 = vpop.permute.xlu0 %9515
    %9517 = vrot.lane.b32.xlu0 %v9230, 96
    %v9518 = vpop.permute.xlu0 %9517
    %9519 = vrot.lane.b32.xlu0 %v9232, 96
    %v9520 = vpop.permute.xlu0 %9519
    %9521 = vrot.lane.b32.xlu0 %v9234, 96
    %v9522 = vpop.permute.xlu0 %9521
    %9523 = vrot.lane.b32.xlu0 %v9236, 96
    %v9524 = vpop.permute.xlu0 %9523
    %9525 = vrot.lane.b32.xlu0 %v8847, 96
    %v9526 = vpop.permute.xlu0 %9525
    %9527 = vrot.lane.b32.xlu0 %v8854, 96
    %v9528 = vpop.permute.xlu0 %9527
    %9529 = vrot.lane.b32.xlu0 %v8861, 96
    %v9530 = vpop.permute.xlu0 %9529
    %9531 = vrot.lane.b32.xlu0 %v8868, 96
    %v9532 = vpop.permute.xlu0 %9531
    %9533 = vrot.lane.b32.xlu0 %v9238, 96
    %v9534 = vpop.permute.xlu0 %9533
    %9535 = vrot.lane.b32.xlu0 %v9240, 96
    %v9536 = vpop.permute.xlu0 %9535
    %9537 = vrot.lane.b32.xlu0 %v9242, 96
    %v9538 = vpop.permute.xlu0 %9537
    %9539 = vrot.lane.b32.xlu0 %v9244, 96
    %v9540 = vpop.permute.xlu0 %9539
    %9605 = vrot.lane.b32.xlu0 %v8847, 80
    %v9606 = vpop.permute.xlu0 %9605
    %9607 = vrot.lane.b32.xlu0 %v8854, 80
    %v9608 = vpop.permute.xlu0 %9607
    %9609 = vrot.lane.b32.xlu0 %v8861, 80
    %v9610 = vpop.permute.xlu0 %9609
    %9611 = vrot.lane.b32.xlu0 %v8868, 80
    %v9612 = vpop.permute.xlu0 %9611
    %v9617 = vld [vmem:[#allocation8] sm:$0xff]
    %v9618 = vld [vmem:[#allocation8 + $0x8] sm:$0xff]
    %v9619 = vld [vmem:[#allocation8 + $0x10] sm:$0xff]
    %v9620 = vld [vmem:[#allocation8 + $0x18] sm:$0xff]
    %v9621 = vld [vmem:[#allocation8 + $0x20] sm:$0xff]
    %v9622 = vld [vmem:[#allocation8 + $0x28] sm:$0xff]
    %v9623 = vld [vmem:[#allocation8 + $0x30] sm:$0xff]
    %v9624 = vld [vmem:[#allocation8 + $0x38] sm:$0xff]
    %v9625 = vld [vmem:[#allocation8 + $0x40] sm:$0xff]
    %v9626 = vld [vmem:[#allocation8 + $0x48] sm:$0xff]
    %v9627 = vld [vmem:[#allocation8 + $0x50] sm:$0xff]
    %v9628 = vld [vmem:[#allocation8 + $0x58] sm:$0xff]
    %v9629 = vld [vmem:[#allocation8 + $0x60] sm:$0xff]
    %v9630 = vld [vmem:[#allocation8 + $0x68] sm:$0x3]
    %v9631 = vld [vmem:[#allocation8 + $0x70] sm:$0x3]
    %v9632 = vld [vmem:[#allocation8 + $0x78] sm:$0x3]
    %v9633 = vld [vmem:[#allocation8 + $0x80] sm:$0x3]
    %v9634 = vld [vmem:[#allocation8 + $0x88] sm:$0x3]
    %v9635 = vld [vmem:[#allocation8 + $0x90] sm:$0x3]
    %v9636 = vld [vmem:[#allocation8 + $0x98] sm:$0x3]
    %v9637 = vld [vmem:[#allocation8 + $0xa0] sm:$0x3]
    %v9638 = vld [vmem:[#allocation8 + $0xa8] sm:$0x3]
    %v9639 = vld [vmem:[#allocation8 + $0xb0] sm:$0x3]
    %v9640 = vld [vmem:[#allocation8 + $0xb8] sm:$0x3]
    %v9641 = vld [vmem:[#allocation8 + $0xc0] sm:$0x3]
    %v9642 = vld [vmem:[#allocation8 + $0xc8] sm:$0x3]
    %v9643 = vld [vmem:[%s7] sm:$0xff]
    %v9644 = vld [vmem:[%s7 + $0x8] sm:$0x3]
    %9646 = vset.pattern.permute.xlu0 0
    %9647 = vperm.xlu0 %9646, %v9643
    %v9648 = vpop.permute.xlu0 %9647
    %9651 = vset.pattern.permute.xlu0 0
    %9652 = vperm.xlu0 %9651, %v9644
    %v9653 = vpop.permute.xlu0 %9652
    %vm9655 = vcmask 261120
    %v9657 = vsel %vm9655, %v9629, 0
    %v9660 = vsel %vm9655, %v9642, 0
    %9662 = vmatprep.subr.mxu0 0.0
    %9663 = vmatpush1.msra.mxu0 %v8841
    %9664 = vmatprep.subr.mxu0 0.0
    %9665 = vmatpush1.msra.mxu0 %v8848
    %9666 = vmatprep.subr.mxu0 0.0
    %9667 = vmatpush1.msra.mxu0 %v8855
    %9668 = vmatprep.subr.mxu0 0.0
    %9669 = vmatpush1.msra.mxu0 %v8862
    %9670 = vmatprep.subr.mxu0 0.0
    %9671 = vmatpush1.msra.mxu0 %v8874
    %9672 = vmatprep.subr.mxu0 0.0
    %9673 = vmatpush1.msra.mxu0 %v8876
    %9674 = vmatprep.subr.mxu0 0.0
    %9675 = vmatpush1.msra.mxu0 %v8878
    %9676 = vmatprep.subr.mxu0 0.0
    %9677 = vmatpush1.msra.mxu0 %v8880
    %9678 = vmatprep.subr.mxu0 0.0
    %9679 = vmatpush1.msra.mxu0 %v8886
    %9680 = vmatprep.subr.mxu0 0.0
    %9681 = vmatpush1.msra.mxu0 %v8888
    %9682 = vmatprep.subr.mxu0 0.0
    %9683 = vmatpush1.msra.mxu0 %v8890
    %9684 = vmatprep.subr.mxu0 0.0
    %9685 = vmatpush1.msra.mxu0 %v8892
    %9686 = vmatprep.subr.mxu0 0.0
    %9687 = vmatpush1.msra.mxu0 %v8898
    %9688 = vmatprep.subr.mxu0 0.0
    %9689 = vmatpush1.msra.mxu0 %v8900
    %9690 = vmatprep.subr.mxu0 0.0
    %9691 = vmatpush1.msra.mxu0 %v8902
    %9692 = vmatprep.subr.mxu0 0.0
    %9693 = vmatpush1.msra.mxu0 %v8904
    %9694 = vmatprep.subr.mxu0 0.0
    %9695 = vmatpush1.msra.mxu0 %v8910
    %9696 = vmatprep.subr.mxu0 0.0
    %9697 = vmatpush1.msra.mxu0 %v8912
    %9698 = vmatprep.subr.mxu0 0.0
    %9699 = vmatpush1.msra.mxu0 %v8914
    %9700 = vmatprep.subr.mxu0 0.0
    %9701 = vmatpush1.msra.mxu0 %v8916
    %9702 = vmatprep.subr.mxu0 0.0
    %9703 = vmatpush1.msra.mxu0 %v8922
    %9704 = vmatprep.subr.mxu0 0.0
    %9705 = vmatpush1.msra.mxu0 %v8924
    %9706 = vmatprep.subr.mxu0 0.0
    %9707 = vmatpush1.msra.mxu0 %v8926
    %9708 = vmatprep.subr.mxu0 0.0
    %9709 = vmatpush1.msra.mxu0 %v8928
    %9710 = vmatprep.subr.mxu0 0.0
    %9711 = vmatpush1.msra.mxu0 %v8934
    %9712 = vmatprep.subr.mxu0 0.0
    %9713 = vmatpush1.msra.mxu0 %v8936
    %9714 = vmatprep.subr.mxu0 0.0
    %9715 = vmatpush1.msra.mxu0 %v8938
    %9716 = vmatprep.subr.mxu0 0.0
    %9717 = vmatpush1.msra.mxu0 %v8940
    %9718 = vmatprep.subr.mxu0 0.0
    %9719 = vmatpush1.msra.mxu0 %v8842
    %9720 = vmatprep.subr.mxu0 0.0
    %9721 = vmatpush1.msra.mxu0 %v8849
    %9722 = vmatprep.subr.mxu0 0.0
    %9723 = vmatpush1.msra.mxu0 %v8856
    %9724 = vmatprep.subr.mxu0 0.0
    %9725 = vmatpush1.msra.mxu0 %v8863
    %9726 = vmatprep.mubr.f32.mxu0 %v9618
    %9727 = vmatmul.mubr.f32.gmra.mrb[0].mxu0 %v9617
    %v9728 = vpop.f32.mrb[0].mxu0
    %v9729 = vadd.f32 %v9648, %v9728
    %v9730 = vpop.f32.mrb[0].mxu0
    %9731 = vmatprep.mubr.f32.mxu0 %v9631
    %9732 = vmatmul.mubr.f32.gmra.mrb[0].mxu0 %v9630
    %v9733 = vpop.f32.mrb[0].mxu0
    %v9734 = vadd.f32 %v9653, %v9733
    %v9735 = vpop.f32.mrb[0].mxu0
    %9736 = vdwg.mxu0
    %9737 = vmatprep.subr.mxu0 0.0
    %9738 = vmatpush1.msra.mxu0 %v8950
    %9739 = vmatprep.subr.mxu0 0.0
    %9740 = vmatpush1.msra.mxu0 %v8952
    %9741 = vmatprep.subr.mxu0 0.0
    %9742 = vmatpush1.msra.mxu0 %v8954
    %9743 = vmatprep.subr.mxu0 0.0
    %9744 = vmatpush1.msra.mxu0 %v8956
    %9745 = vmatprep.subr.mxu0 0.0
    %9746 = vmatpush1.msra.mxu0 %v8962
    %9747 = vmatprep.subr.mxu0 0.0
    %9748 = vmatpush1.msra.mxu0 %v8964
    %9749 = vmatprep.subr.mxu0 0.0
    %9750 = vmatpush1.msra.mxu0 %v8966
    %9751 = vmatprep.subr.mxu0 0.0
    %9752 = vmatpush1.msra.mxu0 %v8968
    %9753 = vmatprep.subr.mxu0 0.0
    %9754 = vmatpush1.msra.mxu0 %v8974
    %9755 = vmatprep.subr.mxu0 0.0
    %9756 = vmatpush1.msra.mxu0 %v8976
    %9757 = vmatprep.subr.mxu0 0.0
    %9758 = vmatpush1.msra.mxu0 %v8978
    %9759 = vmatprep.subr.mxu0 0.0
    %9760 = vmatpush1.msra.mxu0 %v8980
    %9761 = vmatprep.subr.mxu0 0.0
    %9762 = vmatpush1.msra.mxu0 %v8986
    %9763 = vmatprep.subr.mxu0 0.0
    %9764 = vmatpush1.msra.mxu0 %v8988
    %9765 = vmatprep.subr.mxu0 0.0
    %9766 = vmatpush1.msra.mxu0 %v8990
    %9767 = vmatprep.subr.mxu0 0.0
    %9768 = vmatpush1.msra.mxu0 %v8992
    %9769 = vmatprep.subr.mxu0 0.0
    %9770 = vmatpush1.msra.mxu0 %v8998
    %9771 = vmatprep.subr.mxu0 0.0
    %9772 = vmatpush1.msra.mxu0 %v9000
    %9773 = vmatprep.subr.mxu0 0.0
    %9774 = vmatpush1.msra.mxu0 %v9002
    %9775 = vmatprep.subr.mxu0 0.0
    %9776 = vmatpush1.msra.mxu0 %v9004
    %9777 = vmatprep.subr.mxu0 0.0
    %9778 = vmatpush1.msra.mxu0 %v9010
    %9779 = vmatprep.subr.mxu0 0.0
    %9780 = vmatpush1.msra.mxu0 %v9012
    %9781 = vmatprep.subr.mxu0 0.0
    %9782 = vmatpush1.msra.mxu0 %v9014
    %9783 = vmatprep.subr.mxu0 0.0
    %9784 = vmatpush1.msra.mxu0 %v9016
    %9785 = vmatprep.subr.mxu0 0.0
    %9786 = vmatpush1.msra.mxu0 %v8843
    %9787 = vmatprep.subr.mxu0 0.0
    %9788 = vmatpush1.msra.mxu0 %v8850
    %9789 = vmatprep.subr.mxu0 0.0
    %9790 = vmatpush1.msra.mxu0 %v8857
    %9791 = vmatprep.subr.mxu0 0.0
    %9792 = vmatpush1.msra.mxu0 %v8864
    %9793 = vmatprep.subr.mxu0 0.0
    %9794 = vmatpush1.msra.mxu0 %v9026
    %9795 = vmatprep.subr.mxu0 0.0
    %9796 = vmatpush1.msra.mxu0 %v9028
    %9797 = vmatprep.subr.mxu0 0.0
    %9798 = vmatpush1.msra.mxu0 %v9030
    %9799 = vmatprep.subr.mxu0 0.0
    %9800 = vmatpush1.msra.mxu0 %v9032
    %9801 = vmatprep.mubr.f32.mxu0 %v9620
    %9802 = vmatmul.mubr.f32.gmra.mrb[0].mxu0 %v9619
    %v9803 = vpop.f32.mrb[0].mxu0
    %v9804 = vadd.f32 %v9729, %v9803
    %v9805 = vpop.f32.mrb[0].mxu0
    %9806 = vmatprep.mubr.f32.mxu0 %v9633
    %9807 = vmatmul.mubr.f32.gmra.mrb[0].mxu0 %v9632
    %v9808 = vpop.f32.mrb[0].mxu0
    %v9809 = vadd.f32 %v9734, %v9808
    %v9810 = vpop.f32.mrb[0].mxu0
    %9811 = vdwg.mxu0
    %9812 = vmatprep.subr.mxu0 0.0
    %9813 = vmatpush1.msra.mxu0 %v9038
    %9814 = vmatprep.subr.mxu0 0.0
    %9815 = vmatpush1.msra.mxu0 %v9040
    %9816 = vmatprep.subr.mxu0 0.0
    %9817 = vmatpush1.msra.mxu0 %v9042
    %9818 = vmatprep.subr.mxu0 0.0
    %9819 = vmatpush1.msra.mxu0 %v9044
    %9820 = vmatprep.subr.mxu0 0.0
    %9821 = vmatpush1.msra.mxu0 %v9246
    %9822 = vmatprep.subr.mxu0 0.0
    %9823 = vmatpush1.msra.mxu0 %v9248
    %9824 = vmatprep.subr.mxu0 0.0
    %9825 = vmatpush1.msra.mxu0 %v9250
    %9826 = vmatprep.subr.mxu0 0.0
    %9827 = vmatpush1.msra.mxu0 %v9252
    %9828 = vmatprep.subr.mxu0 0.0
    %9829 = vmatpush1.msra.mxu0 %v9254
    %9830 = vmatprep.subr.mxu0 0.0
    %9831 = vmatpush1.msra.mxu0 %v9256
    %9832 = vmatprep.subr.mxu0 0.0
    %9833 = vmatpush1.msra.mxu0 %v9258
    %9834 = vmatprep.subr.mxu0 0.0
    %9835 = vmatpush1.msra.mxu0 %v9260
    %9836 = vmatprep.subr.mxu0 0.0
    %9837 = vmatpush1.msra.mxu0 %v9262
    %9838 = vmatprep.subr.mxu0 0.0
    %9839 = vmatpush1.msra.mxu0 %v9264
    %9840 = vmatprep.subr.mxu0 0.0
    %9841 = vmatpush1.msra.mxu0 %v9266
    %9842 = vmatprep.subr.mxu0 0.0
    %9843 = vmatpush1.msra.mxu0 %v9268
    %9844 = vmatprep.subr.mxu0 0.0
    %9845 = vmatpush1.msra.mxu0 %v9270
    %9846 = vmatprep.subr.mxu0 0.0
    %9847 = vmatpush1.msra.mxu0 %v9272
    %9848 = vmatprep.subr.mxu0 0.0
    %9849 = vmatpush1.msra.mxu0 %v9274
    %9850 = vmatprep.subr.mxu0 0.0
    %9851 = vmatpush1.msra.mxu0 %v9276
    %9852 = vmatprep.subr.mxu0 0.0
    %9853 = vmatpush1.msra.mxu0 %v9278
    %9854 = vmatprep.subr.mxu0 0.0
    %9855 = vmatpush1.msra.mxu0 %v9280
    %9856 = vmatprep.subr.mxu0 0.0
    %9857 = vmatpush1.msra.mxu0 %v9282
    %9858 = vmatprep.subr.mxu0 0.0
    %9859 = vmatpush1.msra.mxu0 %v9284
    %9860 = vmatprep.subr.mxu0 0.0
    %9861 = vmatpush1.msra.mxu0 %v9286
    %9862 = vmatprep.subr.mxu0 0.0
    %9863 = vmatpush1.msra.mxu0 %v9288
    %9864 = vmatprep.subr.mxu0 0.0
    %9865 = vmatpush1.msra.mxu0 %v9290
    %9866 = vmatprep.subr.mxu0 0.0
    %9867 = vmatpush1.msra.mxu0 %v9292
    %9868 = vmatprep.subr.mxu0 0.0
    %9869 = vmatpush1.msra.mxu0 %v9090
    %9870 = vmatprep.subr.mxu0 0.0
    %9871 = vmatpush1.msra.mxu0 %v9092
    %9872 = vmatprep.subr.mxu0 0.0
    %9873 = vmatpush1.msra.mxu0 %v9094
    %9874 = vmatprep.subr.mxu0 0.0
    %9875 = vmatpush1.msra.mxu0 %v9096
    %9876 = vmatprep.mubr.f32.mxu0 %v9622
    %9877 = vmatmul.mubr.f32.gmra.mrb[0].mxu0 %v9621
    %v9878 = vpop.f32.mrb[0].mxu0
    %v9879 = vadd.f32 %v9804, %v9878
    %v9880 = vpop.f32.mrb[0].mxu0
    %9881 = vmatprep.mubr.f32.mxu0 %v9635
    %9882 = vmatmul.mubr.f32.gmra.mrb[0].mxu0 %v9634
    %v9883 = vpop.f32.mrb[0].mxu0
    %v9884 = vadd.f32 %v9809, %v9883
    %v9885 = vpop.f32.mrb[0].mxu0
    %9886 = vdwg.mxu0
    %9887 = vmatprep.subr.mxu0 0.0
    %9888 = vmatpush1.msra.mxu0 %v9294
    %9889 = vmatprep.subr.mxu0 0.0
    %9890 = vmatpush1.msra.mxu0 %v9296
    %9891 = vmatprep.subr.mxu0 0.0
    %9892 = vmatpush1.msra.mxu0 %v9298
    %9893 = vmatprep.subr.mxu0 0.0
    %9894 = vmatpush1.msra.mxu0 %v9300
    %9895 = vmatprep.subr.mxu0 0.0
    %9896 = vmatpush1.msra.mxu0 %v9302
    %9897 = vmatprep.subr.mxu0 0.0
    %9898 = vmatpush1.msra.mxu0 %v9304
    %9899 = vmatprep.subr.mxu0 0.0
    %9900 = vmatpush1.msra.mxu0 %v9306
    %9901 = vmatprep.subr.mxu0 0.0
    %9902 = vmatpush1.msra.mxu0 %v9308
    %9903 = vmatprep.subr.mxu0 0.0
    %9904 = vmatpush1.msra.mxu0 %v9310
    %9905 = vmatprep.subr.mxu0 0.0
    %9906 = vmatpush1.msra.mxu0 %v9312
    %9907 = vmatprep.subr.mxu0 0.0
    %9908 = vmatpush1.msra.mxu0 %v9314
    %9909 = vmatprep.subr.mxu0 0.0
    %9910 = vmatpush1.msra.mxu0 %v9316
    %9911 = vmatprep.subr.mxu0 0.0
    %9912 = vmatpush1.msra.mxu0 %v9318
    %9913 = vmatprep.subr.mxu0 0.0
    %9914 = vmatpush1.msra.mxu0 %v9320
    %9915 = vmatprep.subr.mxu0 0.0
    %9916 = vmatpush1.msra.mxu0 %v9322
    %9917 = vmatprep.subr.mxu0 0.0
    %9918 = vmatpush1.msra.mxu0 %v9324
    %9919 = vmatprep.subr.mxu0 0.0
    %9920 = vmatpush1.msra.mxu0 %v9326
    %9921 = vmatprep.subr.mxu0 0.0
    %9922 = vmatpush1.msra.mxu0 %v9328
    %9923 = vmatprep.subr.mxu0 0.0
    %9924 = vmatpush1.msra.mxu0 %v9330
    %9925 = vmatprep.subr.mxu0 0.0
    %9926 = vmatpush1.msra.mxu0 %v9332
    %9927 = vmatprep.subr.mxu0 0.0
    %9928 = vmatpush1.msra.mxu0 %v9334
    %9929 = vmatprep.subr.mxu0 0.0
    %9930 = vmatpush1.msra.mxu0 %v9336
    %9931 = vmatprep.subr.mxu0 0.0
    %9932 = vmatpush1.msra.mxu0 %v9338
    %9933 = vmatprep.subr.mxu0 0.0
    %9934 = vmatpush1.msra.mxu0 %v9340
    %9935 = vmatprep.subr.mxu0 0.0
    %9936 = vmatpush1.msra.mxu0 %v9142
    %9937 = vmatprep.subr.mxu0 0.0
    %9938 = vmatpush1.msra.mxu0 %v9144
    %9939 = vmatprep.subr.mxu0 0.0
    %9940 = vmatpush1.msra.mxu0 %v9146
    %9941 = vmatprep.subr.mxu0 0.0
    %9942 = vmatpush1.msra.mxu0 %v9148
    %9943 = vmatprep.subr.mxu0 0.0
    %9944 = vmatpush1.msra.mxu0 %v9342
    %9945 = vmatprep.subr.mxu0 0.0
    %9946 = vmatpush1.msra.mxu0 %v9344
    %9947 = vmatprep.subr.mxu0 0.0
    %9948 = vmatpush1.msra.mxu0 %v9346
    %9949 = vmatprep.subr.mxu0 0.0
    %9950 = vmatpush1.msra.mxu0 %v9348
    %9951 = vmatprep.mubr.f32.mxu0 %v9624
    %9952 = vmatmul.mubr.f32.gmra.mrb[0].mxu0 %v9623
    %v9953 = vpop.f32.mrb[0].mxu0
    %v9954 = vadd.f32 %v9879, %v9953
    %v9955 = vpop.f32.mrb[0].mxu0
    %9956 = vmatprep.mubr.f32.mxu0 %v9637
    %9957 = vmatmul.mubr.f32.gmra.mrb[0].mxu0 %v9636
    %v9958 = vpop.f32.mrb[0].mxu0
    %v9959 = vadd.f32 %v9884, %v9958
    %v9960 = vpop.f32.mrb[0].mxu0
    %9961 = vdwg.mxu0
    %9962 = vmatprep.subr.mxu0 0.0
    %9963 = vmatpush1.msra.mxu0 %v9414
    %9964 = vmatprep.subr.mxu0 0.0
    %9965 = vmatpush1.msra.mxu0 %v9416
    %9966 = vmatprep.subr.mxu0 0.0
    %9967 = vmatpush1.msra.mxu0 %v9418
    %9968 = vmatprep.subr.mxu0 0.0
    %9969 = vmatpush1.msra.mxu0 %v9420
    %9970 = vmatprep.subr.mxu0 0.0
    %9971 = vmatpush1.msra.mxu0 %v9422
    %9972 = vmatprep.subr.mxu0 0.0
    %9973 = vmatpush1.msra.mxu0 %v9424
    %9974 = vmatprep.subr.mxu0 0.0
    %9975 = vmatpush1.msra.mxu0 %v9426
    %9976 = vmatprep.subr.mxu0 0.0
    %9977 = vmatpush1.msra.mxu0 %v9428
    %9978 = vmatprep.subr.mxu0 0.0
    %9979 = vmatpush1.msra.mxu0 %v9430
    %9980 = vmatprep.subr.mxu0 0.0
    %9981 = vmatpush1.msra.mxu0 %v9432
    %9982 = vmatprep.subr.mxu0 0.0
    %9983 = vmatpush1.msra.mxu0 %v9434
    %9984 = vmatprep.subr.mxu0 0.0
    %9985 = vmatpush1.msra.mxu0 %v9436
    %9986 = vmatprep.subr.mxu0 0.0
    %9987 = vmatpush1.msra.mxu0 %v9438
    %9988 = vmatprep.subr.mxu0 0.0
    %9989 = vmatpush1.msra.mxu0 %v9440
    %9990 = vmatprep.subr.mxu0 0.0
    %9991 = vmatpush1.msra.mxu0 %v9442
    %9992 = vmatprep.subr.mxu0 0.0
    %9993 = vmatpush1.msra.mxu0 %v9444
    %9994 = vmatprep.subr.mxu0 0.0
    %9995 = vmatpush1.msra.mxu0 %v9446
    %9996 = vmatprep.subr.mxu0 0.0
    %9997 = vmatpush1.msra.mxu0 %v9448
    %9998 = vmatprep.subr.mxu0 0.0
    %9999 = vmatpush1.msra.mxu0 %v9450
    %10000 = vmatprep.subr.mxu0 0.0
    %10001 = vmatpush1.msra.mxu0 %v9452
    %10002 = vmatprep.subr.mxu0 0.0
    %10003 = vmatpush1.msra.mxu0 %v9454
    %10004 = vmatprep.subr.mxu0 0.0
    %10005 = vmatpush1.msra.mxu0 %v9456
    %10006 = vmatprep.subr.mxu0 0.0
    %10007 = vmatpush1.msra.mxu0 %v9458
    %10008 = vmatprep.subr.mxu0 0.0
    %10009 = vmatpush1.msra.mxu0 %v9460
    %10010 = vmatprep.subr.mxu0 0.0
    %10011 = vmatpush1.msra.mxu0 %v9462
    %10012 = vmatprep.subr.mxu0 0.0
    %10013 = vmatpush1.msra.mxu0 %v9464
    %10014 = vmatprep.subr.mxu0 0.0
    %10015 = vmatpush1.msra.mxu0 %v9466
    %10016 = vmatprep.subr.mxu0 0.0
    %10017 = vmatpush1.msra.mxu0 %v9468
    %10018 = vmatprep.subr.mxu0 0.0
    %10019 = vmatpush1.msra.mxu0 %v9470
    %10020 = vmatprep.subr.mxu0 0.0
    %10021 = vmatpush1.msra.mxu0 %v9472
    %10022 = vmatprep.subr.mxu0 0.0
    %10023 = vmatpush1.msra.mxu0 %v9474
    %10024 = vmatprep.subr.mxu0 0.0
    %10025 = vmatpush1.msra.mxu0 %v9476
    %10026 = vmatprep.mubr.f32.mxu0 %v9626
    %10027 = vmatmul.mubr.f32.gmra.mrb[0].mxu0 %v9625
    %v10028 = vpop.f32.mrb[0].mxu0
    %v10029 = vadd.f32 %v9954, %v10028
    %v10030 = vpop.f32.mrb[0].mxu0
    %10031 = vmatprep.mubr.f32.mxu0 %v9639
    %10032 = vmatmul.mubr.f32.gmra.mrb[0].mxu0 %v9638
    %v10033 = vpop.f32.mrb[0].mxu0
    %v10034 = vadd.f32 %v9959, %v10033
    %v10035 = vpop.f32.mrb[0].mxu0
    %10036 = vdwg.mxu0
    %10037 = vmatprep.subr.mxu0 0.0
    %10038 = vmatpush1.msra.mxu0 %v9478
    %10039 = vmatprep.subr.mxu0 0.0
    %10040 = vmatpush1.msra.mxu0 %v9480
    %10041 = vmatprep.subr.mxu0 0.0
    %10042 = vmatpush1.msra.mxu0 %v9482
    %10043 = vmatprep.subr.mxu0 0.0
    %10044 = vmatpush1.msra.mxu0 %v9484
    %10045 = vmatprep.subr.mxu0 0.0
    %10046 = vmatpush1.msra.mxu0 %v9486
    %10047 = vmatprep.subr.mxu0 0.0
    %10048 = vmatpush1.msra.mxu0 %v9488
    %10049 = vmatprep.subr.mxu0 0.0
    %10050 = vmatpush1.msra.mxu0 %v9490
    %10051 = vmatprep.subr.mxu0 0.0
    %10052 = vmatpush1.msra.mxu0 %v9492
    %10053 = vmatprep.subr.mxu0 0.0
    %10054 = vmatpush1.msra.mxu0 %v9494
    %10055 = vmatprep.subr.mxu0 0.0
    %10056 = vmatpush1.msra.mxu0 %v9496
    %10057 = vmatprep.subr.mxu0 0.0
    %10058 = vmatpush1.msra.mxu0 %v9498
    %10059 = vmatprep.subr.mxu0 0.0
    %10060 = vmatpush1.msra.mxu0 %v9500
    %10061 = vmatprep.subr.mxu0 0.0
    %10062 = vmatpush1.msra.mxu0 %v9502
    %10063 = vmatprep.subr.mxu0 0.0
    %10064 = vmatpush1.msra.mxu0 %v9504
    %10065 = vmatprep.subr.mxu0 0.0
    %10066 = vmatpush1.msra.mxu0 %v9506
    %10067 = vmatprep.subr.mxu0 0.0
    %10068 = vmatpush1.msra.mxu0 %v9508
    %10069 = vmatprep.subr.mxu0 0.0
    %10070 = vmatpush1.msra.mxu0 %v9510
    %10071 = vmatprep.subr.mxu0 0.0
    %10072 = vmatpush1.msra.mxu0 %v9512
    %10073 = vmatprep.subr.mxu0 0.0
    %10074 = vmatpush1.msra.mxu0 %v9514
    %10075 = vmatprep.subr.mxu0 0.0
    %10076 = vmatpush1.msra.mxu0 %v9516
    %10077 = vmatprep.subr.mxu0 0.0
    %10078 = vmatpush1.msra.mxu0 %v9518
    %10079 = vmatprep.subr.mxu0 0.0
    %10080 = vmatpush1.msra.mxu0 %v9520
    %10081 = vmatprep.subr.mxu0 0.0
    %10082 = vmatpush1.msra.mxu0 %v9522
    %10083 = vmatprep.subr.mxu0 0.0
    %10084 = vmatpush1.msra.mxu0 %v9524
    %10085 = vmatprep.subr.mxu0 0.0
    %10086 = vmatpush1.msra.mxu0 %v9526
    %10087 = vmatprep.subr.mxu0 0.0
    %10088 = vmatpush1.msra.mxu0 %v9528
    %10089 = vmatprep.subr.mxu0 0.0
    %10090 = vmatpush1.msra.mxu0 %v9530
    %10091 = vmatprep.subr.mxu0 0.0
    %10092 = vmatpush1.msra.mxu0 %v9532
    %10093 = vmatprep.subr.mxu0 0.0
    %10094 = vmatpush1.msra.mxu0 %v9534
    %10095 = vmatprep.subr.mxu0 0.0
    %10096 = vmatpush1.msra.mxu0 %v9536
    %10097 = vmatprep.subr.mxu0 0.0
    %10098 = vmatpush1.msra.mxu0 %v9538
    %10099 = vmatprep.subr.mxu0 0.0
    %10100 = vmatpush1.msra.mxu0 %v9540
    %10101 = vmatprep.mubr.f32.mxu0 %v9628
    %10102 = vmatmul.mubr.f32.gmra.mrb[0].mxu0 %v9627
    %v10103 = vpop.f32.mrb[0].mxu0
    %v10104 = vadd.f32 %v10029, %v10103
    %v10105 = vpop.f32.mrb[0].mxu0
    %10106 = vmatprep.mubr.f32.mxu0 %v9641
    %10107 = vmatmul.mubr.f32.gmra.mrb[0].mxu0 %v9640
    %v10108 = vpop.f32.mrb[0].mxu0
    %v10109 = vadd.f32 %v10034, %v10108
    %v10110 = vpop.f32.mrb[0].mxu0
    %10111 = vdwg.mxu0
    %10112 = vmatprep.subr.mxu0 0.0
    %10113 = vmatpush1.msra.mxu0 %v9606
    %10114 = vmatprep.subr.mxu0 0.0
    %10115 = vmatpush1.msra.mxu0 %v9608
    %10116 = vmatprep.subr.mxu0 0.0
    %10117 = vmatpush1.msra.mxu0 %v9610
    %10118 = vmatprep.subr.mxu0 0.0
    %10119 = vmatpush1.msra.mxu0 %v9612
    %10120 = vmatprep.subr.mxu0 0.0
    %10121 = vmatpush1.msra.mxu0 0.0
    %10122 = vmatprep.subr.mxu0 0.0
    %10123 = vmatpush1.msra.mxu0 0.0
    %10124 = vmatprep.subr.mxu0 0.0
    %10125 = vmatpush1.msra.mxu0 0.0
    %10126 = vmatprep.subr.mxu0 0.0
    %10127 = vmatpush1.msra.mxu0 0.0
    %10128 = vmatprep.subr.mxu0 0.0
    %10129 = vmatpush1.msra.mxu0 0.0
    %10130 = vmatprep.subr.mxu0 0.0
    %10131 = vmatpush1.msra.mxu0 0.0
    %10132 = vmatprep.subr.mxu0 0.0
    %10133 = vmatpush1.msra.mxu0 0.0
    %10134 = vmatprep.subr.mxu0 0.0
    %10135 = vmatpush1.msra.mxu0 0.0
    %10136 = vmatprep.subr.mxu0 0.0
    %10137 = vmatpush1.msra.mxu0 0.0
    %10138 = vmatprep.subr.mxu0 0.0
    %10139 = vmatpush1.msra.mxu0 0.0
    %10140 = vmatprep.subr.mxu0 0.0
    %10141 = vmatpush1.msra.mxu0 0.0
    %10142 = vmatprep.subr.mxu0 0.0
    %10143 = vmatpush1.msra.mxu0 0.0
    %10144 = vmatprep.subr.mxu0 0.0
    %10145 = vmatpush1.msra.mxu0 0.0
    %10146 = vmatprep.subr.mxu0 0.0
    %10147 = vmatpush1.msra.mxu0 0.0
    %10148 = vmatprep.subr.mxu0 0.0
    %10149 = vmatpush1.msra.mxu0 0.0
    %10150 = vmatprep.subr.mxu0 0.0
    %10151 = vmatpush1.msra.mxu0 0.0
    %10152 = vmatprep.subr.mxu0 0.0
    %10153 = vmatpush1.msra.mxu0 0.0
    %10154 = vmatprep.subr.mxu0 0.0
    %10155 = vmatpush1.msra.mxu0 0.0
    %10156 = vmatprep.subr.mxu0 0.0
    %10157 = vmatpush1.msra.mxu0 0.0
    %10158 = vmatprep.subr.mxu0 0.0
    %10159 = vmatpush1.msra.mxu0 0.0
    %10160 = vmatprep.subr.mxu0 0.0
    %10161 = vmatpush1.msra.mxu0 0.0
    %10162 = vmatprep.subr.mxu0 0.0
    %10163 = vmatpush1.msra.mxu0 0.0
    %10164 = vmatprep.subr.mxu0 0.0
    %10165 = vmatpush1.msra.mxu0 0.0
    %10166 = vmatprep.subr.mxu0 0.0
    %10167 = vmatpush1.msra.mxu0 0.0
    %10168 = vmatprep.subr.mxu0 0.0
    %10169 = vmatpush1.msra.mxu0 0.0
    %10170 = vmatprep.subr.mxu0 0.0
    %10171 = vmatpush1.msra.mxu0 0.0
    %10172 = vmatprep.subr.mxu0 0.0
    %10173 = vmatpush1.msra.mxu0 0.0
    %10174 = vmatprep.subr.mxu0 0.0
    %10175 = vmatpush1.msra.mxu0 0.0
    %10176 = vmatprep.mubr.f32.mxu0 0.0
    %10177 = vmatmul.mubr.f32.gmra.mrb[0].mxu0 %v9657
    %v10178 = vpop.f32.mrb[0].mxu0
    %v10179 = vadd.f32 %v10104, %v10178
    %v10180 = vpop.f32.mrb[0].mxu0
    %10181 = vmatprep.mubr.f32.mxu0 0.0
    %10182 = vmatmul.mubr.f32.gmra.mrb[0].mxu0 %v9660
    %v10183 = vpop.f32.mrb[0].mxu0
    %v10184 = vadd.f32 %v10109, %v10183
    %v10185 = vpop.f32.mrb[0].mxu0
    %10186 = vdwg.mxu0
    %vm10187 = vcmask 15360
    %10188 = vst.msk [vmem:[%s8] sm:$0xff] %vm10187, %v10179
    %vm10189 = vcmask 9216
    %10190 = vst.msk [vmem:[%s8 + $0x8] sm:$0x3] %vm10189, %v10184
    // Predicated region
    $region42: #{tpu_custom_call.1} parent=1 // pred_check
      _
    $region43: #{tpu_custom_call.1} parent=1 // pred_check_branch
      %10192 = sbr.rel (0) target = $region45
    $region44: #{tpu_custom_call.1} parent=1 // pred_region
      _
    $region45: #{tpu_custom_call.1} parent=1 // pred_fallthru
      _
    // Predicated region
    $region46: #{tpu_custom_call.1} parent=1 // pred_check
      _
    $region47: #{tpu_custom_call.1} parent=1 // pred_check_branch
      %10194 = sbr.rel (0) target = $region49
    $region48: #{tpu_custom_call.1} parent=1 // pred_region
      _
    $region49: #{tpu_custom_call.1} parent=1 // pred_fallthru
      _
    %10195 = vsyncpa [#allocation7], 1
    %10196 = vsyncpa [#allocation9], 1

</llo_original>
